<compile_context>
chip_gen: v5e
topology: v5e:2x2
jax: 0.10.0
libtpu: 0.0.40
codegen_flags: <defaults>
</compile_context>

<pallas_src>
import jax
import jax.numpy as jnp
from jax.experimental import pallas as pl
from jax.experimental.pallas import tpu as pltpu

# ----------------------------- model config ---------------------------------
NUM_CLASSES = 3
RNN_HIDDEN = 32
RNN_LAYERS = 2
NUM_TEL = 2            # num_telemetry_data_pts
BASE_WIDTH = 8         # resnet18 uses 64; reduced width, same topology
BN_EPS = 1e-5
NUM_STAGES = 4
BLOCKS_PER_STAGE = 2
# Which BasicBlocks carry a 1x1 downsample conv (first block of stages 2..4).
HAS_DOWN = tuple((li > 0 and bi == 0)
                 for li in range(NUM_STAGES) for bi in range(BLOCKS_PER_STAGE))
VMEM_LIMIT_BYTES = 32 * 1024 * 1024   # fits v7x (64 MiB phys) and v5e/v6e.


# --------------------------- BlockSpec helpers --------------------------------
def _const_spec(shape):
    nd = len(shape)
    return pl.BlockSpec(shape, lambda i, _n=nd: (0,) * _n)


# ------------------------------- fused kernel --------------------------------
def _make_fused_kernel(ts, b_z, hidden, n_layers, has_down):
    """Backbone + 2-layer LSTM + fc1/sigmoid head, all in one kernel body."""
    n_pos = ts * b_z
    bf16 = jnp.bfloat16
    f32 = jnp.float32

    def kernel(*refs):
        it = iter(refs)
        x_ref = next(it)           # (rows_pad, Cin*H*W) f32
        tel_ref = next(it)         # (rows_pad, NUM_TEL) f32, row = b*ts + t
        telsel_ref = next(it)      # (b_z, 1) f32, tel[:, ts-2, 0]
        stem_u = next(it)          # bf16
        stem_b = next(it)          # f32
        gh = next(it)              # (3, ., .) bf16 — H-direction pool gathers
        gw = next(it)              # (3, ., .) bf16 — W-direction pool gathers
        blocks = []
        for down in has_down:
            u1 = next(it); b1 = next(it); u2 = next(it); b2 = next(it)
            if down:
                ud = next(it); bd = next(it)
            else:
                ud = bd = None
            blocks.append((u1, b1, u2, b2, ud, bd))
        gap = next(it)             # bf16
        w_ihf0 = next(it)          # (feat_pad, 4H) bf16
        w_iht0 = next(it)          # (NUM_TEL, 4H) f32
        w_hh0 = next(it)           # (H, 4H) bf16
        bl0 = next(it)             # (1, 4H) f32
        upper = []
        for _ in range(n_layers - 1):
            upper.append((next(it), next(it), next(it)))   # w_ih bf16, w_hh bf16, b f32
        wa = next(it)              # (H, C) f32
        wt = next(it)              # (1, C) f32
        bfc = next(it)             # (1, C) f32
        o_ref = next(it)

        # ----------------------- backbone (rows = b*ts + t) -----------------
        h = jnp.dot(x_ref[...].astype(bf16), stem_u[...],
                    preferred_element_type=f32)
        h = jnp.maximum(h + stem_b[...], 0.0)          # post-ReLU: >= 0
        # Separable maxpool 3x3/2 (H then W), tree-max.  Zero-pad via gather
        # matrices is exact ONLY because inputs are post-ReLU (>= 0).
        hb = h.astype(bf16)
        ph = jnp.maximum(
            jnp.maximum(jnp.dot(hb, gh[0], preferred_element_type=f32),
                        jnp.dot(hb, gh[1], preferred_element_type=f32)),
            jnp.dot(hb, gh[2], preferred_element_type=f32))
        pb = ph.astype(bf16)
        h = jnp.maximum(
            jnp.maximum(jnp.dot(pb, gw[0], preferred_element_type=f32),
                        jnp.dot(pb, gw[1], preferred_element_type=f32)),
            jnp.dot(pb, gw[2], preferred_element_type=f32))
        # 4 stages x 2 BasicBlocks, residual add + relu fused.
        for (u1, b1, u2, b2, ud, bd) in blocks:
            hb = h.astype(bf16)
            if ud is not None:
                ident = jnp.dot(hb, ud[...], preferred_element_type=f32) + bd[...]
            else:
                ident = h
            t = jnp.dot(hb, u1[...], preferred_element_type=f32) + b1[...]
            t = jnp.maximum(t, 0.0)
            t = jnp.dot(t.astype(bf16), u2[...], preferred_element_type=f32) + b2[...]
            h = jnp.maximum(t + ident, 0.0)
        # Global average pool -> (rows_pad, feat_pad), padded lanes are zero.
        feats = jnp.dot(h.astype(bf16), gap[...], preferred_element_type=f32)

        # --------------------------- LSTM -----------------------------------
        # Sequential position p = f*b_z + s (frame-major, hidden carried
        # continuously, exactly like the torch frame loop with seq_len=b_z).
        # feats/tel rows are ordered r = s*ts + f, so layer-0 projections are
        # indexed with that static mapping.
        def lstm_layer(xp, w_hh_ref, row_of_p, capture_frame):
            w_hh = w_hh_ref[...]
            hcur = jnp.zeros((1, hidden), f32)
            ccur = jnp.zeros((1, hidden), f32)
            outs, captured = [], []
            for p in range(n_pos):
                r = row_of_p(p)
                g = xp[r:r + 1, :] + jnp.dot(hcur.astype(bf16), w_hh,
                                             preferred_element_type=f32)
                sg = jax.nn.sigmoid(g)           # one full-width EUP push
                tg = jnp.tanh(g)                 # one full-width EUP push
                i_g = sg[:, 0:hidden]
                f_g = sg[:, hidden:2 * hidden]
                g_g = tg[:, 2 * hidden:3 * hidden]
                o_g = sg[:, 3 * hidden:4 * hidden]
                ccur = f_g * ccur + i_g * g_g
                hcur = o_g * jnp.tanh(ccur)
                outs.append(hcur)
                if capture_frame is not None and (p // b_z) == capture_frame:
                    captured.append(hcur)        # in s = 0..b_z-1 order
            return outs, captured

        # Layer 0: hoisted input projection at M = ts*b_z.
        xp0 = (jnp.dot(feats.astype(bf16), w_ihf0[...],
                       preferred_element_type=f32) + bl0[...])
        tel_v = tel_ref[...]
        w_t = w_iht0[...]
        for j in range(NUM_TEL):                 # tiny: VPU broadcast-mul-add
            xp0 = xp0 + tel_v[:, j:j + 1] * w_t[j:j + 1, :]

        row0 = lambda p: (p % b_z) * ts + (p // b_z)
        cap_frame0 = (ts - 2) if n_layers == 1 else None
        prev_outs, cap = lstm_layer(xp0, w_hh0, row0, cap_frame0)

        # Upper layers: input projection batched over the stored hidden seq.
        for li, (w_ih, w_hh, b) in enumerate(upper):
            h_seq = jnp.concatenate(prev_outs, axis=0)        # (n_pos, H), p-order
            xp = jnp.dot(h_seq.astype(bf16), w_ih[...],
                         preferred_element_type=f32) + b[...]
            cap_frame = (ts - 2) if li == len(upper) - 1 else None
            prev_outs, cap = lstm_layer(xp, w_hh, lambda p: p, cap_frame)

        # cat((out, temp_out), 1)[:, -2, :]  ==  top-layer hidden at frame ts-2.
        feat_sel = jnp.concatenate(cap, axis=0)               # (b_z, H)

        # --------------------------- head ------------------------------------
        # TODO(synk): nn.Dropout has no deterministic inference effect; identity.
        tel_sig = jax.nn.sigmoid(telsel_ref[...])             # (b_z, 1)
        y = (jnp.dot(feat_sel, wa[...], preferred_element_type=f32)
             + tel_sig * wt[...] + bfc[...])
        o_ref[...] = jax.nn.sigmoid(y)

    return kernel


# -------------------------- pallas_call wrapper -------------------------------
def _fused_call(packed, x, tel_flat, tel_sel, ts, b_z):
    ins = [x, tel_flat, tel_sel,
           packed["stem_u"], packed["stem_b"],
           packed["pool_gh"], packed["pool_gw"]]
    ins += list(packed["block_flat"])
    ins += [packed["gap"],
            packed["lstm0_wf"], packed["lstm0_wt"],
            packed["lstm0_whh"], packed["lstm0_b"]]
    for (w_ih, w_hh, b) in packed["lstm_upper"]:
        ins += [w_ih, w_hh, b]
    wa, wt, bfc = packed["fc1"]
    ins += [wa, wt, bfc]

    kernel = _make_fused_kernel(ts, b_z, RNN_HIDDEN, RNN_LAYERS, HAS_DOWN)
    return pl.pallas_call(
        kernel,
        grid=(1,),
        out_shape=jax.ShapeDtypeStruct((b_z, NUM_CLASSES), jnp.float32),
        in_specs=[_const_spec(a.shape) for a in ins],
        out_specs=_const_spec((b_z, NUM_CLASSES)),
        compiler_params=pltpu.CompilerParams(
            dimension_semantics=("arbitrary",),
            vmem_limit_bytes=VMEM_LIMIT_BYTES),
    )(*ins)


# ------------------------------ full forward ---------------------------------
def resnt18rnn_forward(packed, img, tel):
    b_z, ts, c, h, w = img.shape
    assert ts >= 2, "original module requires ts >= 2"
    rows = b_z * ts
    rows_pad = max(8, ((rows + 7) // 8) * 8)

    x = img.astype(jnp.float32).reshape(rows, c * h * w)        # row = b*ts + t
    x = jnp.pad(x, ((0, rows_pad - rows), (0, 0)))
    tel_flat = tel.astype(jnp.float32).reshape(rows, NUM_TEL)   # row = b*ts + t
    tel_flat = jnp.pad(tel_flat, ((0, rows_pad - rows), (0, 0)))
    tel_sel = tel[:, ts - 2, 0:1].astype(jnp.float32)           # sigmoid(tel[:,-2,0])

    return _fused_call(packed, x, tel_flat, tel_sel, ts, b_z)


# ------------------- one-time parameter packing (plain JAX) -------------------
def _fold_bn(bn):
    gamma, beta, mean, var = bn
    scale = gamma / jnp.sqrt(var + BN_EPS)
    bias = beta - mean * scale
    return scale, bias


def _sel_matrix(k_sz, size_in, size_out, stride, pad):
    # sel[k, i, o] = 1 iff input index i == o*stride - pad + k (0 if OOB).
    k = jnp.arange(k_sz)[:, None, None]
    i = jnp.arange(size_in)[None, :, None]
    o = jnp.arange(size_out)[None, None, :]
    return (i == o * stride - pad + k).astype(jnp.float32)


def _unroll_conv_bn(wgt, bn, h, w, stride, pad):
    """Dense U, bias b so conv+BN == x_flat @ U + b (x_flat: (N, Cin*H*W))."""
    cout, cin, kh, kw = wgt.shape
    oh = (h + 2 * pad - kh) // stride + 1
    ow = (w + 2 * pad - kw) // stride + 1
    ah = _sel_matrix(kh, h, oh, stride, pad)       # (kh, H, OH)
    aw = _sel_matrix(kw, w, ow, stride, pad)       # (kw, W, OW)
    u = jnp.einsum("oikl,khu,lwv->ihwouv", wgt, ah, aw)
    u = u.reshape(cin * h * w, cout * oh * ow)
    scale, bias = _fold_bn(bn)
    u = u * jnp.repeat(scale, oh * ow)[None, :]
    b = jnp.repeat(bias, oh * ow)[None, :]
    return u, b, oh, ow


def _unroll_maxpool_sep(c, h, w, k=3, stride=2, pad=1):
    """Separable maxpool gathers: maxpool == max_kw((max_kh(x@GH_kh)) @ GW_kw).
    0-pad is exact because the input is post-ReLU (>= 0)."""
    oh = (h + 2 * pad - k) // stride + 1
    ow = (w + 2 * pad - k) // stride + 1
    ah = _sel_matrix(k, h, oh, stride, pad)
    aw = _sel_matrix(k, w, ow, stride, pad)
    eye_c = jnp.eye(c, dtype=jnp.float32)
    eye_w = jnp.eye(w, dtype=jnp.float32)
    eye_oh = jnp.eye(oh, dtype=jnp.float32)
    gh = [jnp.einsum("cd,hu,wx->chwdux", eye_c, ah[kk], eye_w
                     ).reshape(c * h * w, c * oh * w) for kk in range(k)]
    gw = [jnp.einsum("cd,ux,wv->cuwdxv", eye_c, eye_oh, aw[kk]
                     ).reshape(c * oh * w, c * oh * ow) for kk in range(k)]
    return gh, gw, oh, ow


def _gap_matrix(c, h, w):
    return jnp.repeat(jnp.eye(c, dtype=jnp.float32), h * w, axis=0) / float(h * w)


def _ceil128(n):
    return ((n + 127) // 128) * 128


def _pad_to(a, rows=None, cols=None):
    r, c = a.shape
    pr = 0 if rows is None else rows - r
    pc = 0 if cols is None else cols - c
    return jnp.pad(a, ((0, pr), (0, pc)))


def pack_params(params, img_h, img_w):
    """Pre-lower every conv/pool/GAP to dense matrices; pad all activation
    widths to multiples of 128 lanes; cast matmul operands to bf16."""
    bf16 = jnp.bfloat16
    bb = params["backbone"]
    h, w = img_h, img_w

    # Stem conv + BN.
    stem_u, stem_b, h, w = _unroll_conv_bn(bb["conv1_w"], bb["bn1"], h, w,
                                           stride=2, pad=3)
    chans = bb["conv1_w"].shape[0]
    cur = chans * h * w
    cur_p = _ceil128(cur)
    stem_u_p = _pad_to(stem_u, cols=cur_p).astype(bf16)
    stem_b_p = _pad_to(stem_b, cols=cur_p)

    # Separable maxpool 3x3/2.
    gh_l, gw_l, oh, ow = _unroll_maxpool_sep(chans, h, w, 3, 2, 1)
    mid = chans * oh * w
    mid_p = _ceil128(mid)
    nxt = chans * oh * ow
    nxt_p = _ceil128(nxt)
    pool_gh = jnp.stack([_pad_to(g, rows=cur_p, cols=mid_p) for g in gh_l]
                        ).astype(bf16)
    pool_gw = jnp.stack([_pad_to(g, rows=mid_p, cols=nxt_p) for g in gw_l]
                        ).astype(bf16)
    h, w = oh, ow
    cur, cur_p = nxt, nxt_p

    # 4 stages x 2 BasicBlocks.
    block_flat = []
    for li, layer in enumerate(bb["layers"]):
        for bi, blk in enumerate(layer):
            stride = 2 if (li > 0 and bi == 0) else 1
            u1, b1, oh, ow = _unroll_conv_bn(blk["conv1_w"], blk["bn1"],
                                             h, w, stride, 1)
            u2, b2, _, _ = _unroll_conv_bn(blk["conv2_w"], blk["bn2"],
                                           oh, ow, 1, 1)
            cout = blk["conv1_w"].shape[0]
            out_w = cout * oh * ow
            out_p = _ceil128(out_w)
            block_flat += [_pad_to(u1, rows=cur_p, cols=out_p).astype(bf16),
                           _pad_to(b1, cols=out_p),
                           _pad_to(u2, rows=out_p, cols=out_p).astype(bf16),
                           _pad_to(b2, cols=out_p)]
            if "down_w" in blk:
                ud, bd, _, _ = _unroll_conv_bn(blk["down_w"], blk["down_bn"],
                                               h, w, stride, 0)
                block_flat += [_pad_to(ud, rows=cur_p, cols=out_p).astype(bf16),
                               _pad_to(bd, cols=out_p)]
            h, w = oh, ow
            chans = cout
            cur, cur_p = out_w, out_p

    # Global average pool.
    gap = _gap_matrix(chans, h, w)                       # (cur, chans)
    feat_p = _ceil128(chans)
    gap_p = _pad_to(gap, rows=cur_p, cols=feat_p).astype(bf16)

    # LSTM layer 0: split W_ih into feature part (padded to feat_p rows) and
    # telemetry part; upper layers cast to bf16; biases stay f32.
    lstm = params["lstm"]
    w_ih0, w_hh0, b0 = lstm[0]
    lstm0_wf = _pad_to(w_ih0[:chans], rows=feat_p).astype(bf16)
    lstm0_wt = w_ih0[chans:chans + NUM_TEL]              # (NUM_TEL, 4H) f32
    lstm_upper = [(w_ih.astype(bf16), w_hh.astype(bf16), b)
                  for (w_ih, w_hh, b) in lstm[1:]]

    packed = {
        "stem_u": stem_u_p, "stem_b": stem_b_p,
        "pool_gh": pool_gh, "pool_gw": pool_gw,
        "block_flat": block_flat, "gap": gap_p,
        "lstm0_wf": lstm0_wf, "lstm0_wt": lstm0_wt,
        "lstm0_whh": w_hh0.astype(bf16), "lstm0_b": b0,
        "lstm_upper": lstm_upper,
        "fc1": params["fc1"],
    }

    # VMEM scaling guard: dense-unrolled conv matrices grow as (H*W)^2, and
    # v7x has only 64 MiB physical VMEM.  Keep double-buffered weights + slack
    # under the kernel's VMEM limit; larger inputs need per-stage tiling.
    total = sum(int(v.size) * v.dtype.itemsize
                for v in jax.tree_util.tree_leaves(packed))
    assert 2 * total + (8 << 20) <= VMEM_LIMIT_BYTES, (
        f"packed weights ({total/2**20:.1f} MiB) too large for single-kernel "
        "VMEM residency; split backbone stages into grid steps for this size")
    return packed


# ----------------------------- parameter init --------------------------------
def _conv_init(key, cout, cin, k):
    fan = cin * k * k
    return jax.random.normal(key, (cout, cin, k, k), jnp.float32) / jnp.sqrt(
        float(fan))


def _bn_init(key, c):
    k1, k2, k3, k4 = jax.random.split(key, 4)
    gamma = 1.0 + 0.1 * jax.random.normal(k1, (c,), jnp.float32)
    beta = 0.1 * jax.random.normal(k2, (c,), jnp.float32)
    mean = 0.1 * jax.random.normal(k3, (c,), jnp.float32)
    var = 1.0 + 0.1 * jnp.abs(jax.random.normal(k4, (c,), jnp.float32))
    return (gamma, beta, mean, var)


def _block_init(key, cin, cout, downsample):
    ks = jax.random.split(key, 6)
    p = {
        "conv1_w": _conv_init(ks[0], cout, cin, 3),
        "bn1": _bn_init(ks[1], cout),
        "conv2_w": _conv_init(ks[2], cout, cout, 3),
        "bn2": _bn_init(ks[3], cout),
    }
    if downsample:
        p["down_w"] = _conv_init(ks[4], cout, cin, 1)
        p["down_bn"] = _bn_init(ks[5], cout)
    return p


def init_params(key):
    keys = jax.random.split(key, 16)
    widths = [BASE_WIDTH, BASE_WIDTH * 2, BASE_WIDTH * 4, BASE_WIDTH * 8]
    backbone = {
        "conv1_w": _conv_init(keys[0], widths[0], 3, 7),
        "bn1": _bn_init(keys[1], widths[0]),
        "layers": [],
    }
    kidx = 2
    cin = widths[0]
    for li, cout in enumerate(widths):
        blocks = []
        for bi in range(BLOCKS_PER_STAGE):
            down = (bi == 0) and (li > 0)
            blocks.append(
                _block_init(keys[kidx], cin if bi == 0 else cout, cout, down))
            kidx += 1
        backbone["layers"].append(blocks)
        cin = cout

    feat_dim = widths[-1] + NUM_TEL                     # num_features
    lstm = []
    lkeys = jax.random.split(keys[kidx], RNN_LAYERS)
    kidx += 1
    in_dim = feat_dim
    s = 1.0 / jnp.sqrt(float(RNN_HIDDEN))
    for l in range(RNN_LAYERS):
        k1, k2, k3, k4 = jax.random.split(lkeys[l], 4)
        w_ih = jax.random.uniform(k1, (in_dim, 4 * RNN_HIDDEN), jnp.float32,
                                  -s, s)
        w_hh = jax.random.uniform(k2, (RNN_HIDDEN, 4 * RNN_HIDDEN),
                                  jnp.float32, -s, s)
        # b = b_ih + b_hh (two independent uniforms, as in PyTorch).
        b = (jax.random.uniform(k3, (1, 4 * RNN_HIDDEN), jnp.float32, -s, s)
             + jax.random.uniform(k4, (1, 4 * RNN_HIDDEN), jnp.float32, -s, s))
        lstm.append((w_ih, w_hh, b))
        in_dim = RNN_HIDDEN

    fk1, fk2 = jax.random.split(keys[kidx], 2)
    sf = 1.0 / jnp.sqrt(float(RNN_HIDDEN + 1))
    w_fc = jax.random.uniform(fk1, (NUM_CLASSES, RNN_HIDDEN + 1), jnp.float32,
                              -sf, sf)
    b_fc = jax.random.uniform(fk2, (1, NUM_CLASSES), jnp.float32, -sf, sf)
    fc1 = (w_fc[:, :RNN_HIDDEN].T, w_fc[:, RNN_HIDDEN:].T, b_fc)
    return {"backbone": backbone, "lstm": lstm, "fc1": fc1}


# ---------------------------------- main --------------------------------------
if __name__ == "__main__":
    key = jax.random.PRNGKey(0)
    pkey, ikey, tkey = jax.random.split(key, 3)
    params = init_params(pkey)

    b_z, ts, c, h, w = 2, 4, 3, 16, 16          # img: (B, T, C, H, W)
    packed = pack_params(params, h, w)          # one-time weight unrolling

    img = jax.random.normal(ikey, (b_z, ts, c, h, w), jnp.float32)
    tel = jax.random.normal(tkey, (b_z, ts, NUM_TEL), jnp.float32)

    fwd = jax.jit(resnt18rnn_forward)
    out = jax.block_until_ready(fwd(packed, img, tel))

    assert out.shape == (b_z, NUM_CLASSES), out.shape
    assert out.dtype == jnp.float32
    assert bool(jnp.all(jnp.isfinite(out)))
    assert bool(jnp.all((out >= 0.0) & (out <= 1.0)))   # sigmoid output
    print("KERNEL_OK")
</pallas_src>

<mosaic_0001>
module attributes {stable_mosaic.version = 11 : i64} {
  func.func @kernel(%arg0: i32, %arg1: memref<8x768xf32, #tpu.memory_space<vmem>>, %arg2: memref<8x2xf32, #tpu.memory_space<vmem>>, %arg3: memref<2x1xf32, #tpu.memory_space<vmem>>, %arg4: memref<768x512xbf16, #tpu.memory_space<vmem>>, %arg5: memref<1x512xf32, #tpu.memory_space<vmem>>, %arg6: memref<3x512x256xbf16, #tpu.memory_space<vmem>>, %arg7: memref<3x256x128xbf16, #tpu.memory_space<vmem>>, %arg8: memref<128x128xbf16, #tpu.memory_space<vmem>>, %arg9: memref<1x128xf32, #tpu.memory_space<vmem>>, %arg10: memref<128x128xbf16, #tpu.memory_space<vmem>>, %arg11: memref<1x128xf32, #tpu.memory_space<vmem>>, %arg12: memref<128x128xbf16, #tpu.memory_space<vmem>>, %arg13: memref<1x128xf32, #tpu.memory_space<vmem>>, %arg14: memref<128x128xbf16, #tpu.memory_space<vmem>>, %arg15: memref<1x128xf32, #tpu.memory_space<vmem>>, %arg16: memref<128x128xbf16, #tpu.memory_space<vmem>>, %arg17: memref<1x128xf32, #tpu.memory_space<vmem>>, %arg18: memref<128x128xbf16, #tpu.memory_space<vmem>>, %arg19: memref<1x128xf32, #tpu.memory_space<vmem>>, %arg20: memref<128x128xbf16, #tpu.memory_space<vmem>>, %arg21: memref<1x128xf32, #tpu.memory_space<vmem>>, %arg22: memref<128x128xbf16, #tpu.memory_space<vmem>>, %arg23: memref<1x128xf32, #tpu.memory_space<vmem>>, %arg24: memref<128x128xbf16, #tpu.memory_space<vmem>>, %arg25: memref<1x128xf32, #tpu.memory_space<vmem>>, %arg26: memref<128x128xbf16, #tpu.memory_space<vmem>>, %arg27: memref<1x128xf32, #tpu.memory_space<vmem>>, %arg28: memref<128x128xbf16, #tpu.memory_space<vmem>>, %arg29: memref<1x128xf32, #tpu.memory_space<vmem>>, %arg30: memref<128x128xbf16, #tpu.memory_space<vmem>>, %arg31: memref<1x128xf32, #tpu.memory_space<vmem>>, %arg32: memref<128x128xbf16, #tpu.memory_space<vmem>>, %arg33: memref<1x128xf32, #tpu.memory_space<vmem>>, %arg34: memref<128x128xbf16, #tpu.memory_space<vmem>>, %arg35: memref<1x128xf32, #tpu.memory_space<vmem>>, %arg36: memref<128x128xbf16, #tpu.memory_space<vmem>>, %arg37: memref<1x128xf32, #tpu.memory_space<vmem>>, %arg38: memref<128x128xbf16, #tpu.memory_space<vmem>>, %arg39: memref<1x128xf32, #tpu.memory_space<vmem>>, %arg40: memref<128x128xbf16, #tpu.memory_space<vmem>>, %arg41: memref<1x128xf32, #tpu.memory_space<vmem>>, %arg42: memref<128x128xbf16, #tpu.memory_space<vmem>>, %arg43: memref<1x128xf32, #tpu.memory_space<vmem>>, %arg44: memref<128x128xbf16, #tpu.memory_space<vmem>>, %arg45: memref<1x128xf32, #tpu.memory_space<vmem>>, %arg46: memref<128x128xbf16, #tpu.memory_space<vmem>>, %arg47: memref<128x128xbf16, #tpu.memory_space<vmem>>, %arg48: memref<2x128xf32, #tpu.memory_space<vmem>>, %arg49: memref<32x128xbf16, #tpu.memory_space<vmem>>, %arg50: memref<1x128xf32, #tpu.memory_space<vmem>>, %arg51: memref<32x128xbf16, #tpu.memory_space<vmem>>, %arg52: memref<32x128xbf16, #tpu.memory_space<vmem>>, %arg53: memref<1x128xf32, #tpu.memory_space<vmem>>, %arg54: memref<32x3xf32, #tpu.memory_space<vmem>>, %arg55: memref<1x3xf32, #tpu.memory_space<vmem>>, %arg56: memref<1x3xf32, #tpu.memory_space<vmem>>, %arg57: memref<2x3xf32, #tpu.memory_space<vmem>>) attributes {dimension_semantics = [#tpu.dimension_semantics<arbitrary>], iteration_bounds = array<i64: 1>, scalar_prefetch = 0 : i64, scratch_operands = 0 : i64, tpu.core_type = #tpu.core_type<tc>, window_params = [{pipeline_mode = #tpu.pipeline_mode<synchronous>, transform_indices = @transform_0, window_bounds = array<i64: 8, 768>}, {pipeline_mode = #tpu.pipeline_mode<synchronous>, transform_indices = @transform_1, window_bounds = array<i64: 8, 2>}, {pipeline_mode = #tpu.pipeline_mode<synchronous>, transform_indices = @transform_2, window_bounds = array<i64: 2, 1>}, {pipeline_mode = #tpu.pipeline_mode<synchronous>, transform_indices = @transform_3, window_bounds = array<i64: 768, 512>}, {pipeline_mode = #tpu.pipeline_mode<synchronous>, transform_indices = @transform_4, window_bounds = array<i64: 1, 512>}, {pipeline_mode = #tpu.pipeline_mode<synchronous>, transform_indices = @transform_5, window_bounds = array<i64: 3, 512, 256>}, {pipeline_mode = #tpu.pipeline_mode<synchronous>, transform_indices = @transform_6, window_bounds = array<i64: 3, 256, 128>}, {pipeline_mode = #tpu.pipeline_mode<synchronous>, transform_indices = @transform_7, window_bounds = array<i64: 128, 128>}, {pipeline_mode = #tpu.pipeline_mode<synchronous>, transform_indices = @transform_8, window_bounds = array<i64: 1, 128>}, {pipeline_mode = #tpu.pipeline_mode<synchronous>, transform_indices = @transform_9, window_bounds = array<i64: 128, 128>}, {pipeline_mode = #tpu.pipeline_mode<synchronous>, transform_indices = @transform_10, window_bounds = array<i64: 1, 128>}, {pipeline_mode = #tpu.pipeline_mode<synchronous>, transform_indices = @transform_11, window_bounds = array<i64: 128, 128>}, {pipeline_mode = #tpu.pipeline_mode<synchronous>, transform_indices = @transform_12, window_bounds = array<i64: 1, 128>}, {pipeline_mode = #tpu.pipeline_mode<synchronous>, transform_indices = @transform_13, window_bounds = array<i64: 128, 128>}, {pipeline_mode = #tpu.pipeline_mode<synchronous>, transform_indices = @transform_14, window_bounds = array<i64: 1, 128>}, {pipeline_mode = #tpu.pipeline_mode<synchronous>, transform_indices = @transform_15, window_bounds = array<i64: 128, 128>}, {pipeline_mode = #tpu.pipeline_mode<synchronous>, transform_indices = @transform_16, window_bounds = array<i64: 1, 128>}, {pipeline_mode = #tpu.pipeline_mode<synchronous>, transform_indices = @transform_17, window_bounds = array<i64: 128, 128>}, {pipeline_mode = #tpu.pipeline_mode<synchronous>, transform_indices = @transform_18, window_bounds = array<i64: 1, 128>}, {pipeline_mode = #tpu.pipeline_mode<synchronous>, transform_indices = @transform_19, window_bounds = array<i64: 128, 128>}, {pipeline_mode = #tpu.pipeline_mode<synchronous>, transform_indices = @transform_20, window_bounds = array<i64: 1, 128>}, {pipeline_mode = #tpu.pipeline_mode<synchronous>, transform_indices = @transform_21, window_bounds = array<i64: 128, 128>}, {pipeline_mode = #tpu.pipeline_mode<synchronous>, transform_indices = @transform_22, window_bounds = array<i64: 1, 128>}, {pipeline_mode = #tpu.pipeline_mode<synchronous>, transform_indices = @transform_23, window_bounds = array<i64: 128, 128>}, {pipeline_mode = #tpu.pipeline_mode<synchronous>, transform_indices = @transform_24, window_bounds = array<i64: 1, 128>}, {pipeline_mode = #tpu.pipeline_mode<synchronous>, transform_indices = @transform_25, window_bounds = array<i64: 128, 128>}, {pipeline_mode = #tpu.pipeline_mode<synchronous>, transform_indices = @transform_26, window_bounds = array<i64: 1, 128>}, {pipeline_mode = #tpu.pipeline_mode<synchronous>, transform_indices = @transform_27, window_bounds = array<i64: 128, 128>}, {pipeline_mode = #tpu.pipeline_mode<synchronous>, transform_indices = @transform_28, window_bounds = array<i64: 1, 128>}, {pipeline_mode = #tpu.pipeline_mode<synchronous>, transform_indices = @transform_29, window_bounds = array<i64: 128, 128>}, {pipeline_mode = #tpu.pipeline_mode<synchronous>, transform_indices = @transform_30, window_bounds = array<i64: 1, 128>}, {pipeline_mode = #tpu.pipeline_mode<synchronous>, transform_indices = @transform_31, window_bounds = array<i64: 128, 128>}, {pipeline_mode = #tpu.pipeline_mode<synchronous>, transform_indices = @transform_32, window_bounds = array<i64: 1, 128>}, {pipeline_mode = #tpu.pipeline_mode<synchronous>, transform_indices = @transform_33, window_bounds = array<i64: 128, 128>}, {pipeline_mode = #tpu.pipeline_mode<synchronous>, transform_indices = @transform_34, window_bounds = array<i64: 1, 128>}, {pipeline_mode = #tpu.pipeline_mode<synchronous>, transform_indices = @transform_35, window_bounds = array<i64: 128, 128>}, {pipeline_mode = #tpu.pipeline_mode<synchronous>, transform_indices = @transform_36, window_bounds = array<i64: 1, 128>}, {pipeline_mode = #tpu.pipeline_mode<synchronous>, transform_indices = @transform_37, window_bounds = array<i64: 128, 128>}, {pipeline_mode = #tpu.pipeline_mode<synchronous>, transform_indices = @transform_38, window_bounds = array<i64: 1, 128>}, {pipeline_mode = #tpu.pipeline_mode<synchronous>, transform_indices = @transform_39, window_bounds = array<i64: 128, 128>}, {pipeline_mode = #tpu.pipeline_mode<synchronous>, transform_indices = @transform_40, window_bounds = array<i64: 1, 128>}, {pipeline_mode = #tpu.pipeline_mode<synchronous>, transform_indices = @transform_41, window_bounds = array<i64: 128, 128>}, {pipeline_mode = #tpu.pipeline_mode<synchronous>, transform_indices = @transform_42, window_bounds = array<i64: 1, 128>}, {pipeline_mode = #tpu.pipeline_mode<synchronous>, transform_indices = @transform_43, window_bounds = array<i64: 128, 128>}, {pipeline_mode = #tpu.pipeline_mode<synchronous>, transform_indices = @transform_44, window_bounds = array<i64: 1, 128>}, {pipeline_mode = #tpu.pipeline_mode<synchronous>, transform_indices = @transform_45, window_bounds = array<i64: 128, 128>}, {pipeline_mode = #tpu.pipeline_mode<synchronous>, transform_indices = @transform_46, window_bounds = array<i64: 128, 128>}, {pipeline_mode = #tpu.pipeline_mode<synchronous>, transform_indices = @transform_47, window_bounds = array<i64: 2, 128>}, {pipeline_mode = #tpu.pipeline_mode<synchronous>, transform_indices = @transform_48, window_bounds = array<i64: 32, 128>}, {pipeline_mode = #tpu.pipeline_mode<synchronous>, transform_indices = @transform_49, window_bounds = array<i64: 1, 128>}, {pipeline_mode = #tpu.pipeline_mode<synchronous>, transform_indices = @transform_50, window_bounds = array<i64: 32, 128>}, {pipeline_mode = #tpu.pipeline_mode<synchronous>, transform_indices = @transform_51, window_bounds = array<i64: 32, 128>}, {pipeline_mode = #tpu.pipeline_mode<synchronous>, transform_indices = @transform_52, window_bounds = array<i64: 1, 128>}, {pipeline_mode = #tpu.pipeline_mode<synchronous>, transform_indices = @transform_53, window_bounds = array<i64: 32, 3>}, {pipeline_mode = #tpu.pipeline_mode<synchronous>, transform_indices = @transform_54, window_bounds = array<i64: 1, 3>}, {pipeline_mode = #tpu.pipeline_mode<synchronous>, transform_indices = @transform_55, window_bounds = array<i64: 1, 3>}, {pipeline_mode = #tpu.pipeline_mode<synchronous>, transform_indices = @transform_56, window_bounds = array<i64: 2, 3>}]} {
    %c0 = arith.constant 0 : index
    %c0_0 = arith.constant 0 : index
    %0 = vector.load %arg1[%c0, %c0_0] : memref<8x768xf32, #tpu.memory_space<vmem>>, vector<8x768xf32>
    %1 = arith.truncf %0 : vector<8x768xf32> to vector<8x768xbf16>
    %c0_1 = arith.constant 0 : index
    %c0_2 = arith.constant 0 : index
    %2 = vector.load %arg4[%c0_1, %c0_2] : memref<768x512xbf16, #tpu.memory_space<vmem>>, vector<768x512xbf16>
    %cst = arith.constant dense<0.000000e+00> : vector<8x512xf32>
    %3 = tpu.matmul %1, %2, %cst {dimension_numbers = #tpu.dot_dimension_numbers<[1], [0], [0], [1], [0, 0, 1, 1], [], []>} : vector<8x768xbf16>, vector<768x512xbf16>, vector<8x512xf32> -> vector<8x512xf32>
    %c0_3 = arith.constant 0 : index
    %c0_4 = arith.constant 0 : index
    %4 = vector.load %arg5[%c0_3, %c0_4] : memref<1x512xf32, #tpu.memory_space<vmem>>, vector<1x512xf32>
    %5 = vector.broadcast %4 : vector<1x512xf32> to vector<8x512xf32>
    %6 = arith.addf %3, %5 : vector<8x512xf32>
    %cst_5 = arith.constant 0.000000e+00 : f32
    %7 = vector.broadcast %cst_5 : f32 to vector<8x512xf32>
    %8 = arith.maximumf %6, %7 : vector<8x512xf32>
    %9 = arith.truncf %8 : vector<8x512xf32> to vector<8x512xbf16>
    %c0_6 = arith.constant 0 : index
    %c0_7 = arith.constant 0 : index
    %c0_8 = arith.constant 0 : index
    %10 = vector.load %arg6[%c0_6, %c0_7, %c0_8] : memref<3x512x256xbf16, #tpu.memory_space<vmem>>, vector<1x512x256xbf16>
    %11 = vector.shape_cast %10 : vector<1x512x256xbf16> to vector<512x256xbf16>
    %cst_9 = arith.constant dense<0.000000e+00> : vector<8x256xf32>
    %12 = tpu.matmul %9, %11, %cst_9 {dimension_numbers = #tpu.dot_dimension_numbers<[1], [0], [0], [1], [0, 0, 1, 1], [], []>} : vector<8x512xbf16>, vector<512x256xbf16>, vector<8x256xf32> -> vector<8x256xf32>
    %c1 = arith.constant 1 : index
    %c0_10 = arith.constant 0 : index
    %c0_11 = arith.constant 0 : index
    %13 = vector.load %arg6[%c1, %c0_10, %c0_11] : memref<3x512x256xbf16, #tpu.memory_space<vmem>>, vector<1x512x256xbf16>
    %14 = vector.shape_cast %13 : vector<1x512x256xbf16> to vector<512x256xbf16>
    %cst_12 = arith.constant dense<0.000000e+00> : vector<8x256xf32>
    %15 = tpu.matmul %9, %14, %cst_12 {dimension_numbers = #tpu.dot_dimension_numbers<[1], [0], [0], [1], [0, 0, 1, 1], [], []>} : vector<8x512xbf16>, vector<512x256xbf16>, vector<8x256xf32> -> vector<8x256xf32>
    %16 = arith.maximumf %12, %15 : vector<8x256xf32>
    %c2 = arith.constant 2 : index
    %c0_13 = arith.constant 0 : index
    %c0_14 = arith.constant 0 : index
    %17 = vector.load %arg6[%c2, %c0_13, %c0_14] : memref<3x512x256xbf16, #tpu.memory_space<vmem>>, vector<1x512x256xbf16>
    %18 = vector.shape_cast %17 : vector<1x512x256xbf16> to vector<512x256xbf16>
    %cst_15 = arith.constant dense<0.000000e+00> : vector<8x256xf32>
    %19 = tpu.matmul %9, %18, %cst_15 {dimension_numbers = #tpu.dot_dimension_numbers<[1], [0], [0], [1], [0, 0, 1, 1], [], []>} : vector<8x512xbf16>, vector<512x256xbf16>, vector<8x256xf32> -> vector<8x256xf32>
    %20 = arith.maximumf %16, %19 : vector<8x256xf32>
    %21 = arith.truncf %20 : vector<8x256xf32> to vector<8x256xbf16>
    %c0_16 = arith.constant 0 : index
    %c0_17 = arith.constant 0 : index
    %c0_18 = arith.constant 0 : index
    %22 = vector.load %arg7[%c0_16, %c0_17, %c0_18] : memref<3x256x128xbf16, #tpu.memory_space<vmem>>, vector<1x256x128xbf16>
    %23 = vector.shape_cast %22 : vector<1x256x128xbf16> to vector<256x128xbf16>
    %cst_19 = arith.constant dense<0.000000e+00> : vector<8x128xf32>
    %24 = tpu.matmul %21, %23, %cst_19 {dimension_numbers = #tpu.dot_dimension_numbers<[1], [0], [0], [1], [0, 0, 1, 1], [], []>} : vector<8x256xbf16>, vector<256x128xbf16>, vector<8x128xf32> -> vector<8x128xf32>
    %c1_20 = arith.constant 1 : index
    %c0_21 = arith.constant 0 : index
    %c0_22 = arith.constant 0 : index
    %25 = vector.load %arg7[%c1_20, %c0_21, %c0_22] : memref<3x256x128xbf16, #tpu.memory_space<vmem>>, vector<1x256x128xbf16>
    %26 = vector.shape_cast %25 : vector<1x256x128xbf16> to vector<256x128xbf16>
    %cst_23 = arith.constant dense<0.000000e+00> : vector<8x128xf32>
    %27 = tpu.matmul %21, %26, %cst_23 {dimension_numbers = #tpu.dot_dimension_numbers<[1], [0], [0], [1], [0, 0, 1, 1], [], []>} : vector<8x256xbf16>, vector<256x128xbf16>, vector<8x128xf32> -> vector<8x128xf32>
    %28 = arith.maximumf %24, %27 : vector<8x128xf32>
    %c2_24 = arith.constant 2 : index
    %c0_25 = arith.constant 0 : index
    %c0_26 = arith.constant 0 : index
    %29 = vector.load %arg7[%c2_24, %c0_25, %c0_26] : memref<3x256x128xbf16, #tpu.memory_space<vmem>>, vector<1x256x128xbf16>
    %30 = vector.shape_cast %29 : vector<1x256x128xbf16> to vector<256x128xbf16>
    %cst_27 = arith.constant dense<0.000000e+00> : vector<8x128xf32>
    %31 = tpu.matmul %21, %30, %cst_27 {dimension_numbers = #tpu.dot_dimension_numbers<[1], [0], [0], [1], [0, 0, 1, 1], [], []>} : vector<8x256xbf16>, vector<256x128xbf16>, vector<8x128xf32> -> vector<8x128xf32>
    %32 = arith.maximumf %28, %31 : vector<8x128xf32>
    %33 = arith.truncf %32 : vector<8x128xf32> to vector<8x128xbf16>
    %c0_28 = arith.constant 0 : index
    %c0_29 = arith.constant 0 : index
    %34 = vector.load %arg8[%c0_28, %c0_29] : memref<128x128xbf16, #tpu.memory_space<vmem>>, vector<128x128xbf16>
    %cst_30 = arith.constant dense<0.000000e+00> : vector<8x128xf32>
    %35 = tpu.matmul %33, %34, %cst_30 {dimension_numbers = #tpu.dot_dimension_numbers<[1], [0], [0], [1], [0, 0, 1, 1], [], []>} : vector<8x128xbf16>, vector<128x128xbf16>, vector<8x128xf32> -> vector<8x128xf32>
    %c0_31 = arith.constant 0 : index
    %c0_32 = arith.constant 0 : index
    %36 = vector.load %arg9[%c0_31, %c0_32] : memref<1x128xf32, #tpu.memory_space<vmem>>, vector<1x128xf32>
    %37 = vector.broadcast %36 : vector<1x128xf32> to vector<8x128xf32>
    %38 = arith.addf %35, %37 : vector<8x128xf32>
    %cst_33 = arith.constant 0.000000e+00 : f32
    %39 = vector.broadcast %cst_33 : f32 to vector<8x128xf32>
    %40 = arith.maximumf %38, %39 : vector<8x128xf32>
    %41 = arith.truncf %40 : vector<8x128xf32> to vector<8x128xbf16>
    %c0_34 = arith.constant 0 : index
    %c0_35 = arith.constant 0 : index
    %42 = vector.load %arg10[%c0_34, %c0_35] : memref<128x128xbf16, #tpu.memory_space<vmem>>, vector<128x128xbf16>
    %cst_36 = arith.constant dense<0.000000e+00> : vector<8x128xf32>
    %43 = tpu.matmul %41, %42, %cst_36 {dimension_numbers = #tpu.dot_dimension_numbers<[1], [0], [0], [1], [0, 0, 1, 1], [], []>} : vector<8x128xbf16>, vector<128x128xbf16>, vector<8x128xf32> -> vector<8x128xf32>
    %c0_37 = arith.constant 0 : index
    %c0_38 = arith.constant 0 : index
    %44 = vector.load %arg11[%c0_37, %c0_38] : memref<1x128xf32, #tpu.memory_space<vmem>>, vector<1x128xf32>
    %45 = vector.broadcast %44 : vector<1x128xf32> to vector<8x128xf32>
    %46 = arith.addf %43, %45 : vector<8x128xf32>
    %47 = arith.addf %46, %32 : vector<8x128xf32>
    %cst_39 = arith.constant 0.000000e+00 : f32
    %48 = vector.broadcast %cst_39 : f32 to vector<8x128xf32>
    %49 = arith.maximumf %47, %48 : vector<8x128xf32>
    %50 = arith.truncf %49 : vector<8x128xf32> to vector<8x128xbf16>
    %c0_40 = arith.constant 0 : index
    %c0_41 = arith.constant 0 : index
    %51 = vector.load %arg12[%c0_40, %c0_41] : memref<128x128xbf16, #tpu.memory_space<vmem>>, vector<128x128xbf16>
    %cst_42 = arith.constant dense<0.000000e+00> : vector<8x128xf32>
    %52 = tpu.matmul %50, %51, %cst_42 {dimension_numbers = #tpu.dot_dimension_numbers<[1], [0], [0], [1], [0, 0, 1, 1], [], []>} : vector<8x128xbf16>, vector<128x128xbf16>, vector<8x128xf32> -> vector<8x128xf32>
    %c0_43 = arith.constant 0 : index
    %c0_44 = arith.constant 0 : index
    %53 = vector.load %arg13[%c0_43, %c0_44] : memref<1x128xf32, #tpu.memory_space<vmem>>, vector<1x128xf32>
    %54 = vector.broadcast %53 : vector<1x128xf32> to vector<8x128xf32>
    %55 = arith.addf %52, %54 : vector<8x128xf32>
    %cst_45 = arith.constant 0.000000e+00 : f32
    %56 = vector.broadcast %cst_45 : f32 to vector<8x128xf32>
    %57 = arith.maximumf %55, %56 : vector<8x128xf32>
    %58 = arith.truncf %57 : vector<8x128xf32> to vector<8x128xbf16>
    %c0_46 = arith.constant 0 : index
    %c0_47 = arith.constant 0 : index
    %59 = vector.load %arg14[%c0_46, %c0_47] : memref<128x128xbf16, #tpu.memory_space<vmem>>, vector<128x128xbf16>
    %cst_48 = arith.constant dense<0.000000e+00> : vector<8x128xf32>
    %60 = tpu.matmul %58, %59, %cst_48 {dimension_numbers = #tpu.dot_dimension_numbers<[1], [0], [0], [1], [0, 0, 1, 1], [], []>} : vector<8x128xbf16>, vector<128x128xbf16>, vector<8x128xf32> -> vector<8x128xf32>
    %c0_49 = arith.constant 0 : index
    %c0_50 = arith.constant 0 : index
    %61 = vector.load %arg15[%c0_49, %c0_50] : memref<1x128xf32, #tpu.memory_space<vmem>>, vector<1x128xf32>
    %62 = vector.broadcast %61 : vector<1x128xf32> to vector<8x128xf32>
    %63 = arith.addf %60, %62 : vector<8x128xf32>
    %64 = arith.addf %63, %49 : vector<8x128xf32>
    %cst_51 = arith.constant 0.000000e+00 : f32
    %65 = vector.broadcast %cst_51 : f32 to vector<8x128xf32>
    %66 = arith.maximumf %64, %65 : vector<8x128xf32>
    %67 = arith.truncf %66 : vector<8x128xf32> to vector<8x128xbf16>
    %c0_52 = arith.constant 0 : index
    %c0_53 = arith.constant 0 : index
    %68 = vector.load %arg20[%c0_52, %c0_53] : memref<128x128xbf16, #tpu.memory_space<vmem>>, vector<128x128xbf16>
    %cst_54 = arith.constant dense<0.000000e+00> : vector<8x128xf32>
    %69 = tpu.matmul %67, %68, %cst_54 {dimension_numbers = #tpu.dot_dimension_numbers<[1], [0], [0], [1], [0, 0, 1, 1], [], []>} : vector<8x128xbf16>, vector<128x128xbf16>, vector<8x128xf32> -> vector<8x128xf32>
    %c0_55 = arith.constant 0 : index
    %c0_56 = arith.constant 0 : index
    %70 = vector.load %arg21[%c0_55, %c0_56] : memref<1x128xf32, #tpu.memory_space<vmem>>, vector<1x128xf32>
    %71 = vector.broadcast %70 : vector<1x128xf32> to vector<8x128xf32>
    %72 = arith.addf %69, %71 : vector<8x128xf32>
    %c0_57 = arith.constant 0 : index
    %c0_58 = arith.constant 0 : index
    %73 = vector.load %arg16[%c0_57, %c0_58] : memref<128x128xbf16, #tpu.memory_space<vmem>>, vector<128x128xbf16>
    %cst_59 = arith.constant dense<0.000000e+00> : vector<8x128xf32>
    %74 = tpu.matmul %67, %73, %cst_59 {dimension_numbers = #tpu.dot_dimension_numbers<[1], [0], [0], [1], [0, 0, 1, 1], [], []>} : vector<8x128xbf16>, vector<128x128xbf16>, vector<8x128xf32> -> vector<8x128xf32>
    %c0_60 = arith.constant 0 : index
    %c0_61 = arith.constant 0 : index
    %75 = vector.load %arg17[%c0_60, %c0_61] : memref<1x128xf32, #tpu.memory_space<vmem>>, vector<1x128xf32>
    %76 = vector.broadcast %75 : vector<1x128xf32> to vector<8x128xf32>
    %77 = arith.addf %74, %76 : vector<8x128xf32>
    %cst_62 = arith.constant 0.000000e+00 : f32
    %78 = vector.broadcast %cst_62 : f32 to vector<8x128xf32>
    %79 = arith.maximumf %77, %78 : vector<8x128xf32>
    %80 = arith.truncf %79 : vector<8x128xf32> to vector<8x128xbf16>
    %c0_63 = arith.constant 0 : index
    %c0_64 = arith.constant 0 : index
    %81 = vector.load %arg18[%c0_63, %c0_64] : memref<128x128xbf16, #tpu.memory_space<vmem>>, vector<128x128xbf16>
    %cst_65 = arith.constant dense<0.000000e+00> : vector<8x128xf32>
    %82 = tpu.matmul %80, %81, %cst_65 {dimension_numbers = #tpu.dot_dimension_numbers<[1], [0], [0], [1], [0, 0, 1, 1], [], []>} : vector<8x128xbf16>, vector<128x128xbf16>, vector<8x128xf32> -> vector<8x128xf32>
    %c0_66 = arith.constant 0 : index
    %c0_67 = arith.constant 0 : index
    %83 = vector.load %arg19[%c0_66, %c0_67] : memref<1x128xf32, #tpu.memory_space<vmem>>, vector<1x128xf32>
    %84 = vector.broadcast %83 : vector<1x128xf32> to vector<8x128xf32>
    %85 = arith.addf %82, %84 : vector<8x128xf32>
    %86 = arith.addf %85, %72 : vector<8x128xf32>
    %cst_68 = arith.constant 0.000000e+00 : f32
    %87 = vector.broadcast %cst_68 : f32 to vector<8x128xf32>
    %88 = arith.maximumf %86, %87 : vector<8x128xf32>
    %89 = arith.truncf %88 : vector<8x128xf32> to vector<8x128xbf16>
    %c0_69 = arith.constant 0 : index
    %c0_70 = arith.constant 0 : index
    %90 = vector.load %arg22[%c0_69, %c0_70] : memref<128x128xbf16, #tpu.memory_space<vmem>>, vector<128x128xbf16>
    %cst_71 = arith.constant dense<0.000000e+00> : vector<8x128xf32>
    %91 = tpu.matmul %89, %90, %cst_71 {dimension_numbers = #tpu.dot_dimension_numbers<[1], [0], [0], [1], [0, 0, 1, 1], [], []>} : vector<8x128xbf16>, vector<128x128xbf16>, vector<8x128xf32> -> vector<8x128xf32>
    %c0_72 = arith.constant 0 : index
    %c0_73 = arith.constant 0 : index
    %92 = vector.load %arg23[%c0_72, %c0_73] : memref<1x128xf32, #tpu.memory_space<vmem>>, vector<1x128xf32>
    %93 = vector.broadcast %92 : vector<1x128xf32> to vector<8x128xf32>
    %94 = arith.addf %91, %93 : vector<8x128xf32>
    %cst_74 = arith.constant 0.000000e+00 : f32
    %95 = vector.broadcast %cst_74 : f32 to vector<8x128xf32>
    %96 = arith.maximumf %94, %95 : vector<8x128xf32>
    %97 = arith.truncf %96 : vector<8x128xf32> to vector<8x128xbf16>
    %c0_75 = arith.constant 0 : index
    %c0_76 = arith.constant 0 : index
    %98 = vector.load %arg24[%c0_75, %c0_76] : memref<128x128xbf16, #tpu.memory_space<vmem>>, vector<128x128xbf16>
    %cst_77 = arith.constant dense<0.000000e+00> : vector<8x128xf32>
    %99 = tpu.matmul %97, %98, %cst_77 {dimension_numbers = #tpu.dot_dimension_numbers<[1], [0], [0], [1], [0, 0, 1, 1], [], []>} : vector<8x128xbf16>, vector<128x128xbf16>, vector<8x128xf32> -> vector<8x128xf32>
    %c0_78 = arith.constant 0 : index
    %c0_79 = arith.constant 0 : index
    %100 = vector.load %arg25[%c0_78, %c0_79] : memref<1x128xf32, #tpu.memory_space<vmem>>, vector<1x128xf32>
    %101 = vector.broadcast %100 : vector<1x128xf32> to vector<8x128xf32>
    %102 = arith.addf %99, %101 : vector<8x128xf32>
    %103 = arith.addf %102, %88 : vector<8x128xf32>
    %cst_80 = arith.constant 0.000000e+00 : f32
    %104 = vector.broadcast %cst_80 : f32 to vector<8x128xf32>
    %105 = arith.maximumf %103, %104 : vector<8x128xf32>
    %106 = arith.truncf %105 : vector<8x128xf32> to vector<8x128xbf16>
    %c0_81 = arith.constant 0 : index
    %c0_82 = arith.constant 0 : index
    %107 = vector.load %arg30[%c0_81, %c0_82] : memref<128x128xbf16, #tpu.memory_space<vmem>>, vector<128x128xbf16>
    %cst_83 = arith.constant dense<0.000000e+00> : vector<8x128xf32>
    %108 = tpu.matmul %106, %107, %cst_83 {dimension_numbers = #tpu.dot_dimension_numbers<[1], [0], [0], [1], [0, 0, 1, 1], [], []>} : vector<8x128xbf16>, vector<128x128xbf16>, vector<8x128xf32> -> vector<8x128xf32>
    %c0_84 = arith.constant 0 : index
    %c0_85 = arith.constant 0 : index
    %109 = vector.load %arg31[%c0_84, %c0_85] : memref<1x128xf32, #tpu.memory_space<vmem>>, vector<1x128xf32>
    %110 = vector.broadcast %109 : vector<1x128xf32> to vector<8x128xf32>
    %111 = arith.addf %108, %110 : vector<8x128xf32>
    %c0_86 = arith.constant 0 : index
    %c0_87 = arith.constant 0 : index
    %112 = vector.load %arg26[%c0_86, %c0_87] : memref<128x128xbf16, #tpu.memory_space<vmem>>, vector<128x128xbf16>
    %cst_88 = arith.constant dense<0.000000e+00> : vector<8x128xf32>
    %113 = tpu.matmul %106, %112, %cst_88 {dimension_numbers = #tpu.dot_dimension_numbers<[1], [0], [0], [1], [0, 0, 1, 1], [], []>} : vector<8x128xbf16>, vector<128x128xbf16>, vector<8x128xf32> -> vector<8x128xf32>
    %c0_89 = arith.constant 0 : index
    %c0_90 = arith.constant 0 : index
    %114 = vector.load %arg27[%c0_89, %c0_90] : memref<1x128xf32, #tpu.memory_space<vmem>>, vector<1x128xf32>
    %115 = vector.broadcast %114 : vector<1x128xf32> to vector<8x128xf32>
    %116 = arith.addf %113, %115 : vector<8x128xf32>
    %cst_91 = arith.constant 0.000000e+00 : f32
    %117 = vector.broadcast %cst_91 : f32 to vector<8x128xf32>
    %118 = arith.maximumf %116, %117 : vector<8x128xf32>
    %119 = arith.truncf %118 : vector<8x128xf32> to vector<8x128xbf16>
    %c0_92 = arith.constant 0 : index
    %c0_93 = arith.constant 0 : index
    %120 = vector.load %arg28[%c0_92, %c0_93] : memref<128x128xbf16, #tpu.memory_space<vmem>>, vector<128x128xbf16>
    %cst_94 = arith.constant dense<0.000000e+00> : vector<8x128xf32>
    %121 = tpu.matmul %119, %120, %cst_94 {dimension_numbers = #tpu.dot_dimension_numbers<[1], [0], [0], [1], [0, 0, 1, 1], [], []>} : vector<8x128xbf16>, vector<128x128xbf16>, vector<8x128xf32> -> vector<8x128xf32>
    %c0_95 = arith.constant 0 : index
    %c0_96 = arith.constant 0 : index
    %122 = vector.load %arg29[%c0_95, %c0_96] : memref<1x128xf32, #tpu.memory_space<vmem>>, vector<1x128xf32>
    %123 = vector.broadcast %122 : vector<1x128xf32> to vector<8x128xf32>
    %124 = arith.addf %121, %123 : vector<8x128xf32>
    %125 = arith.addf %124, %111 : vector<8x128xf32>
    %cst_97 = arith.constant 0.000000e+00 : f32
    %126 = vector.broadcast %cst_97 : f32 to vector<8x128xf32>
    %127 = arith.maximumf %125, %126 : vector<8x128xf32>
    %128 = arith.truncf %127 : vector<8x128xf32> to vector<8x128xbf16>
    %c0_98 = arith.constant 0 : index
    %c0_99 = arith.constant 0 : index
    %129 = vector.load %arg32[%c0_98, %c0_99] : memref<128x128xbf16, #tpu.memory_space<vmem>>, vector<128x128xbf16>
    %cst_100 = arith.constant dense<0.000000e+00> : vector<8x128xf32>
    %130 = tpu.matmul %128, %129, %cst_100 {dimension_numbers = #tpu.dot_dimension_numbers<[1], [0], [0], [1], [0, 0, 1, 1], [], []>} : vector<8x128xbf16>, vector<128x128xbf16>, vector<8x128xf32> -> vector<8x128xf32>
    %c0_101 = arith.constant 0 : index
    %c0_102 = arith.constant 0 : index
    %131 = vector.load %arg33[%c0_101, %c0_102] : memref<1x128xf32, #tpu.memory_space<vmem>>, vector<1x128xf32>
    %132 = vector.broadcast %131 : vector<1x128xf32> to vector<8x128xf32>
    %133 = arith.addf %130, %132 : vector<8x128xf32>
    %cst_103 = arith.constant 0.000000e+00 : f32
    %134 = vector.broadcast %cst_103 : f32 to vector<8x128xf32>
    %135 = arith.maximumf %133, %134 : vector<8x128xf32>
    %136 = arith.truncf %135 : vector<8x128xf32> to vector<8x128xbf16>
    %c0_104 = arith.constant 0 : index
    %c0_105 = arith.constant 0 : index
    %137 = vector.load %arg34[%c0_104, %c0_105] : memref<128x128xbf16, #tpu.memory_space<vmem>>, vector<128x128xbf16>
    %cst_106 = arith.constant dense<0.000000e+00> : vector<8x128xf32>
    %138 = tpu.matmul %136, %137, %cst_106 {dimension_numbers = #tpu.dot_dimension_numbers<[1], [0], [0], [1], [0, 0, 1, 1], [], []>} : vector<8x128xbf16>, vector<128x128xbf16>, vector<8x128xf32> -> vector<8x128xf32>
    %c0_107 = arith.constant 0 : index
    %c0_108 = arith.constant 0 : index
    %139 = vector.load %arg35[%c0_107, %c0_108] : memref<1x128xf32, #tpu.memory_space<vmem>>, vector<1x128xf32>
    %140 = vector.broadcast %139 : vector<1x128xf32> to vector<8x128xf32>
    %141 = arith.addf %138, %140 : vector<8x128xf32>
    %142 = arith.addf %141, %127 : vector<8x128xf32>
    %cst_109 = arith.constant 0.000000e+00 : f32
    %143 = vector.broadcast %cst_109 : f32 to vector<8x128xf32>
    %144 = arith.maximumf %142, %143 : vector<8x128xf32>
    %145 = arith.truncf %144 : vector<8x128xf32> to vector<8x128xbf16>
    %c0_110 = arith.constant 0 : index
    %c0_111 = arith.constant 0 : index
    %146 = vector.load %arg40[%c0_110, %c0_111] : memref<128x128xbf16, #tpu.memory_space<vmem>>, vector<128x128xbf16>
    %cst_112 = arith.constant dense<0.000000e+00> : vector<8x128xf32>
    %147 = tpu.matmul %145, %146, %cst_112 {dimension_numbers = #tpu.dot_dimension_numbers<[1], [0], [0], [1], [0, 0, 1, 1], [], []>} : vector<8x128xbf16>, vector<128x128xbf16>, vector<8x128xf32> -> vector<8x128xf32>
    %c0_113 = arith.constant 0 : index
    %c0_114 = arith.constant 0 : index
    %148 = vector.load %arg41[%c0_113, %c0_114] : memref<1x128xf32, #tpu.memory_space<vmem>>, vector<1x128xf32>
    %149 = vector.broadcast %148 : vector<1x128xf32> to vector<8x128xf32>
    %150 = arith.addf %147, %149 : vector<8x128xf32>
    %c0_115 = arith.constant 0 : index
    %c0_116 = arith.constant 0 : index
    %151 = vector.load %arg36[%c0_115, %c0_116] : memref<128x128xbf16, #tpu.memory_space<vmem>>, vector<128x128xbf16>
    %cst_117 = arith.constant dense<0.000000e+00> : vector<8x128xf32>
    %152 = tpu.matmul %145, %151, %cst_117 {dimension_numbers = #tpu.dot_dimension_numbers<[1], [0], [0], [1], [0, 0, 1, 1], [], []>} : vector<8x128xbf16>, vector<128x128xbf16>, vector<8x128xf32> -> vector<8x128xf32>
    %c0_118 = arith.constant 0 : index
    %c0_119 = arith.constant 0 : index
    %153 = vector.load %arg37[%c0_118, %c0_119] : memref<1x128xf32, #tpu.memory_space<vmem>>, vector<1x128xf32>
    %154 = vector.broadcast %153 : vector<1x128xf32> to vector<8x128xf32>
    %155 = arith.addf %152, %154 : vector<8x128xf32>
    %cst_120 = arith.constant 0.000000e+00 : f32
    %156 = vector.broadcast %cst_120 : f32 to vector<8x128xf32>
    %157 = arith.maximumf %155, %156 : vector<8x128xf32>
    %158 = arith.truncf %157 : vector<8x128xf32> to vector<8x128xbf16>
    %c0_121 = arith.constant 0 : index
    %c0_122 = arith.constant 0 : index
    %159 = vector.load %arg38[%c0_121, %c0_122] : memref<128x128xbf16, #tpu.memory_space<vmem>>, vector<128x128xbf16>
    %cst_123 = arith.constant dense<0.000000e+00> : vector<8x128xf32>
    %160 = tpu.matmul %158, %159, %cst_123 {dimension_numbers = #tpu.dot_dimension_numbers<[1], [0], [0], [1], [0, 0, 1, 1], [], []>} : vector<8x128xbf16>, vector<128x128xbf16>, vector<8x128xf32> -> vector<8x128xf32>
    %c0_124 = arith.constant 0 : index
    %c0_125 = arith.constant 0 : index
    %161 = vector.load %arg39[%c0_124, %c0_125] : memref<1x128xf32, #tpu.memory_space<vmem>>, vector<1x128xf32>
    %162 = vector.broadcast %161 : vector<1x128xf32> to vector<8x128xf32>
    %163 = arith.addf %160, %162 : vector<8x128xf32>
    %164 = arith.addf %163, %150 : vector<8x128xf32>
    %cst_126 = arith.constant 0.000000e+00 : f32
    %165 = vector.broadcast %cst_126 : f32 to vector<8x128xf32>
    %166 = arith.maximumf %164, %165 : vector<8x128xf32>
    %167 = arith.truncf %166 : vector<8x128xf32> to vector<8x128xbf16>
    %c0_127 = arith.constant 0 : index
    %c0_128 = arith.constant 0 : index
    %168 = vector.load %arg42[%c0_127, %c0_128] : memref<128x128xbf16, #tpu.memory_space<vmem>>, vector<128x128xbf16>
    %cst_129 = arith.constant dense<0.000000e+00> : vector<8x128xf32>
    %169 = tpu.matmul %167, %168, %cst_129 {dimension_numbers = #tpu.dot_dimension_numbers<[1], [0], [0], [1], [0, 0, 1, 1], [], []>} : vector<8x128xbf16>, vector<128x128xbf16>, vector<8x128xf32> -> vector<8x128xf32>
    %c0_130 = arith.constant 0 : index
    %c0_131 = arith.constant 0 : index
    %170 = vector.load %arg43[%c0_130, %c0_131] : memref<1x128xf32, #tpu.memory_space<vmem>>, vector<1x128xf32>
    %171 = vector.broadcast %170 : vector<1x128xf32> to vector<8x128xf32>
    %172 = arith.addf %169, %171 : vector<8x128xf32>
    %cst_132 = arith.constant 0.000000e+00 : f32
    %173 = vector.broadcast %cst_132 : f32 to vector<8x128xf32>
    %174 = arith.maximumf %172, %173 : vector<8x128xf32>
    %175 = arith.truncf %174 : vector<8x128xf32> to vector<8x128xbf16>
    %c0_133 = arith.constant 0 : index
    %c0_134 = arith.constant 0 : index
    %176 = vector.load %arg44[%c0_133, %c0_134] : memref<128x128xbf16, #tpu.memory_space<vmem>>, vector<128x128xbf16>
    %cst_135 = arith.constant dense<0.000000e+00> : vector<8x128xf32>
    %177 = tpu.matmul %175, %176, %cst_135 {dimension_numbers = #tpu.dot_dimension_numbers<[1], [0], [0], [1], [0, 0, 1, 1], [], []>} : vector<8x128xbf16>, vector<128x128xbf16>, vector<8x128xf32> -> vector<8x128xf32>
    %c0_136 = arith.constant 0 : index
    %c0_137 = arith.constant 0 : index
    %178 = vector.load %arg45[%c0_136, %c0_137] : memref<1x128xf32, #tpu.memory_space<vmem>>, vector<1x128xf32>
    %179 = vector.broadcast %178 : vector<1x128xf32> to vector<8x128xf32>
    %180 = arith.addf %177, %179 : vector<8x128xf32>
    %181 = arith.addf %180, %166 : vector<8x128xf32>
    %cst_138 = arith.constant 0.000000e+00 : f32
    %182 = vector.broadcast %cst_138 : f32 to vector<8x128xf32>
    %183 = arith.maximumf %181, %182 : vector<8x128xf32>
    %184 = arith.truncf %183 : vector<8x128xf32> to vector<8x128xbf16>
    %c0_139 = arith.constant 0 : index
    %c0_140 = arith.constant 0 : index
    %185 = vector.load %arg46[%c0_139, %c0_140] : memref<128x128xbf16, #tpu.memory_space<vmem>>, vector<128x128xbf16>
    %cst_141 = arith.constant dense<0.000000e+00> : vector<8x128xf32>
    %186 = tpu.matmul %184, %185, %cst_141 {dimension_numbers = #tpu.dot_dimension_numbers<[1], [0], [0], [1], [0, 0, 1, 1], [], []>} : vector<8x128xbf16>, vector<128x128xbf16>, vector<8x128xf32> -> vector<8x128xf32>
    %187 = arith.truncf %186 : vector<8x128xf32> to vector<8x128xbf16>
    %c0_142 = arith.constant 0 : index
    %c0_143 = arith.constant 0 : index
    %188 = vector.load %arg47[%c0_142, %c0_143] : memref<128x128xbf16, #tpu.memory_space<vmem>>, vector<128x128xbf16>
    %cst_144 = arith.constant dense<0.000000e+00> : vector<8x128xf32>
    %189 = tpu.matmul %187, %188, %cst_144 {dimension_numbers = #tpu.dot_dimension_numbers<[1], [0], [0], [1], [0, 0, 1, 1], [], []>} : vector<8x128xbf16>, vector<128x128xbf16>, vector<8x128xf32> -> vector<8x128xf32>
    %c0_145 = arith.constant 0 : index
    %c0_146 = arith.constant 0 : index
    %190 = vector.load %arg50[%c0_145, %c0_146] : memref<1x128xf32, #tpu.memory_space<vmem>>, vector<1x128xf32>
    %191 = vector.broadcast %190 : vector<1x128xf32> to vector<8x128xf32>
    %192 = arith.addf %189, %191 : vector<8x128xf32>
    %c0_147 = arith.constant 0 : index
    %c0_148 = arith.constant 0 : index
    %193 = vector.load %arg2[%c0_147, %c0_148] : memref<8x2xf32, #tpu.memory_space<vmem>>, vector<8x2xf32>
    %c0_149 = arith.constant 0 : index
    %c0_150 = arith.constant 0 : index
    %194 = vector.load %arg48[%c0_149, %c0_150] : memref<2x128xf32, #tpu.memory_space<vmem>>, vector<2x128xf32>
    %195 = vector.extract_strided_slice %193 {offsets = [0, 0], sizes = [8, 1], strides = [1, 1]} : vector<8x2xf32> to vector<8x1xf32>
    %196 = vector.extract_strided_slice %194 {offsets = [0, 0], sizes = [1, 128], strides = [1, 1]} : vector<2x128xf32> to vector<1x128xf32>
    %197 = vector.broadcast %195 : vector<8x1xf32> to vector<8x128xf32>
    %198 = vector.broadcast %196 : vector<1x128xf32> to vector<8x128xf32>
    %199 = arith.mulf %197, %198 : vector<8x128xf32>
    %200 = arith.addf %192, %199 : vector<8x128xf32>
    %201 = vector.extract_strided_slice %193 {offsets = [0, 1], sizes = [8, 1], strides = [1, 1]} : vector<8x2xf32> to vector<8x1xf32>
    %202 = vector.extract_strided_slice %194 {offsets = [1, 0], sizes = [1, 128], strides = [1, 1]} : vector<2x128xf32> to vector<1x128xf32>
    %203 = vector.broadcast %201 : vector<8x1xf32> to vector<8x128xf32>
    %204 = vector.broadcast %202 : vector<1x128xf32> to vector<8x128xf32>
    %205 = arith.mulf %203, %204 : vector<8x128xf32>
    %206 = arith.addf %200, %205 : vector<8x128xf32>
    %c0_151 = arith.constant 0 : index
    %c0_152 = arith.constant 0 : index
    %207 = vector.load %arg49[%c0_151, %c0_152] : memref<32x128xbf16, #tpu.memory_space<vmem>>, vector<32x128xbf16>
    %cst_153 = arith.constant 0.000000e+00 : f32
    %208 = vector.broadcast %cst_153 : f32 to vector<1x32xf32>
    %cst_154 = arith.constant 0.000000e+00 : f32
    %209 = vector.broadcast %cst_154 : f32 to vector<1x32xf32>
    %210 = vector.extract_strided_slice %206 {offsets = [0, 0], sizes = [1, 128], strides = [1, 1]} : vector<8x128xf32> to vector<1x128xf32>
    %211 = arith.truncf %208 : vector<1x32xf32> to vector<1x32xbf16>
    %cst_155 = arith.constant dense<0.000000e+00> : vector<1x128xf32>
    %212 = tpu.matmul %211, %207, %cst_155 {dimension_numbers = #tpu.dot_dimension_numbers<[1], [0], [0], [1], [0, 0, 1, 1], [], []>} : vector<1x32xbf16>, vector<32x128xbf16>, vector<1x128xf32> -> vector<1x128xf32>
    %213 = arith.addf %210, %212 : vector<1x128xf32>
    %214 = arith.negf %213 : vector<1x128xf32>
    %215 = math.exp %214 : vector<1x128xf32>
    %cst_156 = arith.constant 1.000000e+00 : f32
    %216 = vector.broadcast %cst_156 : f32 to vector<1x128xf32>
    %217 = arith.addf %216, %215 : vector<1x128xf32>
    %218 = arith.divf %216, %217 : vector<1x128xf32>
    %219 = math.tanh %213 : vector<1x128xf32>
    %220 = vector.extract_strided_slice %218 {offsets = [0, 0], sizes = [1, 32], strides = [1, 1]} : vector<1x128xf32> to vector<1x32xf32>
    %221 = vector.extract_strided_slice %218 {offsets = [0, 32], sizes = [1, 32], strides = [1, 1]} : vector<1x128xf32> to vector<1x32xf32>
    %222 = vector.extract_strided_slice %219 {offsets = [0, 64], sizes = [1, 32], strides = [1, 1]} : vector<1x128xf32> to vector<1x32xf32>
    %223 = vector.extract_strided_slice %218 {offsets = [0, 96], sizes = [1, 32], strides = [1, 1]} : vector<1x128xf32> to vector<1x32xf32>
    %224 = arith.mulf %221, %209 : vector<1x32xf32>
    %225 = arith.mulf %220, %222 : vector<1x32xf32>
    %226 = arith.addf %224, %225 : vector<1x32xf32>
    %227 = math.tanh %226 : vector<1x32xf32>
    %228 = arith.mulf %223, %227 : vector<1x32xf32>
    %229 = vector.extract_strided_slice %206 {offsets = [4, 0], sizes = [1, 128], strides = [1, 1]} : vector<8x128xf32> to vector<1x128xf32>
    %230 = arith.truncf %228 : vector<1x32xf32> to vector<1x32xbf16>
    %cst_157 = arith.constant dense<0.000000e+00> : vector<1x128xf32>
    %231 = tpu.matmul %230, %207, %cst_157 {dimension_numbers = #tpu.dot_dimension_numbers<[1], [0], [0], [1], [0, 0, 1, 1], [], []>} : vector<1x32xbf16>, vector<32x128xbf16>, vector<1x128xf32> -> vector<1x128xf32>
    %232 = arith.addf %229, %231 : vector<1x128xf32>
    %233 = arith.negf %232 : vector<1x128xf32>
    %234 = math.exp %233 : vector<1x128xf32>
    %cst_158 = arith.constant 1.000000e+00 : f32
    %235 = vector.broadcast %cst_158 : f32 to vector<1x128xf32>
    %236 = arith.addf %235, %234 : vector<1x128xf32>
    %237 = arith.divf %235, %236 : vector<1x128xf32>
    %238 = math.tanh %232 : vector<1x128xf32>
    %239 = vector.extract_strided_slice %237 {offsets = [0, 0], sizes = [1, 32], strides = [1, 1]} : vector<1x128xf32> to vector<1x32xf32>
    %240 = vector.extract_strided_slice %237 {offsets = [0, 32], sizes = [1, 32], strides = [1, 1]} : vector<1x128xf32> to vector<1x32xf32>
    %241 = vector.extract_strided_slice %238 {offsets = [0, 64], sizes = [1, 32], strides = [1, 1]} : vector<1x128xf32> to vector<1x32xf32>
    %242 = vector.extract_strided_slice %237 {offsets = [0, 96], sizes = [1, 32], strides = [1, 1]} : vector<1x128xf32> to vector<1x32xf32>
    %243 = arith.mulf %240, %226 : vector<1x32xf32>
    %244 = arith.mulf %239, %241 : vector<1x32xf32>
    %245 = arith.addf %243, %244 : vector<1x32xf32>
    %246 = math.tanh %245 : vector<1x32xf32>
    %247 = arith.mulf %242, %246 : vector<1x32xf32>
    %248 = vector.extract_strided_slice %206 {offsets = [1, 0], sizes = [1, 128], strides = [1, 1]} : vector<8x128xf32> to vector<1x128xf32>
    %249 = arith.truncf %247 : vector<1x32xf32> to vector<1x32xbf16>
    %cst_159 = arith.constant dense<0.000000e+00> : vector<1x128xf32>
    %250 = tpu.matmul %249, %207, %cst_159 {dimension_numbers = #tpu.dot_dimension_numbers<[1], [0], [0], [1], [0, 0, 1, 1], [], []>} : vector<1x32xbf16>, vector<32x128xbf16>, vector<1x128xf32> -> vector<1x128xf32>
    %251 = arith.addf %248, %250 : vector<1x128xf32>
    %252 = arith.negf %251 : vector<1x128xf32>
    %253 = math.exp %252 : vector<1x128xf32>
    %cst_160 = arith.constant 1.000000e+00 : f32
    %254 = vector.broadcast %cst_160 : f32 to vector<1x128xf32>
    %255 = arith.addf %254, %253 : vector<1x128xf32>
    %256 = arith.divf %254, %255 : vector<1x128xf32>
    %257 = math.tanh %251 : vector<1x128xf32>
    %258 = vector.extract_strided_slice %256 {offsets = [0, 0], sizes = [1, 32], strides = [1, 1]} : vector<1x128xf32> to vector<1x32xf32>
    %259 = vector.extract_strided_slice %256 {offsets = [0, 32], sizes = [1, 32], strides = [1, 1]} : vector<1x128xf32> to vector<1x32xf32>
    %260 = vector.extract_strided_slice %257 {offsets = [0, 64], sizes = [1, 32], strides = [1, 1]} : vector<1x128xf32> to vector<1x32xf32>
    %261 = vector.extract_strided_slice %256 {offsets = [0, 96], sizes = [1, 32], strides = [1, 1]} : vector<1x128xf32> to vector<1x32xf32>
    %262 = arith.mulf %259, %245 : vector<1x32xf32>
    %263 = arith.mulf %258, %260 : vector<1x32xf32>
    %264 = arith.addf %262, %263 : vector<1x32xf32>
    %265 = math.tanh %264 : vector<1x32xf32>
    %266 = arith.mulf %261, %265 : vector<1x32xf32>
    %267 = vector.extract_strided_slice %206 {offsets = [5, 0], sizes = [1, 128], strides = [1, 1]} : vector<8x128xf32> to vector<1x128xf32>
    %268 = arith.truncf %266 : vector<1x32xf32> to vector<1x32xbf16>
    %cst_161 = arith.constant dense<0.000000e+00> : vector<1x128xf32>
    %269 = tpu.matmul %268, %207, %cst_161 {dimension_numbers = #tpu.dot_dimension_numbers<[1], [0], [0], [1], [0, 0, 1, 1], [], []>} : vector<1x32xbf16>, vector<32x128xbf16>, vector<1x128xf32> -> vector<1x128xf32>
    %270 = arith.addf %267, %269 : vector<1x128xf32>
    %271 = arith.negf %270 : vector<1x128xf32>
    %272 = math.exp %271 : vector<1x128xf32>
    %cst_162 = arith.constant 1.000000e+00 : f32
    %273 = vector.broadcast %cst_162 : f32 to vector<1x128xf32>
    %274 = arith.addf %273, %272 : vector<1x128xf32>
    %275 = arith.divf %273, %274 : vector<1x128xf32>
    %276 = math.tanh %270 : vector<1x128xf32>
    %277 = vector.extract_strided_slice %275 {offsets = [0, 0], sizes = [1, 32], strides = [1, 1]} : vector<1x128xf32> to vector<1x32xf32>
    %278 = vector.extract_strided_slice %275 {offsets = [0, 32], sizes = [1, 32], strides = [1, 1]} : vector<1x128xf32> to vector<1x32xf32>
    %279 = vector.extract_strided_slice %276 {offsets = [0, 64], sizes = [1, 32], strides = [1, 1]} : vector<1x128xf32> to vector<1x32xf32>
    %280 = vector.extract_strided_slice %275 {offsets = [0, 96], sizes = [1, 32], strides = [1, 1]} : vector<1x128xf32> to vector<1x32xf32>
    %281 = arith.mulf %278, %264 : vector<1x32xf32>
    %282 = arith.mulf %277, %279 : vector<1x32xf32>
    %283 = arith.addf %281, %282 : vector<1x32xf32>
    %284 = math.tanh %283 : vector<1x32xf32>
    %285 = arith.mulf %280, %284 : vector<1x32xf32>
    %286 = vector.extract_strided_slice %206 {offsets = [2, 0], sizes = [1, 128], strides = [1, 1]} : vector<8x128xf32> to vector<1x128xf32>
    %287 = arith.truncf %285 : vector<1x32xf32> to vector<1x32xbf16>
    %cst_163 = arith.constant dense<0.000000e+00> : vector<1x128xf32>
    %288 = tpu.matmul %287, %207, %cst_163 {dimension_numbers = #tpu.dot_dimension_numbers<[1], [0], [0], [1], [0, 0, 1, 1], [], []>} : vector<1x32xbf16>, vector<32x128xbf16>, vector<1x128xf32> -> vector<1x128xf32>
    %289 = arith.addf %286, %288 : vector<1x128xf32>
    %290 = arith.negf %289 : vector<1x128xf32>
    %291 = math.exp %290 : vector<1x128xf32>
    %cst_164 = arith.constant 1.000000e+00 : f32
    %292 = vector.broadcast %cst_164 : f32 to vector<1x128xf32>
    %293 = arith.addf %292, %291 : vector<1x128xf32>
    %294 = arith.divf %292, %293 : vector<1x128xf32>
    %295 = math.tanh %289 : vector<1x128xf32>
    %296 = vector.extract_strided_slice %294 {offsets = [0, 0], sizes = [1, 32], strides = [1, 1]} : vector<1x128xf32> to vector<1x32xf32>
    %297 = vector.extract_strided_slice %294 {offsets = [0, 32], sizes = [1, 32], strides = [1, 1]} : vector<1x128xf32> to vector<1x32xf32>
    %298 = vector.extract_strided_slice %295 {offsets = [0, 64], sizes = [1, 32], strides = [1, 1]} : vector<1x128xf32> to vector<1x32xf32>
    %299 = vector.extract_strided_slice %294 {offsets = [0, 96], sizes = [1, 32], strides = [1, 1]} : vector<1x128xf32> to vector<1x32xf32>
    %300 = arith.mulf %297, %283 : vector<1x32xf32>
    %301 = arith.mulf %296, %298 : vector<1x32xf32>
    %302 = arith.addf %300, %301 : vector<1x32xf32>
    %303 = math.tanh %302 : vector<1x32xf32>
    %304 = arith.mulf %299, %303 : vector<1x32xf32>
    %305 = vector.extract_strided_slice %206 {offsets = [6, 0], sizes = [1, 128], strides = [1, 1]} : vector<8x128xf32> to vector<1x128xf32>
    %306 = arith.truncf %304 : vector<1x32xf32> to vector<1x32xbf16>
    %cst_165 = arith.constant dense<0.000000e+00> : vector<1x128xf32>
    %307 = tpu.matmul %306, %207, %cst_165 {dimension_numbers = #tpu.dot_dimension_numbers<[1], [0], [0], [1], [0, 0, 1, 1], [], []>} : vector<1x32xbf16>, vector<32x128xbf16>, vector<1x128xf32> -> vector<1x128xf32>
    %308 = arith.addf %305, %307 : vector<1x128xf32>
    %309 = arith.negf %308 : vector<1x128xf32>
    %310 = math.exp %309 : vector<1x128xf32>
    %cst_166 = arith.constant 1.000000e+00 : f32
    %311 = vector.broadcast %cst_166 : f32 to vector<1x128xf32>
    %312 = arith.addf %311, %310 : vector<1x128xf32>
    %313 = arith.divf %311, %312 : vector<1x128xf32>
    %314 = math.tanh %308 : vector<1x128xf32>
    %315 = vector.extract_strided_slice %313 {offsets = [0, 0], sizes = [1, 32], strides = [1, 1]} : vector<1x128xf32> to vector<1x32xf32>
    %316 = vector.extract_strided_slice %313 {offsets = [0, 32], sizes = [1, 32], strides = [1, 1]} : vector<1x128xf32> to vector<1x32xf32>
    %317 = vector.extract_strided_slice %314 {offsets = [0, 64], sizes = [1, 32], strides = [1, 1]} : vector<1x128xf32> to vector<1x32xf32>
    %318 = vector.extract_strided_slice %313 {offsets = [0, 96], sizes = [1, 32], strides = [1, 1]} : vector<1x128xf32> to vector<1x32xf32>
    %319 = arith.mulf %316, %302 : vector<1x32xf32>
    %320 = arith.mulf %315, %317 : vector<1x32xf32>
    %321 = arith.addf %319, %320 : vector<1x32xf32>
    %322 = math.tanh %321 : vector<1x32xf32>
    %323 = arith.mulf %318, %322 : vector<1x32xf32>
    %324 = vector.extract_strided_slice %206 {offsets = [3, 0], sizes = [1, 128], strides = [1, 1]} : vector<8x128xf32> to vector<1x128xf32>
    %325 = arith.truncf %323 : vector<1x32xf32> to vector<1x32xbf16>
    %cst_167 = arith.constant dense<0.000000e+00> : vector<1x128xf32>
    %326 = tpu.matmul %325, %207, %cst_167 {dimension_numbers = #tpu.dot_dimension_numbers<[1], [0], [0], [1], [0, 0, 1, 1], [], []>} : vector<1x32xbf16>, vector<32x128xbf16>, vector<1x128xf32> -> vector<1x128xf32>
    %327 = arith.addf %324, %326 : vector<1x128xf32>
    %328 = arith.negf %327 : vector<1x128xf32>
    %329 = math.exp %328 : vector<1x128xf32>
    %cst_168 = arith.constant 1.000000e+00 : f32
    %330 = vector.broadcast %cst_168 : f32 to vector<1x128xf32>
    %331 = arith.addf %330, %329 : vector<1x128xf32>
    %332 = arith.divf %330, %331 : vector<1x128xf32>
    %333 = math.tanh %327 : vector<1x128xf32>
    %334 = vector.extract_strided_slice %332 {offsets = [0, 0], sizes = [1, 32], strides = [1, 1]} : vector<1x128xf32> to vector<1x32xf32>
    %335 = vector.extract_strided_slice %332 {offsets = [0, 32], sizes = [1, 32], strides = [1, 1]} : vector<1x128xf32> to vector<1x32xf32>
    %336 = vector.extract_strided_slice %333 {offsets = [0, 64], sizes = [1, 32], strides = [1, 1]} : vector<1x128xf32> to vector<1x32xf32>
    %337 = vector.extract_strided_slice %332 {offsets = [0, 96], sizes = [1, 32], strides = [1, 1]} : vector<1x128xf32> to vector<1x32xf32>
    %338 = arith.mulf %335, %321 : vector<1x32xf32>
    %339 = arith.mulf %334, %336 : vector<1x32xf32>
    %340 = arith.addf %338, %339 : vector<1x32xf32>
    %341 = math.tanh %340 : vector<1x32xf32>
    %342 = arith.mulf %337, %341 : vector<1x32xf32>
    %343 = vector.extract_strided_slice %206 {offsets = [7, 0], sizes = [1, 128], strides = [1, 1]} : vector<8x128xf32> to vector<1x128xf32>
    %344 = arith.truncf %342 : vector<1x32xf32> to vector<1x32xbf16>
    %cst_169 = arith.constant dense<0.000000e+00> : vector<1x128xf32>
    %345 = tpu.matmul %344, %207, %cst_169 {dimension_numbers = #tpu.dot_dimension_numbers<[1], [0], [0], [1], [0, 0, 1, 1], [], []>} : vector<1x32xbf16>, vector<32x128xbf16>, vector<1x128xf32> -> vector<1x128xf32>
    %346 = arith.addf %343, %345 : vector<1x128xf32>
    %347 = arith.negf %346 : vector<1x128xf32>
    %348 = math.exp %347 : vector<1x128xf32>
    %cst_170 = arith.constant 1.000000e+00 : f32
    %349 = vector.broadcast %cst_170 : f32 to vector<1x128xf32>
    %350 = arith.addf %349, %348 : vector<1x128xf32>
    %351 = arith.divf %349, %350 : vector<1x128xf32>
    %352 = math.tanh %346 : vector<1x128xf32>
    %353 = vector.extract_strided_slice %351 {offsets = [0, 0], sizes = [1, 32], strides = [1, 1]} : vector<1x128xf32> to vector<1x32xf32>
    %354 = vector.extract_strided_slice %351 {offsets = [0, 32], sizes = [1, 32], strides = [1, 1]} : vector<1x128xf32> to vector<1x32xf32>
    %355 = vector.extract_strided_slice %352 {offsets = [0, 64], sizes = [1, 32], strides = [1, 1]} : vector<1x128xf32> to vector<1x32xf32>
    %356 = vector.extract_strided_slice %351 {offsets = [0, 96], sizes = [1, 32], strides = [1, 1]} : vector<1x128xf32> to vector<1x32xf32>
    %357 = arith.mulf %354, %340 : vector<1x32xf32>
    %358 = arith.mulf %353, %355 : vector<1x32xf32>
    %359 = arith.addf %357, %358 : vector<1x32xf32>
    %360 = math.tanh %359 : vector<1x32xf32>
    %361 = arith.mulf %356, %360 : vector<1x32xf32>
    %362 = tpu.concatenate %228, %247, %266, %285, %304, %323, %342, %361 in 0 : vector<1x32xf32>, vector<1x32xf32>, vector<1x32xf32>, vector<1x32xf32>, vector<1x32xf32>, vector<1x32xf32>, vector<1x32xf32>, vector<1x32xf32> -> vector<8x32xf32>
    %363 = arith.truncf %362 : vector<8x32xf32> to vector<8x32xbf16>
    %c0_171 = arith.constant 0 : index
    %c0_172 = arith.constant 0 : index
    %364 = vector.load %arg51[%c0_171, %c0_172] : memref<32x128xbf16, #tpu.memory_space<vmem>>, vector<32x128xbf16>
    %cst_173 = arith.constant dense<0.000000e+00> : vector<8x128xf32>
    %365 = tpu.matmul %363, %364, %cst_173 {dimension_numbers = #tpu.dot_dimension_numbers<[1], [0], [0], [1], [0, 0, 1, 1], [], []>} : vector<8x32xbf16>, vector<32x128xbf16>, vector<8x128xf32> -> vector<8x128xf32>
    %c0_174 = arith.constant 0 : index
    %c0_175 = arith.constant 0 : index
    %366 = vector.load %arg53[%c0_174, %c0_175] : memref<1x128xf32, #tpu.memory_space<vmem>>, vector<1x128xf32>
    %367 = vector.broadcast %366 : vector<1x128xf32> to vector<8x128xf32>
    %368 = arith.addf %365, %367 : vector<8x128xf32>
    %c0_176 = arith.constant 0 : index
    %c0_177 = arith.constant 0 : index
    %369 = vector.load %arg52[%c0_176, %c0_177] : memref<32x128xbf16, #tpu.memory_space<vmem>>, vector<32x128xbf16>
    %cst_178 = arith.constant 0.000000e+00 : f32
    %370 = vector.broadcast %cst_178 : f32 to vector<1x32xf32>
    %cst_179 = arith.constant 0.000000e+00 : f32
    %371 = vector.broadcast %cst_179 : f32 to vector<1x32xf32>
    %372 = vector.extract_strided_slice %368 {offsets = [0, 0], sizes = [1, 128], strides = [1, 1]} : vector<8x128xf32> to vector<1x128xf32>
    %373 = arith.truncf %370 : vector<1x32xf32> to vector<1x32xbf16>
    %cst_180 = arith.constant dense<0.000000e+00> : vector<1x128xf32>
    %374 = tpu.matmul %373, %369, %cst_180 {dimension_numbers = #tpu.dot_dimension_numbers<[1], [0], [0], [1], [0, 0, 1, 1], [], []>} : vector<1x32xbf16>, vector<32x128xbf16>, vector<1x128xf32> -> vector<1x128xf32>
    %375 = arith.addf %372, %374 : vector<1x128xf32>
    %376 = arith.negf %375 : vector<1x128xf32>
    %377 = math.exp %376 : vector<1x128xf32>
    %cst_181 = arith.constant 1.000000e+00 : f32
    %378 = vector.broadcast %cst_181 : f32 to vector<1x128xf32>
    %379 = arith.addf %378, %377 : vector<1x128xf32>
    %380 = arith.divf %378, %379 : vector<1x128xf32>
    %381 = math.tanh %375 : vector<1x128xf32>
    %382 = vector.extract_strided_slice %380 {offsets = [0, 0], sizes = [1, 32], strides = [1, 1]} : vector<1x128xf32> to vector<1x32xf32>
    %383 = vector.extract_strided_slice %380 {offsets = [0, 32], sizes = [1, 32], strides = [1, 1]} : vector<1x128xf32> to vector<1x32xf32>
    %384 = vector.extract_strided_slice %381 {offsets = [0, 64], sizes = [1, 32], strides = [1, 1]} : vector<1x128xf32> to vector<1x32xf32>
    %385 = vector.extract_strided_slice %380 {offsets = [0, 96], sizes = [1, 32], strides = [1, 1]} : vector<1x128xf32> to vector<1x32xf32>
    %386 = arith.mulf %383, %371 : vector<1x32xf32>
    %387 = arith.mulf %382, %384 : vector<1x32xf32>
    %388 = arith.addf %386, %387 : vector<1x32xf32>
    %389 = math.tanh %388 : vector<1x32xf32>
    %390 = arith.mulf %385, %389 : vector<1x32xf32>
    %391 = vector.extract_strided_slice %368 {offsets = [1, 0], sizes = [1, 128], strides = [1, 1]} : vector<8x128xf32> to vector<1x128xf32>
    %392 = arith.truncf %390 : vector<1x32xf32> to vector<1x32xbf16>
    %cst_182 = arith.constant dense<0.000000e+00> : vector<1x128xf32>
    %393 = tpu.matmul %392, %369, %cst_182 {dimension_numbers = #tpu.dot_dimension_numbers<[1], [0], [0], [1], [0, 0, 1, 1], [], []>} : vector<1x32xbf16>, vector<32x128xbf16>, vector<1x128xf32> -> vector<1x128xf32>
    %394 = arith.addf %391, %393 : vector<1x128xf32>
    %395 = arith.negf %394 : vector<1x128xf32>
    %396 = math.exp %395 : vector<1x128xf32>
    %cst_183 = arith.constant 1.000000e+00 : f32
    %397 = vector.broadcast %cst_183 : f32 to vector<1x128xf32>
    %398 = arith.addf %397, %396 : vector<1x128xf32>
    %399 = arith.divf %397, %398 : vector<1x128xf32>
    %400 = math.tanh %394 : vector<1x128xf32>
    %401 = vector.extract_strided_slice %399 {offsets = [0, 0], sizes = [1, 32], strides = [1, 1]} : vector<1x128xf32> to vector<1x32xf32>
    %402 = vector.extract_strided_slice %399 {offsets = [0, 32], sizes = [1, 32], strides = [1, 1]} : vector<1x128xf32> to vector<1x32xf32>
    %403 = vector.extract_strided_slice %400 {offsets = [0, 64], sizes = [1, 32], strides = [1, 1]} : vector<1x128xf32> to vector<1x32xf32>
    %404 = vector.extract_strided_slice %399 {offsets = [0, 96], sizes = [1, 32], strides = [1, 1]} : vector<1x128xf32> to vector<1x32xf32>
    %405 = arith.mulf %402, %388 : vector<1x32xf32>
    %406 = arith.mulf %401, %403 : vector<1x32xf32>
    %407 = arith.addf %405, %406 : vector<1x32xf32>
    %408 = math.tanh %407 : vector<1x32xf32>
    %409 = arith.mulf %404, %408 : vector<1x32xf32>
    %410 = vector.extract_strided_slice %368 {offsets = [2, 0], sizes = [1, 128], strides = [1, 1]} : vector<8x128xf32> to vector<1x128xf32>
    %411 = arith.truncf %409 : vector<1x32xf32> to vector<1x32xbf16>
    %cst_184 = arith.constant dense<0.000000e+00> : vector<1x128xf32>
    %412 = tpu.matmul %411, %369, %cst_184 {dimension_numbers = #tpu.dot_dimension_numbers<[1], [0], [0], [1], [0, 0, 1, 1], [], []>} : vector<1x32xbf16>, vector<32x128xbf16>, vector<1x128xf32> -> vector<1x128xf32>
    %413 = arith.addf %410, %412 : vector<1x128xf32>
    %414 = arith.negf %413 : vector<1x128xf32>
    %415 = math.exp %414 : vector<1x128xf32>
    %cst_185 = arith.constant 1.000000e+00 : f32
    %416 = vector.broadcast %cst_185 : f32 to vector<1x128xf32>
    %417 = arith.addf %416, %415 : vector<1x128xf32>
    %418 = arith.divf %416, %417 : vector<1x128xf32>
    %419 = math.tanh %413 : vector<1x128xf32>
    %420 = vector.extract_strided_slice %418 {offsets = [0, 0], sizes = [1, 32], strides = [1, 1]} : vector<1x128xf32> to vector<1x32xf32>
    %421 = vector.extract_strided_slice %418 {offsets = [0, 32], sizes = [1, 32], strides = [1, 1]} : vector<1x128xf32> to vector<1x32xf32>
    %422 = vector.extract_strided_slice %419 {offsets = [0, 64], sizes = [1, 32], strides = [1, 1]} : vector<1x128xf32> to vector<1x32xf32>
    %423 = vector.extract_strided_slice %418 {offsets = [0, 96], sizes = [1, 32], strides = [1, 1]} : vector<1x128xf32> to vector<1x32xf32>
    %424 = arith.mulf %421, %407 : vector<1x32xf32>
    %425 = arith.mulf %420, %422 : vector<1x32xf32>
    %426 = arith.addf %424, %425 : vector<1x32xf32>
    %427 = math.tanh %426 : vector<1x32xf32>
    %428 = arith.mulf %423, %427 : vector<1x32xf32>
    %429 = vector.extract_strided_slice %368 {offsets = [3, 0], sizes = [1, 128], strides = [1, 1]} : vector<8x128xf32> to vector<1x128xf32>
    %430 = arith.truncf %428 : vector<1x32xf32> to vector<1x32xbf16>
    %cst_186 = arith.constant dense<0.000000e+00> : vector<1x128xf32>
    %431 = tpu.matmul %430, %369, %cst_186 {dimension_numbers = #tpu.dot_dimension_numbers<[1], [0], [0], [1], [0, 0, 1, 1], [], []>} : vector<1x32xbf16>, vector<32x128xbf16>, vector<1x128xf32> -> vector<1x128xf32>
    %432 = arith.addf %429, %431 : vector<1x128xf32>
    %433 = arith.negf %432 : vector<1x128xf32>
    %434 = math.exp %433 : vector<1x128xf32>
    %cst_187 = arith.constant 1.000000e+00 : f32
    %435 = vector.broadcast %cst_187 : f32 to vector<1x128xf32>
    %436 = arith.addf %435, %434 : vector<1x128xf32>
    %437 = arith.divf %435, %436 : vector<1x128xf32>
    %438 = math.tanh %432 : vector<1x128xf32>
    %439 = vector.extract_strided_slice %437 {offsets = [0, 0], sizes = [1, 32], strides = [1, 1]} : vector<1x128xf32> to vector<1x32xf32>
    %440 = vector.extract_strided_slice %437 {offsets = [0, 32], sizes = [1, 32], strides = [1, 1]} : vector<1x128xf32> to vector<1x32xf32>
    %441 = vector.extract_strided_slice %438 {offsets = [0, 64], sizes = [1, 32], strides = [1, 1]} : vector<1x128xf32> to vector<1x32xf32>
    %442 = vector.extract_strided_slice %437 {offsets = [0, 96], sizes = [1, 32], strides = [1, 1]} : vector<1x128xf32> to vector<1x32xf32>
    %443 = arith.mulf %440, %426 : vector<1x32xf32>
    %444 = arith.mulf %439, %441 : vector<1x32xf32>
    %445 = arith.addf %443, %444 : vector<1x32xf32>
    %446 = math.tanh %445 : vector<1x32xf32>
    %447 = arith.mulf %442, %446 : vector<1x32xf32>
    %448 = vector.extract_strided_slice %368 {offsets = [4, 0], sizes = [1, 128], strides = [1, 1]} : vector<8x128xf32> to vector<1x128xf32>
    %449 = arith.truncf %447 : vector<1x32xf32> to vector<1x32xbf16>
    %cst_188 = arith.constant dense<0.000000e+00> : vector<1x128xf32>
    %450 = tpu.matmul %449, %369, %cst_188 {dimension_numbers = #tpu.dot_dimension_numbers<[1], [0], [0], [1], [0, 0, 1, 1], [], []>} : vector<1x32xbf16>, vector<32x128xbf16>, vector<1x128xf32> -> vector<1x128xf32>
    %451 = arith.addf %448, %450 : vector<1x128xf32>
    %452 = arith.negf %451 : vector<1x128xf32>
    %453 = math.exp %452 : vector<1x128xf32>
    %cst_189 = arith.constant 1.000000e+00 : f32
    %454 = vector.broadcast %cst_189 : f32 to vector<1x128xf32>
    %455 = arith.addf %454, %453 : vector<1x128xf32>
    %456 = arith.divf %454, %455 : vector<1x128xf32>
    %457 = math.tanh %451 : vector<1x128xf32>
    %458 = vector.extract_strided_slice %456 {offsets = [0, 0], sizes = [1, 32], strides = [1, 1]} : vector<1x128xf32> to vector<1x32xf32>
    %459 = vector.extract_strided_slice %456 {offsets = [0, 32], sizes = [1, 32], strides = [1, 1]} : vector<1x128xf32> to vector<1x32xf32>
    %460 = vector.extract_strided_slice %457 {offsets = [0, 64], sizes = [1, 32], strides = [1, 1]} : vector<1x128xf32> to vector<1x32xf32>
    %461 = vector.extract_strided_slice %456 {offsets = [0, 96], sizes = [1, 32], strides = [1, 1]} : vector<1x128xf32> to vector<1x32xf32>
    %462 = arith.mulf %459, %445 : vector<1x32xf32>
    %463 = arith.mulf %458, %460 : vector<1x32xf32>
    %464 = arith.addf %462, %463 : vector<1x32xf32>
    %465 = math.tanh %464 : vector<1x32xf32>
    %466 = arith.mulf %461, %465 : vector<1x32xf32>
    %467 = vector.extract_strided_slice %368 {offsets = [5, 0], sizes = [1, 128], strides = [1, 1]} : vector<8x128xf32> to vector<1x128xf32>
    %468 = arith.truncf %466 : vector<1x32xf32> to vector<1x32xbf16>
    %cst_190 = arith.constant dense<0.000000e+00> : vector<1x128xf32>
    %469 = tpu.matmul %468, %369, %cst_190 {dimension_numbers = #tpu.dot_dimension_numbers<[1], [0], [0], [1], [0, 0, 1, 1], [], []>} : vector<1x32xbf16>, vector<32x128xbf16>, vector<1x128xf32> -> vector<1x128xf32>
    %470 = arith.addf %467, %469 : vector<1x128xf32>
    %471 = arith.negf %470 : vector<1x128xf32>
    %472 = math.exp %471 : vector<1x128xf32>
    %cst_191 = arith.constant 1.000000e+00 : f32
    %473 = vector.broadcast %cst_191 : f32 to vector<1x128xf32>
    %474 = arith.addf %473, %472 : vector<1x128xf32>
    %475 = arith.divf %473, %474 : vector<1x128xf32>
    %476 = math.tanh %470 : vector<1x128xf32>
    %477 = vector.extract_strided_slice %475 {offsets = [0, 0], sizes = [1, 32], strides = [1, 1]} : vector<1x128xf32> to vector<1x32xf32>
    %478 = vector.extract_strided_slice %475 {offsets = [0, 32], sizes = [1, 32], strides = [1, 1]} : vector<1x128xf32> to vector<1x32xf32>
    %479 = vector.extract_strided_slice %476 {offsets = [0, 64], sizes = [1, 32], strides = [1, 1]} : vector<1x128xf32> to vector<1x32xf32>
    %480 = vector.extract_strided_slice %475 {offsets = [0, 96], sizes = [1, 32], strides = [1, 1]} : vector<1x128xf32> to vector<1x32xf32>
    %481 = arith.mulf %478, %464 : vector<1x32xf32>
    %482 = arith.mulf %477, %479 : vector<1x32xf32>
    %483 = arith.addf %481, %482 : vector<1x32xf32>
    %484 = math.tanh %483 : vector<1x32xf32>
    %485 = arith.mulf %480, %484 : vector<1x32xf32>
    %486 = tpu.concatenate %466, %485 in 0 : vector<1x32xf32>, vector<1x32xf32> -> vector<2x32xf32>
    %c0_192 = arith.constant 0 : index
    %c0_193 = arith.constant 0 : index
    %487 = vector.load %arg3[%c0_192, %c0_193] : memref<2x1xf32, #tpu.memory_space<vmem>>, vector<2x1xf32>
    %488 = arith.negf %487 : vector<2x1xf32>
    %489 = math.exp %488 : vector<2x1xf32>
    %cst_194 = arith.constant 1.000000e+00 : f32
    %490 = vector.broadcast %cst_194 : f32 to vector<2x1xf32>
    %491 = arith.addf %490, %489 : vector<2x1xf32>
    %492 = arith.divf %490, %491 : vector<2x1xf32>
    %c0_195 = arith.constant 0 : index
    %c0_196 = arith.constant 0 : index
    %493 = vector.load %arg54[%c0_195, %c0_196] : memref<32x3xf32, #tpu.memory_space<vmem>>, vector<32x3xf32>
    %cst_197 = arith.constant dense<0.000000e+00> : vector<2x3xf32>
    %494 = tpu.matmul %486, %493, %cst_197 {dimension_numbers = #tpu.dot_dimension_numbers<[1], [0], [0], [1], [0, 0, 1, 1], [], []>} : vector<2x32xf32>, vector<32x3xf32>, vector<2x3xf32> -> vector<2x3xf32>
    %c0_198 = arith.constant 0 : index
    %c0_199 = arith.constant 0 : index
    %495 = vector.load %arg55[%c0_198, %c0_199] : memref<1x3xf32, #tpu.memory_space<vmem>>, vector<1x3xf32>
    %496 = vector.broadcast %492 : vector<2x1xf32> to vector<2x3xf32>
    %497 = vector.broadcast %495 : vector<1x3xf32> to vector<2x3xf32>
    %498 = arith.mulf %496, %497 : vector<2x3xf32>
    %499 = arith.addf %494, %498 : vector<2x3xf32>
    %c0_200 = arith.constant 0 : index
    %c0_201 = arith.constant 0 : index
    %500 = vector.load %arg56[%c0_200, %c0_201] : memref<1x3xf32, #tpu.memory_space<vmem>>, vector<1x3xf32>
    %501 = vector.broadcast %500 : vector<1x3xf32> to vector<2x3xf32>
    %502 = arith.addf %499, %501 : vector<2x3xf32>
    %503 = arith.negf %502 : vector<2x3xf32>
    %504 = math.exp %503 : vector<2x3xf32>
    %cst_202 = arith.constant 1.000000e+00 : f32
    %505 = vector.broadcast %cst_202 : f32 to vector<2x3xf32>
    %506 = arith.addf %505, %504 : vector<2x3xf32>
    %507 = arith.divf %505, %506 : vector<2x3xf32>
    %c0_203 = arith.constant 0 : index
    %c0_204 = arith.constant 0 : index
    %508 = vector.load %arg57[%c0_203, %c0_204] : memref<2x3xf32, #tpu.memory_space<vmem>>, vector<2x3xf32>
    tpu.vector_store %arg57[%c0_203, %c0_204], %507 {strides = array<i32>} : memref<2x3xf32, #tpu.memory_space<vmem>>, vector<2x3xf32>,
    return
  }
  func.func @transform_0(%arg0: i32) -> (i32, i32) {
    %c0_i32 = arith.constant 0 : i32
    %c0_i32_0 = arith.constant 0 : i32
    %c0_i32_1 = arith.constant 0 : i32
    return %c0_i32, %c0_i32_0 : i32, i32
  }
  func.func @transform_1(%arg0: i32) -> (i32, i32) {
    %c0_i32 = arith.constant 0 : i32
    %c0_i32_0 = arith.constant 0 : i32
    %c0_i32_1 = arith.constant 0 : i32
    return %c0_i32, %c0_i32_0 : i32, i32
  }
  func.func @transform_2(%arg0: i32) -> (i32, i32) {
    %c0_i32 = arith.constant 0 : i32
    %c0_i32_0 = arith.constant 0 : i32
    %c0_i32_1 = arith.constant 0 : i32
    return %c0_i32, %c0_i32_0 : i32, i32
  }
  func.func @transform_3(%arg0: i32) -> (i32, i32) {
    %c0_i32 = arith.constant 0 : i32
    %c0_i32_0 = arith.constant 0 : i32
    %c0_i32_1 = arith.constant 0 : i32
    return %c0_i32, %c0_i32_0 : i32, i32
  }
  func.func @transform_4(%arg0: i32) -> (i32, i32) {
    %c0_i32 = arith.constant 0 : i32
    %c0_i32_0 = arith.constant 0 : i32
    %c0_i32_1 = arith.constant 0 : i32
    return %c0_i32, %c0_i32_0 : i32, i32
  }
  func.func @transform_5(%arg0: i32) -> (i32, i32, i32) {
    %c0_i32 = arith.constant 0 : i32
    %c0_i32_0 = arith.constant 0 : i32
    %c0_i32_1 = arith.constant 0 : i32
    %c0_i32_2 = arith.constant 0 : i32
    return %c0_i32, %c0_i32_0, %c0_i32_1 : i32, i32, i32
  }
  func.func @transform_6(%arg0: i32) -> (i32, i32, i32) {
    %c0_i32 = arith.constant 0 : i32
    %c0_i32_0 = arith.constant 0 : i32
    %c0_i32_1 = arith.constant 0 : i32
    %c0_i32_2 = arith.constant 0 : i32
    return %c0_i32, %c0_i32_0, %c0_i32_1 : i32, i32, i32
  }
  func.func @transform_7(%arg0: i32) -> (i32, i32) {
    %c0_i32 = arith.constant 0 : i32
    %c0_i32_0 = arith.constant 0 : i32
    %c0_i32_1 = arith.constant 0 : i32
    return %c0_i32, %c0_i32_0 : i32, i32
  }
  func.func @transform_8(%arg0: i32) -> (i32, i32) {
    %c0_i32 = arith.constant 0 : i32
    %c0_i32_0 = arith.constant 0 : i32
    %c0_i32_1 = arith.constant 0 : i32
    return %c0_i32, %c0_i32_0 : i32, i32
  }
  func.func @transform_9(%arg0: i32) -> (i32, i32) {
    %c0_i32 = arith.constant 0 : i32
    %c0_i32_0 = arith.constant 0 : i32
    %c0_i32_1 = arith.constant 0 : i32
    return %c0_i32, %c0_i32_0 : i32, i32
  }
  func.func @transform_10(%arg0: i32) -> (i32, i32) {
    %c0_i32 = arith.constant 0 : i32
    %c0_i32_0 = arith.constant 0 : i32
    %c0_i32_1 = arith.constant 0 : i32
    return %c0_i32, %c0_i32_0 : i32, i32
  }
  func.func @transform_11(%arg0: i32) -> (i32, i32) {
    %c0_i32 = arith.constant 0 : i32
    %c0_i32_0 = arith.constant 0 : i32
    %c0_i32_1 = arith.constant 0 : i32
    return %c0_i32, %c0_i32_0 : i32, i32
  }
  func.func @transform_12(%arg0: i32) -> (i32, i32) {
    %c0_i32 = arith.constant 0 : i32
    %c0_i32_0 = arith.constant 0 : i32
    %c0_i32_1 = arith.constant 0 : i32
    return %c0_i32, %c0_i32_0 : i32, i32
  }
  func.func @transform_13(%arg0: i32) -> (i32, i32) {
    %c0_i32 = arith.constant 0 : i32
    %c0_i32_0 = arith.constant 0 : i32
    %c0_i32_1 = arith.constant 0 : i32
    return %c0_i32, %c0_i32_0 : i32, i32
  }
  func.func @transform_14(%arg0: i32) -> (i32, i32) {
    %c0_i32 = arith.constant 0 : i32
    %c0_i32_0 = arith.constant 0 : i32
    %c0_i32_1 = arith.constant 0 : i32
    return %c0_i32, %c0_i32_0 : i32, i32
  }
  func.func @transform_15(%arg0: i32) -> (i32, i32) {
    %c0_i32 = arith.constant 0 : i32
    %c0_i32_0 = arith.constant 0 : i32
    %c0_i32_1 = arith.constant 0 : i32
    return %c0_i32, %c0_i32_0 : i32, i32
  }
  func.func @transform_16(%arg0: i32) -> (i32, i32) {
    %c0_i32 = arith.constant 0 : i32
    %c0_i32_0 = arith.constant 0 : i32
    %c0_i32_1 = arith.constant 0 : i32
    return %c0_i32, %c0_i32_0 : i32, i32
  }
  func.func @transform_17(%arg0: i32) -> (i32, i32) {
    %c0_i32 = arith.constant 0 : i32
    %c0_i32_0 = arith.constant 0 : i32
    %c0_i32_1 = arith.constant 0 : i32
    return %c0_i32, %c0_i32_0 : i32, i32
  }
  func.func @transform_18(%arg0: i32) -> (i32, i32) {
    %c0_i32 = arith.constant 0 : i32
    %c0_i32_0 = arith.constant 0 : i32
    %c0_i32_1 = arith.constant 0 : i32
    return %c0_i32, %c0_i32_0 : i32, i32
  }
  func.func @transform_19(%arg0: i32) -> (i32, i32) {
    %c0_i32 = arith.constant 0 : i32
    %c0_i32_0 = arith.constant 0 : i32
    %c0_i32_1 = arith.constant 0 : i32
    return %c0_i32, %c0_i32_0 : i32, i32
  }
  func.func @transform_20(%arg0: i32) -> (i32, i32) {
    %c0_i32 = arith.constant 0 : i32
    %c0_i32_0 = arith.constant 0 : i32
    %c0_i32_1 = arith.constant 0 : i32
    return %c0_i32, %c0_i32_0 : i32, i32
  }
  func.func @transform_21(%arg0: i32) -> (i32, i32) {
    %c0_i32 = arith.constant 0 : i32
    %c0_i32_0 = arith.constant 0 : i32
    %c0_i32_1 = arith.constant 0 : i32
    return %c0_i32, %c0_i32_0 : i32, i32
  }
  func.func @transform_22(%arg0: i32) -> (i32, i32) {
    %c0_i32 = arith.constant 0 : i32
    %c0_i32_0 = arith.constant 0 : i32
    %c0_i32_1 = arith.constant 0 : i32
    return %c0_i32, %c0_i32_0 : i32, i32
  }
  func.func @transform_23(%arg0: i32) -> (i32, i32) {
    %c0_i32 = arith.constant 0 : i32
    %c0_i32_0 = arith.constant 0 : i32
    %c0_i32_1 = arith.constant 0 : i32
    return %c0_i32, %c0_i32_0 : i32, i32
  }
  func.func @transform_24(%arg0: i32) -> (i32, i32) {
    %c0_i32 = arith.constant 0 : i32
    %c0_i32_0 = arith.constant 0 : i32
    %c0_i32_1 = arith.constant 0 : i32
    return %c0_i32, %c0_i32_0 : i32, i32
  }
  func.func @transform_25(%arg0: i32) -> (i32, i32) {
    %c0_i32 = arith.constant 0 : i32
    %c0_i32_0 = arith.constant 0 : i32
    %c0_i32_1 = arith.constant 0 : i32
    return %c0_i32, %c0_i32_0 : i32, i32
  }
  func.func @transform_26(%arg0: i32) -> (i32, i32) {
    %c0_i32 = arith.constant 0 : i32
    %c0_i32_0 = arith.constant 0 : i32
    %c0_i32_1 = arith.constant 0 : i32
    return %c0_i32, %c0_i32_0 : i32, i32
  }
  func.func @transform_27(%arg0: i32) -> (i32, i32) {
    %c0_i32 = arith.constant 0 : i32
    %c0_i32_0 = arith.constant 0 : i32
    %c0_i32_1 = arith.constant 0 : i32
    return %c0_i32, %c0_i32_0 : i32, i32
  }
  func.func @transform_28(%arg0: i32) -> (i32, i32) {
    %c0_i32 = arith.constant 0 : i32
    %c0_i32_0 = arith.constant 0 : i32
    %c0_i32_1 = arith.constant 0 : i32
    return %c0_i32, %c0_i32_0 : i32, i32
  }
  func.func @transform_29(%arg0: i32) -> (i32, i32) {
    %c0_i32 = arith.constant 0 : i32
    %c0_i32_0 = arith.constant 0 : i32
    %c0_i32_1 = arith.constant 0 : i32
    return %c0_i32, %c0_i32_0 : i32, i32
  }
  func.func @transform_30(%arg0: i32) -> (i32, i32) {
    %c0_i32 = arith.constant 0 : i32
    %c0_i32_0 = arith.constant 0 : i32
    %c0_i32_1 = arith.constant 0 : i32
    return %c0_i32, %c0_i32_0 : i32, i32
  }
  func.func @transform_31(%arg0: i32) -> (i32, i32) {
    %c0_i32 = arith.constant 0 : i32
    %c0_i32_0 = arith.constant 0 : i32
    %c0_i32_1 = arith.constant 0 : i32
    return %c0_i32, %c0_i32_0 : i32, i32
  }
  func.func @transform_32(%arg0: i32) -> (i32, i32) {
    %c0_i32 = arith.constant 0 : i32
    %c0_i32_0 = arith.constant 0 : i32
    %c0_i32_1 = arith.constant 0 : i32
    return %c0_i32, %c0_i32_0 : i32, i32
  }
  func.func @transform_33(%arg0: i32) -> (i32, i32) {
    %c0_i32 = arith.constant 0 : i32
    %c0_i32_0 = arith.constant 0 : i32
    %c0_i32_1 = arith.constant 0 : i32
    return %c0_i32, %c0_i32_0 : i32, i32
  }
  func.func @transform_34(%arg0: i32) -> (i32, i32) {
    %c0_i32 = arith.constant 0 : i32
    %c0_i32_0 = arith.constant 0 : i32
    %c0_i32_1 = arith.constant 0 : i32
    return %c0_i32, %c0_i32_0 : i32, i32
  }
  func.func @transform_35(%arg0: i32) -> (i32, i32) {
    %c0_i32 = arith.constant 0 : i32
    %c0_i32_0 = arith.constant 0 : i32
    %c0_i32_1 = arith.constant 0 : i32
    return %c0_i32, %c0_i32_0 : i32, i32
  }
  func.func @transform_36(%arg0: i32) -> (i32, i32) {
    %c0_i32 = arith.constant 0 : i32
    %c0_i32_0 = arith.constant 0 : i32
    %c0_i32_1 = arith.constant 0 : i32
    return %c0_i32, %c0_i32_0 : i32, i32
  }
  func.func @transform_37(%arg0: i32) -> (i32, i32) {
    %c0_i32 = arith.constant 0 : i32
    %c0_i32_0 = arith.constant 0 : i32
    %c0_i32_1 = arith.constant 0 : i32
    return %c0_i32, %c0_i32_0 : i32, i32
  }
  func.func @transform_38(%arg0: i32) -> (i32, i32) {
    %c0_i32 = arith.constant 0 : i32
    %c0_i32_0 = arith.constant 0 : i32
    %c0_i32_1 = arith.constant 0 : i32
    return %c0_i32, %c0_i32_0 : i32, i32
  }
  func.func @transform_39(%arg0: i32) -> (i32, i32) {
    %c0_i32 = arith.constant 0 : i32
    %c0_i32_0 = arith.constant 0 : i32
    %c0_i32_1 = arith.constant 0 : i32
    return %c0_i32, %c0_i32_0 : i32, i32
  }
  func.func @transform_40(%arg0: i32) -> (i32, i32) {
    %c0_i32 = arith.constant 0 : i32
    %c0_i32_0 = arith.constant 0 : i32
    %c0_i32_1 = arith.constant 0 : i32
    return %c0_i32, %c0_i32_0 : i32, i32
  }
  func.func @transform_41(%arg0: i32) -> (i32, i32) {
    %c0_i32 = arith.constant 0 : i32
    %c0_i32_0 = arith.constant 0 : i32
    %c0_i32_1 = arith.constant 0 : i32
    return %c0_i32, %c0_i32_0 : i32, i32
  }
  func.func @transform_42(%arg0: i32) -> (i32, i32) {
    %c0_i32 = arith.constant 0 : i32
    %c0_i32_0 = arith.constant 0 : i32
    %c0_i32_1 = arith.constant 0 : i32
    return %c0_i32, %c0_i32_0 : i32, i32
  }
  func.func @transform_43(%arg0: i32) -> (i32, i32) {
    %c0_i32 = arith.constant 0 : i32
    %c0_i32_0 = arith.constant 0 : i32
    %c0_i32_1 = arith.constant 0 : i32
    return %c0_i32, %c0_i32_0 : i32, i32
  }
  func.func @transform_44(%arg0: i32) -> (i32, i32) {
    %c0_i32 = arith.constant 0 : i32
    %c0_i32_0 = arith.constant 0 : i32
    %c0_i32_1 = arith.constant 0 : i32
    return %c0_i32, %c0_i32_0 : i32, i32
  }
  func.func @transform_45(%arg0: i32) -> (i32, i32) {
    %c0_i32 = arith.constant 0 : i32
    %c0_i32_0 = arith.constant 0 : i32
    %c0_i32_1 = arith.constant 0 : i32
    return %c0_i32, %c0_i32_0 : i32, i32
  }
  func.func @transform_46(%arg0: i32) -> (i32, i32) {
    %c0_i32 = arith.constant 0 : i32
    %c0_i32_0 = arith.constant 0 : i32
    %c0_i32_1 = arith.constant 0 : i32
    return %c0_i32, %c0_i32_0 : i32, i32
  }
  func.func @transform_47(%arg0: i32) -> (i32, i32) {
    %c0_i32 = arith.constant 0 : i32
    %c0_i32_0 = arith.constant 0 : i32
    %c0_i32_1 = arith.constant 0 : i32
    return %c0_i32, %c0_i32_0 : i32, i32
  }
  func.func @transform_48(%arg0: i32) -> (i32, i32) {
    %c0_i32 = arith.constant 0 : i32
    %c0_i32_0 = arith.constant 0 : i32
    %c0_i32_1 = arith.constant 0 : i32
    return %c0_i32, %c0_i32_0 : i32, i32
  }
  func.func @transform_49(%arg0: i32) -> (i32, i32) {
    %c0_i32 = arith.constant 0 : i32
    %c0_i32_0 = arith.constant 0 : i32
    %c0_i32_1 = arith.constant 0 : i32
    return %c0_i32, %c0_i32_0 : i32, i32
  }
  func.func @transform_50(%arg0: i32) -> (i32, i32) {
    %c0_i32 = arith.constant 0 : i32
    %c0_i32_0 = arith.constant 0 : i32
    %c0_i32_1 = arith.constant 0 : i32
    return %c0_i32, %c0_i32_0 : i32, i32
  }
  func.func @transform_51(%arg0: i32) -> (i32, i32) {
    %c0_i32 = arith.constant 0 : i32
    %c0_i32_0 = arith.constant 0 : i32
    %c0_i32_1 = arith.constant 0 : i32
    return %c0_i32, %c0_i32_0 : i32, i32
  }
  func.func @transform_52(%arg0: i32) -> (i32, i32) {
    %c0_i32 = arith.constant 0 : i32
    %c0_i32_0 = arith.constant 0 : i32
    %c0_i32_1 = arith.constant 0 : i32
    return %c0_i32, %c0_i32_0 : i32, i32
  }
  func.func @transform_53(%arg0: i32) -> (i32, i32) {
    %c0_i32 = arith.constant 0 : i32
    %c0_i32_0 = arith.constant 0 : i32
    %c0_i32_1 = arith.constant 0 : i32
    return %c0_i32, %c0_i32_0 : i32, i32
  }
  func.func @transform_54(%arg0: i32) -> (i32, i32) {
    %c0_i32 = arith.constant 0 : i32
    %c0_i32_0 = arith.constant 0 : i32
    %c0_i32_1 = arith.constant 0 : i32
    return %c0_i32, %c0_i32_0 : i32, i32
  }
  func.func @transform_55(%arg0: i32) -> (i32, i32) {
    %c0_i32 = arith.constant 0 : i32
    %c0_i32_0 = arith.constant 0 : i32
    %c0_i32_1 = arith.constant 0 : i32
    return %c0_i32, %c0_i32_0 : i32, i32
  }
  func.func @transform_56(%arg0: i32) -> (i32, i32) {
    %c0_i32 = arith.constant 0 : i32
    %c0_i32_0 = arith.constant 0 : i32
    %c0_i32_1 = arith.constant 0 : i32
    return %c0_i32, %c0_i32_0 : i32, i32
  }
}

</mosaic_0001>

<llo_original>
// kernel: resnt18rnn_forward.1
$region0: #{resnt18rnn_forward.1}
  #allocation0 [shape = 'u32[]', space=smem, size = 0x4, offset = 0x4, fixed_abs, tag = 'smem constant byte address 0x4 - core index']
  #allocation1 [shape = 'u32[72,128]{1,0:T(1,128)}', space=vmem, size = 0x9000, scoped, tag = 'internal scratch']
  %s0 = inlined_call_operand.smem [shape: u32[57], index: -1, kind: input, shape index: {}]
  %s1 = sld [smem:[%s0]]
  %s2 = scalar_lea.smem %s0, 1
  %s3 = sld [smem:[%s2]]
  %s4 = scalar_lea.smem %s0, 2
  %s5 = sld [smem:[%s4]]
  %s6 = scalar_lea.smem %s0, 3
  %s7 = sld [smem:[%s6]]
  %s8 = scalar_lea.smem %s0, 4
  %s9 = sld [smem:[%s8]]
  %s10 = scalar_lea.smem %s0, 5
  %s11 = sld [smem:[%s10]]
  %s12 = scalar_lea.smem %s0, 6
  %s13 = sld [smem:[%s12]]
  %s14 = scalar_lea.smem %s0, 7
  %s15 = sld [smem:[%s14]]
  %s16 = scalar_lea.smem %s0, 8
  %s17 = sld [smem:[%s16]]
  %s18 = scalar_lea.smem %s0, 9
  %s19 = sld [smem:[%s18]]
  %s20 = scalar_lea.smem %s0, 10
  %s21 = sld [smem:[%s20]]
  %s22 = scalar_lea.smem %s0, 11
  %s23 = sld [smem:[%s22]]
  %s24 = scalar_lea.smem %s0, 12
  %s25 = sld [smem:[%s24]]
  %s26 = scalar_lea.smem %s0, 13
  %s27 = sld [smem:[%s26]]
  %s28 = scalar_lea.smem %s0, 14
  %s29 = sld [smem:[%s28]]
  %s30 = scalar_lea.smem %s0, 15
  %s31 = sld [smem:[%s30]]
  %s32 = scalar_lea.smem %s0, 16
  %s33 = sld [smem:[%s32]]
  %s34 = scalar_lea.smem %s0, 17
  %s35 = sld [smem:[%s34]]
  %s36 = scalar_lea.smem %s0, 18
  %s37 = sld [smem:[%s36]]
  %s38 = scalar_lea.smem %s0, 19
  %s39 = sld [smem:[%s38]]
  %s40 = scalar_lea.smem %s0, 20
  %s41 = sld [smem:[%s40]]
  %s42 = scalar_lea.smem %s0, 21
  %s43 = sld [smem:[%s42]]
  %s44 = scalar_lea.smem %s0, 22
  %s45 = sld [smem:[%s44]]
  %s46 = scalar_lea.smem %s0, 23
  %s47 = sld [smem:[%s46]]
  %s48 = scalar_lea.smem %s0, 24
  %s49 = sld [smem:[%s48]]
  %s50 = scalar_lea.smem %s0, 25
  %s51 = sld [smem:[%s50]]
  %s52 = scalar_lea.smem %s0, 26
  %s53 = sld [smem:[%s52]]
  %s54 = scalar_lea.smem %s0, 27
  %s55 = sld [smem:[%s54]]
  %s56 = scalar_lea.smem %s0, 28
  %s57 = sld [smem:[%s56]]
  %s58 = scalar_lea.smem %s0, 29
  %s59 = sld [smem:[%s58]]
  %s60 = scalar_lea.smem %s0, 30
  %s61 = sld [smem:[%s60]]
  %s62 = scalar_lea.smem %s0, 31
  %s63 = sld [smem:[%s62]]
  %s64 = scalar_lea.smem %s0, 32
  %s65 = sld [smem:[%s64]]
  %s66 = scalar_lea.smem %s0, 33
  %s67 = sld [smem:[%s66]]
  %s68 = scalar_lea.smem %s0, 34
  %s69 = sld [smem:[%s68]]
  %s70 = scalar_lea.smem %s0, 35
  %s71 = sld [smem:[%s70]]
  %s72 = scalar_lea.smem %s0, 36
  %s73 = sld [smem:[%s72]]
  %s74 = scalar_lea.smem %s0, 37
  %s75 = sld [smem:[%s74]]
  %s76 = scalar_lea.smem %s0, 38
  %s77 = sld [smem:[%s76]]
  %s78 = scalar_lea.smem %s0, 39
  %s79 = sld [smem:[%s78]]
  %s80 = scalar_lea.smem %s0, 40
  %s81 = sld [smem:[%s80]]
  %s82 = scalar_lea.smem %s0, 41
  %s83 = sld [smem:[%s82]]
  %s84 = scalar_lea.smem %s0, 42
  %s85 = sld [smem:[%s84]]
  %s86 = scalar_lea.smem %s0, 43
  %s87 = sld [smem:[%s86]]
  %s88 = scalar_lea.smem %s0, 44
  %s89 = sld [smem:[%s88]]
  %s90 = scalar_lea.smem %s0, 45
  %s91 = sld [smem:[%s90]]
  %s92 = scalar_lea.smem %s0, 46
  %s93 = sld [smem:[%s92]]
  %s94 = scalar_lea.smem %s0, 47
  %s95 = sld [smem:[%s94]]
  %s96 = scalar_lea.smem %s0, 48
  %s97 = sld [smem:[%s96]]
  %s98 = scalar_lea.smem %s0, 49
  %s99 = sld [smem:[%s98]]
  %s100 = scalar_lea.smem %s0, 50
  %s101 = sld [smem:[%s100]]
  %s102 = scalar_lea.smem %s0, 51
  %s103 = sld [smem:[%s102]]
  %s104 = scalar_lea.smem %s0, 52
  %s105 = sld [smem:[%s104]]
  %s106 = scalar_lea.smem %s0, 53
  %s107 = sld [smem:[%s106]]
  %s108 = scalar_lea.smem %s0, 54
  %s109 = sld [smem:[%s108]]
  %s110 = scalar_lea.smem %s0, 55
  %s111 = sld [smem:[%s110]]
  %s112 = scalar_lea.smem %s0, 56
  %s113 = sld [smem:[%s112]]
  %s114 = sld [smem:[#allocation0]]
  $region378: #{resnt18rnn_forward.1} parent=0
    _
  %s116 = ssub.s32 1, %s114
  %s117 = scalar_select 0, %s116, %s114
  $region1: #{resnt18rnn_forward.1} parent=0
    #allocation2 [shape = 'u8[786432]{0}', space=vmem, size = 0xc0000, scoped, tag = 'input window, operand 3, single buffered']
    #allocation3 [shape = 's32[1]{0}', space=sflag, size = 0x4, scoped, tag = 'scoped memory for resnt18rnn_forward.1']
    #allocation4 [shape = 's32[1]{0}', space=sflag, size = 0x4, scoped, tag = 'scoped memory for resnt18rnn_forward.1']
    #allocation5 [shape = 'u8[786432]{0}', space=vmem, size = 0xc0000, scoped, tag = 'input window, operand 5, single buffered']
    #allocation6 [shape = 's32[1]{0}', space=sflag, size = 0x4, scoped, tag = 'scoped memory for resnt18rnn_forward.1']
    #allocation7 [shape = 'u8[32768]{0}', space=vmem, size = 0x8000, scoped, tag = 'input window, operand 9, single buffered']
    #allocation8 [shape = 'u8[512]{0}', space=vmem, size = 0x400, scoped, tag = 'input window, operand 10, single buffered']
    #allocation9 [shape = 's32[1]{0}', space=sflag, size = 0x4, scoped, tag = 'scoped memory for resnt18rnn_forward.1']
    #allocation10 [shape = 'u8[32768]{0}', space=vmem, size = 0x8000, scoped, tag = 'input window, operand 11, single buffered']
    #allocation11 [shape = 'u8[512]{0}', space=vmem, size = 0x400, scoped, tag = 'input window, operand 12, single buffered']
    #allocation12 [shape = 's32[1]{0}', space=sflag, size = 0x4, scoped, tag = 'scoped memory for resnt18rnn_forward.1']
    #allocation13 [shape = 'u8[32768]{0}', space=vmem, size = 0x8000, scoped, tag = 'input window, operand 13, single buffered']
    #allocation14 [shape = 'u8[512]{0}', space=vmem, size = 0x400, scoped, tag = 'input window, operand 14, single buffered']
    #allocation15 [shape = 's32[1]{0}', space=sflag, size = 0x4, scoped, tag = 'scoped memory for resnt18rnn_forward.1']
    #allocation16 [shape = 'u8[32768]{0}', space=vmem, size = 0x8000, scoped, tag = 'input window, operand 15, single buffered']
    #allocation17 [shape = 'u8[512]{0}', space=vmem, size = 0x400, scoped, tag = 'input window, operand 16, single buffered']
    #allocation18 [shape = 's32[1]{0}', space=sflag, size = 0x4, scoped, tag = 'scoped memory for resnt18rnn_forward.1']
    #allocation19 [shape = 'u8[32768]{0}', space=vmem, size = 0x8000, scoped, tag = 'input window, operand 17, single buffered']
    #allocation20 [shape = 'u8[512]{0}', space=vmem, size = 0x400, scoped, tag = 'input window, operand 18, single buffered']
    #allocation21 [shape = 's32[1]{0}', space=sflag, size = 0x4, scoped, tag = 'scoped memory for resnt18rnn_forward.1']
    #allocation22 [shape = 'u8[32768]{0}', space=vmem, size = 0x8000, scoped, tag = 'input window, operand 19, single buffered']
    #allocation23 [shape = 'u8[512]{0}', space=vmem, size = 0x400, scoped, tag = 'input window, operand 20, single buffered']
    #allocation24 [shape = 's32[1]{0}', space=sflag, size = 0x4, scoped, tag = 'scoped memory for resnt18rnn_forward.1']
    #allocation25 [shape = 'u8[32768]{0}', space=vmem, size = 0x8000, scoped, tag = 'input window, operand 21, single buffered']
    #allocation26 [shape = 'u8[512]{0}', space=vmem, size = 0x400, scoped, tag = 'input window, operand 22, single buffered']
    #allocation27 [shape = 's32[1]{0}', space=sflag, size = 0x4, scoped, tag = 'scoped memory for resnt18rnn_forward.1']
    #allocation28 [shape = 'u8[32768]{0}', space=vmem, size = 0x8000, scoped, tag = 'input window, operand 23, single buffered']
    #allocation29 [shape = 'u8[512]{0}', space=vmem, size = 0x400, scoped, tag = 'input window, operand 24, single buffered']
    #allocation30 [shape = 's32[1]{0}', space=sflag, size = 0x4, scoped, tag = 'scoped memory for resnt18rnn_forward.1']
    #allocation31 [shape = 'u8[32768]{0}', space=vmem, size = 0x8000, scoped, tag = 'input window, operand 25, single buffered']
    #allocation32 [shape = 'u8[512]{0}', space=vmem, size = 0x400, scoped, tag = 'input window, operand 26, single buffered']
    #allocation33 [shape = 's32[1]{0}', space=sflag, size = 0x4, scoped, tag = 'scoped memory for resnt18rnn_forward.1']
    #allocation34 [shape = 'u8[32768]{0}', space=vmem, size = 0x8000, scoped, tag = 'input window, operand 27, single buffered']
    #allocation35 [shape = 'u8[512]{0}', space=vmem, size = 0x400, scoped, tag = 'input window, operand 28, single buffered']
    #allocation36 [shape = 's32[1]{0}', space=sflag, size = 0x4, scoped, tag = 'scoped memory for resnt18rnn_forward.1']
    #allocation37 [shape = 'u8[32768]{0}', space=vmem, size = 0x8000, scoped, tag = 'input window, operand 29, single buffered']
    #allocation38 [shape = 'u8[512]{0}', space=vmem, size = 0x400, scoped, tag = 'input window, operand 30, single buffered']
    #allocation39 [shape = 's32[1]{0}', space=sflag, size = 0x4, scoped, tag = 'scoped memory for resnt18rnn_forward.1']
    #allocation40 [shape = 'u8[32768]{0}', space=vmem, size = 0x8000, scoped, tag = 'input window, operand 31, single buffered']
    #allocation41 [shape = 'u8[512]{0}', space=vmem, size = 0x400, scoped, tag = 'input window, operand 32, single buffered']
    #allocation42 [shape = 's32[1]{0}', space=sflag, size = 0x4, scoped, tag = 'scoped memory for resnt18rnn_forward.1']
    #allocation43 [shape = 'u8[32768]{0}', space=vmem, size = 0x8000, scoped, tag = 'input window, operand 33, single buffered']
    #allocation44 [shape = 'u8[512]{0}', space=vmem, size = 0x400, scoped, tag = 'input window, operand 34, single buffered']
    #allocation45 [shape = 's32[1]{0}', space=sflag, size = 0x4, scoped, tag = 'scoped memory for resnt18rnn_forward.1']
    #allocation46 [shape = 'u8[32768]{0}', space=vmem, size = 0x8000, scoped, tag = 'input window, operand 35, single buffered']
    #allocation47 [shape = 'u8[512]{0}', space=vmem, size = 0x400, scoped, tag = 'input window, operand 36, single buffered']
    #allocation48 [shape = 's32[1]{0}', space=sflag, size = 0x4, scoped, tag = 'scoped memory for resnt18rnn_forward.1']
    #allocation49 [shape = 'u8[32768]{0}', space=vmem, size = 0x8000, scoped, tag = 'input window, operand 37, single buffered']
    #allocation50 [shape = 'u8[32768]{0}', space=vmem, size = 0x8000, scoped, tag = 'input window, operand 39, single buffered']
    #allocation51 [shape = 's32[1]{0}', space=sflag, size = 0x4, scoped, tag = 'scoped memory for resnt18rnn_forward.1']
    #allocation52 [shape = 'u8[32768]{0}', space=vmem, size = 0x8000, scoped, tag = 'input window, operand 41, single buffered']
    #allocation53 [shape = 'u8[32768]{0}', space=vmem, size = 0x8000, scoped, tag = 'input window, operand 43, single buffered']
    #allocation54 [shape = 's32[1]{0}', space=sflag, size = 0x4, scoped, tag = 'scoped memory for resnt18rnn_forward.1']
    #allocation55 [shape = 'u8[32768]{0}', space=vmem, size = 0x8000, scoped, tag = 'input window, operand 45, single buffered']
    #allocation56 [shape = 'u8[32768]{0}', space=vmem, size = 0x8000, scoped, tag = 'input window, operand 46, single buffered']
    #allocation57 [shape = 's32[1]{0}', space=sflag, size = 0x4, scoped, tag = 'scoped memory for resnt18rnn_forward.1']
    #allocation58 [shape = 'u8[1024]{0}', space=vmem, size = 0x400, scoped, tag = 'output window, operand 0, single buffered']
    %118 = vsyncpa [#allocation3], 0
    %119 = vsyncpa [#allocation6], 0
    %120 = vsyncpa [#allocation9], 0
    %121 = vsyncpa [#allocation12], 0
    %122 = vsyncpa [#allocation15], 0
    %123 = vsyncpa [#allocation18], 0
    %124 = vsyncpa [#allocation21], 0
    %125 = vsyncpa [#allocation24], 0
    %126 = vsyncpa [#allocation27], 0
    %127 = vsyncpa [#allocation30], 0
    %128 = vsyncpa [#allocation33], 0
    %129 = vsyncpa [#allocation36], 0
    %130 = vsyncpa [#allocation39], 0
    %131 = vsyncpa [#allocation42], 0
    %132 = vsyncpa [#allocation45], 0
    %133 = vsyncpa [#allocation48], 0
    %134 = vsyncpa [#allocation51], 0
    %135 = vsyncpa [#allocation54], 0
    %136 = vsyncpa [#allocation57], 0
    %137 = vsyncpa [#allocation4], 0
    // Predicated region
    $region2: #{resnt18rnn_forward.1} parent=1 // pred_check
      _
    $region3: #{resnt18rnn_forward.1} parent=1 // pred_check_branch
      %139 = sbr.rel (0) target = $region5
    $region4: #{resnt18rnn_forward.1} parent=1 // pred_region
      _
    $region5: #{resnt18rnn_forward.1} parent=1 // pred_fallthru
      _
    // Predicated region
    $region6: #{resnt18rnn_forward.1} parent=1 // pred_check
      _
    $region7: #{resnt18rnn_forward.1} parent=1 // pred_check_branch
      %141 = sbr.rel (0) target = $region9
    $region8: #{resnt18rnn_forward.1} parent=1 // pred_region
      _
    $region9: #{resnt18rnn_forward.1} parent=1 // pred_fallthru
      _
    // Predicated region
    $region10: #{resnt18rnn_forward.1} parent=1 // pred_check
      _
    $region11: #{resnt18rnn_forward.1} parent=1 // pred_check_branch
      %143 = sbr.rel (0) target = $region13
    $region12: #{resnt18rnn_forward.1} parent=1 // pred_region
      _
    $region13: #{resnt18rnn_forward.1} parent=1 // pred_fallthru
      _
    // Predicated region
    $region14: #{resnt18rnn_forward.1} parent=1 // pred_check
      _
    $region15: #{resnt18rnn_forward.1} parent=1 // pred_check_branch
      %145 = sbr.rel (0) target = $region17
    $region16: #{resnt18rnn_forward.1} parent=1 // pred_region
      %147 = vsyncadd [#allocation3], 0
      %s148 = sshll.u32 %s7, 4
      %s149 = int_to_ptr.hbm [resolvable:$true] %s148
      %s150 = sshll.u32 [#allocation2], 4
      %s151 = int_to_ptr.vmem [resolvable:$true] %s150
      %156 = dma.hbm_to_vmem [thread:$0]  %s149, 24576, %s151, [#allocation3], 256, 256, 16
    $region17: #{resnt18rnn_forward.1} parent=1 // pred_fallthru
      _
    // Predicated region
    $region18: #{resnt18rnn_forward.1} parent=1 // pred_check
      _
    $region19: #{resnt18rnn_forward.1} parent=1 // pred_check_branch
      %158 = sbr.rel (0) target = $region21
    $region20: #{resnt18rnn_forward.1} parent=1 // pred_region
      _
    $region21: #{resnt18rnn_forward.1} parent=1 // pred_fallthru
      _
    // Predicated region
    $region22: #{resnt18rnn_forward.1} parent=1 // pred_check
      _
    $region23: #{resnt18rnn_forward.1} parent=1 // pred_check_branch
      %160 = sbr.rel (0) target = $region25
    $region24: #{resnt18rnn_forward.1} parent=1 // pred_region
      %162 = vsyncadd [#allocation6], 0
      %s163 = sshll.u32 %s11, 4
      %s164 = int_to_ptr.hbm [resolvable:$true] %s163
      %s165 = sshll.u32 [#allocation5], 4
      %s166 = int_to_ptr.vmem [resolvable:$true] %s165
      %171 = dma.hbm_to_vmem [thread:$0]  %s164, 24576, %s166, [#allocation6], 128, 128, 8
    $region25: #{resnt18rnn_forward.1} parent=1 // pred_fallthru
      _
    // Predicated region
    $region26: #{resnt18rnn_forward.1} parent=1 // pred_check
      _
    $region27: #{resnt18rnn_forward.1} parent=1 // pred_check_branch
      %173 = sbr.rel (0) target = $region29
    $region28: #{resnt18rnn_forward.1} parent=1 // pred_region
      _
    $region29: #{resnt18rnn_forward.1} parent=1 // pred_fallthru
      _
    // Predicated region
    $region30: #{resnt18rnn_forward.1} parent=1 // pred_check
      _
    $region31: #{resnt18rnn_forward.1} parent=1 // pred_check_branch
      %175 = sbr.rel (0) target = $region33
    $region32: #{resnt18rnn_forward.1} parent=1 // pred_region
      _
    $region33: #{resnt18rnn_forward.1} parent=1 // pred_fallthru
      _
    // Predicated region
    $region34: #{resnt18rnn_forward.1} parent=1 // pred_check
      _
    $region35: #{resnt18rnn_forward.1} parent=1 // pred_check_branch
      %177 = sbr.rel (0) target = $region37
    $region36: #{resnt18rnn_forward.1} parent=1 // pred_region
      _
    $region37: #{resnt18rnn_forward.1} parent=1 // pred_fallthru
      _
    // Predicated region
    $region38: #{resnt18rnn_forward.1} parent=1 // pred_check
      _
    $region39: #{resnt18rnn_forward.1} parent=1 // pred_check_branch
      %179 = sbr.rel (0) target = $region41
    $region40: #{resnt18rnn_forward.1} parent=1 // pred_region
      %181 = vsyncadd [#allocation6], 0
      %s182 = sshll.u32 %s19, 4
      %s183 = int_to_ptr.hbm [resolvable:$true] %s182
      %s184 = sshll.u32 [#allocation7], 4
      %s185 = int_to_ptr.vmem [resolvable:$true] %s184
      %190 = dma.hbm_to_vmem [thread:$0]  %s183, 1024, %s185, [#allocation6], 64, 64, 4
    $region41: #{resnt18rnn_forward.1} parent=1 // pred_fallthru
      _
    // Predicated region
    $region42: #{resnt18rnn_forward.1} parent=1 // pred_check
      _
    $region43: #{resnt18rnn_forward.1} parent=1 // pred_check_branch
      %192 = sbr.rel (0) target = $region45
    $region44: #{resnt18rnn_forward.1} parent=1 // pred_region
      %194 = vsyncadd [#allocation9], 0
      %s196 = sshll.u32 %s21, 4
      %s197 = int_to_ptr.hbm [resolvable:$true] %s196
      %s198 = sshll.u32 [#allocation8], 4
      %s199 = int_to_ptr.vmem [resolvable:$true] %s198
      %201 = dma.hbm_to_vmem [thread:$0]  %s197, 16, %s199, [#allocation9]
    $region45: #{resnt18rnn_forward.1} parent=1 // pred_fallthru
      _
    // Predicated region
    $region46: #{resnt18rnn_forward.1} parent=1 // pred_check
      _
    $region47: #{resnt18rnn_forward.1} parent=1 // pred_check_branch
      %203 = sbr.rel (0) target = $region49
    $region48: #{resnt18rnn_forward.1} parent=1 // pred_region
      %205 = vsyncadd [#allocation9], 0
      %s206 = sshll.u32 %s23, 4
      %s207 = int_to_ptr.hbm [resolvable:$true] %s206
      %s208 = sshll.u32 [#allocation10], 4
      %s209 = int_to_ptr.vmem [resolvable:$true] %s208
      %214 = dma.hbm_to_vmem [thread:$0]  %s207, 1024, %s209, [#allocation9], 64, 64, 4
    $region49: #{resnt18rnn_forward.1} parent=1 // pred_fallthru
      _
    // Predicated region
    $region50: #{resnt18rnn_forward.1} parent=1 // pred_check
      _
    $region51: #{resnt18rnn_forward.1} parent=1 // pred_check_branch
      %216 = sbr.rel (0) target = $region53
    $region52: #{resnt18rnn_forward.1} parent=1 // pred_region
      %218 = vsyncadd [#allocation12], 0
      %s220 = sshll.u32 %s25, 4
      %s221 = int_to_ptr.hbm [resolvable:$true] %s220
      %s222 = sshll.u32 [#allocation11], 4
      %s223 = int_to_ptr.vmem [resolvable:$true] %s222
      %225 = dma.hbm_to_vmem [thread:$0]  %s221, 16, %s223, [#allocation12]
    $region53: #{resnt18rnn_forward.1} parent=1 // pred_fallthru
      _
    // Predicated region
    $region54: #{resnt18rnn_forward.1} parent=1 // pred_check
      _
    $region55: #{resnt18rnn_forward.1} parent=1 // pred_check_branch
      %227 = sbr.rel (0) target = $region57
    $region56: #{resnt18rnn_forward.1} parent=1 // pred_region
      %229 = vsyncadd [#allocation12], 0
      %s230 = sshll.u32 %s27, 4
      %s231 = int_to_ptr.hbm [resolvable:$true] %s230
      %s232 = sshll.u32 [#allocation13], 4
      %s233 = int_to_ptr.vmem [resolvable:$true] %s232
      %238 = dma.hbm_to_vmem [thread:$0]  %s231, 1024, %s233, [#allocation12], 64, 64, 4
    $region57: #{resnt18rnn_forward.1} parent=1 // pred_fallthru
      _
    // Predicated region
    $region58: #{resnt18rnn_forward.1} parent=1 // pred_check
      _
    $region59: #{resnt18rnn_forward.1} parent=1 // pred_check_branch
      %240 = sbr.rel (0) target = $region61
    $region60: #{resnt18rnn_forward.1} parent=1 // pred_region
      %242 = vsyncadd [#allocation15], 0
      %s244 = sshll.u32 %s29, 4
      %s245 = int_to_ptr.hbm [resolvable:$true] %s244
      %s246 = sshll.u32 [#allocation14], 4
      %s247 = int_to_ptr.vmem [resolvable:$true] %s246
      %249 = dma.hbm_to_vmem [thread:$0]  %s245, 16, %s247, [#allocation15]
    $region61: #{resnt18rnn_forward.1} parent=1 // pred_fallthru
      _
    // Predicated region
    $region62: #{resnt18rnn_forward.1} parent=1 // pred_check
      _
    $region63: #{resnt18rnn_forward.1} parent=1 // pred_check_branch
      %251 = sbr.rel (0) target = $region65
    $region64: #{resnt18rnn_forward.1} parent=1 // pred_region
      %253 = vsyncadd [#allocation15], 0
      %s254 = sshll.u32 %s31, 4
      %s255 = int_to_ptr.hbm [resolvable:$true] %s254
      %s256 = sshll.u32 [#allocation16], 4
      %s257 = int_to_ptr.vmem [resolvable:$true] %s256
      %262 = dma.hbm_to_vmem [thread:$0]  %s255, 1024, %s257, [#allocation15], 64, 64, 4
    $region65: #{resnt18rnn_forward.1} parent=1 // pred_fallthru
      _
    // Predicated region
    $region66: #{resnt18rnn_forward.1} parent=1 // pred_check
      _
    $region67: #{resnt18rnn_forward.1} parent=1 // pred_check_branch
      %264 = sbr.rel (0) target = $region69
    $region68: #{resnt18rnn_forward.1} parent=1 // pred_region
      %266 = vsyncadd [#allocation18], 0
      %s268 = sshll.u32 %s33, 4
      %s269 = int_to_ptr.hbm [resolvable:$true] %s268
      %s270 = sshll.u32 [#allocation17], 4
      %s271 = int_to_ptr.vmem [resolvable:$true] %s270
      %273 = dma.hbm_to_vmem [thread:$0]  %s269, 16, %s271, [#allocation18]
    $region69: #{resnt18rnn_forward.1} parent=1 // pred_fallthru
      _
    // Predicated region
    $region70: #{resnt18rnn_forward.1} parent=1 // pred_check
      _
    $region71: #{resnt18rnn_forward.1} parent=1 // pred_check_branch
      %275 = sbr.rel (0) target = $region73
    $region72: #{resnt18rnn_forward.1} parent=1 // pred_region
      %277 = vsyncadd [#allocation18], 0
      %s278 = sshll.u32 %s35, 4
      %s279 = int_to_ptr.hbm [resolvable:$true] %s278
      %s280 = sshll.u32 [#allocation19], 4
      %s281 = int_to_ptr.vmem [resolvable:$true] %s280
      %286 = dma.hbm_to_vmem [thread:$0]  %s279, 1024, %s281, [#allocation18], 64, 64, 4
    $region73: #{resnt18rnn_forward.1} parent=1 // pred_fallthru
      _
    // Predicated region
    $region74: #{resnt18rnn_forward.1} parent=1 // pred_check
      _
    $region75: #{resnt18rnn_forward.1} parent=1 // pred_check_branch
      %288 = sbr.rel (0) target = $region77
    $region76: #{resnt18rnn_forward.1} parent=1 // pred_region
      %290 = vsyncadd [#allocation21], 0
      %s292 = sshll.u32 %s37, 4
      %s293 = int_to_ptr.hbm [resolvable:$true] %s292
      %s294 = sshll.u32 [#allocation20], 4
      %s295 = int_to_ptr.vmem [resolvable:$true] %s294
      %297 = dma.hbm_to_vmem [thread:$0]  %s293, 16, %s295, [#allocation21]
    $region77: #{resnt18rnn_forward.1} parent=1 // pred_fallthru
      _
    // Predicated region
    $region78: #{resnt18rnn_forward.1} parent=1 // pred_check
      _
    $region79: #{resnt18rnn_forward.1} parent=1 // pred_check_branch
      %299 = sbr.rel (0) target = $region81
    $region80: #{resnt18rnn_forward.1} parent=1 // pred_region
      %301 = vsyncadd [#allocation21], 0
      %s302 = sshll.u32 %s39, 4
      %s303 = int_to_ptr.hbm [resolvable:$true] %s302
      %s304 = sshll.u32 [#allocation22], 4
      %s305 = int_to_ptr.vmem [resolvable:$true] %s304
      %310 = dma.hbm_to_vmem [thread:$0]  %s303, 1024, %s305, [#allocation21], 64, 64, 4
    $region81: #{resnt18rnn_forward.1} parent=1 // pred_fallthru
      _
    // Predicated region
    $region82: #{resnt18rnn_forward.1} parent=1 // pred_check
      _
    $region83: #{resnt18rnn_forward.1} parent=1 // pred_check_branch
      %312 = sbr.rel (0) target = $region85
    $region84: #{resnt18rnn_forward.1} parent=1 // pred_region
      %314 = vsyncadd [#allocation24], 0
      %s316 = sshll.u32 %s41, 4
      %s317 = int_to_ptr.hbm [resolvable:$true] %s316
      %s318 = sshll.u32 [#allocation23], 4
      %s319 = int_to_ptr.vmem [resolvable:$true] %s318
      %321 = dma.hbm_to_vmem [thread:$0]  %s317, 16, %s319, [#allocation24]
    $region85: #{resnt18rnn_forward.1} parent=1 // pred_fallthru
      _
    // Predicated region
    $region86: #{resnt18rnn_forward.1} parent=1 // pred_check
      _
    $region87: #{resnt18rnn_forward.1} parent=1 // pred_check_branch
      %323 = sbr.rel (0) target = $region89
    $region88: #{resnt18rnn_forward.1} parent=1 // pred_region
      %325 = vsyncadd [#allocation24], 0
      %s326 = sshll.u32 %s43, 4
      %s327 = int_to_ptr.hbm [resolvable:$true] %s326
      %s328 = sshll.u32 [#allocation25], 4
      %s329 = int_to_ptr.vmem [resolvable:$true] %s328
      %334 = dma.hbm_to_vmem [thread:$0]  %s327, 1024, %s329, [#allocation24], 64, 64, 4
    $region89: #{resnt18rnn_forward.1} parent=1 // pred_fallthru
      _
    // Predicated region
    $region90: #{resnt18rnn_forward.1} parent=1 // pred_check
      _
    $region91: #{resnt18rnn_forward.1} parent=1 // pred_check_branch
      %336 = sbr.rel (0) target = $region93
    $region92: #{resnt18rnn_forward.1} parent=1 // pred_region
      %338 = vsyncadd [#allocation27], 0
      %s340 = sshll.u32 %s45, 4
      %s341 = int_to_ptr.hbm [resolvable:$true] %s340
      %s342 = sshll.u32 [#allocation26], 4
      %s343 = int_to_ptr.vmem [resolvable:$true] %s342
      %345 = dma.hbm_to_vmem [thread:$0]  %s341, 16, %s343, [#allocation27]
    $region93: #{resnt18rnn_forward.1} parent=1 // pred_fallthru
      _
    // Predicated region
    $region94: #{resnt18rnn_forward.1} parent=1 // pred_check
      _
    $region95: #{resnt18rnn_forward.1} parent=1 // pred_check_branch
      %347 = sbr.rel (0) target = $region97
    $region96: #{resnt18rnn_forward.1} parent=1 // pred_region
      %349 = vsyncadd [#allocation27], 0
      %s350 = sshll.u32 %s47, 4
      %s351 = int_to_ptr.hbm [resolvable:$true] %s350
      %s352 = sshll.u32 [#allocation28], 4
      %s353 = int_to_ptr.vmem [resolvable:$true] %s352
      %358 = dma.hbm_to_vmem [thread:$0]  %s351, 1024, %s353, [#allocation27], 64, 64, 4
    $region97: #{resnt18rnn_forward.1} parent=1 // pred_fallthru
      _
    // Predicated region
    $region98: #{resnt18rnn_forward.1} parent=1 // pred_check
      _
    $region99: #{resnt18rnn_forward.1} parent=1 // pred_check_branch
      %360 = sbr.rel (0) target = $region101
    $region100: #{resnt18rnn_forward.1} parent=1 // pred_region
      %362 = vsyncadd [#allocation30], 0
      %s364 = sshll.u32 %s49, 4
      %s365 = int_to_ptr.hbm [resolvable:$true] %s364
      %s366 = sshll.u32 [#allocation29], 4
      %s367 = int_to_ptr.vmem [resolvable:$true] %s366
      %369 = dma.hbm_to_vmem [thread:$0]  %s365, 16, %s367, [#allocation30]
    $region101: #{resnt18rnn_forward.1} parent=1 // pred_fallthru
      _
    // Predicated region
    $region102: #{resnt18rnn_forward.1} parent=1 // pred_check
      _
    $region103: #{resnt18rnn_forward.1} parent=1 // pred_check_branch
      %371 = sbr.rel (0) target = $region105
    $region104: #{resnt18rnn_forward.1} parent=1 // pred_region
      %373 = vsyncadd [#allocation30], 0
      %s374 = sshll.u32 %s51, 4
      %s375 = int_to_ptr.hbm [resolvable:$true] %s374
      %s376 = sshll.u32 [#allocation31], 4
      %s377 = int_to_ptr.vmem [resolvable:$true] %s376
      %382 = dma.hbm_to_vmem [thread:$0]  %s375, 1024, %s377, [#allocation30], 64, 64, 4
    $region105: #{resnt18rnn_forward.1} parent=1 // pred_fallthru
      _
    // Predicated region
    $region106: #{resnt18rnn_forward.1} parent=1 // pred_check
      _
    $region107: #{resnt18rnn_forward.1} parent=1 // pred_check_branch
      %384 = sbr.rel (0) target = $region109
    $region108: #{resnt18rnn_forward.1} parent=1 // pred_region
      %386 = vsyncadd [#allocation33], 0
      %s388 = sshll.u32 %s53, 4
      %s389 = int_to_ptr.hbm [resolvable:$true] %s388
      %s390 = sshll.u32 [#allocation32], 4
      %s391 = int_to_ptr.vmem [resolvable:$true] %s390
      %393 = dma.hbm_to_vmem [thread:$0]  %s389, 16, %s391, [#allocation33]
    $region109: #{resnt18rnn_forward.1} parent=1 // pred_fallthru
      _
    // Predicated region
    $region110: #{resnt18rnn_forward.1} parent=1 // pred_check
      _
    $region111: #{resnt18rnn_forward.1} parent=1 // pred_check_branch
      %395 = sbr.rel (0) target = $region113
    $region112: #{resnt18rnn_forward.1} parent=1 // pred_region
      %397 = vsyncadd [#allocation33], 0
      %s398 = sshll.u32 %s55, 4
      %s399 = int_to_ptr.hbm [resolvable:$true] %s398
      %s400 = sshll.u32 [#allocation34], 4
      %s401 = int_to_ptr.vmem [resolvable:$true] %s400
      %406 = dma.hbm_to_vmem [thread:$0]  %s399, 1024, %s401, [#allocation33], 64, 64, 4
    $region113: #{resnt18rnn_forward.1} parent=1 // pred_fallthru
      _
    // Predicated region
    $region114: #{resnt18rnn_forward.1} parent=1 // pred_check
      _
    $region115: #{resnt18rnn_forward.1} parent=1 // pred_check_branch
      %408 = sbr.rel (0) target = $region117
    $region116: #{resnt18rnn_forward.1} parent=1 // pred_region
      %410 = vsyncadd [#allocation36], 0
      %s412 = sshll.u32 %s57, 4
      %s413 = int_to_ptr.hbm [resolvable:$true] %s412
      %s414 = sshll.u32 [#allocation35], 4
      %s415 = int_to_ptr.vmem [resolvable:$true] %s414
      %417 = dma.hbm_to_vmem [thread:$0]  %s413, 16, %s415, [#allocation36]
    $region117: #{resnt18rnn_forward.1} parent=1 // pred_fallthru
      _
    // Predicated region
    $region118: #{resnt18rnn_forward.1} parent=1 // pred_check
      _
    $region119: #{resnt18rnn_forward.1} parent=1 // pred_check_branch
      %419 = sbr.rel (0) target = $region121
    $region120: #{resnt18rnn_forward.1} parent=1 // pred_region
      %421 = vsyncadd [#allocation36], 0
      %s422 = sshll.u32 %s59, 4
      %s423 = int_to_ptr.hbm [resolvable:$true] %s422
      %s424 = sshll.u32 [#allocation37], 4
      %s425 = int_to_ptr.vmem [resolvable:$true] %s424
      %430 = dma.hbm_to_vmem [thread:$0]  %s423, 1024, %s425, [#allocation36], 64, 64, 4
    $region121: #{resnt18rnn_forward.1} parent=1 // pred_fallthru
      _
    // Predicated region
    $region122: #{resnt18rnn_forward.1} parent=1 // pred_check
      _
    $region123: #{resnt18rnn_forward.1} parent=1 // pred_check_branch
      %432 = sbr.rel (0) target = $region125
    $region124: #{resnt18rnn_forward.1} parent=1 // pred_region
      %434 = vsyncadd [#allocation39], 0
      %s436 = sshll.u32 %s61, 4
      %s437 = int_to_ptr.hbm [resolvable:$true] %s436
      %s438 = sshll.u32 [#allocation38], 4
      %s439 = int_to_ptr.vmem [resolvable:$true] %s438
      %441 = dma.hbm_to_vmem [thread:$0]  %s437, 16, %s439, [#allocation39]
    $region125: #{resnt18rnn_forward.1} parent=1 // pred_fallthru
      _
    // Predicated region
    $region126: #{resnt18rnn_forward.1} parent=1 // pred_check
      _
    $region127: #{resnt18rnn_forward.1} parent=1 // pred_check_branch
      %443 = sbr.rel (0) target = $region129
    $region128: #{resnt18rnn_forward.1} parent=1 // pred_region
      %445 = vsyncadd [#allocation39], 0
      %s446 = sshll.u32 %s63, 4
      %s447 = int_to_ptr.hbm [resolvable:$true] %s446
      %s448 = sshll.u32 [#allocation40], 4
      %s449 = int_to_ptr.vmem [resolvable:$true] %s448
      %454 = dma.hbm_to_vmem [thread:$0]  %s447, 1024, %s449, [#allocation39], 64, 64, 4
    $region129: #{resnt18rnn_forward.1} parent=1 // pred_fallthru
      _
    // Predicated region
    $region130: #{resnt18rnn_forward.1} parent=1 // pred_check
      _
    $region131: #{resnt18rnn_forward.1} parent=1 // pred_check_branch
      %456 = sbr.rel (0) target = $region133
    $region132: #{resnt18rnn_forward.1} parent=1 // pred_region
      %458 = vsyncadd [#allocation42], 0
      %s460 = sshll.u32 %s65, 4
      %s461 = int_to_ptr.hbm [resolvable:$true] %s460
      %s462 = sshll.u32 [#allocation41], 4
      %s463 = int_to_ptr.vmem [resolvable:$true] %s462
      %465 = dma.hbm_to_vmem [thread:$0]  %s461, 16, %s463, [#allocation42]
    $region133: #{resnt18rnn_forward.1} parent=1 // pred_fallthru
      _
    // Predicated region
    $region134: #{resnt18rnn_forward.1} parent=1 // pred_check
      _
    $region135: #{resnt18rnn_forward.1} parent=1 // pred_check_branch
      %467 = sbr.rel (0) target = $region137
    $region136: #{resnt18rnn_forward.1} parent=1 // pred_region
      %469 = vsyncadd [#allocation42], 0
      %s470 = sshll.u32 %s67, 4
      %s471 = int_to_ptr.hbm [resolvable:$true] %s470
      %s472 = sshll.u32 [#allocation43], 4
      %s473 = int_to_ptr.vmem [resolvable:$true] %s472
      %478 = dma.hbm_to_vmem [thread:$0]  %s471, 1024, %s473, [#allocation42], 64, 64, 4
    $region137: #{resnt18rnn_forward.1} parent=1 // pred_fallthru
      _
    // Predicated region
    $region138: #{resnt18rnn_forward.1} parent=1 // pred_check
      _
    $region139: #{resnt18rnn_forward.1} parent=1 // pred_check_branch
      %480 = sbr.rel (0) target = $region141
    $region140: #{resnt18rnn_forward.1} parent=1 // pred_region
      %482 = vsyncadd [#allocation45], 0
      %s484 = sshll.u32 %s69, 4
      %s485 = int_to_ptr.hbm [resolvable:$true] %s484
      %s486 = sshll.u32 [#allocation44], 4
      %s487 = int_to_ptr.vmem [resolvable:$true] %s486
      %489 = dma.hbm_to_vmem [thread:$0]  %s485, 16, %s487, [#allocation45]
    $region141: #{resnt18rnn_forward.1} parent=1 // pred_fallthru
      _
    // Predicated region
    $region142: #{resnt18rnn_forward.1} parent=1 // pred_check
      _
    $region143: #{resnt18rnn_forward.1} parent=1 // pred_check_branch
      %491 = sbr.rel (0) target = $region145
    $region144: #{resnt18rnn_forward.1} parent=1 // pred_region
      %493 = vsyncadd [#allocation45], 0
      %s494 = sshll.u32 %s71, 4
      %s495 = int_to_ptr.hbm [resolvable:$true] %s494
      %s496 = sshll.u32 [#allocation46], 4
      %s497 = int_to_ptr.vmem [resolvable:$true] %s496
      %502 = dma.hbm_to_vmem [thread:$0]  %s495, 1024, %s497, [#allocation45], 64, 64, 4
    $region145: #{resnt18rnn_forward.1} parent=1 // pred_fallthru
      _
    // Predicated region
    $region146: #{resnt18rnn_forward.1} parent=1 // pred_check
      _
    $region147: #{resnt18rnn_forward.1} parent=1 // pred_check_branch
      %504 = sbr.rel (0) target = $region149
    $region148: #{resnt18rnn_forward.1} parent=1 // pred_region
      %506 = vsyncadd [#allocation48], 0
      %s508 = sshll.u32 %s73, 4
      %s509 = int_to_ptr.hbm [resolvable:$true] %s508
      %s510 = sshll.u32 [#allocation47], 4
      %s511 = int_to_ptr.vmem [resolvable:$true] %s510
      %513 = dma.hbm_to_vmem [thread:$0]  %s509, 16, %s511, [#allocation48]
    $region149: #{resnt18rnn_forward.1} parent=1 // pred_fallthru
      _
    // Predicated region
    $region150: #{resnt18rnn_forward.1} parent=1 // pred_check
      _
    $region151: #{resnt18rnn_forward.1} parent=1 // pred_check_branch
      %515 = sbr.rel (0) target = $region153
    $region152: #{resnt18rnn_forward.1} parent=1 // pred_region
      %517 = vsyncadd [#allocation48], 0
      %s518 = sshll.u32 %s75, 4
      %s519 = int_to_ptr.hbm [resolvable:$true] %s518
      %s520 = sshll.u32 [#allocation49], 4
      %s521 = int_to_ptr.vmem [resolvable:$true] %s520
      %526 = dma.hbm_to_vmem [thread:$0]  %s519, 1024, %s521, [#allocation48], 64, 64, 4
    $region153: #{resnt18rnn_forward.1} parent=1 // pred_fallthru
      _
    // Predicated region
    $region154: #{resnt18rnn_forward.1} parent=1 // pred_check
      _
    $region155: #{resnt18rnn_forward.1} parent=1 // pred_check_branch
      %528 = sbr.rel (0) target = $region157
    $region156: #{resnt18rnn_forward.1} parent=1 // pred_region
      _
    $region157: #{resnt18rnn_forward.1} parent=1 // pred_fallthru
      _
    // Predicated region
    $region158: #{resnt18rnn_forward.1} parent=1 // pred_check
      _
    $region159: #{resnt18rnn_forward.1} parent=1 // pred_check_branch
      %530 = sbr.rel (0) target = $region161
    $region160: #{resnt18rnn_forward.1} parent=1 // pred_region
      %532 = vsyncadd [#allocation51], 0
      %s533 = sshll.u32 %s79, 4
      %s534 = int_to_ptr.hbm [resolvable:$true] %s533
      %s535 = sshll.u32 [#allocation50], 4
      %s536 = int_to_ptr.vmem [resolvable:$true] %s535
      %541 = dma.hbm_to_vmem [thread:$0]  %s534, 1024, %s536, [#allocation51], 64, 64, 4
    $region161: #{resnt18rnn_forward.1} parent=1 // pred_fallthru
      _
    // Predicated region
    $region162: #{resnt18rnn_forward.1} parent=1 // pred_check
      _
    $region163: #{resnt18rnn_forward.1} parent=1 // pred_check_branch
      %543 = sbr.rel (0) target = $region165
    $region164: #{resnt18rnn_forward.1} parent=1 // pred_region
      _
    $region165: #{resnt18rnn_forward.1} parent=1 // pred_fallthru
      _
    // Predicated region
    $region166: #{resnt18rnn_forward.1} parent=1 // pred_check
      _
    $region167: #{resnt18rnn_forward.1} parent=1 // pred_check_branch
      %545 = sbr.rel (0) target = $region169
    $region168: #{resnt18rnn_forward.1} parent=1 // pred_region
      %547 = vsyncadd [#allocation51], 0
      %s548 = sshll.u32 %s83, 4
      %s549 = int_to_ptr.hbm [resolvable:$true] %s548
      %s550 = sshll.u32 [#allocation52], 4
      %s551 = int_to_ptr.vmem [resolvable:$true] %s550
      %556 = dma.hbm_to_vmem [thread:$0]  %s549, 1024, %s551, [#allocation51], 64, 64, 4
    $region169: #{resnt18rnn_forward.1} parent=1 // pred_fallthru
      _
    // Predicated region
    $region170: #{resnt18rnn_forward.1} parent=1 // pred_check
      _
    $region171: #{resnt18rnn_forward.1} parent=1 // pred_check_branch
      %558 = sbr.rel (0) target = $region173
    $region172: #{resnt18rnn_forward.1} parent=1 // pred_region
      _
    $region173: #{resnt18rnn_forward.1} parent=1 // pred_fallthru
      _
    // Predicated region
    $region174: #{resnt18rnn_forward.1} parent=1 // pred_check
      _
    $region175: #{resnt18rnn_forward.1} parent=1 // pred_check_branch
      %560 = sbr.rel (0) target = $region177
    $region176: #{resnt18rnn_forward.1} parent=1 // pred_region
      %562 = vsyncadd [#allocation54], 0
      %s563 = sshll.u32 %s87, 4
      %s564 = int_to_ptr.hbm [resolvable:$true] %s563
      %s565 = sshll.u32 [#allocation53], 4
      %s566 = int_to_ptr.vmem [resolvable:$true] %s565
      %571 = dma.hbm_to_vmem [thread:$0]  %s564, 1024, %s566, [#allocation54], 64, 64, 4
    $region177: #{resnt18rnn_forward.1} parent=1 // pred_fallthru
      _
    // Predicated region
    $region178: #{resnt18rnn_forward.1} parent=1 // pred_check
      _
    $region179: #{resnt18rnn_forward.1} parent=1 // pred_check_branch
      %573 = sbr.rel (0) target = $region181
    $region180: #{resnt18rnn_forward.1} parent=1 // pred_region
      _
    $region181: #{resnt18rnn_forward.1} parent=1 // pred_fallthru
      _
    // Predicated region
    $region182: #{resnt18rnn_forward.1} parent=1 // pred_check
      _
    $region183: #{resnt18rnn_forward.1} parent=1 // pred_check_branch
      %575 = sbr.rel (0) target = $region185
    $region184: #{resnt18rnn_forward.1} parent=1 // pred_region
      %577 = vsyncadd [#allocation54], 0
      %s578 = sshll.u32 %s91, 4
      %s579 = int_to_ptr.hbm [resolvable:$true] %s578
      %s580 = sshll.u32 [#allocation55], 4
      %s581 = int_to_ptr.vmem [resolvable:$true] %s580
      %586 = dma.hbm_to_vmem [thread:$0]  %s579, 1024, %s581, [#allocation54], 64, 64, 4
    $region185: #{resnt18rnn_forward.1} parent=1 // pred_fallthru
      _
    // Predicated region
    $region186: #{resnt18rnn_forward.1} parent=1 // pred_check
      _
    $region187: #{resnt18rnn_forward.1} parent=1 // pred_check_branch
      %588 = sbr.rel (0) target = $region189
    $region188: #{resnt18rnn_forward.1} parent=1 // pred_region
      %590 = vsyncadd [#allocation57], 0
      %s591 = sshll.u32 %s93, 4
      %s592 = int_to_ptr.hbm [resolvable:$true] %s591
      %s593 = sshll.u32 [#allocation56], 4
      %s594 = int_to_ptr.vmem [resolvable:$true] %s593
      %599 = dma.hbm_to_vmem [thread:$0]  %s592, 1024, %s594, [#allocation57], 64, 64, 4
    $region189: #{resnt18rnn_forward.1} parent=1 // pred_fallthru
      _
    // Predicated region
    $region190: #{resnt18rnn_forward.1} parent=1 // pred_check
      _
    $region191: #{resnt18rnn_forward.1} parent=1 // pred_check_branch
      %601 = sbr.rel (0) target = $region193
    $region192: #{resnt18rnn_forward.1} parent=1 // pred_region
      _
    $region193: #{resnt18rnn_forward.1} parent=1 // pred_fallthru
      _
    // Predicated region
    $region194: #{resnt18rnn_forward.1} parent=1 // pred_check
      _
    $region195: #{resnt18rnn_forward.1} parent=1 // pred_check_branch
      %603 = sbr.rel (0) target = $region197
    $region196: #{resnt18rnn_forward.1} parent=1 // pred_region
      _
    $region197: #{resnt18rnn_forward.1} parent=1 // pred_fallthru
      _
    // Predicated region
    $region198: #{resnt18rnn_forward.1} parent=1 // pred_check
      _
    $region199: #{resnt18rnn_forward.1} parent=1 // pred_check_branch
      %605 = sbr.rel (0) target = $region201
    $region200: #{resnt18rnn_forward.1} parent=1 // pred_region
      _
    $region201: #{resnt18rnn_forward.1} parent=1 // pred_fallthru
      _
    // Predicated region
    $region202: #{resnt18rnn_forward.1} parent=1 // pred_check
      _
    $region203: #{resnt18rnn_forward.1} parent=1 // pred_check_branch
      %607 = sbr.rel (0) target = $region205
    $region204: #{resnt18rnn_forward.1} parent=1 // pred_region
      _
    $region205: #{resnt18rnn_forward.1} parent=1 // pred_fallthru
      _
    // Predicated region
    $region206: #{resnt18rnn_forward.1} parent=1 // pred_check
      _
    $region207: #{resnt18rnn_forward.1} parent=1 // pred_check_branch
      %609 = sbr.rel (0) target = $region209
    $region208: #{resnt18rnn_forward.1} parent=1 // pred_region
      _
    $region209: #{resnt18rnn_forward.1} parent=1 // pred_fallthru
      _
    // Predicated region
    $region210: #{resnt18rnn_forward.1} parent=1 // pred_check
      _
    $region211: #{resnt18rnn_forward.1} parent=1 // pred_check_branch
      %611 = sbr.rel (0) target = $region213
    $region212: #{resnt18rnn_forward.1} parent=1 // pred_region
      _
    $region213: #{resnt18rnn_forward.1} parent=1 // pred_fallthru
      _
    // Predicated region
    $region214: #{resnt18rnn_forward.1} parent=1 // pred_check
      _
    $region215: #{resnt18rnn_forward.1} parent=1 // pred_check_branch
      %613 = sbr.rel (0) target = $region217
    $region216: #{resnt18rnn_forward.1} parent=1 // pred_region
      _
    $region217: #{resnt18rnn_forward.1} parent=1 // pred_fallthru
      _
    // Predicated region
    $region218: #{resnt18rnn_forward.1} parent=1 // pred_check
      _
    $region219: #{resnt18rnn_forward.1} parent=1 // pred_check_branch
      %615 = sbr.rel (0) target = $region221
    $region220: #{resnt18rnn_forward.1} parent=1 // pred_region
      _
    $region221: #{resnt18rnn_forward.1} parent=1 // pred_fallthru
      _
    // Predicated region
    $region222: #{resnt18rnn_forward.1} parent=1 // pred_check
      _
    $region223: #{resnt18rnn_forward.1} parent=1 // pred_check_branch
      %617 = sbr.rel (0) target = $region225
    $region224: #{resnt18rnn_forward.1} parent=1 // pred_region
      _
    $region225: #{resnt18rnn_forward.1} parent=1 // pred_fallthru
      _
    // Predicated region
    $region226: #{resnt18rnn_forward.1} parent=1 // pred_check
      _
    $region227: #{resnt18rnn_forward.1} parent=1 // pred_check_branch
      %619 = sbr.rel (0) target = $region229
    $region228: #{resnt18rnn_forward.1} parent=1 // pred_region
      %621 = dma.done [#allocation3], 24576
    $region229: #{resnt18rnn_forward.1} parent=1 // pred_fallthru
      _
    // Predicated region
    $region230: #{resnt18rnn_forward.1} parent=1 // pred_check
      _
    $region231: #{resnt18rnn_forward.1} parent=1 // pred_check_branch
      %623 = sbr.rel (0) target = $region233
    $region232: #{resnt18rnn_forward.1} parent=1 // pred_region
      %625 = dma.done [#allocation6], 24576
    $region233: #{resnt18rnn_forward.1} parent=1 // pred_fallthru
      _
    // Predicated region
    $region234: #{resnt18rnn_forward.1} parent=1 // pred_check
      _
    $region235: #{resnt18rnn_forward.1} parent=1 // pred_check_branch
      %627 = sbr.rel (0) target = $region237
    $region236: #{resnt18rnn_forward.1} parent=1 // pred_region
      %629 = dma.done [#allocation6], 1024
    $region237: #{resnt18rnn_forward.1} parent=1 // pred_fallthru
      _
    // Predicated region
    $region238: #{resnt18rnn_forward.1} parent=1 // pred_check
      _
    $region239: #{resnt18rnn_forward.1} parent=1 // pred_check_branch
      %631 = sbr.rel (0) target = $region241
    $region240: #{resnt18rnn_forward.1} parent=1 // pred_region
      %633 = dma.done [#allocation9], 16
    $region241: #{resnt18rnn_forward.1} parent=1 // pred_fallthru
      _
    // Predicated region
    $region242: #{resnt18rnn_forward.1} parent=1 // pred_check
      _
    $region243: #{resnt18rnn_forward.1} parent=1 // pred_check_branch
      %635 = sbr.rel (0) target = $region245
    $region244: #{resnt18rnn_forward.1} parent=1 // pred_region
      %637 = dma.done [#allocation9], 1024
    $region245: #{resnt18rnn_forward.1} parent=1 // pred_fallthru
      _
    // Predicated region
    $region246: #{resnt18rnn_forward.1} parent=1 // pred_check
      _
    $region247: #{resnt18rnn_forward.1} parent=1 // pred_check_branch
      %639 = sbr.rel (0) target = $region249
    $region248: #{resnt18rnn_forward.1} parent=1 // pred_region
      %641 = dma.done [#allocation12], 16
    $region249: #{resnt18rnn_forward.1} parent=1 // pred_fallthru
      _
    // Predicated region
    $region250: #{resnt18rnn_forward.1} parent=1 // pred_check
      _
    $region251: #{resnt18rnn_forward.1} parent=1 // pred_check_branch
      %643 = sbr.rel (0) target = $region253
    $region252: #{resnt18rnn_forward.1} parent=1 // pred_region
      %645 = dma.done [#allocation12], 1024
    $region253: #{resnt18rnn_forward.1} parent=1 // pred_fallthru
      _
    // Predicated region
    $region254: #{resnt18rnn_forward.1} parent=1 // pred_check
      _
    $region255: #{resnt18rnn_forward.1} parent=1 // pred_check_branch
      %647 = sbr.rel (0) target = $region257
    $region256: #{resnt18rnn_forward.1} parent=1 // pred_region
      %649 = dma.done [#allocation15], 16
    $region257: #{resnt18rnn_forward.1} parent=1 // pred_fallthru
      _
    // Predicated region
    $region258: #{resnt18rnn_forward.1} parent=1 // pred_check
      _
    $region259: #{resnt18rnn_forward.1} parent=1 // pred_check_branch
      %651 = sbr.rel (0) target = $region261
    $region260: #{resnt18rnn_forward.1} parent=1 // pred_region
      %653 = dma.done [#allocation15], 1024
    $region261: #{resnt18rnn_forward.1} parent=1 // pred_fallthru
      _
    // Predicated region
    $region262: #{resnt18rnn_forward.1} parent=1 // pred_check
      _
    $region263: #{resnt18rnn_forward.1} parent=1 // pred_check_branch
      %655 = sbr.rel (0) target = $region265
    $region264: #{resnt18rnn_forward.1} parent=1 // pred_region
      %657 = dma.done [#allocation18], 16
    $region265: #{resnt18rnn_forward.1} parent=1 // pred_fallthru
      _
    // Predicated region
    $region266: #{resnt18rnn_forward.1} parent=1 // pred_check
      _
    $region267: #{resnt18rnn_forward.1} parent=1 // pred_check_branch
      %659 = sbr.rel (0) target = $region269
    $region268: #{resnt18rnn_forward.1} parent=1 // pred_region
      %661 = dma.done [#allocation18], 1024
    $region269: #{resnt18rnn_forward.1} parent=1 // pred_fallthru
      _
    // Predicated region
    $region270: #{resnt18rnn_forward.1} parent=1 // pred_check
      _
    $region271: #{resnt18rnn_forward.1} parent=1 // pred_check_branch
      %663 = sbr.rel (0) target = $region273
    $region272: #{resnt18rnn_forward.1} parent=1 // pred_region
      %665 = dma.done [#allocation21], 16
    $region273: #{resnt18rnn_forward.1} parent=1 // pred_fallthru
      _
    // Predicated region
    $region274: #{resnt18rnn_forward.1} parent=1 // pred_check
      _
    $region275: #{resnt18rnn_forward.1} parent=1 // pred_check_branch
      %667 = sbr.rel (0) target = $region277
    $region276: #{resnt18rnn_forward.1} parent=1 // pred_region
      %669 = dma.done [#allocation21], 1024
    $region277: #{resnt18rnn_forward.1} parent=1 // pred_fallthru
      _
    // Predicated region
    $region278: #{resnt18rnn_forward.1} parent=1 // pred_check
      _
    $region279: #{resnt18rnn_forward.1} parent=1 // pred_check_branch
      %671 = sbr.rel (0) target = $region281
    $region280: #{resnt18rnn_forward.1} parent=1 // pred_region
      %673 = dma.done [#allocation24], 16
    $region281: #{resnt18rnn_forward.1} parent=1 // pred_fallthru
      _
    // Predicated region
    $region282: #{resnt18rnn_forward.1} parent=1 // pred_check
      _
    $region283: #{resnt18rnn_forward.1} parent=1 // pred_check_branch
      %675 = sbr.rel (0) target = $region285
    $region284: #{resnt18rnn_forward.1} parent=1 // pred_region
      %677 = dma.done [#allocation24], 1024
    $region285: #{resnt18rnn_forward.1} parent=1 // pred_fallthru
      _
    // Predicated region
    $region286: #{resnt18rnn_forward.1} parent=1 // pred_check
      _
    $region287: #{resnt18rnn_forward.1} parent=1 // pred_check_branch
      %679 = sbr.rel (0) target = $region289
    $region288: #{resnt18rnn_forward.1} parent=1 // pred_region
      %681 = dma.done [#allocation27], 16
    $region289: #{resnt18rnn_forward.1} parent=1 // pred_fallthru
      _
    // Predicated region
    $region290: #{resnt18rnn_forward.1} parent=1 // pred_check
      _
    $region291: #{resnt18rnn_forward.1} parent=1 // pred_check_branch
      %683 = sbr.rel (0) target = $region293
    $region292: #{resnt18rnn_forward.1} parent=1 // pred_region
      %685 = dma.done [#allocation27], 1024
    $region293: #{resnt18rnn_forward.1} parent=1 // pred_fallthru
      _
    // Predicated region
    $region294: #{resnt18rnn_forward.1} parent=1 // pred_check
      _
    $region295: #{resnt18rnn_forward.1} parent=1 // pred_check_branch
      %687 = sbr.rel (0) target = $region297
    $region296: #{resnt18rnn_forward.1} parent=1 // pred_region
      %689 = dma.done [#allocation30], 16
    $region297: #{resnt18rnn_forward.1} parent=1 // pred_fallthru
      _
    // Predicated region
    $region298: #{resnt18rnn_forward.1} parent=1 // pred_check
      _
    $region299: #{resnt18rnn_forward.1} parent=1 // pred_check_branch
      %691 = sbr.rel (0) target = $region301
    $region300: #{resnt18rnn_forward.1} parent=1 // pred_region
      %693 = dma.done [#allocation30], 1024
    $region301: #{resnt18rnn_forward.1} parent=1 // pred_fallthru
      _
    // Predicated region
    $region302: #{resnt18rnn_forward.1} parent=1 // pred_check
      _
    $region303: #{resnt18rnn_forward.1} parent=1 // pred_check_branch
      %695 = sbr.rel (0) target = $region305
    $region304: #{resnt18rnn_forward.1} parent=1 // pred_region
      %697 = dma.done [#allocation33], 16
    $region305: #{resnt18rnn_forward.1} parent=1 // pred_fallthru
      _
    // Predicated region
    $region306: #{resnt18rnn_forward.1} parent=1 // pred_check
      _
    $region307: #{resnt18rnn_forward.1} parent=1 // pred_check_branch
      %699 = sbr.rel (0) target = $region309
    $region308: #{resnt18rnn_forward.1} parent=1 // pred_region
      %701 = dma.done [#allocation33], 1024
    $region309: #{resnt18rnn_forward.1} parent=1 // pred_fallthru
      _
    // Predicated region
    $region310: #{resnt18rnn_forward.1} parent=1 // pred_check
      _
    $region311: #{resnt18rnn_forward.1} parent=1 // pred_check_branch
      %703 = sbr.rel (0) target = $region313
    $region312: #{resnt18rnn_forward.1} parent=1 // pred_region
      %705 = dma.done [#allocation36], 16
    $region313: #{resnt18rnn_forward.1} parent=1 // pred_fallthru
      _
    // Predicated region
    $region314: #{resnt18rnn_forward.1} parent=1 // pred_check
      _
    $region315: #{resnt18rnn_forward.1} parent=1 // pred_check_branch
      %707 = sbr.rel (0) target = $region317
    $region316: #{resnt18rnn_forward.1} parent=1 // pred_region
      %709 = dma.done [#allocation36], 1024
    $region317: #{resnt18rnn_forward.1} parent=1 // pred_fallthru
      _
    // Predicated region
    $region318: #{resnt18rnn_forward.1} parent=1 // pred_check
      _
    $region319: #{resnt18rnn_forward.1} parent=1 // pred_check_branch
      %711 = sbr.rel (0) target = $region321
    $region320: #{resnt18rnn_forward.1} parent=1 // pred_region
      %713 = dma.done [#allocation39], 16
    $region321: #{resnt18rnn_forward.1} parent=1 // pred_fallthru
      _
    // Predicated region
    $region322: #{resnt18rnn_forward.1} parent=1 // pred_check
      _
    $region323: #{resnt18rnn_forward.1} parent=1 // pred_check_branch
      %715 = sbr.rel (0) target = $region325
    $region324: #{resnt18rnn_forward.1} parent=1 // pred_region
      %717 = dma.done [#allocation39], 1024
    $region325: #{resnt18rnn_forward.1} parent=1 // pred_fallthru
      _
    // Predicated region
    $region326: #{resnt18rnn_forward.1} parent=1 // pred_check
      _
    $region327: #{resnt18rnn_forward.1} parent=1 // pred_check_branch
      %719 = sbr.rel (0) target = $region329
    $region328: #{resnt18rnn_forward.1} parent=1 // pred_region
      %721 = dma.done [#allocation42], 16
    $region329: #{resnt18rnn_forward.1} parent=1 // pred_fallthru
      _
    // Predicated region
    $region330: #{resnt18rnn_forward.1} parent=1 // pred_check
      _
    $region331: #{resnt18rnn_forward.1} parent=1 // pred_check_branch
      %723 = sbr.rel (0) target = $region333
    $region332: #{resnt18rnn_forward.1} parent=1 // pred_region
      %725 = dma.done [#allocation42], 1024
    $region333: #{resnt18rnn_forward.1} parent=1 // pred_fallthru
      _
    // Predicated region
    $region334: #{resnt18rnn_forward.1} parent=1 // pred_check
      _
    $region335: #{resnt18rnn_forward.1} parent=1 // pred_check_branch
      %727 = sbr.rel (0) target = $region337
    $region336: #{resnt18rnn_forward.1} parent=1 // pred_region
      %729 = dma.done [#allocation45], 16
    $region337: #{resnt18rnn_forward.1} parent=1 // pred_fallthru
      _
    // Predicated region
    $region338: #{resnt18rnn_forward.1} parent=1 // pred_check
      _
    $region339: #{resnt18rnn_forward.1} parent=1 // pred_check_branch
      %731 = sbr.rel (0) target = $region341
    $region340: #{resnt18rnn_forward.1} parent=1 // pred_region
      %733 = dma.done [#allocation45], 1024
    $region341: #{resnt18rnn_forward.1} parent=1 // pred_fallthru
      _
    // Predicated region
    $region342: #{resnt18rnn_forward.1} parent=1 // pred_check
      _
    $region343: #{resnt18rnn_forward.1} parent=1 // pred_check_branch
      %735 = sbr.rel (0) target = $region345
    $region344: #{resnt18rnn_forward.1} parent=1 // pred_region
      %737 = dma.done [#allocation48], 16
    $region345: #{resnt18rnn_forward.1} parent=1 // pred_fallthru
      _
    // Predicated region
    $region346: #{resnt18rnn_forward.1} parent=1 // pred_check
      _
    $region347: #{resnt18rnn_forward.1} parent=1 // pred_check_branch
      %739 = sbr.rel (0) target = $region349
    $region348: #{resnt18rnn_forward.1} parent=1 // pred_region
      %741 = dma.done [#allocation48], 1024
    $region349: #{resnt18rnn_forward.1} parent=1 // pred_fallthru
      _
    // Predicated region
    $region350: #{resnt18rnn_forward.1} parent=1 // pred_check
      _
    $region351: #{resnt18rnn_forward.1} parent=1 // pred_check_branch
      %743 = sbr.rel (0) target = $region353
    $region352: #{resnt18rnn_forward.1} parent=1 // pred_region
      %745 = dma.done [#allocation51], 1024
    $region353: #{resnt18rnn_forward.1} parent=1 // pred_fallthru
      _
    // Predicated region
    $region354: #{resnt18rnn_forward.1} parent=1 // pred_check
      _
    $region355: #{resnt18rnn_forward.1} parent=1 // pred_check_branch
      %747 = sbr.rel (0) target = $region357
    $region356: #{resnt18rnn_forward.1} parent=1 // pred_region
      %749 = dma.done [#allocation51], 1024
    $region357: #{resnt18rnn_forward.1} parent=1 // pred_fallthru
      _
    // Predicated region
    $region358: #{resnt18rnn_forward.1} parent=1 // pred_check
      _
    $region359: #{resnt18rnn_forward.1} parent=1 // pred_check_branch
      %751 = sbr.rel (0) target = $region361
    $region360: #{resnt18rnn_forward.1} parent=1 // pred_region
      %753 = dma.done [#allocation54], 1024
    $region361: #{resnt18rnn_forward.1} parent=1 // pred_fallthru
      _
    // Predicated region
    $region362: #{resnt18rnn_forward.1} parent=1 // pred_check
      _
    $region363: #{resnt18rnn_forward.1} parent=1 // pred_check_branch
      %755 = sbr.rel (0) target = $region365
    $region364: #{resnt18rnn_forward.1} parent=1 // pred_region
      %757 = dma.done [#allocation54], 1024
    $region365: #{resnt18rnn_forward.1} parent=1 // pred_fallthru
      _
    // Predicated region
    $region366: #{resnt18rnn_forward.1} parent=1 // pred_check
      _
    $region367: #{resnt18rnn_forward.1} parent=1 // pred_check_branch
      %759 = sbr.rel (0) target = $region369
    $region368: #{resnt18rnn_forward.1} parent=1 // pred_region
      %761 = dma.done [#allocation57], 1024
    $region369: #{resnt18rnn_forward.1} parent=1 // pred_fallthru
      _
    %v763 = vld [vmem:[%s1] sm:$0xff]
    %v764 = vld [vmem:[%s1 + $0x8] sm:$0xff]
    %v765 = vld [vmem:[%s1 + $0x10] sm:$0xff]
    %v766 = vld [vmem:[%s1 + $0x18] sm:$0xff]
    %v767 = vld [vmem:[%s1 + $0x20] sm:$0xff]
    %v768 = vld [vmem:[%s1 + $0x28] sm:$0xff]
    %v769 = vpack.c.bf16 %v763, %v763
    %v770 = vpack.c.bf16 %v764, %v764
    %v771 = vpack.c.bf16 %v765, %v765
    %v772 = vpack.c.bf16 %v766, %v766
    %v773 = vpack.c.bf16 %v767, %v767
    %v774 = vpack.c.bf16 %v768, %v768
    %v775 = vld [vmem:[#allocation2] sm:$0xff]
    %v776 = vld [vmem:[#allocation2 + $0x8] sm:$0xff]
    %v777 = vld [vmem:[#allocation2 + $0x10] sm:$0xff]
    %v778 = vld [vmem:[#allocation2 + $0x18] sm:$0xff]
    %v779 = vld [vmem:[#allocation2 + $0x20] sm:$0xff]
    %v780 = vld [vmem:[#allocation2 + $0x28] sm:$0xff]
    %v781 = vld [vmem:[#allocation2 + $0x30] sm:$0xff]
    %v782 = vld [vmem:[#allocation2 + $0x38] sm:$0xff]
    %v783 = vld [vmem:[#allocation2 + $0x40] sm:$0xff]
    %v784 = vld [vmem:[#allocation2 + $0x48] sm:$0xff]
    %v785 = vld [vmem:[#allocation2 + $0x50] sm:$0xff]
    %v786 = vld [vmem:[#allocation2 + $0x58] sm:$0xff]
    %v787 = vld [vmem:[#allocation2 + $0x60] sm:$0xff]
    %v788 = vld [vmem:[#allocation2 + $0x68] sm:$0xff]
    %v789 = vld [vmem:[#allocation2 + $0x70] sm:$0xff]
    %v790 = vld [vmem:[#allocation2 + $0x78] sm:$0xff]
    %v791 = vld [vmem:[#allocation2 + $0x80] sm:$0xff]
    %v792 = vld [vmem:[#allocation2 + $0x88] sm:$0xff]
    %v793 = vld [vmem:[#allocation2 + $0x90] sm:$0xff]
    %v794 = vld [vmem:[#allocation2 + $0x98] sm:$0xff]
    %v795 = vld [vmem:[#allocation2 + $0xa0] sm:$0xff]
    %v796 = vld [vmem:[#allocation2 + $0xa8] sm:$0xff]
    %v797 = vld [vmem:[#allocation2 + $0xb0] sm:$0xff]
    %v798 = vld [vmem:[#allocation2 + $0xb8] sm:$0xff]
    %v799 = vld [vmem:[#allocation2 + $0xc0] sm:$0xff]
    %v800 = vld [vmem:[#allocation2 + $0xc8] sm:$0xff]
    %v801 = vld [vmem:[#allocation2 + $0xd0] sm:$0xff]
    %v802 = vld [vmem:[#allocation2 + $0xd8] sm:$0xff]
    %v803 = vld [vmem:[#allocation2 + $0xe0] sm:$0xff]
    %v804 = vld [vmem:[#allocation2 + $0xe8] sm:$0xff]
    %v805 = vld [vmem:[#allocation2 + $0xf0] sm:$0xff]
    %v806 = vld [vmem:[#allocation2 + $0xf8] sm:$0xff]
    %v807 = vld [vmem:[#allocation2 + $0x100] sm:$0xff]
    %v808 = vld [vmem:[#allocation2 + $0x108] sm:$0xff]
    %v809 = vld [vmem:[#allocation2 + $0x110] sm:$0xff]
    %v810 = vld [vmem:[#allocation2 + $0x118] sm:$0xff]
    %v811 = vld [vmem:[#allocation2 + $0x120] sm:$0xff]
    %v812 = vld [vmem:[#allocation2 + $0x128] sm:$0xff]
    %v813 = vld [vmem:[#allocation2 + $0x130] sm:$0xff]
    %v814 = vld [vmem:[#allocation2 + $0x138] sm:$0xff]
    %v815 = vld [vmem:[#allocation2 + $0x140] sm:$0xff]
    %v816 = vld [vmem:[#allocation2 + $0x148] sm:$0xff]
    %v817 = vld [vmem:[#allocation2 + $0x150] sm:$0xff]
    %v818 = vld [vmem:[#allocation2 + $0x158] sm:$0xff]
    %v819 = vld [vmem:[#allocation2 + $0x160] sm:$0xff]
    %v820 = vld [vmem:[#allocation2 + $0x168] sm:$0xff]
    %v821 = vld [vmem:[#allocation2 + $0x170] sm:$0xff]
    %v822 = vld [vmem:[#allocation2 + $0x178] sm:$0xff]
    %v823 = vld [vmem:[#allocation2 + $0x180] sm:$0xff]
    %v824 = vld [vmem:[#allocation2 + $0x188] sm:$0xff]
    %v825 = vld [vmem:[#allocation2 + $0x190] sm:$0xff]
    %v826 = vld [vmem:[#allocation2 + $0x198] sm:$0xff]
    %v827 = vld [vmem:[#allocation2 + $0x1a0] sm:$0xff]
    %v828 = vld [vmem:[#allocation2 + $0x1a8] sm:$0xff]
    %v829 = vld [vmem:[#allocation2 + $0x1b0] sm:$0xff]
    %v830 = vld [vmem:[#allocation2 + $0x1b8] sm:$0xff]
    %v831 = vld [vmem:[#allocation2 + $0x1c0] sm:$0xff]
    %v832 = vld [vmem:[#allocation2 + $0x1c8] sm:$0xff]
    %v833 = vld [vmem:[#allocation2 + $0x1d0] sm:$0xff]
    %v834 = vld [vmem:[#allocation2 + $0x1d8] sm:$0xff]
    %v835 = vld [vmem:[#allocation2 + $0x1e0] sm:$0xff]
    %v836 = vld [vmem:[#allocation2 + $0x1e8] sm:$0xff]
    %v837 = vld [vmem:[#allocation2 + $0x1f0] sm:$0xff]
    %v838 = vld [vmem:[#allocation2 + $0x1f8] sm:$0xff]
    %v839 = vld [vmem:[#allocation2 + $0x200] sm:$0xff]
    %v840 = vld [vmem:[#allocation2 + $0x208] sm:$0xff]
    %v841 = vld [vmem:[#allocation2 + $0x210] sm:$0xff]
    %v842 = vld [vmem:[#allocation2 + $0x218] sm:$0xff]
    %v843 = vld [vmem:[#allocation2 + $0x220] sm:$0xff]
    %v844 = vld [vmem:[#allocation2 + $0x228] sm:$0xff]
    %v845 = vld [vmem:[#allocation2 + $0x230] sm:$0xff]
    %v846 = vld [vmem:[#allocation2 + $0x238] sm:$0xff]
    %v847 = vld [vmem:[#allocation2 + $0x240] sm:$0xff]
    %v848 = vld [vmem:[#allocation2 + $0x248] sm:$0xff]
    %v849 = vld [vmem:[#allocation2 + $0x250] sm:$0xff]
    %v850 = vld [vmem:[#allocation2 + $0x258] sm:$0xff]
    %v851 = vld [vmem:[#allocation2 + $0x260] sm:$0xff]
    %v852 = vld [vmem:[#allocation2 + $0x268] sm:$0xff]
    %v853 = vld [vmem:[#allocation2 + $0x270] sm:$0xff]
    %v854 = vld [vmem:[#allocation2 + $0x278] sm:$0xff]
    %v855 = vld [vmem:[#allocation2 + $0x280] sm:$0xff]
    %v856 = vld [vmem:[#allocation2 + $0x288] sm:$0xff]
    %v857 = vld [vmem:[#allocation2 + $0x290] sm:$0xff]
    %v858 = vld [vmem:[#allocation2 + $0x298] sm:$0xff]
    %v859 = vld [vmem:[#allocation2 + $0x2a0] sm:$0xff]
    %v860 = vld [vmem:[#allocation2 + $0x2a8] sm:$0xff]
    %v861 = vld [vmem:[#allocation2 + $0x2b0] sm:$0xff]
    %v862 = vld [vmem:[#allocation2 + $0x2b8] sm:$0xff]
    %v863 = vld [vmem:[#allocation2 + $0x2c0] sm:$0xff]
    %v864 = vld [vmem:[#allocation2 + $0x2c8] sm:$0xff]
    %v865 = vld [vmem:[#allocation2 + $0x2d0] sm:$0xff]
    %v866 = vld [vmem:[#allocation2 + $0x2d8] sm:$0xff]
    %v867 = vld [vmem:[#allocation2 + $0x2e0] sm:$0xff]
    %v868 = vld [vmem:[#allocation2 + $0x2e8] sm:$0xff]
    %v869 = vld [vmem:[#allocation2 + $0x2f0] sm:$0xff]
    %v870 = vld [vmem:[#allocation2 + $0x2f8] sm:$0xff]
    %v871 = vld [vmem:[#allocation2 + $0x300] sm:$0xff]
    %v872 = vld [vmem:[#allocation2 + $0x308] sm:$0xff]
    %v873 = vld [vmem:[#allocation2 + $0x310] sm:$0xff]
    %v874 = vld [vmem:[#allocation2 + $0x318] sm:$0xff]
    %v875 = vld [vmem:[#allocation2 + $0x320] sm:$0xff]
    %v876 = vld [vmem:[#allocation2 + $0x328] sm:$0xff]
    %v877 = vld [vmem:[#allocation2 + $0x330] sm:$0xff]
    %v878 = vld [vmem:[#allocation2 + $0x338] sm:$0xff]
    %v879 = vld [vmem:[#allocation2 + $0x340] sm:$0xff]
    %v880 = vld [vmem:[#allocation2 + $0x348] sm:$0xff]
    %v881 = vld [vmem:[#allocation2 + $0x350] sm:$0xff]
    %v882 = vld [vmem:[#allocation2 + $0x358] sm:$0xff]
    %v883 = vld [vmem:[#allocation2 + $0x360] sm:$0xff]
    %v884 = vld [vmem:[#allocation2 + $0x368] sm:$0xff]
    %v885 = vld [vmem:[#allocation2 + $0x370] sm:$0xff]
    %v886 = vld [vmem:[#allocation2 + $0x378] sm:$0xff]
    %v887 = vld [vmem:[#allocation2 + $0x380] sm:$0xff]
    %v888 = vld [vmem:[#allocation2 + $0x388] sm:$0xff]
    %v889 = vld [vmem:[#allocation2 + $0x390] sm:$0xff]
    %v890 = vld [vmem:[#allocation2 + $0x398] sm:$0xff]
    %v891 = vld [vmem:[#allocation2 + $0x3a0] sm:$0xff]
    %v892 = vld [vmem:[#allocation2 + $0x3a8] sm:$0xff]
    %v893 = vld [vmem:[#allocation2 + $0x3b0] sm:$0xff]
    %v894 = vld [vmem:[#allocation2 + $0x3b8] sm:$0xff]
    %v895 = vld [vmem:[#allocation2 + $0x3c0] sm:$0xff]
    %v896 = vld [vmem:[#allocation2 + $0x3c8] sm:$0xff]
    %v897 = vld [vmem:[#allocation2 + $0x3d0] sm:$0xff]
    %v898 = vld [vmem:[#allocation2 + $0x3d8] sm:$0xff]
    %v899 = vld [vmem:[#allocation2 + $0x3e0] sm:$0xff]
    %v900 = vld [vmem:[#allocation2 + $0x3e8] sm:$0xff]
    %v901 = vld [vmem:[#allocation2 + $0x3f0] sm:$0xff]
    %v902 = vld [vmem:[#allocation2 + $0x3f8] sm:$0xff]
    %v903 = vld [vmem:[#allocation2 + $0x400] sm:$0xff]
    %v904 = vld [vmem:[#allocation2 + $0x408] sm:$0xff]
    %v905 = vld [vmem:[#allocation2 + $0x410] sm:$0xff]
    %v906 = vld [vmem:[#allocation2 + $0x418] sm:$0xff]
    %v907 = vld [vmem:[#allocation2 + $0x420] sm:$0xff]
    %v908 = vld [vmem:[#allocation2 + $0x428] sm:$0xff]
    %v909 = vld [vmem:[#allocation2 + $0x430] sm:$0xff]
    %v910 = vld [vmem:[#allocation2 + $0x438] sm:$0xff]
    %v911 = vld [vmem:[#allocation2 + $0x440] sm:$0xff]
    %v912 = vld [vmem:[#allocation2 + $0x448] sm:$0xff]
    %v913 = vld [vmem:[#allocation2 + $0x450] sm:$0xff]
    %v914 = vld [vmem:[#allocation2 + $0x458] sm:$0xff]
    %v915 = vld [vmem:[#allocation2 + $0x460] sm:$0xff]
    %v916 = vld [vmem:[#allocation2 + $0x468] sm:$0xff]
    %v917 = vld [vmem:[#allocation2 + $0x470] sm:$0xff]
    %v918 = vld [vmem:[#allocation2 + $0x478] sm:$0xff]
    %v919 = vld [vmem:[#allocation2 + $0x480] sm:$0xff]
    %v920 = vld [vmem:[#allocation2 + $0x488] sm:$0xff]
    %v921 = vld [vmem:[#allocation2 + $0x490] sm:$0xff]
    %v922 = vld [vmem:[#allocation2 + $0x498] sm:$0xff]
    %v923 = vld [vmem:[#allocation2 + $0x4a0] sm:$0xff]
    %v924 = vld [vmem:[#allocation2 + $0x4a8] sm:$0xff]
    %v925 = vld [vmem:[#allocation2 + $0x4b0] sm:$0xff]
    %v926 = vld [vmem:[#allocation2 + $0x4b8] sm:$0xff]
    %v927 = vld [vmem:[#allocation2 + $0x4c0] sm:$0xff]
    %v928 = vld [vmem:[#allocation2 + $0x4c8] sm:$0xff]
    %v929 = vld [vmem:[#allocation2 + $0x4d0] sm:$0xff]
    %v930 = vld [vmem:[#allocation2 + $0x4d8] sm:$0xff]
    %v931 = vld [vmem:[#allocation2 + $0x4e0] sm:$0xff]
    %v932 = vld [vmem:[#allocation2 + $0x4e8] sm:$0xff]
    %v933 = vld [vmem:[#allocation2 + $0x4f0] sm:$0xff]
    %v934 = vld [vmem:[#allocation2 + $0x4f8] sm:$0xff]
    %v935 = vld [vmem:[#allocation2 + $0x500] sm:$0xff]
    %v936 = vld [vmem:[#allocation2 + $0x508] sm:$0xff]
    %v937 = vld [vmem:[#allocation2 + $0x510] sm:$0xff]
    %v938 = vld [vmem:[#allocation2 + $0x518] sm:$0xff]
    %v939 = vld [vmem:[#allocation2 + $0x520] sm:$0xff]
    %v940 = vld [vmem:[#allocation2 + $0x528] sm:$0xff]
    %v941 = vld [vmem:[#allocation2 + $0x530] sm:$0xff]
    %v942 = vld [vmem:[#allocation2 + $0x538] sm:$0xff]
    %v943 = vld [vmem:[#allocation2 + $0x540] sm:$0xff]
    %v944 = vld [vmem:[#allocation2 + $0x548] sm:$0xff]
    %v945 = vld [vmem:[#allocation2 + $0x550] sm:$0xff]
    %v946 = vld [vmem:[#allocation2 + $0x558] sm:$0xff]
    %v947 = vld [vmem:[#allocation2 + $0x560] sm:$0xff]
    %v948 = vld [vmem:[#allocation2 + $0x568] sm:$0xff]
    %v949 = vld [vmem:[#allocation2 + $0x570] sm:$0xff]
    %v950 = vld [vmem:[#allocation2 + $0x578] sm:$0xff]
    %v951 = vld [vmem:[#allocation2 + $0x580] sm:$0xff]
    %v952 = vld [vmem:[#allocation2 + $0x588] sm:$0xff]
    %v953 = vld [vmem:[#allocation2 + $0x590] sm:$0xff]
    %v954 = vld [vmem:[#allocation2 + $0x598] sm:$0xff]
    %v955 = vld [vmem:[#allocation2 + $0x5a0] sm:$0xff]
    %v956 = vld [vmem:[#allocation2 + $0x5a8] sm:$0xff]
    %v957 = vld [vmem:[#allocation2 + $0x5b0] sm:$0xff]
    %v958 = vld [vmem:[#allocation2 + $0x5b8] sm:$0xff]
    %v959 = vld [vmem:[#allocation2 + $0x5c0] sm:$0xff]
    %v960 = vld [vmem:[#allocation2 + $0x5c8] sm:$0xff]
    %v961 = vld [vmem:[#allocation2 + $0x5d0] sm:$0xff]
    %v962 = vld [vmem:[#allocation2 + $0x5d8] sm:$0xff]
    %v963 = vld [vmem:[#allocation2 + $0x5e0] sm:$0xff]
    %v964 = vld [vmem:[#allocation2 + $0x5e8] sm:$0xff]
    %v965 = vld [vmem:[#allocation2 + $0x5f0] sm:$0xff]
    %v966 = vld [vmem:[#allocation2 + $0x5f8] sm:$0xff]
    %v967 = vld [vmem:[%s9] sm:$0xf]
    %v969 = vperm.slane %v967, 0
    %v970 = vperm.slane %v967, 1
    %v971 = vperm.slane %v967, 2
    %v972 = vperm.slane %v967, 3
    %v1169 = vunpack.c.l.b16 %v775
    %v1170 = vunpack.c.h.b16 %v775
    %v1171 = vunpack.c.l.b16 %v776
    %v1172 = vunpack.c.h.b16 %v776
    %v1173 = vunpack.c.l.b16 %v777
    %v1174 = vunpack.c.h.b16 %v777
    %v1175 = vunpack.c.l.b16 %v778
    %v1176 = vunpack.c.h.b16 %v778
    %v1177 = vunpack.c.l.b16 %v779
    %v1178 = vunpack.c.h.b16 %v779
    %v1179 = vunpack.c.l.b16 %v780
    %v1180 = vunpack.c.h.b16 %v780
    %v1181 = vunpack.c.l.b16 %v781
    %v1182 = vunpack.c.h.b16 %v781
    %v1183 = vunpack.c.l.b16 %v782
    %v1184 = vunpack.c.h.b16 %v782
    %v1185 = vunpack.c.l.b16 %v783
    %v1186 = vunpack.c.h.b16 %v783
    %v1187 = vunpack.c.l.b16 %v784
    %v1188 = vunpack.c.h.b16 %v784
    %v1189 = vunpack.c.l.b16 %v785
    %v1190 = vunpack.c.h.b16 %v785
    %v1191 = vunpack.c.l.b16 %v786
    %v1192 = vunpack.c.h.b16 %v786
    %v1193 = vunpack.c.l.b16 %v787
    %v1194 = vunpack.c.h.b16 %v787
    %v1195 = vunpack.c.l.b16 %v788
    %v1196 = vunpack.c.h.b16 %v788
    %v1197 = vunpack.c.l.b16 %v789
    %v1198 = vunpack.c.h.b16 %v789
    %v1199 = vunpack.c.l.b16 %v790
    %v1200 = vunpack.c.h.b16 %v790
    %v1201 = vunpack.c.l.b16 %v791
    %v1202 = vunpack.c.h.b16 %v791
    %v1203 = vunpack.c.l.b16 %v792
    %v1204 = vunpack.c.h.b16 %v792
    %v1205 = vunpack.c.l.b16 %v793
    %v1206 = vunpack.c.h.b16 %v793
    %v1207 = vunpack.c.l.b16 %v794
    %v1208 = vunpack.c.h.b16 %v794
    %v1209 = vunpack.c.l.b16 %v795
    %v1210 = vunpack.c.h.b16 %v795
    %v1211 = vunpack.c.l.b16 %v796
    %v1212 = vunpack.c.h.b16 %v796
    %v1213 = vunpack.c.l.b16 %v797
    %v1214 = vunpack.c.h.b16 %v797
    %v1215 = vunpack.c.l.b16 %v798
    %v1216 = vunpack.c.h.b16 %v798
    %v1217 = vunpack.c.l.b16 %v799
    %v1218 = vunpack.c.h.b16 %v799
    %v1219 = vunpack.c.l.b16 %v800
    %v1220 = vunpack.c.h.b16 %v800
    %v1221 = vunpack.c.l.b16 %v801
    %v1222 = vunpack.c.h.b16 %v801
    %v1223 = vunpack.c.l.b16 %v802
    %v1224 = vunpack.c.h.b16 %v802
    %v1225 = vunpack.c.l.b16 %v803
    %v1226 = vunpack.c.h.b16 %v803
    %v1227 = vunpack.c.l.b16 %v804
    %v1228 = vunpack.c.h.b16 %v804
    %v1229 = vunpack.c.l.b16 %v805
    %v1230 = vunpack.c.h.b16 %v805
    %v1231 = vunpack.c.l.b16 %v806
    %v1232 = vunpack.c.h.b16 %v806
    %v1233 = vunpack.c.l.b16 %v807
    %v1234 = vunpack.c.h.b16 %v807
    %v1235 = vunpack.c.l.b16 %v808
    %v1236 = vunpack.c.h.b16 %v808
    %v1237 = vunpack.c.l.b16 %v809
    %v1238 = vunpack.c.h.b16 %v809
    %v1239 = vunpack.c.l.b16 %v810
    %v1240 = vunpack.c.h.b16 %v810
    %v1241 = vunpack.c.l.b16 %v811
    %v1242 = vunpack.c.h.b16 %v811
    %v1243 = vunpack.c.l.b16 %v812
    %v1244 = vunpack.c.h.b16 %v812
    %v1245 = vunpack.c.l.b16 %v813
    %v1246 = vunpack.c.h.b16 %v813
    %v1247 = vunpack.c.l.b16 %v814
    %v1248 = vunpack.c.h.b16 %v814
    %v1249 = vunpack.c.l.b16 %v815
    %v1250 = vunpack.c.h.b16 %v815
    %v1251 = vunpack.c.l.b16 %v816
    %v1252 = vunpack.c.h.b16 %v816
    %v1253 = vunpack.c.l.b16 %v817
    %v1254 = vunpack.c.h.b16 %v817
    %v1255 = vunpack.c.l.b16 %v818
    %v1256 = vunpack.c.h.b16 %v818
    %v1257 = vunpack.c.l.b16 %v819
    %v1258 = vunpack.c.h.b16 %v819
    %v1259 = vunpack.c.l.b16 %v820
    %v1260 = vunpack.c.h.b16 %v820
    %v1261 = vunpack.c.l.b16 %v821
    %v1262 = vunpack.c.h.b16 %v821
    %v1263 = vunpack.c.l.b16 %v822
    %v1264 = vunpack.c.h.b16 %v822
    %v1265 = vunpack.c.l.b16 %v823
    %v1266 = vunpack.c.h.b16 %v823
    %v1267 = vunpack.c.l.b16 %v824
    %v1268 = vunpack.c.h.b16 %v824
    %v1269 = vunpack.c.l.b16 %v825
    %v1270 = vunpack.c.h.b16 %v825
    %v1271 = vunpack.c.l.b16 %v826
    %v1272 = vunpack.c.h.b16 %v826
    %v1273 = vunpack.c.l.b16 %v827
    %v1274 = vunpack.c.h.b16 %v827
    %v1275 = vunpack.c.l.b16 %v828
    %v1276 = vunpack.c.h.b16 %v828
    %v1277 = vunpack.c.l.b16 %v829
    %v1278 = vunpack.c.h.b16 %v829
    %v1279 = vunpack.c.l.b16 %v830
    %v1280 = vunpack.c.h.b16 %v830
    %v1281 = vunpack.c.l.b16 %v831
    %v1282 = vunpack.c.h.b16 %v831
    %v1283 = vunpack.c.l.b16 %v832
    %v1284 = vunpack.c.h.b16 %v832
    %v1285 = vunpack.c.l.b16 %v833
    %v1286 = vunpack.c.h.b16 %v833
    %v1287 = vunpack.c.l.b16 %v834
    %v1288 = vunpack.c.h.b16 %v834
    %v1289 = vunpack.c.l.b16 %v835
    %v1290 = vunpack.c.h.b16 %v835
    %v1291 = vunpack.c.l.b16 %v836
    %v1292 = vunpack.c.h.b16 %v836
    %v1293 = vunpack.c.l.b16 %v837
    %v1294 = vunpack.c.h.b16 %v837
    %v1295 = vunpack.c.l.b16 %v838
    %v1296 = vunpack.c.h.b16 %v838
    %v1297 = vunpack.c.l.b16 %v839
    %v1298 = vunpack.c.h.b16 %v839
    %v1299 = vunpack.c.l.b16 %v840
    %v1300 = vunpack.c.h.b16 %v840
    %v1301 = vunpack.c.l.b16 %v841
    %v1302 = vunpack.c.h.b16 %v841
    %v1303 = vunpack.c.l.b16 %v842
    %v1304 = vunpack.c.h.b16 %v842
    %v1305 = vunpack.c.l.b16 %v843
    %v1306 = vunpack.c.h.b16 %v843
    %v1307 = vunpack.c.l.b16 %v844
    %v1308 = vunpack.c.h.b16 %v844
    %v1309 = vunpack.c.l.b16 %v845
    %v1310 = vunpack.c.h.b16 %v845
    %v1311 = vunpack.c.l.b16 %v846
    %v1312 = vunpack.c.h.b16 %v846
    %v1313 = vunpack.c.l.b16 %v847
    %v1314 = vunpack.c.h.b16 %v847
    %v1315 = vunpack.c.l.b16 %v848
    %v1316 = vunpack.c.h.b16 %v848
    %v1317 = vunpack.c.l.b16 %v849
    %v1318 = vunpack.c.h.b16 %v849
    %v1319 = vunpack.c.l.b16 %v850
    %v1320 = vunpack.c.h.b16 %v850
    %v1321 = vunpack.c.l.b16 %v851
    %v1322 = vunpack.c.h.b16 %v851
    %v1323 = vunpack.c.l.b16 %v852
    %v1324 = vunpack.c.h.b16 %v852
    %v1325 = vunpack.c.l.b16 %v853
    %v1326 = vunpack.c.h.b16 %v853
    %v1327 = vunpack.c.l.b16 %v854
    %v1328 = vunpack.c.h.b16 %v854
    %v1329 = vunpack.c.l.b16 %v855
    %v1330 = vunpack.c.h.b16 %v855
    %v1331 = vunpack.c.l.b16 %v856
    %v1332 = vunpack.c.h.b16 %v856
    %v1333 = vunpack.c.l.b16 %v857
    %v1334 = vunpack.c.h.b16 %v857
    %v1335 = vunpack.c.l.b16 %v858
    %v1336 = vunpack.c.h.b16 %v858
    %v1337 = vunpack.c.l.b16 %v859
    %v1338 = vunpack.c.h.b16 %v859
    %v1339 = vunpack.c.l.b16 %v860
    %v1340 = vunpack.c.h.b16 %v860
    %v1341 = vunpack.c.l.b16 %v861
    %v1342 = vunpack.c.h.b16 %v861
    %v1343 = vunpack.c.l.b16 %v862
    %v1344 = vunpack.c.h.b16 %v862
    %v1345 = vunpack.c.l.b16 %v863
    %v1346 = vunpack.c.h.b16 %v863
    %v1347 = vunpack.c.l.b16 %v864
    %v1348 = vunpack.c.h.b16 %v864
    %v1349 = vunpack.c.l.b16 %v865
    %v1350 = vunpack.c.h.b16 %v865
    %v1351 = vunpack.c.l.b16 %v866
    %v1352 = vunpack.c.h.b16 %v866
    %v1353 = vunpack.c.l.b16 %v867
    %v1354 = vunpack.c.h.b16 %v867
    %v1355 = vunpack.c.l.b16 %v868
    %v1356 = vunpack.c.h.b16 %v868
    %v1357 = vunpack.c.l.b16 %v869
    %v1358 = vunpack.c.h.b16 %v869
    %v1359 = vunpack.c.l.b16 %v870
    %v1360 = vunpack.c.h.b16 %v870
    %v1361 = vunpack.c.l.b16 %v871
    %v1362 = vunpack.c.h.b16 %v871
    %v1363 = vunpack.c.l.b16 %v872
    %v1364 = vunpack.c.h.b16 %v872
    %v1365 = vunpack.c.l.b16 %v873
    %v1366 = vunpack.c.h.b16 %v873
    %v1367 = vunpack.c.l.b16 %v874
    %v1368 = vunpack.c.h.b16 %v874
    %v1369 = vunpack.c.l.b16 %v875
    %v1370 = vunpack.c.h.b16 %v875
    %v1371 = vunpack.c.l.b16 %v876
    %v1372 = vunpack.c.h.b16 %v876
    %v1373 = vunpack.c.l.b16 %v877
    %v1374 = vunpack.c.h.b16 %v877
    %v1375 = vunpack.c.l.b16 %v878
    %v1376 = vunpack.c.h.b16 %v878
    %v1377 = vunpack.c.l.b16 %v879
    %v1378 = vunpack.c.h.b16 %v879
    %v1379 = vunpack.c.l.b16 %v880
    %v1380 = vunpack.c.h.b16 %v880
    %v1381 = vunpack.c.l.b16 %v881
    %v1382 = vunpack.c.h.b16 %v881
    %v1383 = vunpack.c.l.b16 %v882
    %v1384 = vunpack.c.h.b16 %v882
    %v1385 = vunpack.c.l.b16 %v883
    %v1386 = vunpack.c.h.b16 %v883
    %v1387 = vunpack.c.l.b16 %v884
    %v1388 = vunpack.c.h.b16 %v884
    %v1389 = vunpack.c.l.b16 %v885
    %v1390 = vunpack.c.h.b16 %v885
    %v1391 = vunpack.c.l.b16 %v886
    %v1392 = vunpack.c.h.b16 %v886
    %v1393 = vunpack.c.l.b16 %v887
    %v1394 = vunpack.c.h.b16 %v887
    %v1395 = vunpack.c.l.b16 %v888
    %v1396 = vunpack.c.h.b16 %v888
    %v1397 = vunpack.c.l.b16 %v889
    %v1398 = vunpack.c.h.b16 %v889
    %v1399 = vunpack.c.l.b16 %v890
    %v1400 = vunpack.c.h.b16 %v890
    %v1401 = vunpack.c.l.b16 %v891
    %v1402 = vunpack.c.h.b16 %v891
    %v1403 = vunpack.c.l.b16 %v892
    %v1404 = vunpack.c.h.b16 %v892
    %v1405 = vunpack.c.l.b16 %v893
    %v1406 = vunpack.c.h.b16 %v893
    %v1407 = vunpack.c.l.b16 %v894
    %v1408 = vunpack.c.h.b16 %v894
    %v1409 = vunpack.c.l.b16 %v895
    %v1410 = vunpack.c.h.b16 %v895
    %v1411 = vunpack.c.l.b16 %v896
    %v1412 = vunpack.c.h.b16 %v896
    %v1413 = vunpack.c.l.b16 %v897
    %v1414 = vunpack.c.h.b16 %v897
    %v1415 = vunpack.c.l.b16 %v898
    %v1416 = vunpack.c.h.b16 %v898
    %v1417 = vunpack.c.l.b16 %v899
    %v1418 = vunpack.c.h.b16 %v899
    %v1419 = vunpack.c.l.b16 %v900
    %v1420 = vunpack.c.h.b16 %v900
    %v1421 = vunpack.c.l.b16 %v901
    %v1422 = vunpack.c.h.b16 %v901
    %v1423 = vunpack.c.l.b16 %v902
    %v1424 = vunpack.c.h.b16 %v902
    %v1425 = vunpack.c.l.b16 %v903
    %v1426 = vunpack.c.h.b16 %v903
    %v1427 = vunpack.c.l.b16 %v904
    %v1428 = vunpack.c.h.b16 %v904
    %v1429 = vunpack.c.l.b16 %v905
    %v1430 = vunpack.c.h.b16 %v905
    %v1431 = vunpack.c.l.b16 %v906
    %v1432 = vunpack.c.h.b16 %v906
    %v1433 = vunpack.c.l.b16 %v907
    %v1434 = vunpack.c.h.b16 %v907
    %v1435 = vunpack.c.l.b16 %v908
    %v1436 = vunpack.c.h.b16 %v908
    %v1437 = vunpack.c.l.b16 %v909
    %v1438 = vunpack.c.h.b16 %v909
    %v1439 = vunpack.c.l.b16 %v910
    %v1440 = vunpack.c.h.b16 %v910
    %v1441 = vunpack.c.l.b16 %v911
    %v1442 = vunpack.c.h.b16 %v911
    %v1443 = vunpack.c.l.b16 %v912
    %v1444 = vunpack.c.h.b16 %v912
    %v1445 = vunpack.c.l.b16 %v913
    %v1446 = vunpack.c.h.b16 %v913
    %v1447 = vunpack.c.l.b16 %v914
    %v1448 = vunpack.c.h.b16 %v914
    %v1449 = vunpack.c.l.b16 %v915
    %v1450 = vunpack.c.h.b16 %v915
    %v1451 = vunpack.c.l.b16 %v916
    %v1452 = vunpack.c.h.b16 %v916
    %v1453 = vunpack.c.l.b16 %v917
    %v1454 = vunpack.c.h.b16 %v917
    %v1455 = vunpack.c.l.b16 %v918
    %v1456 = vunpack.c.h.b16 %v918
    %v1457 = vunpack.c.l.b16 %v919
    %v1458 = vunpack.c.h.b16 %v919
    %v1459 = vunpack.c.l.b16 %v920
    %v1460 = vunpack.c.h.b16 %v920
    %v1461 = vunpack.c.l.b16 %v921
    %v1462 = vunpack.c.h.b16 %v921
    %v1463 = vunpack.c.l.b16 %v922
    %v1464 = vunpack.c.h.b16 %v922
    %v1465 = vunpack.c.l.b16 %v923
    %v1466 = vunpack.c.h.b16 %v923
    %v1467 = vunpack.c.l.b16 %v924
    %v1468 = vunpack.c.h.b16 %v924
    %v1469 = vunpack.c.l.b16 %v925
    %v1470 = vunpack.c.h.b16 %v925
    %v1471 = vunpack.c.l.b16 %v926
    %v1472 = vunpack.c.h.b16 %v926
    %v1473 = vunpack.c.l.b16 %v927
    %v1474 = vunpack.c.h.b16 %v927
    %v1475 = vunpack.c.l.b16 %v928
    %v1476 = vunpack.c.h.b16 %v928
    %v1477 = vunpack.c.l.b16 %v929
    %v1478 = vunpack.c.h.b16 %v929
    %v1479 = vunpack.c.l.b16 %v930
    %v1480 = vunpack.c.h.b16 %v930
    %v1481 = vunpack.c.l.b16 %v931
    %v1482 = vunpack.c.h.b16 %v931
    %v1483 = vunpack.c.l.b16 %v932
    %v1484 = vunpack.c.h.b16 %v932
    %v1485 = vunpack.c.l.b16 %v933
    %v1486 = vunpack.c.h.b16 %v933
    %v1487 = vunpack.c.l.b16 %v934
    %v1488 = vunpack.c.h.b16 %v934
    %v1489 = vunpack.c.l.b16 %v935
    %v1490 = vunpack.c.h.b16 %v935
    %v1491 = vunpack.c.l.b16 %v936
    %v1492 = vunpack.c.h.b16 %v936
    %v1493 = vunpack.c.l.b16 %v937
    %v1494 = vunpack.c.h.b16 %v937
    %v1495 = vunpack.c.l.b16 %v938
    %v1496 = vunpack.c.h.b16 %v938
    %v1497 = vunpack.c.l.b16 %v939
    %v1498 = vunpack.c.h.b16 %v939
    %v1499 = vunpack.c.l.b16 %v940
    %v1500 = vunpack.c.h.b16 %v940
    %v1501 = vunpack.c.l.b16 %v941
    %v1502 = vunpack.c.h.b16 %v941
    %v1503 = vunpack.c.l.b16 %v942
    %v1504 = vunpack.c.h.b16 %v942
    %v1505 = vunpack.c.l.b16 %v943
    %v1506 = vunpack.c.h.b16 %v943
    %v1507 = vunpack.c.l.b16 %v944
    %v1508 = vunpack.c.h.b16 %v944
    %v1509 = vunpack.c.l.b16 %v945
    %v1510 = vunpack.c.h.b16 %v945
    %v1511 = vunpack.c.l.b16 %v946
    %v1512 = vunpack.c.h.b16 %v946
    %v1513 = vunpack.c.l.b16 %v947
    %v1514 = vunpack.c.h.b16 %v947
    %v1515 = vunpack.c.l.b16 %v948
    %v1516 = vunpack.c.h.b16 %v948
    %v1517 = vunpack.c.l.b16 %v949
    %v1518 = vunpack.c.h.b16 %v949
    %v1519 = vunpack.c.l.b16 %v950
    %v1520 = vunpack.c.h.b16 %v950
    %v1521 = vunpack.c.l.b16 %v951
    %v1522 = vunpack.c.h.b16 %v951
    %v1523 = vunpack.c.l.b16 %v952
    %v1524 = vunpack.c.h.b16 %v952
    %v1525 = vunpack.c.l.b16 %v953
    %v1526 = vunpack.c.h.b16 %v953
    %v1527 = vunpack.c.l.b16 %v954
    %v1528 = vunpack.c.h.b16 %v954
    %v1529 = vunpack.c.l.b16 %v955
    %v1530 = vunpack.c.h.b16 %v955
    %v1531 = vunpack.c.l.b16 %v956
    %v1532 = vunpack.c.h.b16 %v956
    %v1533 = vunpack.c.l.b16 %v957
    %v1534 = vunpack.c.h.b16 %v957
    %v1535 = vunpack.c.l.b16 %v958
    %v1536 = vunpack.c.h.b16 %v958
    %v1537 = vunpack.c.l.b16 %v959
    %v1538 = vunpack.c.h.b16 %v959
    %v1539 = vunpack.c.l.b16 %v960
    %v1540 = vunpack.c.h.b16 %v960
    %v1541 = vunpack.c.l.b16 %v961
    %v1542 = vunpack.c.h.b16 %v961
    %v1543 = vunpack.c.l.b16 %v962
    %v1544 = vunpack.c.h.b16 %v962
    %v1545 = vunpack.c.l.b16 %v963
    %v1546 = vunpack.c.h.b16 %v963
    %v1547 = vunpack.c.l.b16 %v964
    %v1548 = vunpack.c.h.b16 %v964
    %v1549 = vunpack.c.l.b16 %v965
    %v1550 = vunpack.c.h.b16 %v965
    %v1551 = vunpack.c.l.b16 %v966
    %v1552 = vunpack.c.h.b16 %v966
    %v1553 = vpack.c.b16 %v1173, %v1169
    %v1554 = vpack.c.b16 %v1174, %v1170
    %v1555 = vpack.c.b16 %v1175, %v1171
    %v1556 = vpack.c.b16 %v1176, %v1172
    %v1557 = vpack.c.b16 %v1181, %v1177
    %v1558 = vpack.c.b16 %v1182, %v1178
    %v1559 = vpack.c.b16 %v1183, %v1179
    %v1560 = vpack.c.b16 %v1184, %v1180
    %v1561 = vpack.c.b16 %v1189, %v1185
    %v1562 = vpack.c.b16 %v1190, %v1186
    %v1563 = vpack.c.b16 %v1191, %v1187
    %v1564 = vpack.c.b16 %v1192, %v1188
    %v1565 = vpack.c.b16 %v1197, %v1193
    %v1566 = vpack.c.b16 %v1198, %v1194
    %v1567 = vpack.c.b16 %v1199, %v1195
    %v1568 = vpack.c.b16 %v1200, %v1196
    %v1569 = vpack.c.b16 %v1205, %v1201
    %v1570 = vpack.c.b16 %v1206, %v1202
    %v1571 = vpack.c.b16 %v1207, %v1203
    %v1572 = vpack.c.b16 %v1208, %v1204
    %v1573 = vpack.c.b16 %v1213, %v1209
    %v1574 = vpack.c.b16 %v1214, %v1210
    %v1575 = vpack.c.b16 %v1215, %v1211
    %v1576 = vpack.c.b16 %v1216, %v1212
    %v1577 = vpack.c.b16 %v1221, %v1217
    %v1578 = vpack.c.b16 %v1222, %v1218
    %v1579 = vpack.c.b16 %v1223, %v1219
    %v1580 = vpack.c.b16 %v1224, %v1220
    %v1581 = vpack.c.b16 %v1229, %v1225
    %v1582 = vpack.c.b16 %v1230, %v1226
    %v1583 = vpack.c.b16 %v1231, %v1227
    %v1584 = vpack.c.b16 %v1232, %v1228
    %v1585 = vpack.c.b16 %v1237, %v1233
    %v1586 = vpack.c.b16 %v1238, %v1234
    %v1587 = vpack.c.b16 %v1239, %v1235
    %v1588 = vpack.c.b16 %v1240, %v1236
    %v1589 = vpack.c.b16 %v1245, %v1241
    %v1590 = vpack.c.b16 %v1246, %v1242
    %v1591 = vpack.c.b16 %v1247, %v1243
    %v1592 = vpack.c.b16 %v1248, %v1244
    %v1593 = vpack.c.b16 %v1253, %v1249
    %v1594 = vpack.c.b16 %v1254, %v1250
    %v1595 = vpack.c.b16 %v1255, %v1251
    %v1596 = vpack.c.b16 %v1256, %v1252
    %v1597 = vpack.c.b16 %v1261, %v1257
    %v1598 = vpack.c.b16 %v1262, %v1258
    %v1599 = vpack.c.b16 %v1263, %v1259
    %v1600 = vpack.c.b16 %v1264, %v1260
    %v1601 = vpack.c.b16 %v1269, %v1265
    %v1602 = vpack.c.b16 %v1270, %v1266
    %v1603 = vpack.c.b16 %v1271, %v1267
    %v1604 = vpack.c.b16 %v1272, %v1268
    %v1605 = vpack.c.b16 %v1277, %v1273
    %v1606 = vpack.c.b16 %v1278, %v1274
    %v1607 = vpack.c.b16 %v1279, %v1275
    %v1608 = vpack.c.b16 %v1280, %v1276
    %v1609 = vpack.c.b16 %v1285, %v1281
    %v1610 = vpack.c.b16 %v1286, %v1282
    %v1611 = vpack.c.b16 %v1287, %v1283
    %v1612 = vpack.c.b16 %v1288, %v1284
    %v1613 = vpack.c.b16 %v1293, %v1289
    %v1614 = vpack.c.b16 %v1294, %v1290
    %v1615 = vpack.c.b16 %v1295, %v1291
    %v1616 = vpack.c.b16 %v1296, %v1292
    %v1617 = vpack.c.b16 %v1301, %v1297
    %v1618 = vpack.c.b16 %v1302, %v1298
    %v1619 = vpack.c.b16 %v1303, %v1299
    %v1620 = vpack.c.b16 %v1304, %v1300
    %v1621 = vpack.c.b16 %v1309, %v1305
    %v1622 = vpack.c.b16 %v1310, %v1306
    %v1623 = vpack.c.b16 %v1311, %v1307
    %v1624 = vpack.c.b16 %v1312, %v1308
    %v1625 = vpack.c.b16 %v1317, %v1313
    %v1626 = vpack.c.b16 %v1318, %v1314
    %v1627 = vpack.c.b16 %v1319, %v1315
    %v1628 = vpack.c.b16 %v1320, %v1316
    %v1629 = vpack.c.b16 %v1325, %v1321
    %v1630 = vpack.c.b16 %v1326, %v1322
    %v1631 = vpack.c.b16 %v1327, %v1323
    %v1632 = vpack.c.b16 %v1328, %v1324
    %v1633 = vpack.c.b16 %v1333, %v1329
    %v1634 = vpack.c.b16 %v1334, %v1330
    %v1635 = vpack.c.b16 %v1335, %v1331
    %v1636 = vpack.c.b16 %v1336, %v1332
    %v1637 = vpack.c.b16 %v1341, %v1337
    %v1638 = vpack.c.b16 %v1342, %v1338
    %v1639 = vpack.c.b16 %v1343, %v1339
    %v1640 = vpack.c.b16 %v1344, %v1340
    %v1641 = vpack.c.b16 %v1349, %v1345
    %v1642 = vpack.c.b16 %v1350, %v1346
    %v1643 = vpack.c.b16 %v1351, %v1347
    %v1644 = vpack.c.b16 %v1352, %v1348
    %v1645 = vpack.c.b16 %v1357, %v1353
    %v1646 = vpack.c.b16 %v1358, %v1354
    %v1647 = vpack.c.b16 %v1359, %v1355
    %v1648 = vpack.c.b16 %v1360, %v1356
    %v1649 = vpack.c.b16 %v1365, %v1361
    %v1650 = vpack.c.b16 %v1366, %v1362
    %v1651 = vpack.c.b16 %v1367, %v1363
    %v1652 = vpack.c.b16 %v1368, %v1364
    %v1653 = vpack.c.b16 %v1373, %v1369
    %v1654 = vpack.c.b16 %v1374, %v1370
    %v1655 = vpack.c.b16 %v1375, %v1371
    %v1656 = vpack.c.b16 %v1376, %v1372
    %v1657 = vpack.c.b16 %v1381, %v1377
    %v1658 = vpack.c.b16 %v1382, %v1378
    %v1659 = vpack.c.b16 %v1383, %v1379
    %v1660 = vpack.c.b16 %v1384, %v1380
    %v1661 = vpack.c.b16 %v1389, %v1385
    %v1662 = vpack.c.b16 %v1390, %v1386
    %v1663 = vpack.c.b16 %v1391, %v1387
    %v1664 = vpack.c.b16 %v1392, %v1388
    %v1665 = vpack.c.b16 %v1397, %v1393
    %v1666 = vpack.c.b16 %v1398, %v1394
    %v1667 = vpack.c.b16 %v1399, %v1395
    %v1668 = vpack.c.b16 %v1400, %v1396
    %v1669 = vpack.c.b16 %v1405, %v1401
    %v1670 = vpack.c.b16 %v1406, %v1402
    %v1671 = vpack.c.b16 %v1407, %v1403
    %v1672 = vpack.c.b16 %v1408, %v1404
    %v1673 = vpack.c.b16 %v1413, %v1409
    %v1674 = vpack.c.b16 %v1414, %v1410
    %v1675 = vpack.c.b16 %v1415, %v1411
    %v1676 = vpack.c.b16 %v1416, %v1412
    %v1677 = vpack.c.b16 %v1421, %v1417
    %v1678 = vpack.c.b16 %v1422, %v1418
    %v1679 = vpack.c.b16 %v1423, %v1419
    %v1680 = vpack.c.b16 %v1424, %v1420
    %v1681 = vpack.c.b16 %v1429, %v1425
    %v1682 = vpack.c.b16 %v1430, %v1426
    %v1683 = vpack.c.b16 %v1431, %v1427
    %v1684 = vpack.c.b16 %v1432, %v1428
    %v1685 = vpack.c.b16 %v1437, %v1433
    %v1686 = vpack.c.b16 %v1438, %v1434
    %v1687 = vpack.c.b16 %v1439, %v1435
    %v1688 = vpack.c.b16 %v1440, %v1436
    %v1689 = vpack.c.b16 %v1445, %v1441
    %v1690 = vpack.c.b16 %v1446, %v1442
    %v1691 = vpack.c.b16 %v1447, %v1443
    %v1692 = vpack.c.b16 %v1448, %v1444
    %v1693 = vpack.c.b16 %v1453, %v1449
    %v1694 = vpack.c.b16 %v1454, %v1450
    %v1695 = vpack.c.b16 %v1455, %v1451
    %v1696 = vpack.c.b16 %v1456, %v1452
    %v1697 = vpack.c.b16 %v1461, %v1457
    %v1698 = vpack.c.b16 %v1462, %v1458
    %v1699 = vpack.c.b16 %v1463, %v1459
    %v1700 = vpack.c.b16 %v1464, %v1460
    %v1701 = vpack.c.b16 %v1469, %v1465
    %v1702 = vpack.c.b16 %v1470, %v1466
    %v1703 = vpack.c.b16 %v1471, %v1467
    %v1704 = vpack.c.b16 %v1472, %v1468
    %v1705 = vpack.c.b16 %v1477, %v1473
    %v1706 = vpack.c.b16 %v1478, %v1474
    %v1707 = vpack.c.b16 %v1479, %v1475
    %v1708 = vpack.c.b16 %v1480, %v1476
    %v1709 = vpack.c.b16 %v1485, %v1481
    %v1710 = vpack.c.b16 %v1486, %v1482
    %v1711 = vpack.c.b16 %v1487, %v1483
    %v1712 = vpack.c.b16 %v1488, %v1484
    %v1713 = vpack.c.b16 %v1493, %v1489
    %v1714 = vpack.c.b16 %v1494, %v1490
    %v1715 = vpack.c.b16 %v1495, %v1491
    %v1716 = vpack.c.b16 %v1496, %v1492
    %v1717 = vpack.c.b16 %v1501, %v1497
    %v1718 = vpack.c.b16 %v1502, %v1498
    %v1719 = vpack.c.b16 %v1503, %v1499
    %v1720 = vpack.c.b16 %v1504, %v1500
    %v1721 = vpack.c.b16 %v1509, %v1505
    %v1722 = vpack.c.b16 %v1510, %v1506
    %v1723 = vpack.c.b16 %v1511, %v1507
    %v1724 = vpack.c.b16 %v1512, %v1508
    %v1725 = vpack.c.b16 %v1517, %v1513
    %v1726 = vpack.c.b16 %v1518, %v1514
    %v1727 = vpack.c.b16 %v1519, %v1515
    %v1728 = vpack.c.b16 %v1520, %v1516
    %v1729 = vpack.c.b16 %v1525, %v1521
    %v1730 = vpack.c.b16 %v1526, %v1522
    %v1731 = vpack.c.b16 %v1527, %v1523
    %v1732 = vpack.c.b16 %v1528, %v1524
    %v1733 = vpack.c.b16 %v1533, %v1529
    %v1734 = vpack.c.b16 %v1534, %v1530
    %v1735 = vpack.c.b16 %v1535, %v1531
    %v1736 = vpack.c.b16 %v1536, %v1532
    %v1737 = vpack.c.b16 %v1541, %v1537
    %v1738 = vpack.c.b16 %v1542, %v1538
    %v1739 = vpack.c.b16 %v1543, %v1539
    %v1740 = vpack.c.b16 %v1544, %v1540
    %v1741 = vpack.c.b16 %v1549, %v1545
    %v1742 = vpack.c.b16 %v1550, %v1546
    %v1743 = vpack.c.b16 %v1551, %v1547
    %v1744 = vpack.c.b16 %v1552, %v1548
    %1937 = vmatpush.bf16.msra.mxu0 %v1581
    %1938 = vmatpush.bf16.msra.mxu0 %v1577
    %1939 = vmatpush.bf16.msra.mxu0 %v1573
    %1940 = vmatpush.bf16.msra.mxu0 %v1569
    %1941 = vmatpush.bf16.msra.mxu0 %v1565
    %1942 = vmatpush.bf16.msra.mxu0 %v1561
    %1943 = vmatpush.bf16.msra.mxu0 %v1557
    %1944 = vmatpush.bf16.msra.mxu0 %v1553
    %1945 = vmatmul.bf16.gmra.mxu0 %v769
    %v1946 = vpop.f32.mrf.mxu0
    %v1947 = vadd.f32 %v969, %v1946
    %v1948 = vpop.f32.mrf.mxu0
    %1949 = vdwg.mxu0
    %1950 = vmatpush.bf16.msra.mxu0 %v1613
    %1951 = vmatpush.bf16.msra.mxu0 %v1609
    %1952 = vmatpush.bf16.msra.mxu0 %v1605
    %1953 = vmatpush.bf16.msra.mxu0 %v1601
    %1954 = vmatpush.bf16.msra.mxu0 %v1597
    %1955 = vmatpush.bf16.msra.mxu0 %v1593
    %1956 = vmatpush.bf16.msra.mxu0 %v1589
    %1957 = vmatpush.bf16.msra.mxu0 %v1585
    %1958 = vmatmul.bf16.gmra.mxu0 %v770
    %v1959 = vpop.f32.mrf.mxu0
    %v1960 = vadd.f32 %v1947, %v1959
    %v1961 = vpop.f32.mrf.mxu0
    %1962 = vdwg.mxu0
    %1963 = vmatpush.bf16.msra.mxu0 %v1645
    %1964 = vmatpush.bf16.msra.mxu0 %v1641
    %1965 = vmatpush.bf16.msra.mxu0 %v1637
    %1966 = vmatpush.bf16.msra.mxu0 %v1633
    %1967 = vmatpush.bf16.msra.mxu0 %v1629
    %1968 = vmatpush.bf16.msra.mxu0 %v1625
    %1969 = vmatpush.bf16.msra.mxu0 %v1621
    %1970 = vmatpush.bf16.msra.mxu0 %v1617
    %1971 = vmatmul.bf16.gmra.mxu0 %v771
    %v1972 = vpop.f32.mrf.mxu0
    %v1973 = vadd.f32 %v1960, %v1972
    %v1974 = vpop.f32.mrf.mxu0
    %1975 = vdwg.mxu0
    %1976 = vmatpush.bf16.msra.mxu0 %v1677
    %1977 = vmatpush.bf16.msra.mxu0 %v1673
    %1978 = vmatpush.bf16.msra.mxu0 %v1669
    %1979 = vmatpush.bf16.msra.mxu0 %v1665
    %1980 = vmatpush.bf16.msra.mxu0 %v1661
    %1981 = vmatpush.bf16.msra.mxu0 %v1657
    %1982 = vmatpush.bf16.msra.mxu0 %v1653
    %1983 = vmatpush.bf16.msra.mxu0 %v1649
    %1984 = vmatmul.bf16.gmra.mxu0 %v772
    %v1985 = vpop.f32.mrf.mxu0
    %v1986 = vadd.f32 %v1973, %v1985
    %v1987 = vpop.f32.mrf.mxu0
    %1988 = vdwg.mxu0
    %1989 = vmatpush.bf16.msra.mxu0 %v1709
    %1990 = vmatpush.bf16.msra.mxu0 %v1705
    %1991 = vmatpush.bf16.msra.mxu0 %v1701
    %1992 = vmatpush.bf16.msra.mxu0 %v1697
    %1993 = vmatpush.bf16.msra.mxu0 %v1693
    %1994 = vmatpush.bf16.msra.mxu0 %v1689
    %1995 = vmatpush.bf16.msra.mxu0 %v1685
    %1996 = vmatpush.bf16.msra.mxu0 %v1681
    %1997 = vmatmul.bf16.gmra.mxu0 %v773
    %v1998 = vpop.f32.mrf.mxu0
    %v1999 = vadd.f32 %v1986, %v1998
    %v2000 = vpop.f32.mrf.mxu0
    %2001 = vdwg.mxu0
    %2002 = vmatpush.bf16.msra.mxu0 %v1741
    %2003 = vmatpush.bf16.msra.mxu0 %v1737
    %2004 = vmatpush.bf16.msra.mxu0 %v1733
    %2005 = vmatpush.bf16.msra.mxu0 %v1729
    %2006 = vmatpush.bf16.msra.mxu0 %v1725
    %2007 = vmatpush.bf16.msra.mxu0 %v1721
    %2008 = vmatpush.bf16.msra.mxu0 %v1717
    %2009 = vmatpush.bf16.msra.mxu0 %v1713
    %2010 = vmatmul.bf16.gmra.mxu0 %v774
    %v2011 = vpop.f32.mrf.mxu0
    %v2012 = vadd.f32 %v1999, %v2011
    %v2013 = vpop.f32.mrf.mxu0
    %2014 = vdwg.mxu0
    %2015 = vmatpush.bf16.msra.mxu0 %v1582
    %2016 = vmatpush.bf16.msra.mxu0 %v1578
    %2017 = vmatpush.bf16.msra.mxu0 %v1574
    %2018 = vmatpush.bf16.msra.mxu0 %v1570
    %2019 = vmatpush.bf16.msra.mxu0 %v1566
    %2020 = vmatpush.bf16.msra.mxu0 %v1562
    %2021 = vmatpush.bf16.msra.mxu0 %v1558
    %2022 = vmatpush.bf16.msra.mxu0 %v1554
    %2023 = vmatmul.bf16.gmra.mxu0 %v769
    %v2024 = vpop.f32.mrf.mxu0
    %v2025 = vadd.f32 %v970, %v2024
    %v2026 = vpop.f32.mrf.mxu0
    %2027 = vdwg.mxu0
    %2028 = vmatpush.bf16.msra.mxu0 %v1614
    %2029 = vmatpush.bf16.msra.mxu0 %v1610
    %2030 = vmatpush.bf16.msra.mxu0 %v1606
    %2031 = vmatpush.bf16.msra.mxu0 %v1602
    %2032 = vmatpush.bf16.msra.mxu0 %v1598
    %2033 = vmatpush.bf16.msra.mxu0 %v1594
    %2034 = vmatpush.bf16.msra.mxu0 %v1590
    %2035 = vmatpush.bf16.msra.mxu0 %v1586
    %2036 = vmatmul.bf16.gmra.mxu0 %v770
    %v2037 = vpop.f32.mrf.mxu0
    %v2038 = vadd.f32 %v2025, %v2037
    %v2039 = vpop.f32.mrf.mxu0
    %2040 = vdwg.mxu0
    %2041 = vmatpush.bf16.msra.mxu0 %v1646
    %2042 = vmatpush.bf16.msra.mxu0 %v1642
    %2043 = vmatpush.bf16.msra.mxu0 %v1638
    %2044 = vmatpush.bf16.msra.mxu0 %v1634
    %2045 = vmatpush.bf16.msra.mxu0 %v1630
    %2046 = vmatpush.bf16.msra.mxu0 %v1626
    %2047 = vmatpush.bf16.msra.mxu0 %v1622
    %2048 = vmatpush.bf16.msra.mxu0 %v1618
    %2049 = vmatmul.bf16.gmra.mxu0 %v771
    %v2050 = vpop.f32.mrf.mxu0
    %v2051 = vadd.f32 %v2038, %v2050
    %v2052 = vpop.f32.mrf.mxu0
    %2053 = vdwg.mxu0
    %2054 = vmatpush.bf16.msra.mxu0 %v1678
    %2055 = vmatpush.bf16.msra.mxu0 %v1674
    %2056 = vmatpush.bf16.msra.mxu0 %v1670
    %2057 = vmatpush.bf16.msra.mxu0 %v1666
    %2058 = vmatpush.bf16.msra.mxu0 %v1662
    %2059 = vmatpush.bf16.msra.mxu0 %v1658
    %2060 = vmatpush.bf16.msra.mxu0 %v1654
    %2061 = vmatpush.bf16.msra.mxu0 %v1650
    %2062 = vmatmul.bf16.gmra.mxu0 %v772
    %v2063 = vpop.f32.mrf.mxu0
    %v2064 = vadd.f32 %v2051, %v2063
    %v2065 = vpop.f32.mrf.mxu0
    %2066 = vdwg.mxu0
    %2067 = vmatpush.bf16.msra.mxu0 %v1710
    %2068 = vmatpush.bf16.msra.mxu0 %v1706
    %2069 = vmatpush.bf16.msra.mxu0 %v1702
    %2070 = vmatpush.bf16.msra.mxu0 %v1698
    %2071 = vmatpush.bf16.msra.mxu0 %v1694
    %2072 = vmatpush.bf16.msra.mxu0 %v1690
    %2073 = vmatpush.bf16.msra.mxu0 %v1686
    %2074 = vmatpush.bf16.msra.mxu0 %v1682
    %2075 = vmatmul.bf16.gmra.mxu0 %v773
    %v2076 = vpop.f32.mrf.mxu0
    %v2077 = vadd.f32 %v2064, %v2076
    %v2078 = vpop.f32.mrf.mxu0
    %2079 = vdwg.mxu0
    %2080 = vmatpush.bf16.msra.mxu0 %v1742
    %2081 = vmatpush.bf16.msra.mxu0 %v1738
    %2082 = vmatpush.bf16.msra.mxu0 %v1734
    %2083 = vmatpush.bf16.msra.mxu0 %v1730
    %2084 = vmatpush.bf16.msra.mxu0 %v1726
    %2085 = vmatpush.bf16.msra.mxu0 %v1722
    %2086 = vmatpush.bf16.msra.mxu0 %v1718
    %2087 = vmatpush.bf16.msra.mxu0 %v1714
    %2088 = vmatmul.bf16.gmra.mxu0 %v774
    %v2089 = vpop.f32.mrf.mxu0
    %v2090 = vadd.f32 %v2077, %v2089
    %v2091 = vpop.f32.mrf.mxu0
    %2092 = vdwg.mxu0
    %2093 = vmatpush.bf16.msra.mxu0 %v1583
    %2094 = vmatpush.bf16.msra.mxu0 %v1579
    %2095 = vmatpush.bf16.msra.mxu0 %v1575
    %2096 = vmatpush.bf16.msra.mxu0 %v1571
    %2097 = vmatpush.bf16.msra.mxu0 %v1567
    %2098 = vmatpush.bf16.msra.mxu0 %v1563
    %2099 = vmatpush.bf16.msra.mxu0 %v1559
    %2100 = vmatpush.bf16.msra.mxu0 %v1555
    %2101 = vmatmul.bf16.gmra.mxu0 %v769
    %v2102 = vpop.f32.mrf.mxu0
    %v2103 = vadd.f32 %v971, %v2102
    %v2104 = vpop.f32.mrf.mxu0
    %2105 = vdwg.mxu0
    %2106 = vmatpush.bf16.msra.mxu0 %v1615
    %2107 = vmatpush.bf16.msra.mxu0 %v1611
    %2108 = vmatpush.bf16.msra.mxu0 %v1607
    %2109 = vmatpush.bf16.msra.mxu0 %v1603
    %2110 = vmatpush.bf16.msra.mxu0 %v1599
    %2111 = vmatpush.bf16.msra.mxu0 %v1595
    %2112 = vmatpush.bf16.msra.mxu0 %v1591
    %2113 = vmatpush.bf16.msra.mxu0 %v1587
    %2114 = vmatmul.bf16.gmra.mxu0 %v770
    %v2115 = vpop.f32.mrf.mxu0
    %v2116 = vadd.f32 %v2103, %v2115
    %v2117 = vpop.f32.mrf.mxu0
    %2118 = vdwg.mxu0
    %2119 = vmatpush.bf16.msra.mxu0 %v1647
    %2120 = vmatpush.bf16.msra.mxu0 %v1643
    %2121 = vmatpush.bf16.msra.mxu0 %v1639
    %2122 = vmatpush.bf16.msra.mxu0 %v1635
    %2123 = vmatpush.bf16.msra.mxu0 %v1631
    %2124 = vmatpush.bf16.msra.mxu0 %v1627
    %2125 = vmatpush.bf16.msra.mxu0 %v1623
    %2126 = vmatpush.bf16.msra.mxu0 %v1619
    %2127 = vmatmul.bf16.gmra.mxu0 %v771
    %v2128 = vpop.f32.mrf.mxu0
    %v2129 = vadd.f32 %v2116, %v2128
    %v2130 = vpop.f32.mrf.mxu0
    %2131 = vdwg.mxu0
    %2132 = vmatpush.bf16.msra.mxu0 %v1679
    %2133 = vmatpush.bf16.msra.mxu0 %v1675
    %2134 = vmatpush.bf16.msra.mxu0 %v1671
    %2135 = vmatpush.bf16.msra.mxu0 %v1667
    %2136 = vmatpush.bf16.msra.mxu0 %v1663
    %2137 = vmatpush.bf16.msra.mxu0 %v1659
    %2138 = vmatpush.bf16.msra.mxu0 %v1655
    %2139 = vmatpush.bf16.msra.mxu0 %v1651
    %2140 = vmatmul.bf16.gmra.mxu0 %v772
    %v2141 = vpop.f32.mrf.mxu0
    %v2142 = vadd.f32 %v2129, %v2141
    %v2143 = vpop.f32.mrf.mxu0
    %2144 = vdwg.mxu0
    %2145 = vmatpush.bf16.msra.mxu0 %v1711
    %2146 = vmatpush.bf16.msra.mxu0 %v1707
    %2147 = vmatpush.bf16.msra.mxu0 %v1703
    %2148 = vmatpush.bf16.msra.mxu0 %v1699
    %2149 = vmatpush.bf16.msra.mxu0 %v1695
    %2150 = vmatpush.bf16.msra.mxu0 %v1691
    %2151 = vmatpush.bf16.msra.mxu0 %v1687
    %2152 = vmatpush.bf16.msra.mxu0 %v1683
    %2153 = vmatmul.bf16.gmra.mxu0 %v773
    %v2154 = vpop.f32.mrf.mxu0
    %v2155 = vadd.f32 %v2142, %v2154
    %v2156 = vpop.f32.mrf.mxu0
    %2157 = vdwg.mxu0
    %2158 = vmatpush.bf16.msra.mxu0 %v1743
    %2159 = vmatpush.bf16.msra.mxu0 %v1739
    %2160 = vmatpush.bf16.msra.mxu0 %v1735
    %2161 = vmatpush.bf16.msra.mxu0 %v1731
    %2162 = vmatpush.bf16.msra.mxu0 %v1727
    %2163 = vmatpush.bf16.msra.mxu0 %v1723
    %2164 = vmatpush.bf16.msra.mxu0 %v1719
    %2165 = vmatpush.bf16.msra.mxu0 %v1715
    %2166 = vmatmul.bf16.gmra.mxu0 %v774
    %v2167 = vpop.f32.mrf.mxu0
    %v2168 = vadd.f32 %v2155, %v2167
    %v2169 = vpop.f32.mrf.mxu0
    %2170 = vdwg.mxu0
    %2171 = vmatpush.bf16.msra.mxu0 %v1584
    %2172 = vmatpush.bf16.msra.mxu0 %v1580
    %2173 = vmatpush.bf16.msra.mxu0 %v1576
    %2174 = vmatpush.bf16.msra.mxu0 %v1572
    %2175 = vmatpush.bf16.msra.mxu0 %v1568
    %2176 = vmatpush.bf16.msra.mxu0 %v1564
    %2177 = vmatpush.bf16.msra.mxu0 %v1560
    %2178 = vmatpush.bf16.msra.mxu0 %v1556
    %2179 = vmatmul.bf16.gmra.mxu0 %v769
    %v2180 = vpop.f32.mrf.mxu0
    %v2181 = vadd.f32 %v972, %v2180
    %v2182 = vpop.f32.mrf.mxu0
    %2183 = vdwg.mxu0
    %2184 = vmatpush.bf16.msra.mxu0 %v1616
    %2185 = vmatpush.bf16.msra.mxu0 %v1612
    %2186 = vmatpush.bf16.msra.mxu0 %v1608
    %2187 = vmatpush.bf16.msra.mxu0 %v1604
    %2188 = vmatpush.bf16.msra.mxu0 %v1600
    %2189 = vmatpush.bf16.msra.mxu0 %v1596
    %2190 = vmatpush.bf16.msra.mxu0 %v1592
    %2191 = vmatpush.bf16.msra.mxu0 %v1588
    %2192 = vmatmul.bf16.gmra.mxu0 %v770
    %v2193 = vpop.f32.mrf.mxu0
    %v2194 = vadd.f32 %v2181, %v2193
    %v2195 = vpop.f32.mrf.mxu0
    %2196 = vdwg.mxu0
    %2197 = vmatpush.bf16.msra.mxu0 %v1648
    %2198 = vmatpush.bf16.msra.mxu0 %v1644
    %2199 = vmatpush.bf16.msra.mxu0 %v1640
    %2200 = vmatpush.bf16.msra.mxu0 %v1636
    %2201 = vmatpush.bf16.msra.mxu0 %v1632
    %2202 = vmatpush.bf16.msra.mxu0 %v1628
    %2203 = vmatpush.bf16.msra.mxu0 %v1624
    %2204 = vmatpush.bf16.msra.mxu0 %v1620
    %2205 = vmatmul.bf16.gmra.mxu0 %v771
    %v2206 = vpop.f32.mrf.mxu0
    %v2207 = vadd.f32 %v2194, %v2206
    %v2208 = vpop.f32.mrf.mxu0
    %2209 = vdwg.mxu0
    %2210 = vmatpush.bf16.msra.mxu0 %v1680
    %2211 = vmatpush.bf16.msra.mxu0 %v1676
    %2212 = vmatpush.bf16.msra.mxu0 %v1672
    %2213 = vmatpush.bf16.msra.mxu0 %v1668
    %2214 = vmatpush.bf16.msra.mxu0 %v1664
    %2215 = vmatpush.bf16.msra.mxu0 %v1660
    %2216 = vmatpush.bf16.msra.mxu0 %v1656
    %2217 = vmatpush.bf16.msra.mxu0 %v1652
    %2218 = vmatmul.bf16.gmra.mxu0 %v772
    %v2219 = vpop.f32.mrf.mxu0
    %v2220 = vadd.f32 %v2207, %v2219
    %v2221 = vpop.f32.mrf.mxu0
    %2222 = vdwg.mxu0
    %2223 = vmatpush.bf16.msra.mxu0 %v1712
    %2224 = vmatpush.bf16.msra.mxu0 %v1708
    %2225 = vmatpush.bf16.msra.mxu0 %v1704
    %2226 = vmatpush.bf16.msra.mxu0 %v1700
    %2227 = vmatpush.bf16.msra.mxu0 %v1696
    %2228 = vmatpush.bf16.msra.mxu0 %v1692
    %2229 = vmatpush.bf16.msra.mxu0 %v1688
    %2230 = vmatpush.bf16.msra.mxu0 %v1684
    %2231 = vmatmul.bf16.gmra.mxu0 %v773
    %v2232 = vpop.f32.mrf.mxu0
    %v2233 = vadd.f32 %v2220, %v2232
    %v2234 = vpop.f32.mrf.mxu0
    %2235 = vdwg.mxu0
    %2236 = vmatpush.bf16.msra.mxu0 %v1744
    %2237 = vmatpush.bf16.msra.mxu0 %v1740
    %2238 = vmatpush.bf16.msra.mxu0 %v1736
    %2239 = vmatpush.bf16.msra.mxu0 %v1732
    %2240 = vmatpush.bf16.msra.mxu0 %v1728
    %2241 = vmatpush.bf16.msra.mxu0 %v1724
    %2242 = vmatpush.bf16.msra.mxu0 %v1720
    %2243 = vmatpush.bf16.msra.mxu0 %v1716
    %2244 = vmatmul.bf16.gmra.mxu0 %v774
    %v2245 = vpop.f32.mrf.mxu0
    %v2246 = vadd.f32 %v2233, %v2245
    %v2247 = vpop.f32.mrf.mxu0
    %2248 = vdwg.mxu0
    %v2249 = vmax.f32 %v2012, 0.0
    %v2250 = vmax.f32 %v2090, 0.0
    %v2251 = vmax.f32 %v2168, 0.0
    %v2252 = vmax.f32 %v2246, 0.0
    %v2253 = vpack.c.bf16 %v2249, %v2249
    %v2254 = vpack.c.bf16 %v2250, %v2250
    %v2255 = vpack.c.bf16 %v2251, %v2251
    %v2256 = vpack.c.bf16 %v2252, %v2252
    %v2257 = vld [vmem:[#allocation5] sm:$0xff]
    %v2258 = vld [vmem:[#allocation5 + $0x8] sm:$0xff]
    %v2259 = vld [vmem:[#allocation5 + $0x10] sm:$0xff]
    %v2260 = vld [vmem:[#allocation5 + $0x18] sm:$0xff]
    %v2261 = vld [vmem:[#allocation5 + $0x20] sm:$0xff]
    %v2262 = vld [vmem:[#allocation5 + $0x28] sm:$0xff]
    %v2263 = vld [vmem:[#allocation5 + $0x30] sm:$0xff]
    %v2264 = vld [vmem:[#allocation5 + $0x38] sm:$0xff]
    %v2265 = vld [vmem:[#allocation5 + $0x40] sm:$0xff]
    %v2266 = vld [vmem:[#allocation5 + $0x48] sm:$0xff]
    %v2267 = vld [vmem:[#allocation5 + $0x50] sm:$0xff]
    %v2268 = vld [vmem:[#allocation5 + $0x58] sm:$0xff]
    %v2269 = vld [vmem:[#allocation5 + $0x60] sm:$0xff]
    %v2270 = vld [vmem:[#allocation5 + $0x68] sm:$0xff]
    %v2271 = vld [vmem:[#allocation5 + $0x70] sm:$0xff]
    %v2272 = vld [vmem:[#allocation5 + $0x78] sm:$0xff]
    %v2273 = vld [vmem:[#allocation5 + $0x80] sm:$0xff]
    %v2274 = vld [vmem:[#allocation5 + $0x88] sm:$0xff]
    %v2275 = vld [vmem:[#allocation5 + $0x90] sm:$0xff]
    %v2276 = vld [vmem:[#allocation5 + $0x98] sm:$0xff]
    %v2277 = vld [vmem:[#allocation5 + $0xa0] sm:$0xff]
    %v2278 = vld [vmem:[#allocation5 + $0xa8] sm:$0xff]
    %v2279 = vld [vmem:[#allocation5 + $0xb0] sm:$0xff]
    %v2280 = vld [vmem:[#allocation5 + $0xb8] sm:$0xff]
    %v2281 = vld [vmem:[#allocation5 + $0xc0] sm:$0xff]
    %v2282 = vld [vmem:[#allocation5 + $0xc8] sm:$0xff]
    %v2283 = vld [vmem:[#allocation5 + $0xd0] sm:$0xff]
    %v2284 = vld [vmem:[#allocation5 + $0xd8] sm:$0xff]
    %v2285 = vld [vmem:[#allocation5 + $0xe0] sm:$0xff]
    %v2286 = vld [vmem:[#allocation5 + $0xe8] sm:$0xff]
    %v2287 = vld [vmem:[#allocation5 + $0xf0] sm:$0xff]
    %v2288 = vld [vmem:[#allocation5 + $0xf8] sm:$0xff]
    %v2289 = vld [vmem:[#allocation5 + $0x100] sm:$0xff]
    %v2290 = vld [vmem:[#allocation5 + $0x108] sm:$0xff]
    %v2291 = vld [vmem:[#allocation5 + $0x110] sm:$0xff]
    %v2292 = vld [vmem:[#allocation5 + $0x118] sm:$0xff]
    %v2293 = vld [vmem:[#allocation5 + $0x120] sm:$0xff]
    %v2294 = vld [vmem:[#allocation5 + $0x128] sm:$0xff]
    %v2295 = vld [vmem:[#allocation5 + $0x130] sm:$0xff]
    %v2296 = vld [vmem:[#allocation5 + $0x138] sm:$0xff]
    %v2297 = vld [vmem:[#allocation5 + $0x140] sm:$0xff]
    %v2298 = vld [vmem:[#allocation5 + $0x148] sm:$0xff]
    %v2299 = vld [vmem:[#allocation5 + $0x150] sm:$0xff]
    %v2300 = vld [vmem:[#allocation5 + $0x158] sm:$0xff]
    %v2301 = vld [vmem:[#allocation5 + $0x160] sm:$0xff]
    %v2302 = vld [vmem:[#allocation5 + $0x168] sm:$0xff]
    %v2303 = vld [vmem:[#allocation5 + $0x170] sm:$0xff]
    %v2304 = vld [vmem:[#allocation5 + $0x178] sm:$0xff]
    %v2305 = vld [vmem:[#allocation5 + $0x180] sm:$0xff]
    %v2306 = vld [vmem:[#allocation5 + $0x188] sm:$0xff]
    %v2307 = vld [vmem:[#allocation5 + $0x190] sm:$0xff]
    %v2308 = vld [vmem:[#allocation5 + $0x198] sm:$0xff]
    %v2309 = vld [vmem:[#allocation5 + $0x1a0] sm:$0xff]
    %v2310 = vld [vmem:[#allocation5 + $0x1a8] sm:$0xff]
    %v2311 = vld [vmem:[#allocation5 + $0x1b0] sm:$0xff]
    %v2312 = vld [vmem:[#allocation5 + $0x1b8] sm:$0xff]
    %v2313 = vld [vmem:[#allocation5 + $0x1c0] sm:$0xff]
    %v2314 = vld [vmem:[#allocation5 + $0x1c8] sm:$0xff]
    %v2315 = vld [vmem:[#allocation5 + $0x1d0] sm:$0xff]
    %v2316 = vld [vmem:[#allocation5 + $0x1d8] sm:$0xff]
    %v2317 = vld [vmem:[#allocation5 + $0x1e0] sm:$0xff]
    %v2318 = vld [vmem:[#allocation5 + $0x1e8] sm:$0xff]
    %v2319 = vld [vmem:[#allocation5 + $0x1f0] sm:$0xff]
    %v2320 = vld [vmem:[#allocation5 + $0x1f8] sm:$0xff]
    %v2385 = vunpack.c.l.b16 %v2257
    %v2386 = vunpack.c.h.b16 %v2257
    %v2387 = vunpack.c.l.b16 %v2258
    %v2388 = vunpack.c.h.b16 %v2258
    %v2389 = vunpack.c.l.b16 %v2259
    %v2390 = vunpack.c.h.b16 %v2259
    %v2391 = vunpack.c.l.b16 %v2260
    %v2392 = vunpack.c.h.b16 %v2260
    %v2393 = vunpack.c.l.b16 %v2261
    %v2394 = vunpack.c.h.b16 %v2261
    %v2395 = vunpack.c.l.b16 %v2262
    %v2396 = vunpack.c.h.b16 %v2262
    %v2397 = vunpack.c.l.b16 %v2263
    %v2398 = vunpack.c.h.b16 %v2263
    %v2399 = vunpack.c.l.b16 %v2264
    %v2400 = vunpack.c.h.b16 %v2264
    %v2401 = vunpack.c.l.b16 %v2265
    %v2402 = vunpack.c.h.b16 %v2265
    %v2403 = vunpack.c.l.b16 %v2266
    %v2404 = vunpack.c.h.b16 %v2266
    %v2405 = vunpack.c.l.b16 %v2267
    %v2406 = vunpack.c.h.b16 %v2267
    %v2407 = vunpack.c.l.b16 %v2268
    %v2408 = vunpack.c.h.b16 %v2268
    %v2409 = vunpack.c.l.b16 %v2269
    %v2410 = vunpack.c.h.b16 %v2269
    %v2411 = vunpack.c.l.b16 %v2270
    %v2412 = vunpack.c.h.b16 %v2270
    %v2413 = vunpack.c.l.b16 %v2271
    %v2414 = vunpack.c.h.b16 %v2271
    %v2415 = vunpack.c.l.b16 %v2272
    %v2416 = vunpack.c.h.b16 %v2272
    %v2417 = vunpack.c.l.b16 %v2273
    %v2418 = vunpack.c.h.b16 %v2273
    %v2419 = vunpack.c.l.b16 %v2274
    %v2420 = vunpack.c.h.b16 %v2274
    %v2421 = vunpack.c.l.b16 %v2275
    %v2422 = vunpack.c.h.b16 %v2275
    %v2423 = vunpack.c.l.b16 %v2276
    %v2424 = vunpack.c.h.b16 %v2276
    %v2425 = vunpack.c.l.b16 %v2277
    %v2426 = vunpack.c.h.b16 %v2277
    %v2427 = vunpack.c.l.b16 %v2278
    %v2428 = vunpack.c.h.b16 %v2278
    %v2429 = vunpack.c.l.b16 %v2279
    %v2430 = vunpack.c.h.b16 %v2279
    %v2431 = vunpack.c.l.b16 %v2280
    %v2432 = vunpack.c.h.b16 %v2280
    %v2433 = vunpack.c.l.b16 %v2281
    %v2434 = vunpack.c.h.b16 %v2281
    %v2435 = vunpack.c.l.b16 %v2282
    %v2436 = vunpack.c.h.b16 %v2282
    %v2437 = vunpack.c.l.b16 %v2283
    %v2438 = vunpack.c.h.b16 %v2283
    %v2439 = vunpack.c.l.b16 %v2284
    %v2440 = vunpack.c.h.b16 %v2284
    %v2441 = vunpack.c.l.b16 %v2285
    %v2442 = vunpack.c.h.b16 %v2285
    %v2443 = vunpack.c.l.b16 %v2286
    %v2444 = vunpack.c.h.b16 %v2286
    %v2445 = vunpack.c.l.b16 %v2287
    %v2446 = vunpack.c.h.b16 %v2287
    %v2447 = vunpack.c.l.b16 %v2288
    %v2448 = vunpack.c.h.b16 %v2288
    %v2449 = vunpack.c.l.b16 %v2289
    %v2450 = vunpack.c.h.b16 %v2289
    %v2451 = vunpack.c.l.b16 %v2290
    %v2452 = vunpack.c.h.b16 %v2290
    %v2453 = vunpack.c.l.b16 %v2291
    %v2454 = vunpack.c.h.b16 %v2291
    %v2455 = vunpack.c.l.b16 %v2292
    %v2456 = vunpack.c.h.b16 %v2292
    %v2457 = vunpack.c.l.b16 %v2293
    %v2458 = vunpack.c.h.b16 %v2293
    %v2459 = vunpack.c.l.b16 %v2294
    %v2460 = vunpack.c.h.b16 %v2294
    %v2461 = vunpack.c.l.b16 %v2295
    %v2462 = vunpack.c.h.b16 %v2295
    %v2463 = vunpack.c.l.b16 %v2296
    %v2464 = vunpack.c.h.b16 %v2296
    %v2465 = vunpack.c.l.b16 %v2297
    %v2466 = vunpack.c.h.b16 %v2297
    %v2467 = vunpack.c.l.b16 %v2298
    %v2468 = vunpack.c.h.b16 %v2298
    %v2469 = vunpack.c.l.b16 %v2299
    %v2470 = vunpack.c.h.b16 %v2299
    %v2471 = vunpack.c.l.b16 %v2300
    %v2472 = vunpack.c.h.b16 %v2300
    %v2473 = vunpack.c.l.b16 %v2301
    %v2474 = vunpack.c.h.b16 %v2301
    %v2475 = vunpack.c.l.b16 %v2302
    %v2476 = vunpack.c.h.b16 %v2302
    %v2477 = vunpack.c.l.b16 %v2303
    %v2478 = vunpack.c.h.b16 %v2303
    %v2479 = vunpack.c.l.b16 %v2304
    %v2480 = vunpack.c.h.b16 %v2304
    %v2481 = vunpack.c.l.b16 %v2305
    %v2482 = vunpack.c.h.b16 %v2305
    %v2483 = vunpack.c.l.b16 %v2306
    %v2484 = vunpack.c.h.b16 %v2306
    %v2485 = vunpack.c.l.b16 %v2307
    %v2486 = vunpack.c.h.b16 %v2307
    %v2487 = vunpack.c.l.b16 %v2308
    %v2488 = vunpack.c.h.b16 %v2308
    %v2489 = vunpack.c.l.b16 %v2309
    %v2490 = vunpack.c.h.b16 %v2309
    %v2491 = vunpack.c.l.b16 %v2310
    %v2492 = vunpack.c.h.b16 %v2310
    %v2493 = vunpack.c.l.b16 %v2311
    %v2494 = vunpack.c.h.b16 %v2311
    %v2495 = vunpack.c.l.b16 %v2312
    %v2496 = vunpack.c.h.b16 %v2312
    %v2497 = vunpack.c.l.b16 %v2313
    %v2498 = vunpack.c.h.b16 %v2313
    %v2499 = vunpack.c.l.b16 %v2314
    %v2500 = vunpack.c.h.b16 %v2314
    %v2501 = vunpack.c.l.b16 %v2315
    %v2502 = vunpack.c.h.b16 %v2315
    %v2503 = vunpack.c.l.b16 %v2316
    %v2504 = vunpack.c.h.b16 %v2316
    %v2505 = vunpack.c.l.b16 %v2317
    %v2506 = vunpack.c.h.b16 %v2317
    %v2507 = vunpack.c.l.b16 %v2318
    %v2508 = vunpack.c.h.b16 %v2318
    %v2509 = vunpack.c.l.b16 %v2319
    %v2510 = vunpack.c.h.b16 %v2319
    %v2511 = vunpack.c.l.b16 %v2320
    %v2512 = vunpack.c.h.b16 %v2320
    %v2513 = vpack.c.b16 %v2387, %v2385
    %v2514 = vpack.c.b16 %v2388, %v2386
    %v2515 = vpack.c.b16 %v2391, %v2389
    %v2516 = vpack.c.b16 %v2392, %v2390
    %v2517 = vpack.c.b16 %v2395, %v2393
    %v2518 = vpack.c.b16 %v2396, %v2394
    %v2519 = vpack.c.b16 %v2399, %v2397
    %v2520 = vpack.c.b16 %v2400, %v2398
    %v2521 = vpack.c.b16 %v2403, %v2401
    %v2522 = vpack.c.b16 %v2404, %v2402
    %v2523 = vpack.c.b16 %v2407, %v2405
    %v2524 = vpack.c.b16 %v2408, %v2406
    %v2525 = vpack.c.b16 %v2411, %v2409
    %v2526 = vpack.c.b16 %v2412, %v2410
    %v2527 = vpack.c.b16 %v2415, %v2413
    %v2528 = vpack.c.b16 %v2416, %v2414
    %v2529 = vpack.c.b16 %v2419, %v2417
    %v2530 = vpack.c.b16 %v2420, %v2418
    %v2531 = vpack.c.b16 %v2423, %v2421
    %v2532 = vpack.c.b16 %v2424, %v2422
    %v2533 = vpack.c.b16 %v2427, %v2425
    %v2534 = vpack.c.b16 %v2428, %v2426
    %v2535 = vpack.c.b16 %v2431, %v2429
    %v2536 = vpack.c.b16 %v2432, %v2430
    %v2537 = vpack.c.b16 %v2435, %v2433
    %v2538 = vpack.c.b16 %v2436, %v2434
    %v2539 = vpack.c.b16 %v2439, %v2437
    %v2540 = vpack.c.b16 %v2440, %v2438
    %v2541 = vpack.c.b16 %v2443, %v2441
    %v2542 = vpack.c.b16 %v2444, %v2442
    %v2543 = vpack.c.b16 %v2447, %v2445
    %v2544 = vpack.c.b16 %v2448, %v2446
    %v2545 = vpack.c.b16 %v2451, %v2449
    %v2546 = vpack.c.b16 %v2452, %v2450
    %v2547 = vpack.c.b16 %v2455, %v2453
    %v2548 = vpack.c.b16 %v2456, %v2454
    %v2549 = vpack.c.b16 %v2459, %v2457
    %v2550 = vpack.c.b16 %v2460, %v2458
    %v2551 = vpack.c.b16 %v2463, %v2461
    %v2552 = vpack.c.b16 %v2464, %v2462
    %v2553 = vpack.c.b16 %v2467, %v2465
    %v2554 = vpack.c.b16 %v2468, %v2466
    %v2555 = vpack.c.b16 %v2471, %v2469
    %v2556 = vpack.c.b16 %v2472, %v2470
    %v2557 = vpack.c.b16 %v2475, %v2473
    %v2558 = vpack.c.b16 %v2476, %v2474
    %v2559 = vpack.c.b16 %v2479, %v2477
    %v2560 = vpack.c.b16 %v2480, %v2478
    %v2561 = vpack.c.b16 %v2483, %v2481
    %v2562 = vpack.c.b16 %v2484, %v2482
    %v2563 = vpack.c.b16 %v2487, %v2485
    %v2564 = vpack.c.b16 %v2488, %v2486
    %v2565 = vpack.c.b16 %v2491, %v2489
    %v2566 = vpack.c.b16 %v2492, %v2490
    %v2567 = vpack.c.b16 %v2495, %v2493
    %v2568 = vpack.c.b16 %v2496, %v2494
    %v2569 = vpack.c.b16 %v2499, %v2497
    %v2570 = vpack.c.b16 %v2500, %v2498
    %v2571 = vpack.c.b16 %v2503, %v2501
    %v2572 = vpack.c.b16 %v2504, %v2502
    %v2573 = vpack.c.b16 %v2507, %v2505
    %v2574 = vpack.c.b16 %v2508, %v2506
    %v2575 = vpack.c.b16 %v2511, %v2509
    %v2576 = vpack.c.b16 %v2512, %v2510
    %2641 = vmatpush.bf16.msra.mxu0 %v2527
    %2642 = vmatpush.bf16.msra.mxu0 %v2525
    %2643 = vmatpush.bf16.msra.mxu0 %v2523
    %2644 = vmatpush.bf16.msra.mxu0 %v2521
    %2645 = vmatpush.bf16.msra.mxu0 %v2519
    %2646 = vmatpush.bf16.msra.mxu0 %v2517
    %2647 = vmatpush.bf16.msra.mxu0 %v2515
    %2648 = vmatpush.bf16.msra.mxu0 %v2513
    %2649 = vmatmul.bf16.gmra.mxu0 %v2253
    %v2650 = vpop.f32.mrf.mxu0
    %v2651 = vadd.f32 0.0, %v2650
    %v2652 = vpop.f32.mrf.mxu0
    %2653 = vdwg.mxu0
    %2654 = vmatpush.bf16.msra.mxu0 %v2543
    %2655 = vmatpush.bf16.msra.mxu0 %v2541
    %2656 = vmatpush.bf16.msra.mxu0 %v2539
    %2657 = vmatpush.bf16.msra.mxu0 %v2537
    %2658 = vmatpush.bf16.msra.mxu0 %v2535
    %2659 = vmatpush.bf16.msra.mxu0 %v2533
    %2660 = vmatpush.bf16.msra.mxu0 %v2531
    %2661 = vmatpush.bf16.msra.mxu0 %v2529
    %2662 = vmatmul.bf16.gmra.mxu0 %v2254
    %v2663 = vpop.f32.mrf.mxu0
    %v2664 = vadd.f32 %v2651, %v2663
    %v2665 = vpop.f32.mrf.mxu0
    %2666 = vdwg.mxu0
    %2667 = vmatpush.bf16.msra.mxu0 %v2559
    %2668 = vmatpush.bf16.msra.mxu0 %v2557
    %2669 = vmatpush.bf16.msra.mxu0 %v2555
    %2670 = vmatpush.bf16.msra.mxu0 %v2553
    %2671 = vmatpush.bf16.msra.mxu0 %v2551
    %2672 = vmatpush.bf16.msra.mxu0 %v2549
    %2673 = vmatpush.bf16.msra.mxu0 %v2547
    %2674 = vmatpush.bf16.msra.mxu0 %v2545
    %2675 = vmatmul.bf16.gmra.mxu0 %v2255
    %v2676 = vpop.f32.mrf.mxu0
    %v2677 = vadd.f32 %v2664, %v2676
    %v2678 = vpop.f32.mrf.mxu0
    %2679 = vdwg.mxu0
    %2680 = vmatpush.bf16.msra.mxu0 %v2575
    %2681 = vmatpush.bf16.msra.mxu0 %v2573
    %2682 = vmatpush.bf16.msra.mxu0 %v2571
    %2683 = vmatpush.bf16.msra.mxu0 %v2569
    %2684 = vmatpush.bf16.msra.mxu0 %v2567
    %2685 = vmatpush.bf16.msra.mxu0 %v2565
    %2686 = vmatpush.bf16.msra.mxu0 %v2563
    %2687 = vmatpush.bf16.msra.mxu0 %v2561
    %2688 = vmatmul.bf16.gmra.mxu0 %v2256
    %v2689 = vpop.f32.mrf.mxu0
    %v2690 = vadd.f32 %v2677, %v2689
    %v2691 = vpop.f32.mrf.mxu0
    %2692 = vdwg.mxu0
    %2693 = vmatpush.bf16.msra.mxu0 %v2528
    %2694 = vmatpush.bf16.msra.mxu0 %v2526
    %2695 = vmatpush.bf16.msra.mxu0 %v2524
    %2696 = vmatpush.bf16.msra.mxu0 %v2522
    %2697 = vmatpush.bf16.msra.mxu0 %v2520
    %2698 = vmatpush.bf16.msra.mxu0 %v2518
    %2699 = vmatpush.bf16.msra.mxu0 %v2516
    %2700 = vmatpush.bf16.msra.mxu0 %v2514
    %2701 = vmatmul.bf16.gmra.mxu0 %v2253
    %v2702 = vpop.f32.mrf.mxu0
    %v2703 = vadd.f32 0.0, %v2702
    %v2704 = vpop.f32.mrf.mxu0
    %2705 = vdwg.mxu0
    %2706 = vmatpush.bf16.msra.mxu0 %v2544
    %2707 = vmatpush.bf16.msra.mxu0 %v2542
    %2708 = vmatpush.bf16.msra.mxu0 %v2540
    %2709 = vmatpush.bf16.msra.mxu0 %v2538
    %2710 = vmatpush.bf16.msra.mxu0 %v2536
    %2711 = vmatpush.bf16.msra.mxu0 %v2534
    %2712 = vmatpush.bf16.msra.mxu0 %v2532
    %2713 = vmatpush.bf16.msra.mxu0 %v2530
    %2714 = vmatmul.bf16.gmra.mxu0 %v2254
    %v2715 = vpop.f32.mrf.mxu0
    %v2716 = vadd.f32 %v2703, %v2715
    %v2717 = vpop.f32.mrf.mxu0
    %2718 = vdwg.mxu0
    %2719 = vmatpush.bf16.msra.mxu0 %v2560
    %2720 = vmatpush.bf16.msra.mxu0 %v2558
    %2721 = vmatpush.bf16.msra.mxu0 %v2556
    %2722 = vmatpush.bf16.msra.mxu0 %v2554
    %2723 = vmatpush.bf16.msra.mxu0 %v2552
    %2724 = vmatpush.bf16.msra.mxu0 %v2550
    %2725 = vmatpush.bf16.msra.mxu0 %v2548
    %2726 = vmatpush.bf16.msra.mxu0 %v2546
    %2727 = vmatmul.bf16.gmra.mxu0 %v2255
    %v2728 = vpop.f32.mrf.mxu0
    %v2729 = vadd.f32 %v2716, %v2728
    %v2730 = vpop.f32.mrf.mxu0
    %2731 = vdwg.mxu0
    %2732 = vmatpush.bf16.msra.mxu0 %v2576
    %2733 = vmatpush.bf16.msra.mxu0 %v2574
    %2734 = vmatpush.bf16.msra.mxu0 %v2572
    %2735 = vmatpush.bf16.msra.mxu0 %v2570
    %2736 = vmatpush.bf16.msra.mxu0 %v2568
    %2737 = vmatpush.bf16.msra.mxu0 %v2566
    %2738 = vmatpush.bf16.msra.mxu0 %v2564
    %2739 = vmatpush.bf16.msra.mxu0 %v2562
    %2740 = vmatmul.bf16.gmra.mxu0 %v2256
    %v2741 = vpop.f32.mrf.mxu0
    %v2742 = vadd.f32 %v2729, %v2741
    %v2743 = vpop.f32.mrf.mxu0
    %2744 = vdwg.mxu0
    %s2745 = scalar_lea.vmem [#allocation5], 512
    %v2746 = vld [vmem:[%s2745] sm:$0xff]
    %v2747 = vld [vmem:[%s2745 + $0x8] sm:$0xff]
    %v2748 = vld [vmem:[%s2745 + $0x10] sm:$0xff]
    %v2749 = vld [vmem:[%s2745 + $0x18] sm:$0xff]
    %v2750 = vld [vmem:[%s2745 + $0x20] sm:$0xff]
    %v2751 = vld [vmem:[%s2745 + $0x28] sm:$0xff]
    %v2752 = vld [vmem:[%s2745 + $0x30] sm:$0xff]
    %v2753 = vld [vmem:[%s2745 + $0x38] sm:$0xff]
    %v2754 = vld [vmem:[%s2745 + $0x40] sm:$0xff]
    %v2755 = vld [vmem:[%s2745 + $0x48] sm:$0xff]
    %v2756 = vld [vmem:[%s2745 + $0x50] sm:$0xff]
    %v2757 = vld [vmem:[%s2745 + $0x58] sm:$0xff]
    %v2758 = vld [vmem:[%s2745 + $0x60] sm:$0xff]
    %v2759 = vld [vmem:[%s2745 + $0x68] sm:$0xff]
    %v2760 = vld [vmem:[%s2745 + $0x70] sm:$0xff]
    %v2761 = vld [vmem:[%s2745 + $0x78] sm:$0xff]
    %v2762 = vld [vmem:[%s2745 + $0x80] sm:$0xff]
    %v2763 = vld [vmem:[%s2745 + $0x88] sm:$0xff]
    %v2764 = vld [vmem:[%s2745 + $0x90] sm:$0xff]
    %v2765 = vld [vmem:[%s2745 + $0x98] sm:$0xff]
    %v2766 = vld [vmem:[%s2745 + $0xa0] sm:$0xff]
    %v2767 = vld [vmem:[%s2745 + $0xa8] sm:$0xff]
    %v2768 = vld [vmem:[%s2745 + $0xb0] sm:$0xff]
    %v2769 = vld [vmem:[%s2745 + $0xb8] sm:$0xff]
    %v2770 = vld [vmem:[%s2745 + $0xc0] sm:$0xff]
    %v2771 = vld [vmem:[%s2745 + $0xc8] sm:$0xff]
    %v2772 = vld [vmem:[%s2745 + $0xd0] sm:$0xff]
    %v2773 = vld [vmem:[%s2745 + $0xd8] sm:$0xff]
    %v2774 = vld [vmem:[%s2745 + $0xe0] sm:$0xff]
    %v2775 = vld [vmem:[%s2745 + $0xe8] sm:$0xff]
    %v2776 = vld [vmem:[%s2745 + $0xf0] sm:$0xff]
    %v2777 = vld [vmem:[%s2745 + $0xf8] sm:$0xff]
    %v2778 = vld [vmem:[%s2745 + $0x100] sm:$0xff]
    %v2779 = vld [vmem:[%s2745 + $0x108] sm:$0xff]
    %v2780 = vld [vmem:[%s2745 + $0x110] sm:$0xff]
    %v2781 = vld [vmem:[%s2745 + $0x118] sm:$0xff]
    %v2782 = vld [vmem:[%s2745 + $0x120] sm:$0xff]
    %v2783 = vld [vmem:[%s2745 + $0x128] sm:$0xff]
    %v2784 = vld [vmem:[%s2745 + $0x130] sm:$0xff]
    %v2785 = vld [vmem:[%s2745 + $0x138] sm:$0xff]
    %v2786 = vld [vmem:[%s2745 + $0x140] sm:$0xff]
    %v2787 = vld [vmem:[%s2745 + $0x148] sm:$0xff]
    %v2788 = vld [vmem:[%s2745 + $0x150] sm:$0xff]
    %v2789 = vld [vmem:[%s2745 + $0x158] sm:$0xff]
    %v2790 = vld [vmem:[%s2745 + $0x160] sm:$0xff]
    %v2791 = vld [vmem:[%s2745 + $0x168] sm:$0xff]
    %v2792 = vld [vmem:[%s2745 + $0x170] sm:$0xff]
    %v2793 = vld [vmem:[%s2745 + $0x178] sm:$0xff]
    %v2794 = vld [vmem:[%s2745 + $0x180] sm:$0xff]
    %v2795 = vld [vmem:[%s2745 + $0x188] sm:$0xff]
    %v2796 = vld [vmem:[%s2745 + $0x190] sm:$0xff]
    %v2797 = vld [vmem:[%s2745 + $0x198] sm:$0xff]
    %v2798 = vld [vmem:[%s2745 + $0x1a0] sm:$0xff]
    %v2799 = vld [vmem:[%s2745 + $0x1a8] sm:$0xff]
    %v2800 = vld [vmem:[%s2745 + $0x1b0] sm:$0xff]
    %v2801 = vld [vmem:[%s2745 + $0x1b8] sm:$0xff]
    %v2802 = vld [vmem:[%s2745 + $0x1c0] sm:$0xff]
    %v2803 = vld [vmem:[%s2745 + $0x1c8] sm:$0xff]
    %v2804 = vld [vmem:[%s2745 + $0x1d0] sm:$0xff]
    %v2805 = vld [vmem:[%s2745 + $0x1d8] sm:$0xff]
    %v2806 = vld [vmem:[%s2745 + $0x1e0] sm:$0xff]
    %v2807 = vld [vmem:[%s2745 + $0x1e8] sm:$0xff]
    %v2808 = vld [vmem:[%s2745 + $0x1f0] sm:$0xff]
    %v2809 = vld [vmem:[%s2745 + $0x1f8] sm:$0xff]
    %v2874 = vunpack.c.l.b16 %v2746
    %v2875 = vunpack.c.h.b16 %v2746
    %v2876 = vunpack.c.l.b16 %v2747
    %v2877 = vunpack.c.h.b16 %v2747
    %v2878 = vunpack.c.l.b16 %v2748
    %v2879 = vunpack.c.h.b16 %v2748
    %v2880 = vunpack.c.l.b16 %v2749
    %v2881 = vunpack.c.h.b16 %v2749
    %v2882 = vunpack.c.l.b16 %v2750
    %v2883 = vunpack.c.h.b16 %v2750
    %v2884 = vunpack.c.l.b16 %v2751
    %v2885 = vunpack.c.h.b16 %v2751
    %v2886 = vunpack.c.l.b16 %v2752
    %v2887 = vunpack.c.h.b16 %v2752
    %v2888 = vunpack.c.l.b16 %v2753
    %v2889 = vunpack.c.h.b16 %v2753
    %v2890 = vunpack.c.l.b16 %v2754
    %v2891 = vunpack.c.h.b16 %v2754
    %v2892 = vunpack.c.l.b16 %v2755
    %v2893 = vunpack.c.h.b16 %v2755
    %v2894 = vunpack.c.l.b16 %v2756
    %v2895 = vunpack.c.h.b16 %v2756
    %v2896 = vunpack.c.l.b16 %v2757
    %v2897 = vunpack.c.h.b16 %v2757
    %v2898 = vunpack.c.l.b16 %v2758
    %v2899 = vunpack.c.h.b16 %v2758
    %v2900 = vunpack.c.l.b16 %v2759
    %v2901 = vunpack.c.h.b16 %v2759
    %v2902 = vunpack.c.l.b16 %v2760
    %v2903 = vunpack.c.h.b16 %v2760
    %v2904 = vunpack.c.l.b16 %v2761
    %v2905 = vunpack.c.h.b16 %v2761
    %v2906 = vunpack.c.l.b16 %v2762
    %v2907 = vunpack.c.h.b16 %v2762
    %v2908 = vunpack.c.l.b16 %v2763
    %v2909 = vunpack.c.h.b16 %v2763
    %v2910 = vunpack.c.l.b16 %v2764
    %v2911 = vunpack.c.h.b16 %v2764
    %v2912 = vunpack.c.l.b16 %v2765
    %v2913 = vunpack.c.h.b16 %v2765
    %v2914 = vunpack.c.l.b16 %v2766
    %v2915 = vunpack.c.h.b16 %v2766
    %v2916 = vunpack.c.l.b16 %v2767
    %v2917 = vunpack.c.h.b16 %v2767
    %v2918 = vunpack.c.l.b16 %v2768
    %v2919 = vunpack.c.h.b16 %v2768
    %v2920 = vunpack.c.l.b16 %v2769
    %v2921 = vunpack.c.h.b16 %v2769
    %v2922 = vunpack.c.l.b16 %v2770
    %v2923 = vunpack.c.h.b16 %v2770
    %v2924 = vunpack.c.l.b16 %v2771
    %v2925 = vunpack.c.h.b16 %v2771
    %v2926 = vunpack.c.l.b16 %v2772
    %v2927 = vunpack.c.h.b16 %v2772
    %v2928 = vunpack.c.l.b16 %v2773
    %v2929 = vunpack.c.h.b16 %v2773
    %v2930 = vunpack.c.l.b16 %v2774
    %v2931 = vunpack.c.h.b16 %v2774
    %v2932 = vunpack.c.l.b16 %v2775
    %v2933 = vunpack.c.h.b16 %v2775
    %v2934 = vunpack.c.l.b16 %v2776
    %v2935 = vunpack.c.h.b16 %v2776
    %v2936 = vunpack.c.l.b16 %v2777
    %v2937 = vunpack.c.h.b16 %v2777
    %v2938 = vunpack.c.l.b16 %v2778
    %v2939 = vunpack.c.h.b16 %v2778
    %v2940 = vunpack.c.l.b16 %v2779
    %v2941 = vunpack.c.h.b16 %v2779
    %v2942 = vunpack.c.l.b16 %v2780
    %v2943 = vunpack.c.h.b16 %v2780
    %v2944 = vunpack.c.l.b16 %v2781
    %v2945 = vunpack.c.h.b16 %v2781
    %v2946 = vunpack.c.l.b16 %v2782
    %v2947 = vunpack.c.h.b16 %v2782
    %v2948 = vunpack.c.l.b16 %v2783
    %v2949 = vunpack.c.h.b16 %v2783
    %v2950 = vunpack.c.l.b16 %v2784
    %v2951 = vunpack.c.h.b16 %v2784
    %v2952 = vunpack.c.l.b16 %v2785
    %v2953 = vunpack.c.h.b16 %v2785
    %v2954 = vunpack.c.l.b16 %v2786
    %v2955 = vunpack.c.h.b16 %v2786
    %v2956 = vunpack.c.l.b16 %v2787
    %v2957 = vunpack.c.h.b16 %v2787
    %v2958 = vunpack.c.l.b16 %v2788
    %v2959 = vunpack.c.h.b16 %v2788
    %v2960 = vunpack.c.l.b16 %v2789
    %v2961 = vunpack.c.h.b16 %v2789
    %v2962 = vunpack.c.l.b16 %v2790
    %v2963 = vunpack.c.h.b16 %v2790
    %v2964 = vunpack.c.l.b16 %v2791
    %v2965 = vunpack.c.h.b16 %v2791
    %v2966 = vunpack.c.l.b16 %v2792
    %v2967 = vunpack.c.h.b16 %v2792
    %v2968 = vunpack.c.l.b16 %v2793
    %v2969 = vunpack.c.h.b16 %v2793
    %v2970 = vunpack.c.l.b16 %v2794
    %v2971 = vunpack.c.h.b16 %v2794
    %v2972 = vunpack.c.l.b16 %v2795
    %v2973 = vunpack.c.h.b16 %v2795
    %v2974 = vunpack.c.l.b16 %v2796
    %v2975 = vunpack.c.h.b16 %v2796
    %v2976 = vunpack.c.l.b16 %v2797
    %v2977 = vunpack.c.h.b16 %v2797
    %v2978 = vunpack.c.l.b16 %v2798
    %v2979 = vunpack.c.h.b16 %v2798
    %v2980 = vunpack.c.l.b16 %v2799
    %v2981 = vunpack.c.h.b16 %v2799
    %v2982 = vunpack.c.l.b16 %v2800
    %v2983 = vunpack.c.h.b16 %v2800
    %v2984 = vunpack.c.l.b16 %v2801
    %v2985 = vunpack.c.h.b16 %v2801
    %v2986 = vunpack.c.l.b16 %v2802
    %v2987 = vunpack.c.h.b16 %v2802
    %v2988 = vunpack.c.l.b16 %v2803
    %v2989 = vunpack.c.h.b16 %v2803
    %v2990 = vunpack.c.l.b16 %v2804
    %v2991 = vunpack.c.h.b16 %v2804
    %v2992 = vunpack.c.l.b16 %v2805
    %v2993 = vunpack.c.h.b16 %v2805
    %v2994 = vunpack.c.l.b16 %v2806
    %v2995 = vunpack.c.h.b16 %v2806
    %v2996 = vunpack.c.l.b16 %v2807
    %v2997 = vunpack.c.h.b16 %v2807
    %v2998 = vunpack.c.l.b16 %v2808
    %v2999 = vunpack.c.h.b16 %v2808
    %v3000 = vunpack.c.l.b16 %v2809
    %v3001 = vunpack.c.h.b16 %v2809
    %v3002 = vpack.c.b16 %v2876, %v2874
    %v3003 = vpack.c.b16 %v2877, %v2875
    %v3004 = vpack.c.b16 %v2880, %v2878
    %v3005 = vpack.c.b16 %v2881, %v2879
    %v3006 = vpack.c.b16 %v2884, %v2882
    %v3007 = vpack.c.b16 %v2885, %v2883
    %v3008 = vpack.c.b16 %v2888, %v2886
    %v3009 = vpack.c.b16 %v2889, %v2887
    %v3010 = vpack.c.b16 %v2892, %v2890
    %v3011 = vpack.c.b16 %v2893, %v2891
    %v3012 = vpack.c.b16 %v2896, %v2894
    %v3013 = vpack.c.b16 %v2897, %v2895
    %v3014 = vpack.c.b16 %v2900, %v2898
    %v3015 = vpack.c.b16 %v2901, %v2899
    %v3016 = vpack.c.b16 %v2904, %v2902
    %v3017 = vpack.c.b16 %v2905, %v2903
    %v3018 = vpack.c.b16 %v2908, %v2906
    %v3019 = vpack.c.b16 %v2909, %v2907
    %v3020 = vpack.c.b16 %v2912, %v2910
    %v3021 = vpack.c.b16 %v2913, %v2911
    %v3022 = vpack.c.b16 %v2916, %v2914
    %v3023 = vpack.c.b16 %v2917, %v2915
    %v3024 = vpack.c.b16 %v2920, %v2918
    %v3025 = vpack.c.b16 %v2921, %v2919
    %v3026 = vpack.c.b16 %v2924, %v2922
    %v3027 = vpack.c.b16 %v2925, %v2923
    %v3028 = vpack.c.b16 %v2928, %v2926
    %v3029 = vpack.c.b16 %v2929, %v2927
    %v3030 = vpack.c.b16 %v2932, %v2930
    %v3031 = vpack.c.b16 %v2933, %v2931
    %v3032 = vpack.c.b16 %v2936, %v2934
    %v3033 = vpack.c.b16 %v2937, %v2935
    %v3034 = vpack.c.b16 %v2940, %v2938
    %v3035 = vpack.c.b16 %v2941, %v2939
    %v3036 = vpack.c.b16 %v2944, %v2942
    %v3037 = vpack.c.b16 %v2945, %v2943
    %v3038 = vpack.c.b16 %v2948, %v2946
    %v3039 = vpack.c.b16 %v2949, %v2947
    %v3040 = vpack.c.b16 %v2952, %v2950
    %v3041 = vpack.c.b16 %v2953, %v2951
    %v3042 = vpack.c.b16 %v2956, %v2954
    %v3043 = vpack.c.b16 %v2957, %v2955
    %v3044 = vpack.c.b16 %v2960, %v2958
    %v3045 = vpack.c.b16 %v2961, %v2959
    %v3046 = vpack.c.b16 %v2964, %v2962
    %v3047 = vpack.c.b16 %v2965, %v2963
    %v3048 = vpack.c.b16 %v2968, %v2966
    %v3049 = vpack.c.b16 %v2969, %v2967
    %v3050 = vpack.c.b16 %v2972, %v2970
    %v3051 = vpack.c.b16 %v2973, %v2971
    %v3052 = vpack.c.b16 %v2976, %v2974
    %v3053 = vpack.c.b16 %v2977, %v2975
    %v3054 = vpack.c.b16 %v2980, %v2978
    %v3055 = vpack.c.b16 %v2981, %v2979
    %v3056 = vpack.c.b16 %v2984, %v2982
    %v3057 = vpack.c.b16 %v2985, %v2983
    %v3058 = vpack.c.b16 %v2988, %v2986
    %v3059 = vpack.c.b16 %v2989, %v2987
    %v3060 = vpack.c.b16 %v2992, %v2990
    %v3061 = vpack.c.b16 %v2993, %v2991
    %v3062 = vpack.c.b16 %v2996, %v2994
    %v3063 = vpack.c.b16 %v2997, %v2995
    %v3064 = vpack.c.b16 %v3000, %v2998
    %v3065 = vpack.c.b16 %v3001, %v2999
    %3130 = vmatpush.bf16.msra.mxu0 %v3016
    %3131 = vmatpush.bf16.msra.mxu0 %v3014
    %3132 = vmatpush.bf16.msra.mxu0 %v3012
    %3133 = vmatpush.bf16.msra.mxu0 %v3010
    %3134 = vmatpush.bf16.msra.mxu0 %v3008
    %3135 = vmatpush.bf16.msra.mxu0 %v3006
    %3136 = vmatpush.bf16.msra.mxu0 %v3004
    %3137 = vmatpush.bf16.msra.mxu0 %v3002
    %3138 = vmatmul.bf16.gmra.mxu0 %v2253
    %v3139 = vpop.f32.mrf.mxu0
    %v3140 = vadd.f32 0.0, %v3139
    %v3141 = vpop.f32.mrf.mxu0
    %3142 = vdwg.mxu0
    %3143 = vmatpush.bf16.msra.mxu0 %v3032
    %3144 = vmatpush.bf16.msra.mxu0 %v3030
    %3145 = vmatpush.bf16.msra.mxu0 %v3028
    %3146 = vmatpush.bf16.msra.mxu0 %v3026
    %3147 = vmatpush.bf16.msra.mxu0 %v3024
    %3148 = vmatpush.bf16.msra.mxu0 %v3022
    %3149 = vmatpush.bf16.msra.mxu0 %v3020
    %3150 = vmatpush.bf16.msra.mxu0 %v3018
    %3151 = vmatmul.bf16.gmra.mxu0 %v2254
    %v3152 = vpop.f32.mrf.mxu0
    %v3153 = vadd.f32 %v3140, %v3152
    %v3154 = vpop.f32.mrf.mxu0
    %3155 = vdwg.mxu0
    %3156 = vmatpush.bf16.msra.mxu0 %v3048
    %3157 = vmatpush.bf16.msra.mxu0 %v3046
    %3158 = vmatpush.bf16.msra.mxu0 %v3044
    %3159 = vmatpush.bf16.msra.mxu0 %v3042
    %3160 = vmatpush.bf16.msra.mxu0 %v3040
    %3161 = vmatpush.bf16.msra.mxu0 %v3038
    %3162 = vmatpush.bf16.msra.mxu0 %v3036
    %3163 = vmatpush.bf16.msra.mxu0 %v3034
    %3164 = vmatmul.bf16.gmra.mxu0 %v2255
    %v3165 = vpop.f32.mrf.mxu0
    %v3166 = vadd.f32 %v3153, %v3165
    %v3167 = vpop.f32.mrf.mxu0
    %3168 = vdwg.mxu0
    %3169 = vmatpush.bf16.msra.mxu0 %v3064
    %3170 = vmatpush.bf16.msra.mxu0 %v3062
    %3171 = vmatpush.bf16.msra.mxu0 %v3060
    %3172 = vmatpush.bf16.msra.mxu0 %v3058
    %3173 = vmatpush.bf16.msra.mxu0 %v3056
    %3174 = vmatpush.bf16.msra.mxu0 %v3054
    %3175 = vmatpush.bf16.msra.mxu0 %v3052
    %3176 = vmatpush.bf16.msra.mxu0 %v3050
    %3177 = vmatmul.bf16.gmra.mxu0 %v2256
    %v3178 = vpop.f32.mrf.mxu0
    %v3179 = vadd.f32 %v3166, %v3178
    %v3180 = vpop.f32.mrf.mxu0
    %3181 = vdwg.mxu0
    %3182 = vmatpush.bf16.msra.mxu0 %v3017
    %3183 = vmatpush.bf16.msra.mxu0 %v3015
    %3184 = vmatpush.bf16.msra.mxu0 %v3013
    %3185 = vmatpush.bf16.msra.mxu0 %v3011
    %3186 = vmatpush.bf16.msra.mxu0 %v3009
    %3187 = vmatpush.bf16.msra.mxu0 %v3007
    %3188 = vmatpush.bf16.msra.mxu0 %v3005
    %3189 = vmatpush.bf16.msra.mxu0 %v3003
    %3190 = vmatmul.bf16.gmra.mxu0 %v2253
    %v3191 = vpop.f32.mrf.mxu0
    %v3192 = vadd.f32 0.0, %v3191
    %v3193 = vpop.f32.mrf.mxu0
    %3194 = vdwg.mxu0
    %3195 = vmatpush.bf16.msra.mxu0 %v3033
    %3196 = vmatpush.bf16.msra.mxu0 %v3031
    %3197 = vmatpush.bf16.msra.mxu0 %v3029
    %3198 = vmatpush.bf16.msra.mxu0 %v3027
    %3199 = vmatpush.bf16.msra.mxu0 %v3025
    %3200 = vmatpush.bf16.msra.mxu0 %v3023
    %3201 = vmatpush.bf16.msra.mxu0 %v3021
    %3202 = vmatpush.bf16.msra.mxu0 %v3019
    %3203 = vmatmul.bf16.gmra.mxu0 %v2254
    %v3204 = vpop.f32.mrf.mxu0
    %v3205 = vadd.f32 %v3192, %v3204
    %v3206 = vpop.f32.mrf.mxu0
    %3207 = vdwg.mxu0
    %3208 = vmatpush.bf16.msra.mxu0 %v3049
    %3209 = vmatpush.bf16.msra.mxu0 %v3047
    %3210 = vmatpush.bf16.msra.mxu0 %v3045
    %3211 = vmatpush.bf16.msra.mxu0 %v3043
    %3212 = vmatpush.bf16.msra.mxu0 %v3041
    %3213 = vmatpush.bf16.msra.mxu0 %v3039
    %3214 = vmatpush.bf16.msra.mxu0 %v3037
    %3215 = vmatpush.bf16.msra.mxu0 %v3035
    %3216 = vmatmul.bf16.gmra.mxu0 %v2255
    %v3217 = vpop.f32.mrf.mxu0
    %v3218 = vadd.f32 %v3205, %v3217
    %v3219 = vpop.f32.mrf.mxu0
    %3220 = vdwg.mxu0
    %3221 = vmatpush.bf16.msra.mxu0 %v3065
    %3222 = vmatpush.bf16.msra.mxu0 %v3063
    %3223 = vmatpush.bf16.msra.mxu0 %v3061
    %3224 = vmatpush.bf16.msra.mxu0 %v3059
    %3225 = vmatpush.bf16.msra.mxu0 %v3057
    %3226 = vmatpush.bf16.msra.mxu0 %v3055
    %3227 = vmatpush.bf16.msra.mxu0 %v3053
    %3228 = vmatpush.bf16.msra.mxu0 %v3051
    %3229 = vmatmul.bf16.gmra.mxu0 %v2256
    %v3230 = vpop.f32.mrf.mxu0
    %v3231 = vadd.f32 %v3218, %v3230
    %v3232 = vpop.f32.mrf.mxu0
    %3233 = vdwg.mxu0
    %v3234 = vmax.f32 %v2690, %v3179
    %v3235 = vmax.f32 %v2742, %v3231
    %s3236 = scalar_lea.vmem [#allocation5], 1024
    %v3237 = vld [vmem:[%s3236] sm:$0xff]
    %v3238 = vld [vmem:[%s3236 + $0x8] sm:$0xff]
    %v3239 = vld [vmem:[%s3236 + $0x10] sm:$0xff]
    %v3240 = vld [vmem:[%s3236 + $0x18] sm:$0xff]
    %v3241 = vld [vmem:[%s3236 + $0x20] sm:$0xff]
    %v3242 = vld [vmem:[%s3236 + $0x28] sm:$0xff]
    %v3243 = vld [vmem:[%s3236 + $0x30] sm:$0xff]
    %v3244 = vld [vmem:[%s3236 + $0x38] sm:$0xff]
    %v3245 = vld [vmem:[%s3236 + $0x40] sm:$0xff]
    %v3246 = vld [vmem:[%s3236 + $0x48] sm:$0xff]
    %v3247 = vld [vmem:[%s3236 + $0x50] sm:$0xff]
    %v3248 = vld [vmem:[%s3236 + $0x58] sm:$0xff]
    %v3249 = vld [vmem:[%s3236 + $0x60] sm:$0xff]
    %v3250 = vld [vmem:[%s3236 + $0x68] sm:$0xff]
    %v3251 = vld [vmem:[%s3236 + $0x70] sm:$0xff]
    %v3252 = vld [vmem:[%s3236 + $0x78] sm:$0xff]
    %v3253 = vld [vmem:[%s3236 + $0x80] sm:$0xff]
    %v3254 = vld [vmem:[%s3236 + $0x88] sm:$0xff]
    %v3255 = vld [vmem:[%s3236 + $0x90] sm:$0xff]
    %v3256 = vld [vmem:[%s3236 + $0x98] sm:$0xff]
    %v3257 = vld [vmem:[%s3236 + $0xa0] sm:$0xff]
    %v3258 = vld [vmem:[%s3236 + $0xa8] sm:$0xff]
    %v3259 = vld [vmem:[%s3236 + $0xb0] sm:$0xff]
    %v3260 = vld [vmem:[%s3236 + $0xb8] sm:$0xff]
    %v3261 = vld [vmem:[%s3236 + $0xc0] sm:$0xff]
    %v3262 = vld [vmem:[%s3236 + $0xc8] sm:$0xff]
    %v3263 = vld [vmem:[%s3236 + $0xd0] sm:$0xff]
    %v3264 = vld [vmem:[%s3236 + $0xd8] sm:$0xff]
    %v3265 = vld [vmem:[%s3236 + $0xe0] sm:$0xff]
    %v3266 = vld [vmem:[%s3236 + $0xe8] sm:$0xff]
    %v3267 = vld [vmem:[%s3236 + $0xf0] sm:$0xff]
    %v3268 = vld [vmem:[%s3236 + $0xf8] sm:$0xff]
    %v3269 = vld [vmem:[%s3236 + $0x100] sm:$0xff]
    %v3270 = vld [vmem:[%s3236 + $0x108] sm:$0xff]
    %v3271 = vld [vmem:[%s3236 + $0x110] sm:$0xff]
    %v3272 = vld [vmem:[%s3236 + $0x118] sm:$0xff]
    %v3273 = vld [vmem:[%s3236 + $0x120] sm:$0xff]
    %v3274 = vld [vmem:[%s3236 + $0x128] sm:$0xff]
    %v3275 = vld [vmem:[%s3236 + $0x130] sm:$0xff]
    %v3276 = vld [vmem:[%s3236 + $0x138] sm:$0xff]
    %v3277 = vld [vmem:[%s3236 + $0x140] sm:$0xff]
    %v3278 = vld [vmem:[%s3236 + $0x148] sm:$0xff]
    %v3279 = vld [vmem:[%s3236 + $0x150] sm:$0xff]
    %v3280 = vld [vmem:[%s3236 + $0x158] sm:$0xff]
    %v3281 = vld [vmem:[%s3236 + $0x160] sm:$0xff]
    %v3282 = vld [vmem:[%s3236 + $0x168] sm:$0xff]
    %v3283 = vld [vmem:[%s3236 + $0x170] sm:$0xff]
    %v3284 = vld [vmem:[%s3236 + $0x178] sm:$0xff]
    %v3285 = vld [vmem:[%s3236 + $0x180] sm:$0xff]
    %v3286 = vld [vmem:[%s3236 + $0x188] sm:$0xff]
    %v3287 = vld [vmem:[%s3236 + $0x190] sm:$0xff]
    %v3288 = vld [vmem:[%s3236 + $0x198] sm:$0xff]
    %v3289 = vld [vmem:[%s3236 + $0x1a0] sm:$0xff]
    %v3290 = vld [vmem:[%s3236 + $0x1a8] sm:$0xff]
    %v3291 = vld [vmem:[%s3236 + $0x1b0] sm:$0xff]
    %v3292 = vld [vmem:[%s3236 + $0x1b8] sm:$0xff]
    %v3293 = vld [vmem:[%s3236 + $0x1c0] sm:$0xff]
    %v3294 = vld [vmem:[%s3236 + $0x1c8] sm:$0xff]
    %v3295 = vld [vmem:[%s3236 + $0x1d0] sm:$0xff]
    %v3296 = vld [vmem:[%s3236 + $0x1d8] sm:$0xff]
    %v3297 = vld [vmem:[%s3236 + $0x1e0] sm:$0xff]
    %v3298 = vld [vmem:[%s3236 + $0x1e8] sm:$0xff]
    %v3299 = vld [vmem:[%s3236 + $0x1f0] sm:$0xff]
    %v3300 = vld [vmem:[%s3236 + $0x1f8] sm:$0xff]
    %v3365 = vunpack.c.l.b16 %v3237
    %v3366 = vunpack.c.h.b16 %v3237
    %v3367 = vunpack.c.l.b16 %v3238
    %v3368 = vunpack.c.h.b16 %v3238
    %v3369 = vunpack.c.l.b16 %v3239
    %v3370 = vunpack.c.h.b16 %v3239
    %v3371 = vunpack.c.l.b16 %v3240
    %v3372 = vunpack.c.h.b16 %v3240
    %v3373 = vunpack.c.l.b16 %v3241
    %v3374 = vunpack.c.h.b16 %v3241
    %v3375 = vunpack.c.l.b16 %v3242
    %v3376 = vunpack.c.h.b16 %v3242
    %v3377 = vunpack.c.l.b16 %v3243
    %v3378 = vunpack.c.h.b16 %v3243
    %v3379 = vunpack.c.l.b16 %v3244
    %v3380 = vunpack.c.h.b16 %v3244
    %v3381 = vunpack.c.l.b16 %v3245
    %v3382 = vunpack.c.h.b16 %v3245
    %v3383 = vunpack.c.l.b16 %v3246
    %v3384 = vunpack.c.h.b16 %v3246
    %v3385 = vunpack.c.l.b16 %v3247
    %v3386 = vunpack.c.h.b16 %v3247
    %v3387 = vunpack.c.l.b16 %v3248
    %v3388 = vunpack.c.h.b16 %v3248
    %v3389 = vunpack.c.l.b16 %v3249
    %v3390 = vunpack.c.h.b16 %v3249
    %v3391 = vunpack.c.l.b16 %v3250
    %v3392 = vunpack.c.h.b16 %v3250
    %v3393 = vunpack.c.l.b16 %v3251
    %v3394 = vunpack.c.h.b16 %v3251
    %v3395 = vunpack.c.l.b16 %v3252
    %v3396 = vunpack.c.h.b16 %v3252
    %v3397 = vunpack.c.l.b16 %v3253
    %v3398 = vunpack.c.h.b16 %v3253
    %v3399 = vunpack.c.l.b16 %v3254
    %v3400 = vunpack.c.h.b16 %v3254
    %v3401 = vunpack.c.l.b16 %v3255
    %v3402 = vunpack.c.h.b16 %v3255
    %v3403 = vunpack.c.l.b16 %v3256
    %v3404 = vunpack.c.h.b16 %v3256
    %v3405 = vunpack.c.l.b16 %v3257
    %v3406 = vunpack.c.h.b16 %v3257
    %v3407 = vunpack.c.l.b16 %v3258
    %v3408 = vunpack.c.h.b16 %v3258
    %v3409 = vunpack.c.l.b16 %v3259
    %v3410 = vunpack.c.h.b16 %v3259
    %v3411 = vunpack.c.l.b16 %v3260
    %v3412 = vunpack.c.h.b16 %v3260
    %v3413 = vunpack.c.l.b16 %v3261
    %v3414 = vunpack.c.h.b16 %v3261
    %v3415 = vunpack.c.l.b16 %v3262
    %v3416 = vunpack.c.h.b16 %v3262
    %v3417 = vunpack.c.l.b16 %v3263
    %v3418 = vunpack.c.h.b16 %v3263
    %v3419 = vunpack.c.l.b16 %v3264
    %v3420 = vunpack.c.h.b16 %v3264
    %v3421 = vunpack.c.l.b16 %v3265
    %v3422 = vunpack.c.h.b16 %v3265
    %v3423 = vunpack.c.l.b16 %v3266
    %v3424 = vunpack.c.h.b16 %v3266
    %v3425 = vunpack.c.l.b16 %v3267
    %v3426 = vunpack.c.h.b16 %v3267
    %v3427 = vunpack.c.l.b16 %v3268
    %v3428 = vunpack.c.h.b16 %v3268
    %v3429 = vunpack.c.l.b16 %v3269
    %v3430 = vunpack.c.h.b16 %v3269
    %v3431 = vunpack.c.l.b16 %v3270
    %v3432 = vunpack.c.h.b16 %v3270
    %v3433 = vunpack.c.l.b16 %v3271
    %v3434 = vunpack.c.h.b16 %v3271
    %v3435 = vunpack.c.l.b16 %v3272
    %v3436 = vunpack.c.h.b16 %v3272
    %v3437 = vunpack.c.l.b16 %v3273
    %v3438 = vunpack.c.h.b16 %v3273
    %v3439 = vunpack.c.l.b16 %v3274
    %v3440 = vunpack.c.h.b16 %v3274
    %v3441 = vunpack.c.l.b16 %v3275
    %v3442 = vunpack.c.h.b16 %v3275
    %v3443 = vunpack.c.l.b16 %v3276
    %v3444 = vunpack.c.h.b16 %v3276
    %v3445 = vunpack.c.l.b16 %v3277
    %v3446 = vunpack.c.h.b16 %v3277
    %v3447 = vunpack.c.l.b16 %v3278
    %v3448 = vunpack.c.h.b16 %v3278
    %v3449 = vunpack.c.l.b16 %v3279
    %v3450 = vunpack.c.h.b16 %v3279
    %v3451 = vunpack.c.l.b16 %v3280
    %v3452 = vunpack.c.h.b16 %v3280
    %v3453 = vunpack.c.l.b16 %v3281
    %v3454 = vunpack.c.h.b16 %v3281
    %v3455 = vunpack.c.l.b16 %v3282
    %v3456 = vunpack.c.h.b16 %v3282
    %v3457 = vunpack.c.l.b16 %v3283
    %v3458 = vunpack.c.h.b16 %v3283
    %v3459 = vunpack.c.l.b16 %v3284
    %v3460 = vunpack.c.h.b16 %v3284
    %v3461 = vunpack.c.l.b16 %v3285
    %v3462 = vunpack.c.h.b16 %v3285
    %v3463 = vunpack.c.l.b16 %v3286
    %v3464 = vunpack.c.h.b16 %v3286
    %v3465 = vunpack.c.l.b16 %v3287
    %v3466 = vunpack.c.h.b16 %v3287
    %v3467 = vunpack.c.l.b16 %v3288
    %v3468 = vunpack.c.h.b16 %v3288
    %v3469 = vunpack.c.l.b16 %v3289
    %v3470 = vunpack.c.h.b16 %v3289
    %v3471 = vunpack.c.l.b16 %v3290
    %v3472 = vunpack.c.h.b16 %v3290
    %v3473 = vunpack.c.l.b16 %v3291
    %v3474 = vunpack.c.h.b16 %v3291
    %v3475 = vunpack.c.l.b16 %v3292
    %v3476 = vunpack.c.h.b16 %v3292
    %v3477 = vunpack.c.l.b16 %v3293
    %v3478 = vunpack.c.h.b16 %v3293
    %v3479 = vunpack.c.l.b16 %v3294
    %v3480 = vunpack.c.h.b16 %v3294
    %v3481 = vunpack.c.l.b16 %v3295
    %v3482 = vunpack.c.h.b16 %v3295
    %v3483 = vunpack.c.l.b16 %v3296
    %v3484 = vunpack.c.h.b16 %v3296
    %v3485 = vunpack.c.l.b16 %v3297
    %v3486 = vunpack.c.h.b16 %v3297
    %v3487 = vunpack.c.l.b16 %v3298
    %v3488 = vunpack.c.h.b16 %v3298
    %v3489 = vunpack.c.l.b16 %v3299
    %v3490 = vunpack.c.h.b16 %v3299
    %v3491 = vunpack.c.l.b16 %v3300
    %v3492 = vunpack.c.h.b16 %v3300
    %v3493 = vpack.c.b16 %v3367, %v3365
    %v3494 = vpack.c.b16 %v3368, %v3366
    %v3495 = vpack.c.b16 %v3371, %v3369
    %v3496 = vpack.c.b16 %v3372, %v3370
    %v3497 = vpack.c.b16 %v3375, %v3373
    %v3498 = vpack.c.b16 %v3376, %v3374
    %v3499 = vpack.c.b16 %v3379, %v3377
    %v3500 = vpack.c.b16 %v3380, %v3378
    %v3501 = vpack.c.b16 %v3383, %v3381
    %v3502 = vpack.c.b16 %v3384, %v3382
    %v3503 = vpack.c.b16 %v3387, %v3385
    %v3504 = vpack.c.b16 %v3388, %v3386
    %v3505 = vpack.c.b16 %v3391, %v3389
    %v3506 = vpack.c.b16 %v3392, %v3390
    %v3507 = vpack.c.b16 %v3395, %v3393
    %v3508 = vpack.c.b16 %v3396, %v3394
    %v3509 = vpack.c.b16 %v3399, %v3397
    %v3510 = vpack.c.b16 %v3400, %v3398
    %v3511 = vpack.c.b16 %v3403, %v3401
    %v3512 = vpack.c.b16 %v3404, %v3402
    %v3513 = vpack.c.b16 %v3407, %v3405
    %v3514 = vpack.c.b16 %v3408, %v3406
    %v3515 = vpack.c.b16 %v3411, %v3409
    %v3516 = vpack.c.b16 %v3412, %v3410
    %v3517 = vpack.c.b16 %v3415, %v3413
    %v3518 = vpack.c.b16 %v3416, %v3414
    %v3519 = vpack.c.b16 %v3419, %v3417
    %v3520 = vpack.c.b16 %v3420, %v3418
    %v3521 = vpack.c.b16 %v3423, %v3421
    %v3522 = vpack.c.b16 %v3424, %v3422
    %v3523 = vpack.c.b16 %v3427, %v3425
    %v3524 = vpack.c.b16 %v3428, %v3426
    %v3525 = vpack.c.b16 %v3431, %v3429
    %v3526 = vpack.c.b16 %v3432, %v3430
    %v3527 = vpack.c.b16 %v3435, %v3433
    %v3528 = vpack.c.b16 %v3436, %v3434
    %v3529 = vpack.c.b16 %v3439, %v3437
    %v3530 = vpack.c.b16 %v3440, %v3438
    %v3531 = vpack.c.b16 %v3443, %v3441
    %v3532 = vpack.c.b16 %v3444, %v3442
    %v3533 = vpack.c.b16 %v3447, %v3445
    %v3534 = vpack.c.b16 %v3448, %v3446
    %v3535 = vpack.c.b16 %v3451, %v3449
    %v3536 = vpack.c.b16 %v3452, %v3450
    %v3537 = vpack.c.b16 %v3455, %v3453
    %v3538 = vpack.c.b16 %v3456, %v3454
    %v3539 = vpack.c.b16 %v3459, %v3457
    %v3540 = vpack.c.b16 %v3460, %v3458
    %v3541 = vpack.c.b16 %v3463, %v3461
    %v3542 = vpack.c.b16 %v3464, %v3462
    %v3543 = vpack.c.b16 %v3467, %v3465
    %v3544 = vpack.c.b16 %v3468, %v3466
    %v3545 = vpack.c.b16 %v3471, %v3469
    %v3546 = vpack.c.b16 %v3472, %v3470
    %v3547 = vpack.c.b16 %v3475, %v3473
    %v3548 = vpack.c.b16 %v3476, %v3474
    %v3549 = vpack.c.b16 %v3479, %v3477
    %v3550 = vpack.c.b16 %v3480, %v3478
    %v3551 = vpack.c.b16 %v3483, %v3481
    %v3552 = vpack.c.b16 %v3484, %v3482
    %v3553 = vpack.c.b16 %v3487, %v3485
    %v3554 = vpack.c.b16 %v3488, %v3486
    %v3555 = vpack.c.b16 %v3491, %v3489
    %v3556 = vpack.c.b16 %v3492, %v3490
    %3621 = vmatpush.bf16.msra.mxu0 %v3507
    %3622 = vmatpush.bf16.msra.mxu0 %v3505
    %3623 = vmatpush.bf16.msra.mxu0 %v3503
    %3624 = vmatpush.bf16.msra.mxu0 %v3501
    %3625 = vmatpush.bf16.msra.mxu0 %v3499
    %3626 = vmatpush.bf16.msra.mxu0 %v3497
    %3627 = vmatpush.bf16.msra.mxu0 %v3495
    %3628 = vmatpush.bf16.msra.mxu0 %v3493
    %3629 = vmatmul.bf16.gmra.mxu0 %v2253
    %v3630 = vpop.f32.mrf.mxu0
    %v3631 = vadd.f32 0.0, %v3630
    %v3632 = vpop.f32.mrf.mxu0
    %3633 = vdwg.mxu0
    %3634 = vmatpush.bf16.msra.mxu0 %v3523
    %3635 = vmatpush.bf16.msra.mxu0 %v3521
    %3636 = vmatpush.bf16.msra.mxu0 %v3519
    %3637 = vmatpush.bf16.msra.mxu0 %v3517
    %3638 = vmatpush.bf16.msra.mxu0 %v3515
    %3639 = vmatpush.bf16.msra.mxu0 %v3513
    %3640 = vmatpush.bf16.msra.mxu0 %v3511
    %3641 = vmatpush.bf16.msra.mxu0 %v3509
    %3642 = vmatmul.bf16.gmra.mxu0 %v2254
    %v3643 = vpop.f32.mrf.mxu0
    %v3644 = vadd.f32 %v3631, %v3643
    %v3645 = vpop.f32.mrf.mxu0
    %3646 = vdwg.mxu0
    %3647 = vmatpush.bf16.msra.mxu0 %v3539
    %3648 = vmatpush.bf16.msra.mxu0 %v3537
    %3649 = vmatpush.bf16.msra.mxu0 %v3535
    %3650 = vmatpush.bf16.msra.mxu0 %v3533
    %3651 = vmatpush.bf16.msra.mxu0 %v3531
    %3652 = vmatpush.bf16.msra.mxu0 %v3529
    %3653 = vmatpush.bf16.msra.mxu0 %v3527
    %3654 = vmatpush.bf16.msra.mxu0 %v3525
    %3655 = vmatmul.bf16.gmra.mxu0 %v2255
    %v3656 = vpop.f32.mrf.mxu0
    %v3657 = vadd.f32 %v3644, %v3656
    %v3658 = vpop.f32.mrf.mxu0
    %3659 = vdwg.mxu0
    %3660 = vmatpush.bf16.msra.mxu0 %v3555
    %3661 = vmatpush.bf16.msra.mxu0 %v3553
    %3662 = vmatpush.bf16.msra.mxu0 %v3551
    %3663 = vmatpush.bf16.msra.mxu0 %v3549
    %3664 = vmatpush.bf16.msra.mxu0 %v3547
    %3665 = vmatpush.bf16.msra.mxu0 %v3545
    %3666 = vmatpush.bf16.msra.mxu0 %v3543
    %3667 = vmatpush.bf16.msra.mxu0 %v3541
    %3668 = vmatmul.bf16.gmra.mxu0 %v2256
    %v3669 = vpop.f32.mrf.mxu0
    %v3670 = vadd.f32 %v3657, %v3669
    %v3671 = vpop.f32.mrf.mxu0
    %3672 = vdwg.mxu0
    %3673 = vmatpush.bf16.msra.mxu0 %v3508
    %3674 = vmatpush.bf16.msra.mxu0 %v3506
    %3675 = vmatpush.bf16.msra.mxu0 %v3504
    %3676 = vmatpush.bf16.msra.mxu0 %v3502
    %3677 = vmatpush.bf16.msra.mxu0 %v3500
    %3678 = vmatpush.bf16.msra.mxu0 %v3498
    %3679 = vmatpush.bf16.msra.mxu0 %v3496
    %3680 = vmatpush.bf16.msra.mxu0 %v3494
    %3681 = vmatmul.bf16.gmra.mxu0 %v2253
    %v3682 = vpop.f32.mrf.mxu0
    %v3683 = vadd.f32 0.0, %v3682
    %v3684 = vpop.f32.mrf.mxu0
    %3685 = vdwg.mxu0
    %3686 = vmatpush.bf16.msra.mxu0 %v3524
    %3687 = vmatpush.bf16.msra.mxu0 %v3522
    %3688 = vmatpush.bf16.msra.mxu0 %v3520
    %3689 = vmatpush.bf16.msra.mxu0 %v3518
    %3690 = vmatpush.bf16.msra.mxu0 %v3516
    %3691 = vmatpush.bf16.msra.mxu0 %v3514
    %3692 = vmatpush.bf16.msra.mxu0 %v3512
    %3693 = vmatpush.bf16.msra.mxu0 %v3510
    %3694 = vmatmul.bf16.gmra.mxu0 %v2254
    %v3695 = vpop.f32.mrf.mxu0
    %v3696 = vadd.f32 %v3683, %v3695
    %v3697 = vpop.f32.mrf.mxu0
    %3698 = vdwg.mxu0
    %3699 = vmatpush.bf16.msra.mxu0 %v3540
    %3700 = vmatpush.bf16.msra.mxu0 %v3538
    %3701 = vmatpush.bf16.msra.mxu0 %v3536
    %3702 = vmatpush.bf16.msra.mxu0 %v3534
    %3703 = vmatpush.bf16.msra.mxu0 %v3532
    %3704 = vmatpush.bf16.msra.mxu0 %v3530
    %3705 = vmatpush.bf16.msra.mxu0 %v3528
    %3706 = vmatpush.bf16.msra.mxu0 %v3526
    %3707 = vmatmul.bf16.gmra.mxu0 %v2255
    %v3708 = vpop.f32.mrf.mxu0
    %v3709 = vadd.f32 %v3696, %v3708
    %v3710 = vpop.f32.mrf.mxu0
    %3711 = vdwg.mxu0
    %3712 = vmatpush.bf16.msra.mxu0 %v3556
    %3713 = vmatpush.bf16.msra.mxu0 %v3554
    %3714 = vmatpush.bf16.msra.mxu0 %v3552
    %3715 = vmatpush.bf16.msra.mxu0 %v3550
    %3716 = vmatpush.bf16.msra.mxu0 %v3548
    %3717 = vmatpush.bf16.msra.mxu0 %v3546
    %3718 = vmatpush.bf16.msra.mxu0 %v3544
    %3719 = vmatpush.bf16.msra.mxu0 %v3542
    %3720 = vmatmul.bf16.gmra.mxu0 %v2256
    %v3721 = vpop.f32.mrf.mxu0
    %v3722 = vadd.f32 %v3709, %v3721
    %v3723 = vpop.f32.mrf.mxu0
    %3724 = vdwg.mxu0
    %v3725 = vmax.f32 %v3234, %v3670
    %v3726 = vmax.f32 %v3235, %v3722
    %v3727 = vpack.c.bf16 %v3725, %v3725
    %v3728 = vpack.c.bf16 %v3726, %v3726
    %v3729 = vld [vmem:[%s13] sm:$0xf]
    %v3730 = vld [vmem:[%s13 + $0x4] sm:$0xf]
    %v3731 = vld [vmem:[%s13 + $0x8] sm:$0xf]
    %v3732 = vld [vmem:[%s13 + $0xc] sm:$0xf]
    %v3733 = vld [vmem:[%s13 + $0x10] sm:$0xf]
    %v3734 = vld [vmem:[%s13 + $0x14] sm:$0xf]
    %v3735 = vld [vmem:[%s13 + $0x18] sm:$0xf]
    %v3736 = vld [vmem:[%s13 + $0x1c] sm:$0xf]
    %v3737 = vld [vmem:[%s13 + $0x20] sm:$0xf]
    %v3738 = vld [vmem:[%s13 + $0x24] sm:$0xf]
    %v3739 = vld [vmem:[%s13 + $0x28] sm:$0xf]
    %v3740 = vld [vmem:[%s13 + $0x2c] sm:$0xf]
    %v3741 = vld [vmem:[%s13 + $0x30] sm:$0xf]
    %v3742 = vld [vmem:[%s13 + $0x34] sm:$0xf]
    %v3743 = vld [vmem:[%s13 + $0x38] sm:$0xf]
    %v3744 = vld [vmem:[%s13 + $0x3c] sm:$0xf]
    %v3745 = vld [vmem:[%s13 + $0x40] sm:$0xf]
    %v3746 = vld [vmem:[%s13 + $0x44] sm:$0xf]
    %v3747 = vld [vmem:[%s13 + $0x48] sm:$0xf]
    %v3748 = vld [vmem:[%s13 + $0x4c] sm:$0xf]
    %v3749 = vld [vmem:[%s13 + $0x50] sm:$0xf]
    %v3750 = vld [vmem:[%s13 + $0x54] sm:$0xf]
    %v3751 = vld [vmem:[%s13 + $0x58] sm:$0xf]
    %v3752 = vld [vmem:[%s13 + $0x5c] sm:$0xf]
    %v3753 = vld [vmem:[%s13 + $0x60] sm:$0xf]
    %v3754 = vld [vmem:[%s13 + $0x64] sm:$0xf]
    %v3755 = vld [vmem:[%s13 + $0x68] sm:$0xf]
    %v3756 = vld [vmem:[%s13 + $0x6c] sm:$0xf]
    %v3757 = vld [vmem:[%s13 + $0x70] sm:$0xf]
    %v3758 = vld [vmem:[%s13 + $0x74] sm:$0xf]
    %v3759 = vld [vmem:[%s13 + $0x78] sm:$0xf]
    %v3760 = vld [vmem:[%s13 + $0x7c] sm:$0xf]
    %v3793 = vunpack.c.l.b16 %v3729
    %v3794 = vunpack.c.l.b16 %v3730
    %v3795 = vunpack.c.l.b16 %v3731
    %v3796 = vunpack.c.l.b16 %v3732
    %v3797 = vunpack.c.l.b16 %v3733
    %v3798 = vunpack.c.l.b16 %v3734
    %v3799 = vunpack.c.l.b16 %v3735
    %v3800 = vunpack.c.l.b16 %v3736
    %v3801 = vunpack.c.l.b16 %v3737
    %v3802 = vunpack.c.l.b16 %v3738
    %v3803 = vunpack.c.l.b16 %v3739
    %v3804 = vunpack.c.l.b16 %v3740
    %v3805 = vunpack.c.l.b16 %v3741
    %v3806 = vunpack.c.l.b16 %v3742
    %v3807 = vunpack.c.l.b16 %v3743
    %v3808 = vunpack.c.l.b16 %v3744
    %v3809 = vunpack.c.l.b16 %v3745
    %v3810 = vunpack.c.l.b16 %v3746
    %v3811 = vunpack.c.l.b16 %v3747
    %v3812 = vunpack.c.l.b16 %v3748
    %v3813 = vunpack.c.l.b16 %v3749
    %v3814 = vunpack.c.l.b16 %v3750
    %v3815 = vunpack.c.l.b16 %v3751
    %v3816 = vunpack.c.l.b16 %v3752
    %v3817 = vunpack.c.l.b16 %v3753
    %v3818 = vunpack.c.l.b16 %v3754
    %v3819 = vunpack.c.l.b16 %v3755
    %v3820 = vunpack.c.l.b16 %v3756
    %v3821 = vunpack.c.l.b16 %v3757
    %v3822 = vunpack.c.l.b16 %v3758
    %v3823 = vunpack.c.l.b16 %v3759
    %v3824 = vunpack.c.l.b16 %v3760
    %v3825 = vpack.c.b16 %v3794, %v3793
    %v3826 = vpack.c.b16 %v3796, %v3795
    %v3827 = vpack.c.b16 %v3798, %v3797
    %v3828 = vpack.c.b16 %v3800, %v3799
    %v3829 = vpack.c.b16 %v3802, %v3801
    %v3830 = vpack.c.b16 %v3804, %v3803
    %v3831 = vpack.c.b16 %v3806, %v3805
    %v3832 = vpack.c.b16 %v3808, %v3807
    %v3833 = vpack.c.b16 %v3810, %v3809
    %v3834 = vpack.c.b16 %v3812, %v3811
    %v3835 = vpack.c.b16 %v3814, %v3813
    %v3836 = vpack.c.b16 %v3816, %v3815
    %v3837 = vpack.c.b16 %v3818, %v3817
    %v3838 = vpack.c.b16 %v3820, %v3819
    %v3839 = vpack.c.b16 %v3822, %v3821
    %v3840 = vpack.c.b16 %v3824, %v3823
    %3857 = vmatpush.bf16.msra.mxu0 %v3832
    %3858 = vmatpush.bf16.msra.mxu0 %v3831
    %3859 = vmatpush.bf16.msra.mxu0 %v3830
    %3860 = vmatpush.bf16.msra.mxu0 %v3829
    %3861 = vmatpush.bf16.msra.mxu0 %v3828
    %3862 = vmatpush.bf16.msra.mxu0 %v3827
    %3863 = vmatpush.bf16.msra.mxu0 %v3826
    %3864 = vmatpush.bf16.msra.mxu0 %v3825
    %3865 = vmatmul.bf16.gmra.mxu0 %v3727
    %v3866 = vpop.f32.mrf.mxu0
    %v3867 = vadd.f32 0.0, %v3866
    %v3868 = vpop.f32.mrf.mxu0
    %3869 = vdwg.mxu0
    %3870 = vmatpush.bf16.msra.mxu0 %v3840
    %3871 = vmatpush.bf16.msra.mxu0 %v3839
    %3872 = vmatpush.bf16.msra.mxu0 %v3838
    %3873 = vmatpush.bf16.msra.mxu0 %v3837
    %3874 = vmatpush.bf16.msra.mxu0 %v3836
    %3875 = vmatpush.bf16.msra.mxu0 %v3835
    %3876 = vmatpush.bf16.msra.mxu0 %v3834
    %3877 = vmatpush.bf16.msra.mxu0 %v3833
    %3878 = vmatmul.bf16.gmra.mxu0 %v3728
    %v3879 = vpop.f32.mrf.mxu0
    %v3880 = vadd.f32 %v3867, %v3879
    %v3881 = vpop.f32.mrf.mxu0
    %3882 = vdwg.mxu0
    %s3883 = scalar_lea.vmem %s13, 128
    %v3884 = vld [vmem:[%s3883] sm:$0xf]
    %v3885 = vld [vmem:[%s3883 + $0x4] sm:$0xf]
    %v3886 = vld [vmem:[%s3883 + $0x8] sm:$0xf]
    %v3887 = vld [vmem:[%s3883 + $0xc] sm:$0xf]
    %v3888 = vld [vmem:[%s3883 + $0x10] sm:$0xf]
    %v3889 = vld [vmem:[%s3883 + $0x14] sm:$0xf]
    %v3890 = vld [vmem:[%s3883 + $0x18] sm:$0xf]
    %v3891 = vld [vmem:[%s3883 + $0x1c] sm:$0xf]
    %v3892 = vld [vmem:[%s3883 + $0x20] sm:$0xf]
    %v3893 = vld [vmem:[%s3883 + $0x24] sm:$0xf]
    %v3894 = vld [vmem:[%s3883 + $0x28] sm:$0xf]
    %v3895 = vld [vmem:[%s3883 + $0x2c] sm:$0xf]
    %v3896 = vld [vmem:[%s3883 + $0x30] sm:$0xf]
    %v3897 = vld [vmem:[%s3883 + $0x34] sm:$0xf]
    %v3898 = vld [vmem:[%s3883 + $0x38] sm:$0xf]
    %v3899 = vld [vmem:[%s3883 + $0x3c] sm:$0xf]
    %v3900 = vld [vmem:[%s3883 + $0x40] sm:$0xf]
    %v3901 = vld [vmem:[%s3883 + $0x44] sm:$0xf]
    %v3902 = vld [vmem:[%s3883 + $0x48] sm:$0xf]
    %v3903 = vld [vmem:[%s3883 + $0x4c] sm:$0xf]
    %v3904 = vld [vmem:[%s3883 + $0x50] sm:$0xf]
    %v3905 = vld [vmem:[%s3883 + $0x54] sm:$0xf]
    %v3906 = vld [vmem:[%s3883 + $0x58] sm:$0xf]
    %v3907 = vld [vmem:[%s3883 + $0x5c] sm:$0xf]
    %v3908 = vld [vmem:[%s3883 + $0x60] sm:$0xf]
    %v3909 = vld [vmem:[%s3883 + $0x64] sm:$0xf]
    %v3910 = vld [vmem:[%s3883 + $0x68] sm:$0xf]
    %v3911 = vld [vmem:[%s3883 + $0x6c] sm:$0xf]
    %v3912 = vld [vmem:[%s3883 + $0x70] sm:$0xf]
    %v3913 = vld [vmem:[%s3883 + $0x74] sm:$0xf]
    %v3914 = vld [vmem:[%s3883 + $0x78] sm:$0xf]
    %v3915 = vld [vmem:[%s3883 + $0x7c] sm:$0xf]
    %v3948 = vunpack.c.l.b16 %v3884
    %v3949 = vunpack.c.l.b16 %v3885
    %v3950 = vunpack.c.l.b16 %v3886
    %v3951 = vunpack.c.l.b16 %v3887
    %v3952 = vunpack.c.l.b16 %v3888
    %v3953 = vunpack.c.l.b16 %v3889
    %v3954 = vunpack.c.l.b16 %v3890
    %v3955 = vunpack.c.l.b16 %v3891
    %v3956 = vunpack.c.l.b16 %v3892
    %v3957 = vunpack.c.l.b16 %v3893
    %v3958 = vunpack.c.l.b16 %v3894
    %v3959 = vunpack.c.l.b16 %v3895
    %v3960 = vunpack.c.l.b16 %v3896
    %v3961 = vunpack.c.l.b16 %v3897
    %v3962 = vunpack.c.l.b16 %v3898
    %v3963 = vunpack.c.l.b16 %v3899
    %v3964 = vunpack.c.l.b16 %v3900
    %v3965 = vunpack.c.l.b16 %v3901
    %v3966 = vunpack.c.l.b16 %v3902
    %v3967 = vunpack.c.l.b16 %v3903
    %v3968 = vunpack.c.l.b16 %v3904
    %v3969 = vunpack.c.l.b16 %v3905
    %v3970 = vunpack.c.l.b16 %v3906
    %v3971 = vunpack.c.l.b16 %v3907
    %v3972 = vunpack.c.l.b16 %v3908
    %v3973 = vunpack.c.l.b16 %v3909
    %v3974 = vunpack.c.l.b16 %v3910
    %v3975 = vunpack.c.l.b16 %v3911
    %v3976 = vunpack.c.l.b16 %v3912
    %v3977 = vunpack.c.l.b16 %v3913
    %v3978 = vunpack.c.l.b16 %v3914
    %v3979 = vunpack.c.l.b16 %v3915
    %v3980 = vpack.c.b16 %v3949, %v3948
    %v3981 = vpack.c.b16 %v3951, %v3950
    %v3982 = vpack.c.b16 %v3953, %v3952
    %v3983 = vpack.c.b16 %v3955, %v3954
    %v3984 = vpack.c.b16 %v3957, %v3956
    %v3985 = vpack.c.b16 %v3959, %v3958
    %v3986 = vpack.c.b16 %v3961, %v3960
    %v3987 = vpack.c.b16 %v3963, %v3962
    %v3988 = vpack.c.b16 %v3965, %v3964
    %v3989 = vpack.c.b16 %v3967, %v3966
    %v3990 = vpack.c.b16 %v3969, %v3968
    %v3991 = vpack.c.b16 %v3971, %v3970
    %v3992 = vpack.c.b16 %v3973, %v3972
    %v3993 = vpack.c.b16 %v3975, %v3974
    %v3994 = vpack.c.b16 %v3977, %v3976
    %v3995 = vpack.c.b16 %v3979, %v3978
    %4012 = vmatpush.bf16.msra.mxu0 %v3987
    %4013 = vmatpush.bf16.msra.mxu0 %v3986
    %4014 = vmatpush.bf16.msra.mxu0 %v3985
    %4015 = vmatpush.bf16.msra.mxu0 %v3984
    %4016 = vmatpush.bf16.msra.mxu0 %v3983
    %4017 = vmatpush.bf16.msra.mxu0 %v3982
    %4018 = vmatpush.bf16.msra.mxu0 %v3981
    %4019 = vmatpush.bf16.msra.mxu0 %v3980
    %4020 = vmatmul.bf16.gmra.mxu0 %v3727
    %v4021 = vpop.f32.mrf.mxu0
    %v4022 = vadd.f32 0.0, %v4021
    %v4023 = vpop.f32.mrf.mxu0
    %4024 = vdwg.mxu0
    %4025 = vmatpush.bf16.msra.mxu0 %v3995
    %4026 = vmatpush.bf16.msra.mxu0 %v3994
    %4027 = vmatpush.bf16.msra.mxu0 %v3993
    %4028 = vmatpush.bf16.msra.mxu0 %v3992
    %4029 = vmatpush.bf16.msra.mxu0 %v3991
    %4030 = vmatpush.bf16.msra.mxu0 %v3990
    %4031 = vmatpush.bf16.msra.mxu0 %v3989
    %4032 = vmatpush.bf16.msra.mxu0 %v3988
    %4033 = vmatmul.bf16.gmra.mxu0 %v3728
    %v4034 = vpop.f32.mrf.mxu0
    %v4035 = vadd.f32 %v4022, %v4034
    %v4036 = vpop.f32.mrf.mxu0
    %4037 = vdwg.mxu0
    %v4038 = vmax.f32 %v3880, %v4035
    %s4039 = scalar_lea.vmem %s13, 256
    %v4040 = vld [vmem:[%s4039] sm:$0xf]
    %v4041 = vld [vmem:[%s4039 + $0x4] sm:$0xf]
    %v4042 = vld [vmem:[%s4039 + $0x8] sm:$0xf]
    %v4043 = vld [vmem:[%s4039 + $0xc] sm:$0xf]
    %v4044 = vld [vmem:[%s4039 + $0x10] sm:$0xf]
    %v4045 = vld [vmem:[%s4039 + $0x14] sm:$0xf]
    %v4046 = vld [vmem:[%s4039 + $0x18] sm:$0xf]
    %v4047 = vld [vmem:[%s4039 + $0x1c] sm:$0xf]
    %v4048 = vld [vmem:[%s4039 + $0x20] sm:$0xf]
    %v4049 = vld [vmem:[%s4039 + $0x24] sm:$0xf]
    %v4050 = vld [vmem:[%s4039 + $0x28] sm:$0xf]
    %v4051 = vld [vmem:[%s4039 + $0x2c] sm:$0xf]
    %v4052 = vld [vmem:[%s4039 + $0x30] sm:$0xf]
    %v4053 = vld [vmem:[%s4039 + $0x34] sm:$0xf]
    %v4054 = vld [vmem:[%s4039 + $0x38] sm:$0xf]
    %v4055 = vld [vmem:[%s4039 + $0x3c] sm:$0xf]
    %v4056 = vld [vmem:[%s4039 + $0x40] sm:$0xf]
    %v4057 = vld [vmem:[%s4039 + $0x44] sm:$0xf]
    %v4058 = vld [vmem:[%s4039 + $0x48] sm:$0xf]
    %v4059 = vld [vmem:[%s4039 + $0x4c] sm:$0xf]
    %v4060 = vld [vmem:[%s4039 + $0x50] sm:$0xf]
    %v4061 = vld [vmem:[%s4039 + $0x54] sm:$0xf]
    %v4062 = vld [vmem:[%s4039 + $0x58] sm:$0xf]
    %v4063 = vld [vmem:[%s4039 + $0x5c] sm:$0xf]
    %v4064 = vld [vmem:[%s4039 + $0x60] sm:$0xf]
    %v4065 = vld [vmem:[%s4039 + $0x64] sm:$0xf]
    %v4066 = vld [vmem:[%s4039 + $0x68] sm:$0xf]
    %v4067 = vld [vmem:[%s4039 + $0x6c] sm:$0xf]
    %v4068 = vld [vmem:[%s4039 + $0x70] sm:$0xf]
    %v4069 = vld [vmem:[%s4039 + $0x74] sm:$0xf]
    %v4070 = vld [vmem:[%s4039 + $0x78] sm:$0xf]
    %v4071 = vld [vmem:[%s4039 + $0x7c] sm:$0xf]
    %v4104 = vunpack.c.l.b16 %v4040
    %v4105 = vunpack.c.l.b16 %v4041
    %v4106 = vunpack.c.l.b16 %v4042
    %v4107 = vunpack.c.l.b16 %v4043
    %v4108 = vunpack.c.l.b16 %v4044
    %v4109 = vunpack.c.l.b16 %v4045
    %v4110 = vunpack.c.l.b16 %v4046
    %v4111 = vunpack.c.l.b16 %v4047
    %v4112 = vunpack.c.l.b16 %v4048
    %v4113 = vunpack.c.l.b16 %v4049
    %v4114 = vunpack.c.l.b16 %v4050
    %v4115 = vunpack.c.l.b16 %v4051
    %v4116 = vunpack.c.l.b16 %v4052
    %v4117 = vunpack.c.l.b16 %v4053
    %v4118 = vunpack.c.l.b16 %v4054
    %v4119 = vunpack.c.l.b16 %v4055
    %v4120 = vunpack.c.l.b16 %v4056
    %v4121 = vunpack.c.l.b16 %v4057
    %v4122 = vunpack.c.l.b16 %v4058
    %v4123 = vunpack.c.l.b16 %v4059
    %v4124 = vunpack.c.l.b16 %v4060
    %v4125 = vunpack.c.l.b16 %v4061
    %v4126 = vunpack.c.l.b16 %v4062
    %v4127 = vunpack.c.l.b16 %v4063
    %v4128 = vunpack.c.l.b16 %v4064
    %v4129 = vunpack.c.l.b16 %v4065
    %v4130 = vunpack.c.l.b16 %v4066
    %v4131 = vunpack.c.l.b16 %v4067
    %v4132 = vunpack.c.l.b16 %v4068
    %v4133 = vunpack.c.l.b16 %v4069
    %v4134 = vunpack.c.l.b16 %v4070
    %v4135 = vunpack.c.l.b16 %v4071
    %v4136 = vpack.c.b16 %v4105, %v4104
    %v4137 = vpack.c.b16 %v4107, %v4106
    %v4138 = vpack.c.b16 %v4109, %v4108
    %v4139 = vpack.c.b16 %v4111, %v4110
    %v4140 = vpack.c.b16 %v4113, %v4112
    %v4141 = vpack.c.b16 %v4115, %v4114
    %v4142 = vpack.c.b16 %v4117, %v4116
    %v4143 = vpack.c.b16 %v4119, %v4118
    %v4144 = vpack.c.b16 %v4121, %v4120
    %v4145 = vpack.c.b16 %v4123, %v4122
    %v4146 = vpack.c.b16 %v4125, %v4124
    %v4147 = vpack.c.b16 %v4127, %v4126
    %v4148 = vpack.c.b16 %v4129, %v4128
    %v4149 = vpack.c.b16 %v4131, %v4130
    %v4150 = vpack.c.b16 %v4133, %v4132
    %v4151 = vpack.c.b16 %v4135, %v4134
    %4168 = vmatpush.bf16.msra.mxu0 %v4143
    %4169 = vmatpush.bf16.msra.mxu0 %v4142
    %4170 = vmatpush.bf16.msra.mxu0 %v4141
    %4171 = vmatpush.bf16.msra.mxu0 %v4140
    %4172 = vmatpush.bf16.msra.mxu0 %v4139
    %4173 = vmatpush.bf16.msra.mxu0 %v4138
    %4174 = vmatpush.bf16.msra.mxu0 %v4137
    %4175 = vmatpush.bf16.msra.mxu0 %v4136
    %4176 = vmatmul.bf16.gmra.mxu0 %v3727
    %v4177 = vpop.f32.mrf.mxu0
    %v4178 = vadd.f32 0.0, %v4177
    %v4179 = vpop.f32.mrf.mxu0
    %4180 = vdwg.mxu0
    %4181 = vmatpush.bf16.msra.mxu0 %v4151
    %4182 = vmatpush.bf16.msra.mxu0 %v4150
    %4183 = vmatpush.bf16.msra.mxu0 %v4149
    %4184 = vmatpush.bf16.msra.mxu0 %v4148
    %4185 = vmatpush.bf16.msra.mxu0 %v4147
    %4186 = vmatpush.bf16.msra.mxu0 %v4146
    %4187 = vmatpush.bf16.msra.mxu0 %v4145
    %4188 = vmatpush.bf16.msra.mxu0 %v4144
    %4189 = vmatmul.bf16.gmra.mxu0 %v3728
    %v4190 = vpop.f32.mrf.mxu0
    %v4191 = vadd.f32 %v4178, %v4190
    %v4192 = vpop.f32.mrf.mxu0
    %4193 = vdwg.mxu0
    %v4194 = vmax.f32 %v4038, %v4191
    %v4195 = vpack.c.bf16 %v4194, %v4194
    %v4196 = vld [vmem:[%s15] sm:$0xf]
    %v4197 = vld [vmem:[%s15 + $0x4] sm:$0xf]
    %v4198 = vld [vmem:[%s15 + $0x8] sm:$0xf]
    %v4199 = vld [vmem:[%s15 + $0xc] sm:$0xf]
    %v4200 = vld [vmem:[%s15 + $0x10] sm:$0xf]
    %v4201 = vld [vmem:[%s15 + $0x14] sm:$0xf]
    %v4202 = vld [vmem:[%s15 + $0x18] sm:$0xf]
    %v4203 = vld [vmem:[%s15 + $0x1c] sm:$0xf]
    %v4204 = vld [vmem:[%s15 + $0x20] sm:$0xf]
    %v4205 = vld [vmem:[%s15 + $0x24] sm:$0xf]
    %v4206 = vld [vmem:[%s15 + $0x28] sm:$0xf]
    %v4207 = vld [vmem:[%s15 + $0x2c] sm:$0xf]
    %v4208 = vld [vmem:[%s15 + $0x30] sm:$0xf]
    %v4209 = vld [vmem:[%s15 + $0x34] sm:$0xf]
    %v4210 = vld [vmem:[%s15 + $0x38] sm:$0xf]
    %v4211 = vld [vmem:[%s15 + $0x3c] sm:$0xf]
    %v4212 = vld [vmem:[%s17] sm:$0x1]
    %v4214 = vperm.slane %v4212, 0
    %v4232 = vunpack.c.l.b16 %v4196
    %v4233 = vunpack.c.l.b16 %v4197
    %v4234 = vunpack.c.l.b16 %v4198
    %v4235 = vunpack.c.l.b16 %v4199
    %v4236 = vunpack.c.l.b16 %v4200
    %v4237 = vunpack.c.l.b16 %v4201
    %v4238 = vunpack.c.l.b16 %v4202
    %v4239 = vunpack.c.l.b16 %v4203
    %v4240 = vunpack.c.l.b16 %v4204
    %v4241 = vunpack.c.l.b16 %v4205
    %v4242 = vunpack.c.l.b16 %v4206
    %v4243 = vunpack.c.l.b16 %v4207
    %v4244 = vunpack.c.l.b16 %v4208
    %v4245 = vunpack.c.l.b16 %v4209
    %v4246 = vunpack.c.l.b16 %v4210
    %v4247 = vunpack.c.l.b16 %v4211
    %v4248 = vpack.c.b16 %v4233, %v4232
    %v4249 = vpack.c.b16 %v4235, %v4234
    %v4250 = vpack.c.b16 %v4237, %v4236
    %v4251 = vpack.c.b16 %v4239, %v4238
    %v4252 = vpack.c.b16 %v4241, %v4240
    %v4253 = vpack.c.b16 %v4243, %v4242
    %v4254 = vpack.c.b16 %v4245, %v4244
    %v4255 = vpack.c.b16 %v4247, %v4246
    %4264 = vmatpush.bf16.msra.mxu0 %v4255
    %4265 = vmatpush.bf16.msra.mxu0 %v4254
    %4266 = vmatpush.bf16.msra.mxu0 %v4253
    %4267 = vmatpush.bf16.msra.mxu0 %v4252
    %4268 = vmatpush.bf16.msra.mxu0 %v4251
    %4269 = vmatpush.bf16.msra.mxu0 %v4250
    %4270 = vmatpush.bf16.msra.mxu0 %v4249
    %4271 = vmatpush.bf16.msra.mxu0 %v4248
    %4272 = vmatmul.bf16.gmra.mxu0 %v4195
    %v4273 = vpop.f32.mrf.mxu0
    %v4274 = vadd.f32 %v4214, %v4273
    %v4275 = vpop.f32.mrf.mxu0
    %4276 = vdwg.mxu0
    %v4277 = vmax.f32 %v4274, 0.0
    %v4278 = vpack.c.bf16 %v4277, %v4277
    %v4279 = vld [vmem:[#allocation7] sm:$0xf]
    %v4280 = vld [vmem:[#allocation7 + $0x4] sm:$0xf]
    %v4281 = vld [vmem:[#allocation7 + $0x8] sm:$0xf]
    %v4282 = vld [vmem:[#allocation7 + $0xc] sm:$0xf]
    %v4283 = vld [vmem:[#allocation7 + $0x10] sm:$0xf]
    %v4284 = vld [vmem:[#allocation7 + $0x14] sm:$0xf]
    %v4285 = vld [vmem:[#allocation7 + $0x18] sm:$0xf]
    %v4286 = vld [vmem:[#allocation7 + $0x1c] sm:$0xf]
    %v4287 = vld [vmem:[#allocation7 + $0x20] sm:$0xf]
    %v4288 = vld [vmem:[#allocation7 + $0x24] sm:$0xf]
    %v4289 = vld [vmem:[#allocation7 + $0x28] sm:$0xf]
    %v4290 = vld [vmem:[#allocation7 + $0x2c] sm:$0xf]
    %v4291 = vld [vmem:[#allocation7 + $0x30] sm:$0xf]
    %v4292 = vld [vmem:[#allocation7 + $0x34] sm:$0xf]
    %v4293 = vld [vmem:[#allocation7 + $0x38] sm:$0xf]
    %v4294 = vld [vmem:[#allocation7 + $0x3c] sm:$0xf]
    %v4295 = vld [vmem:[#allocation8] sm:$0x1]
    %v4297 = vperm.slane %v4295, 0
    %v4315 = vunpack.c.l.b16 %v4279
    %v4316 = vunpack.c.l.b16 %v4280
    %v4317 = vunpack.c.l.b16 %v4281
    %v4318 = vunpack.c.l.b16 %v4282
    %v4319 = vunpack.c.l.b16 %v4283
    %v4320 = vunpack.c.l.b16 %v4284
    %v4321 = vunpack.c.l.b16 %v4285
    %v4322 = vunpack.c.l.b16 %v4286
    %v4323 = vunpack.c.l.b16 %v4287
    %v4324 = vunpack.c.l.b16 %v4288
    %v4325 = vunpack.c.l.b16 %v4289
    %v4326 = vunpack.c.l.b16 %v4290
    %v4327 = vunpack.c.l.b16 %v4291
    %v4328 = vunpack.c.l.b16 %v4292
    %v4329 = vunpack.c.l.b16 %v4293
    %v4330 = vunpack.c.l.b16 %v4294
    %v4331 = vpack.c.b16 %v4316, %v4315
    %v4332 = vpack.c.b16 %v4318, %v4317
    %v4333 = vpack.c.b16 %v4320, %v4319
    %v4334 = vpack.c.b16 %v4322, %v4321
    %v4335 = vpack.c.b16 %v4324, %v4323
    %v4336 = vpack.c.b16 %v4326, %v4325
    %v4337 = vpack.c.b16 %v4328, %v4327
    %v4338 = vpack.c.b16 %v4330, %v4329
    %4347 = vmatpush.bf16.msra.mxu0 %v4338
    %4348 = vmatpush.bf16.msra.mxu0 %v4337
    %4349 = vmatpush.bf16.msra.mxu0 %v4336
    %4350 = vmatpush.bf16.msra.mxu0 %v4335
    %4351 = vmatpush.bf16.msra.mxu0 %v4334
    %4352 = vmatpush.bf16.msra.mxu0 %v4333
    %4353 = vmatpush.bf16.msra.mxu0 %v4332
    %4354 = vmatpush.bf16.msra.mxu0 %v4331
    %4355 = vmatmul.bf16.gmra.mxu0 %v4278
    %v4356 = vpop.f32.mrf.mxu0
    %v4357 = vadd.f32 %v4297, %v4356
    %v4358 = vpop.f32.mrf.mxu0
    %4359 = vdwg.mxu0
    %v4360 = vadd.f32 %v4357, %v4194
    %v4361 = vmax.f32 %v4360, 0.0
    %v4362 = vpack.c.bf16 %v4361, %v4361
    %v4363 = vld [vmem:[#allocation10] sm:$0xf]
    %v4364 = vld [vmem:[#allocation10 + $0x4] sm:$0xf]
    %v4365 = vld [vmem:[#allocation10 + $0x8] sm:$0xf]
    %v4366 = vld [vmem:[#allocation10 + $0xc] sm:$0xf]
    %v4367 = vld [vmem:[#allocation10 + $0x10] sm:$0xf]
    %v4368 = vld [vmem:[#allocation10 + $0x14] sm:$0xf]
    %v4369 = vld [vmem:[#allocation10 + $0x18] sm:$0xf]
    %v4370 = vld [vmem:[#allocation10 + $0x1c] sm:$0xf]
    %v4371 = vld [vmem:[#allocation10 + $0x20] sm:$0xf]
    %v4372 = vld [vmem:[#allocation10 + $0x24] sm:$0xf]
    %v4373 = vld [vmem:[#allocation10 + $0x28] sm:$0xf]
    %v4374 = vld [vmem:[#allocation10 + $0x2c] sm:$0xf]
    %v4375 = vld [vmem:[#allocation10 + $0x30] sm:$0xf]
    %v4376 = vld [vmem:[#allocation10 + $0x34] sm:$0xf]
    %v4377 = vld [vmem:[#allocation10 + $0x38] sm:$0xf]
    %v4378 = vld [vmem:[#allocation10 + $0x3c] sm:$0xf]
    %v4379 = vld [vmem:[#allocation11] sm:$0x1]
    %v4381 = vperm.slane %v4379, 0
    %v4399 = vunpack.c.l.b16 %v4363
    %v4400 = vunpack.c.l.b16 %v4364
    %v4401 = vunpack.c.l.b16 %v4365
    %v4402 = vunpack.c.l.b16 %v4366
    %v4403 = vunpack.c.l.b16 %v4367
    %v4404 = vunpack.c.l.b16 %v4368
    %v4405 = vunpack.c.l.b16 %v4369
    %v4406 = vunpack.c.l.b16 %v4370
    %v4407 = vunpack.c.l.b16 %v4371
    %v4408 = vunpack.c.l.b16 %v4372
    %v4409 = vunpack.c.l.b16 %v4373
    %v4410 = vunpack.c.l.b16 %v4374
    %v4411 = vunpack.c.l.b16 %v4375
    %v4412 = vunpack.c.l.b16 %v4376
    %v4413 = vunpack.c.l.b16 %v4377
    %v4414 = vunpack.c.l.b16 %v4378
    %v4415 = vpack.c.b16 %v4400, %v4399
    %v4416 = vpack.c.b16 %v4402, %v4401
    %v4417 = vpack.c.b16 %v4404, %v4403
    %v4418 = vpack.c.b16 %v4406, %v4405
    %v4419 = vpack.c.b16 %v4408, %v4407
    %v4420 = vpack.c.b16 %v4410, %v4409
    %v4421 = vpack.c.b16 %v4412, %v4411
    %v4422 = vpack.c.b16 %v4414, %v4413
    %4431 = vmatpush.bf16.msra.mxu0 %v4422
    %4432 = vmatpush.bf16.msra.mxu0 %v4421
    %4433 = vmatpush.bf16.msra.mxu0 %v4420
    %4434 = vmatpush.bf16.msra.mxu0 %v4419
    %4435 = vmatpush.bf16.msra.mxu0 %v4418
    %4436 = vmatpush.bf16.msra.mxu0 %v4417
    %4437 = vmatpush.bf16.msra.mxu0 %v4416
    %4438 = vmatpush.bf16.msra.mxu0 %v4415
    %4439 = vmatmul.bf16.gmra.mxu0 %v4362
    %v4440 = vpop.f32.mrf.mxu0
    %v4441 = vadd.f32 %v4381, %v4440
    %v4442 = vpop.f32.mrf.mxu0
    %4443 = vdwg.mxu0
    %v4444 = vmax.f32 %v4441, 0.0
    %v4445 = vpack.c.bf16 %v4444, %v4444
    %v4446 = vld [vmem:[#allocation13] sm:$0xf]
    %v4447 = vld [vmem:[#allocation13 + $0x4] sm:$0xf]
    %v4448 = vld [vmem:[#allocation13 + $0x8] sm:$0xf]
    %v4449 = vld [vmem:[#allocation13 + $0xc] sm:$0xf]
    %v4450 = vld [vmem:[#allocation13 + $0x10] sm:$0xf]
    %v4451 = vld [vmem:[#allocation13 + $0x14] sm:$0xf]
    %v4452 = vld [vmem:[#allocation13 + $0x18] sm:$0xf]
    %v4453 = vld [vmem:[#allocation13 + $0x1c] sm:$0xf]
    %v4454 = vld [vmem:[#allocation13 + $0x20] sm:$0xf]
    %v4455 = vld [vmem:[#allocation13 + $0x24] sm:$0xf]
    %v4456 = vld [vmem:[#allocation13 + $0x28] sm:$0xf]
    %v4457 = vld [vmem:[#allocation13 + $0x2c] sm:$0xf]
    %v4458 = vld [vmem:[#allocation13 + $0x30] sm:$0xf]
    %v4459 = vld [vmem:[#allocation13 + $0x34] sm:$0xf]
    %v4460 = vld [vmem:[#allocation13 + $0x38] sm:$0xf]
    %v4461 = vld [vmem:[#allocation13 + $0x3c] sm:$0xf]
    %v4462 = vld [vmem:[#allocation14] sm:$0x1]
    %v4464 = vperm.slane %v4462, 0
    %v4482 = vunpack.c.l.b16 %v4446
    %v4483 = vunpack.c.l.b16 %v4447
    %v4484 = vunpack.c.l.b16 %v4448
    %v4485 = vunpack.c.l.b16 %v4449
    %v4486 = vunpack.c.l.b16 %v4450
    %v4487 = vunpack.c.l.b16 %v4451
    %v4488 = vunpack.c.l.b16 %v4452
    %v4489 = vunpack.c.l.b16 %v4453
    %v4490 = vunpack.c.l.b16 %v4454
    %v4491 = vunpack.c.l.b16 %v4455
    %v4492 = vunpack.c.l.b16 %v4456
    %v4493 = vunpack.c.l.b16 %v4457
    %v4494 = vunpack.c.l.b16 %v4458
    %v4495 = vunpack.c.l.b16 %v4459
    %v4496 = vunpack.c.l.b16 %v4460
    %v4497 = vunpack.c.l.b16 %v4461
    %v4498 = vpack.c.b16 %v4483, %v4482
    %v4499 = vpack.c.b16 %v4485, %v4484
    %v4500 = vpack.c.b16 %v4487, %v4486
    %v4501 = vpack.c.b16 %v4489, %v4488
    %v4502 = vpack.c.b16 %v4491, %v4490
    %v4503 = vpack.c.b16 %v4493, %v4492
    %v4504 = vpack.c.b16 %v4495, %v4494
    %v4505 = vpack.c.b16 %v4497, %v4496
    %4514 = vmatpush.bf16.msra.mxu0 %v4505
    %4515 = vmatpush.bf16.msra.mxu0 %v4504
    %4516 = vmatpush.bf16.msra.mxu0 %v4503
    %4517 = vmatpush.bf16.msra.mxu0 %v4502
    %4518 = vmatpush.bf16.msra.mxu0 %v4501
    %4519 = vmatpush.bf16.msra.mxu0 %v4500
    %4520 = vmatpush.bf16.msra.mxu0 %v4499
    %4521 = vmatpush.bf16.msra.mxu0 %v4498
    %4522 = vmatmul.bf16.gmra.mxu0 %v4445
    %v4523 = vpop.f32.mrf.mxu0
    %v4524 = vadd.f32 %v4464, %v4523
    %v4525 = vpop.f32.mrf.mxu0
    %4526 = vdwg.mxu0
    %v4527 = vadd.f32 %v4524, %v4361
    %v4528 = vmax.f32 %v4527, 0.0
    %v4529 = vpack.c.bf16 %v4528, %v4528
    %v4530 = vld [vmem:[#allocation22] sm:$0xf]
    %v4531 = vld [vmem:[#allocation22 + $0x4] sm:$0xf]
    %v4532 = vld [vmem:[#allocation22 + $0x8] sm:$0xf]
    %v4533 = vld [vmem:[#allocation22 + $0xc] sm:$0xf]
    %v4534 = vld [vmem:[#allocation22 + $0x10] sm:$0xf]
    %v4535 = vld [vmem:[#allocation22 + $0x14] sm:$0xf]
    %v4536 = vld [vmem:[#allocation22 + $0x18] sm:$0xf]
    %v4537 = vld [vmem:[#allocation22 + $0x1c] sm:$0xf]
    %v4538 = vld [vmem:[#allocation22 + $0x20] sm:$0xf]
    %v4539 = vld [vmem:[#allocation22 + $0x24] sm:$0xf]
    %v4540 = vld [vmem:[#allocation22 + $0x28] sm:$0xf]
    %v4541 = vld [vmem:[#allocation22 + $0x2c] sm:$0xf]
    %v4542 = vld [vmem:[#allocation22 + $0x30] sm:$0xf]
    %v4543 = vld [vmem:[#allocation22 + $0x34] sm:$0xf]
    %v4544 = vld [vmem:[#allocation22 + $0x38] sm:$0xf]
    %v4545 = vld [vmem:[#allocation22 + $0x3c] sm:$0xf]
    %v4546 = vld [vmem:[#allocation23] sm:$0x1]
    %v4548 = vperm.slane %v4546, 0
    %v4566 = vunpack.c.l.b16 %v4530
    %v4567 = vunpack.c.l.b16 %v4531
    %v4568 = vunpack.c.l.b16 %v4532
    %v4569 = vunpack.c.l.b16 %v4533
    %v4570 = vunpack.c.l.b16 %v4534
    %v4571 = vunpack.c.l.b16 %v4535
    %v4572 = vunpack.c.l.b16 %v4536
    %v4573 = vunpack.c.l.b16 %v4537
    %v4574 = vunpack.c.l.b16 %v4538
    %v4575 = vunpack.c.l.b16 %v4539
    %v4576 = vunpack.c.l.b16 %v4540
    %v4577 = vunpack.c.l.b16 %v4541
    %v4578 = vunpack.c.l.b16 %v4542
    %v4579 = vunpack.c.l.b16 %v4543
    %v4580 = vunpack.c.l.b16 %v4544
    %v4581 = vunpack.c.l.b16 %v4545
    %v4582 = vpack.c.b16 %v4567, %v4566
    %v4583 = vpack.c.b16 %v4569, %v4568
    %v4584 = vpack.c.b16 %v4571, %v4570
    %v4585 = vpack.c.b16 %v4573, %v4572
    %v4586 = vpack.c.b16 %v4575, %v4574
    %v4587 = vpack.c.b16 %v4577, %v4576
    %v4588 = vpack.c.b16 %v4579, %v4578
    %v4589 = vpack.c.b16 %v4581, %v4580
    %4598 = vmatpush.bf16.msra.mxu0 %v4589
    %4599 = vmatpush.bf16.msra.mxu0 %v4588
    %4600 = vmatpush.bf16.msra.mxu0 %v4587
    %4601 = vmatpush.bf16.msra.mxu0 %v4586
    %4602 = vmatpush.bf16.msra.mxu0 %v4585
    %4603 = vmatpush.bf16.msra.mxu0 %v4584
    %4604 = vmatpush.bf16.msra.mxu0 %v4583
    %4605 = vmatpush.bf16.msra.mxu0 %v4582
    %4606 = vmatmul.bf16.gmra.mxu0 %v4529
    %v4607 = vpop.f32.mrf.mxu0
    %v4608 = vadd.f32 %v4548, %v4607
    %v4609 = vpop.f32.mrf.mxu0
    %4610 = vdwg.mxu0
    %v4611 = vld [vmem:[#allocation16] sm:$0xf]
    %v4612 = vld [vmem:[#allocation16 + $0x4] sm:$0xf]
    %v4613 = vld [vmem:[#allocation16 + $0x8] sm:$0xf]
    %v4614 = vld [vmem:[#allocation16 + $0xc] sm:$0xf]
    %v4615 = vld [vmem:[#allocation16 + $0x10] sm:$0xf]
    %v4616 = vld [vmem:[#allocation16 + $0x14] sm:$0xf]
    %v4617 = vld [vmem:[#allocation16 + $0x18] sm:$0xf]
    %v4618 = vld [vmem:[#allocation16 + $0x1c] sm:$0xf]
    %v4619 = vld [vmem:[#allocation16 + $0x20] sm:$0xf]
    %v4620 = vld [vmem:[#allocation16 + $0x24] sm:$0xf]
    %v4621 = vld [vmem:[#allocation16 + $0x28] sm:$0xf]
    %v4622 = vld [vmem:[#allocation16 + $0x2c] sm:$0xf]
    %v4623 = vld [vmem:[#allocation16 + $0x30] sm:$0xf]
    %v4624 = vld [vmem:[#allocation16 + $0x34] sm:$0xf]
    %v4625 = vld [vmem:[#allocation16 + $0x38] sm:$0xf]
    %v4626 = vld [vmem:[#allocation16 + $0x3c] sm:$0xf]
    %v4627 = vld [vmem:[#allocation17] sm:$0x1]
    %v4629 = vperm.slane %v4627, 0
    %v4647 = vunpack.c.l.b16 %v4611
    %v4648 = vunpack.c.l.b16 %v4612
    %v4649 = vunpack.c.l.b16 %v4613
    %v4650 = vunpack.c.l.b16 %v4614
    %v4651 = vunpack.c.l.b16 %v4615
    %v4652 = vunpack.c.l.b16 %v4616
    %v4653 = vunpack.c.l.b16 %v4617
    %v4654 = vunpack.c.l.b16 %v4618
    %v4655 = vunpack.c.l.b16 %v4619
    %v4656 = vunpack.c.l.b16 %v4620
    %v4657 = vunpack.c.l.b16 %v4621
    %v4658 = vunpack.c.l.b16 %v4622
    %v4659 = vunpack.c.l.b16 %v4623
    %v4660 = vunpack.c.l.b16 %v4624
    %v4661 = vunpack.c.l.b16 %v4625
    %v4662 = vunpack.c.l.b16 %v4626
    %v4663 = vpack.c.b16 %v4648, %v4647
    %v4664 = vpack.c.b16 %v4650, %v4649
    %v4665 = vpack.c.b16 %v4652, %v4651
    %v4666 = vpack.c.b16 %v4654, %v4653
    %v4667 = vpack.c.b16 %v4656, %v4655
    %v4668 = vpack.c.b16 %v4658, %v4657
    %v4669 = vpack.c.b16 %v4660, %v4659
    %v4670 = vpack.c.b16 %v4662, %v4661
    %4679 = vmatpush.bf16.msra.mxu0 %v4670
    %4680 = vmatpush.bf16.msra.mxu0 %v4669
    %4681 = vmatpush.bf16.msra.mxu0 %v4668
    %4682 = vmatpush.bf16.msra.mxu0 %v4667
    %4683 = vmatpush.bf16.msra.mxu0 %v4666
    %4684 = vmatpush.bf16.msra.mxu0 %v4665
    %4685 = vmatpush.bf16.msra.mxu0 %v4664
    %4686 = vmatpush.bf16.msra.mxu0 %v4663
    %4687 = vmatmul.bf16.gmra.mxu0 %v4529
    %v4688 = vpop.f32.mrf.mxu0
    %v4689 = vadd.f32 %v4629, %v4688
    %v4690 = vpop.f32.mrf.mxu0
    %4691 = vdwg.mxu0
    %v4692 = vmax.f32 %v4689, 0.0
    %v4693 = vpack.c.bf16 %v4692, %v4692
    %v4694 = vld [vmem:[#allocation19] sm:$0xf]
    %v4695 = vld [vmem:[#allocation19 + $0x4] sm:$0xf]
    %v4696 = vld [vmem:[#allocation19 + $0x8] sm:$0xf]
    %v4697 = vld [vmem:[#allocation19 + $0xc] sm:$0xf]
    %v4698 = vld [vmem:[#allocation19 + $0x10] sm:$0xf]
    %v4699 = vld [vmem:[#allocation19 + $0x14] sm:$0xf]
    %v4700 = vld [vmem:[#allocation19 + $0x18] sm:$0xf]
    %v4701 = vld [vmem:[#allocation19 + $0x1c] sm:$0xf]
    %v4702 = vld [vmem:[#allocation19 + $0x20] sm:$0xf]
    %v4703 = vld [vmem:[#allocation19 + $0x24] sm:$0xf]
    %v4704 = vld [vmem:[#allocation19 + $0x28] sm:$0xf]
    %v4705 = vld [vmem:[#allocation19 + $0x2c] sm:$0xf]
    %v4706 = vld [vmem:[#allocation19 + $0x30] sm:$0xf]
    %v4707 = vld [vmem:[#allocation19 + $0x34] sm:$0xf]
    %v4708 = vld [vmem:[#allocation19 + $0x38] sm:$0xf]
    %v4709 = vld [vmem:[#allocation19 + $0x3c] sm:$0xf]
    %v4710 = vld [vmem:[#allocation20] sm:$0x1]
    %v4712 = vperm.slane %v4710, 0
    %v4730 = vunpack.c.l.b16 %v4694
    %v4731 = vunpack.c.l.b16 %v4695
    %v4732 = vunpack.c.l.b16 %v4696
    %v4733 = vunpack.c.l.b16 %v4697
    %v4734 = vunpack.c.l.b16 %v4698
    %v4735 = vunpack.c.l.b16 %v4699
    %v4736 = vunpack.c.l.b16 %v4700
    %v4737 = vunpack.c.l.b16 %v4701
    %v4738 = vunpack.c.l.b16 %v4702
    %v4739 = vunpack.c.l.b16 %v4703
    %v4740 = vunpack.c.l.b16 %v4704
    %v4741 = vunpack.c.l.b16 %v4705
    %v4742 = vunpack.c.l.b16 %v4706
    %v4743 = vunpack.c.l.b16 %v4707
    %v4744 = vunpack.c.l.b16 %v4708
    %v4745 = vunpack.c.l.b16 %v4709
    %v4746 = vpack.c.b16 %v4731, %v4730
    %v4747 = vpack.c.b16 %v4733, %v4732
    %v4748 = vpack.c.b16 %v4735, %v4734
    %v4749 = vpack.c.b16 %v4737, %v4736
    %v4750 = vpack.c.b16 %v4739, %v4738
    %v4751 = vpack.c.b16 %v4741, %v4740
    %v4752 = vpack.c.b16 %v4743, %v4742
    %v4753 = vpack.c.b16 %v4745, %v4744
    %4762 = vmatpush.bf16.msra.mxu0 %v4753
    %4763 = vmatpush.bf16.msra.mxu0 %v4752
    %4764 = vmatpush.bf16.msra.mxu0 %v4751
    %4765 = vmatpush.bf16.msra.mxu0 %v4750
    %4766 = vmatpush.bf16.msra.mxu0 %v4749
    %4767 = vmatpush.bf16.msra.mxu0 %v4748
    %4768 = vmatpush.bf16.msra.mxu0 %v4747
    %4769 = vmatpush.bf16.msra.mxu0 %v4746
    %4770 = vmatmul.bf16.gmra.mxu0 %v4693
    %v4771 = vpop.f32.mrf.mxu0
    %v4772 = vadd.f32 %v4712, %v4771
    %v4773 = vpop.f32.mrf.mxu0
    %4774 = vdwg.mxu0
    %v4775 = vadd.f32 %v4772, %v4608
    %v4776 = vmax.f32 %v4775, 0.0
    %v4777 = vpack.c.bf16 %v4776, %v4776
    %v4778 = vld [vmem:[#allocation25] sm:$0xf]
    %v4779 = vld [vmem:[#allocation25 + $0x4] sm:$0xf]
    %v4780 = vld [vmem:[#allocation25 + $0x8] sm:$0xf]
    %v4781 = vld [vmem:[#allocation25 + $0xc] sm:$0xf]
    %v4782 = vld [vmem:[#allocation25 + $0x10] sm:$0xf]
    %v4783 = vld [vmem:[#allocation25 + $0x14] sm:$0xf]
    %v4784 = vld [vmem:[#allocation25 + $0x18] sm:$0xf]
    %v4785 = vld [vmem:[#allocation25 + $0x1c] sm:$0xf]
    %v4786 = vld [vmem:[#allocation25 + $0x20] sm:$0xf]
    %v4787 = vld [vmem:[#allocation25 + $0x24] sm:$0xf]
    %v4788 = vld [vmem:[#allocation25 + $0x28] sm:$0xf]
    %v4789 = vld [vmem:[#allocation25 + $0x2c] sm:$0xf]
    %v4790 = vld [vmem:[#allocation25 + $0x30] sm:$0xf]
    %v4791 = vld [vmem:[#allocation25 + $0x34] sm:$0xf]
    %v4792 = vld [vmem:[#allocation25 + $0x38] sm:$0xf]
    %v4793 = vld [vmem:[#allocation25 + $0x3c] sm:$0xf]
    %v4794 = vld [vmem:[#allocation26] sm:$0x1]
    %v4796 = vperm.slane %v4794, 0
    %v4814 = vunpack.c.l.b16 %v4778
    %v4815 = vunpack.c.l.b16 %v4779
    %v4816 = vunpack.c.l.b16 %v4780
    %v4817 = vunpack.c.l.b16 %v4781
    %v4818 = vunpack.c.l.b16 %v4782
    %v4819 = vunpack.c.l.b16 %v4783
    %v4820 = vunpack.c.l.b16 %v4784
    %v4821 = vunpack.c.l.b16 %v4785
    %v4822 = vunpack.c.l.b16 %v4786
    %v4823 = vunpack.c.l.b16 %v4787
    %v4824 = vunpack.c.l.b16 %v4788
    %v4825 = vunpack.c.l.b16 %v4789
    %v4826 = vunpack.c.l.b16 %v4790
    %v4827 = vunpack.c.l.b16 %v4791
    %v4828 = vunpack.c.l.b16 %v4792
    %v4829 = vunpack.c.l.b16 %v4793
    %v4830 = vpack.c.b16 %v4815, %v4814
    %v4831 = vpack.c.b16 %v4817, %v4816
    %v4832 = vpack.c.b16 %v4819, %v4818
    %v4833 = vpack.c.b16 %v4821, %v4820
    %v4834 = vpack.c.b16 %v4823, %v4822
    %v4835 = vpack.c.b16 %v4825, %v4824
    %v4836 = vpack.c.b16 %v4827, %v4826
    %v4837 = vpack.c.b16 %v4829, %v4828
    %4846 = vmatpush.bf16.msra.mxu0 %v4837
    %4847 = vmatpush.bf16.msra.mxu0 %v4836
    %4848 = vmatpush.bf16.msra.mxu0 %v4835
    %4849 = vmatpush.bf16.msra.mxu0 %v4834
    %4850 = vmatpush.bf16.msra.mxu0 %v4833
    %4851 = vmatpush.bf16.msra.mxu0 %v4832
    %4852 = vmatpush.bf16.msra.mxu0 %v4831
    %4853 = vmatpush.bf16.msra.mxu0 %v4830
    %4854 = vmatmul.bf16.gmra.mxu0 %v4777
    %v4855 = vpop.f32.mrf.mxu0
    %v4856 = vadd.f32 %v4796, %v4855
    %v4857 = vpop.f32.mrf.mxu0
    %4858 = vdwg.mxu0
    %v4859 = vmax.f32 %v4856, 0.0
    %v4860 = vpack.c.bf16 %v4859, %v4859
    %v4861 = vld [vmem:[#allocation28] sm:$0xf]
    %v4862 = vld [vmem:[#allocation28 + $0x4] sm:$0xf]
    %v4863 = vld [vmem:[#allocation28 + $0x8] sm:$0xf]
    %v4864 = vld [vmem:[#allocation28 + $0xc] sm:$0xf]
    %v4865 = vld [vmem:[#allocation28 + $0x10] sm:$0xf]
    %v4866 = vld [vmem:[#allocation28 + $0x14] sm:$0xf]
    %v4867 = vld [vmem:[#allocation28 + $0x18] sm:$0xf]
    %v4868 = vld [vmem:[#allocation28 + $0x1c] sm:$0xf]
    %v4869 = vld [vmem:[#allocation28 + $0x20] sm:$0xf]
    %v4870 = vld [vmem:[#allocation28 + $0x24] sm:$0xf]
    %v4871 = vld [vmem:[#allocation28 + $0x28] sm:$0xf]
    %v4872 = vld [vmem:[#allocation28 + $0x2c] sm:$0xf]
    %v4873 = vld [vmem:[#allocation28 + $0x30] sm:$0xf]
    %v4874 = vld [vmem:[#allocation28 + $0x34] sm:$0xf]
    %v4875 = vld [vmem:[#allocation28 + $0x38] sm:$0xf]
    %v4876 = vld [vmem:[#allocation28 + $0x3c] sm:$0xf]
    %v4877 = vld [vmem:[#allocation29] sm:$0x1]
    %v4879 = vperm.slane %v4877, 0
    %v4897 = vunpack.c.l.b16 %v4861
    %v4898 = vunpack.c.l.b16 %v4862
    %v4899 = vunpack.c.l.b16 %v4863
    %v4900 = vunpack.c.l.b16 %v4864
    %v4901 = vunpack.c.l.b16 %v4865
    %v4902 = vunpack.c.l.b16 %v4866
    %v4903 = vunpack.c.l.b16 %v4867
    %v4904 = vunpack.c.l.b16 %v4868
    %v4905 = vunpack.c.l.b16 %v4869
    %v4906 = vunpack.c.l.b16 %v4870
    %v4907 = vunpack.c.l.b16 %v4871
    %v4908 = vunpack.c.l.b16 %v4872
    %v4909 = vunpack.c.l.b16 %v4873
    %v4910 = vunpack.c.l.b16 %v4874
    %v4911 = vunpack.c.l.b16 %v4875
    %v4912 = vunpack.c.l.b16 %v4876
    %v4913 = vpack.c.b16 %v4898, %v4897
    %v4914 = vpack.c.b16 %v4900, %v4899
    %v4915 = vpack.c.b16 %v4902, %v4901
    %v4916 = vpack.c.b16 %v4904, %v4903
    %v4917 = vpack.c.b16 %v4906, %v4905
    %v4918 = vpack.c.b16 %v4908, %v4907
    %v4919 = vpack.c.b16 %v4910, %v4909
    %v4920 = vpack.c.b16 %v4912, %v4911
    %4929 = vmatpush.bf16.msra.mxu0 %v4920
    %4930 = vmatpush.bf16.msra.mxu0 %v4919
    %4931 = vmatpush.bf16.msra.mxu0 %v4918
    %4932 = vmatpush.bf16.msra.mxu0 %v4917
    %4933 = vmatpush.bf16.msra.mxu0 %v4916
    %4934 = vmatpush.bf16.msra.mxu0 %v4915
    %4935 = vmatpush.bf16.msra.mxu0 %v4914
    %4936 = vmatpush.bf16.msra.mxu0 %v4913
    %4937 = vmatmul.bf16.gmra.mxu0 %v4860
    %v4938 = vpop.f32.mrf.mxu0
    %v4939 = vadd.f32 %v4879, %v4938
    %v4940 = vpop.f32.mrf.mxu0
    %4941 = vdwg.mxu0
    %v4942 = vadd.f32 %v4939, %v4776
    %v4943 = vmax.f32 %v4942, 0.0
    %v4944 = vpack.c.bf16 %v4943, %v4943
    %v4945 = vld [vmem:[#allocation37] sm:$0xf]
    %v4946 = vld [vmem:[#allocation37 + $0x4] sm:$0xf]
    %v4947 = vld [vmem:[#allocation37 + $0x8] sm:$0xf]
    %v4948 = vld [vmem:[#allocation37 + $0xc] sm:$0xf]
    %v4949 = vld [vmem:[#allocation37 + $0x10] sm:$0xf]
    %v4950 = vld [vmem:[#allocation37 + $0x14] sm:$0xf]
    %v4951 = vld [vmem:[#allocation37 + $0x18] sm:$0xf]
    %v4952 = vld [vmem:[#allocation37 + $0x1c] sm:$0xf]
    %v4953 = vld [vmem:[#allocation37 + $0x20] sm:$0xf]
    %v4954 = vld [vmem:[#allocation37 + $0x24] sm:$0xf]
    %v4955 = vld [vmem:[#allocation37 + $0x28] sm:$0xf]
    %v4956 = vld [vmem:[#allocation37 + $0x2c] sm:$0xf]
    %v4957 = vld [vmem:[#allocation37 + $0x30] sm:$0xf]
    %v4958 = vld [vmem:[#allocation37 + $0x34] sm:$0xf]
    %v4959 = vld [vmem:[#allocation37 + $0x38] sm:$0xf]
    %v4960 = vld [vmem:[#allocation37 + $0x3c] sm:$0xf]
    %v4961 = vld [vmem:[#allocation38] sm:$0x1]
    %v4963 = vperm.slane %v4961, 0
    %v4981 = vunpack.c.l.b16 %v4945
    %v4982 = vunpack.c.l.b16 %v4946
    %v4983 = vunpack.c.l.b16 %v4947
    %v4984 = vunpack.c.l.b16 %v4948
    %v4985 = vunpack.c.l.b16 %v4949
    %v4986 = vunpack.c.l.b16 %v4950
    %v4987 = vunpack.c.l.b16 %v4951
    %v4988 = vunpack.c.l.b16 %v4952
    %v4989 = vunpack.c.l.b16 %v4953
    %v4990 = vunpack.c.l.b16 %v4954
    %v4991 = vunpack.c.l.b16 %v4955
    %v4992 = vunpack.c.l.b16 %v4956
    %v4993 = vunpack.c.l.b16 %v4957
    %v4994 = vunpack.c.l.b16 %v4958
    %v4995 = vunpack.c.l.b16 %v4959
    %v4996 = vunpack.c.l.b16 %v4960
    %v4997 = vpack.c.b16 %v4982, %v4981
    %v4998 = vpack.c.b16 %v4984, %v4983
    %v4999 = vpack.c.b16 %v4986, %v4985
    %v5000 = vpack.c.b16 %v4988, %v4987
    %v5001 = vpack.c.b16 %v4990, %v4989
    %v5002 = vpack.c.b16 %v4992, %v4991
    %v5003 = vpack.c.b16 %v4994, %v4993
    %v5004 = vpack.c.b16 %v4996, %v4995
    %5013 = vmatpush.bf16.msra.mxu0 %v5004
    %5014 = vmatpush.bf16.msra.mxu0 %v5003
    %5015 = vmatpush.bf16.msra.mxu0 %v5002
    %5016 = vmatpush.bf16.msra.mxu0 %v5001
    %5017 = vmatpush.bf16.msra.mxu0 %v5000
    %5018 = vmatpush.bf16.msra.mxu0 %v4999
    %5019 = vmatpush.bf16.msra.mxu0 %v4998
    %5020 = vmatpush.bf16.msra.mxu0 %v4997
    %5021 = vmatmul.bf16.gmra.mxu0 %v4944
    %v5022 = vpop.f32.mrf.mxu0
    %v5023 = vadd.f32 %v4963, %v5022
    %v5024 = vpop.f32.mrf.mxu0
    %5025 = vdwg.mxu0
    %v5026 = vld [vmem:[#allocation31] sm:$0xf]
    %v5027 = vld [vmem:[#allocation31 + $0x4] sm:$0xf]
    %v5028 = vld [vmem:[#allocation31 + $0x8] sm:$0xf]
    %v5029 = vld [vmem:[#allocation31 + $0xc] sm:$0xf]
    %v5030 = vld [vmem:[#allocation31 + $0x10] sm:$0xf]
    %v5031 = vld [vmem:[#allocation31 + $0x14] sm:$0xf]
    %v5032 = vld [vmem:[#allocation31 + $0x18] sm:$0xf]
    %v5033 = vld [vmem:[#allocation31 + $0x1c] sm:$0xf]
    %v5034 = vld [vmem:[#allocation31 + $0x20] sm:$0xf]
    %v5035 = vld [vmem:[#allocation31 + $0x24] sm:$0xf]
    %v5036 = vld [vmem:[#allocation31 + $0x28] sm:$0xf]
    %v5037 = vld [vmem:[#allocation31 + $0x2c] sm:$0xf]
    %v5038 = vld [vmem:[#allocation31 + $0x30] sm:$0xf]
    %v5039 = vld [vmem:[#allocation31 + $0x34] sm:$0xf]
    %v5040 = vld [vmem:[#allocation31 + $0x38] sm:$0xf]
    %v5041 = vld [vmem:[#allocation31 + $0x3c] sm:$0xf]
    %v5042 = vld [vmem:[#allocation32] sm:$0x1]
    %v5044 = vperm.slane %v5042, 0
    %v5062 = vunpack.c.l.b16 %v5026
    %v5063 = vunpack.c.l.b16 %v5027
    %v5064 = vunpack.c.l.b16 %v5028
    %v5065 = vunpack.c.l.b16 %v5029
    %v5066 = vunpack.c.l.b16 %v5030
    %v5067 = vunpack.c.l.b16 %v5031
    %v5068 = vunpack.c.l.b16 %v5032
    %v5069 = vunpack.c.l.b16 %v5033
    %v5070 = vunpack.c.l.b16 %v5034
    %v5071 = vunpack.c.l.b16 %v5035
    %v5072 = vunpack.c.l.b16 %v5036
    %v5073 = vunpack.c.l.b16 %v5037
    %v5074 = vunpack.c.l.b16 %v5038
    %v5075 = vunpack.c.l.b16 %v5039
    %v5076 = vunpack.c.l.b16 %v5040
    %v5077 = vunpack.c.l.b16 %v5041
    %v5078 = vpack.c.b16 %v5063, %v5062
    %v5079 = vpack.c.b16 %v5065, %v5064
    %v5080 = vpack.c.b16 %v5067, %v5066
    %v5081 = vpack.c.b16 %v5069, %v5068
    %v5082 = vpack.c.b16 %v5071, %v5070
    %v5083 = vpack.c.b16 %v5073, %v5072
    %v5084 = vpack.c.b16 %v5075, %v5074
    %v5085 = vpack.c.b16 %v5077, %v5076
    %5094 = vmatpush.bf16.msra.mxu0 %v5085
    %5095 = vmatpush.bf16.msra.mxu0 %v5084
    %5096 = vmatpush.bf16.msra.mxu0 %v5083
    %5097 = vmatpush.bf16.msra.mxu0 %v5082
    %5098 = vmatpush.bf16.msra.mxu0 %v5081
    %5099 = vmatpush.bf16.msra.mxu0 %v5080
    %5100 = vmatpush.bf16.msra.mxu0 %v5079
    %5101 = vmatpush.bf16.msra.mxu0 %v5078
    %5102 = vmatmul.bf16.gmra.mxu0 %v4944
    %v5103 = vpop.f32.mrf.mxu0
    %v5104 = vadd.f32 %v5044, %v5103
    %v5105 = vpop.f32.mrf.mxu0
    %5106 = vdwg.mxu0
    %v5107 = vmax.f32 %v5104, 0.0
    %v5108 = vpack.c.bf16 %v5107, %v5107
    %v5109 = vld [vmem:[#allocation34] sm:$0xf]
    %v5110 = vld [vmem:[#allocation34 + $0x4] sm:$0xf]
    %v5111 = vld [vmem:[#allocation34 + $0x8] sm:$0xf]
    %v5112 = vld [vmem:[#allocation34 + $0xc] sm:$0xf]
    %v5113 = vld [vmem:[#allocation34 + $0x10] sm:$0xf]
    %v5114 = vld [vmem:[#allocation34 + $0x14] sm:$0xf]
    %v5115 = vld [vmem:[#allocation34 + $0x18] sm:$0xf]
    %v5116 = vld [vmem:[#allocation34 + $0x1c] sm:$0xf]
    %v5117 = vld [vmem:[#allocation34 + $0x20] sm:$0xf]
    %v5118 = vld [vmem:[#allocation34 + $0x24] sm:$0xf]
    %v5119 = vld [vmem:[#allocation34 + $0x28] sm:$0xf]
    %v5120 = vld [vmem:[#allocation34 + $0x2c] sm:$0xf]
    %v5121 = vld [vmem:[#allocation34 + $0x30] sm:$0xf]
    %v5122 = vld [vmem:[#allocation34 + $0x34] sm:$0xf]
    %v5123 = vld [vmem:[#allocation34 + $0x38] sm:$0xf]
    %v5124 = vld [vmem:[#allocation34 + $0x3c] sm:$0xf]
    %v5125 = vld [vmem:[#allocation35] sm:$0x1]
    %v5127 = vperm.slane %v5125, 0
    %v5145 = vunpack.c.l.b16 %v5109
    %v5146 = vunpack.c.l.b16 %v5110
    %v5147 = vunpack.c.l.b16 %v5111
    %v5148 = vunpack.c.l.b16 %v5112
    %v5149 = vunpack.c.l.b16 %v5113
    %v5150 = vunpack.c.l.b16 %v5114
    %v5151 = vunpack.c.l.b16 %v5115
    %v5152 = vunpack.c.l.b16 %v5116
    %v5153 = vunpack.c.l.b16 %v5117
    %v5154 = vunpack.c.l.b16 %v5118
    %v5155 = vunpack.c.l.b16 %v5119
    %v5156 = vunpack.c.l.b16 %v5120
    %v5157 = vunpack.c.l.b16 %v5121
    %v5158 = vunpack.c.l.b16 %v5122
    %v5159 = vunpack.c.l.b16 %v5123
    %v5160 = vunpack.c.l.b16 %v5124
    %v5161 = vpack.c.b16 %v5146, %v5145
    %v5162 = vpack.c.b16 %v5148, %v5147
    %v5163 = vpack.c.b16 %v5150, %v5149
    %v5164 = vpack.c.b16 %v5152, %v5151
    %v5165 = vpack.c.b16 %v5154, %v5153
    %v5166 = vpack.c.b16 %v5156, %v5155
    %v5167 = vpack.c.b16 %v5158, %v5157
    %v5168 = vpack.c.b16 %v5160, %v5159
    %5177 = vmatpush.bf16.msra.mxu0 %v5168
    %5178 = vmatpush.bf16.msra.mxu0 %v5167
    %5179 = vmatpush.bf16.msra.mxu0 %v5166
    %5180 = vmatpush.bf16.msra.mxu0 %v5165
    %5181 = vmatpush.bf16.msra.mxu0 %v5164
    %5182 = vmatpush.bf16.msra.mxu0 %v5163
    %5183 = vmatpush.bf16.msra.mxu0 %v5162
    %5184 = vmatpush.bf16.msra.mxu0 %v5161
    %5185 = vmatmul.bf16.gmra.mxu0 %v5108
    %v5186 = vpop.f32.mrf.mxu0
    %v5187 = vadd.f32 %v5127, %v5186
    %v5188 = vpop.f32.mrf.mxu0
    %5189 = vdwg.mxu0
    %v5190 = vadd.f32 %v5187, %v5023
    %v5191 = vmax.f32 %v5190, 0.0
    %v5192 = vpack.c.bf16 %v5191, %v5191
    %v5193 = vld [vmem:[#allocation40] sm:$0xf]
    %v5194 = vld [vmem:[#allocation40 + $0x4] sm:$0xf]
    %v5195 = vld [vmem:[#allocation40 + $0x8] sm:$0xf]
    %v5196 = vld [vmem:[#allocation40 + $0xc] sm:$0xf]
    %v5197 = vld [vmem:[#allocation40 + $0x10] sm:$0xf]
    %v5198 = vld [vmem:[#allocation40 + $0x14] sm:$0xf]
    %v5199 = vld [vmem:[#allocation40 + $0x18] sm:$0xf]
    %v5200 = vld [vmem:[#allocation40 + $0x1c] sm:$0xf]
    %v5201 = vld [vmem:[#allocation40 + $0x20] sm:$0xf]
    %v5202 = vld [vmem:[#allocation40 + $0x24] sm:$0xf]
    %v5203 = vld [vmem:[#allocation40 + $0x28] sm:$0xf]
    %v5204 = vld [vmem:[#allocation40 + $0x2c] sm:$0xf]
    %v5205 = vld [vmem:[#allocation40 + $0x30] sm:$0xf]
    %v5206 = vld [vmem:[#allocation40 + $0x34] sm:$0xf]
    %v5207 = vld [vmem:[#allocation40 + $0x38] sm:$0xf]
    %v5208 = vld [vmem:[#allocation40 + $0x3c] sm:$0xf]
    %v5209 = vld [vmem:[#allocation41] sm:$0x1]
    %v5211 = vperm.slane %v5209, 0
    %v5229 = vunpack.c.l.b16 %v5193
    %v5230 = vunpack.c.l.b16 %v5194
    %v5231 = vunpack.c.l.b16 %v5195
    %v5232 = vunpack.c.l.b16 %v5196
    %v5233 = vunpack.c.l.b16 %v5197
    %v5234 = vunpack.c.l.b16 %v5198
    %v5235 = vunpack.c.l.b16 %v5199
    %v5236 = vunpack.c.l.b16 %v5200
    %v5237 = vunpack.c.l.b16 %v5201
    %v5238 = vunpack.c.l.b16 %v5202
    %v5239 = vunpack.c.l.b16 %v5203
    %v5240 = vunpack.c.l.b16 %v5204
    %v5241 = vunpack.c.l.b16 %v5205
    %v5242 = vunpack.c.l.b16 %v5206
    %v5243 = vunpack.c.l.b16 %v5207
    %v5244 = vunpack.c.l.b16 %v5208
    %v5245 = vpack.c.b16 %v5230, %v5229
    %v5246 = vpack.c.b16 %v5232, %v5231
    %v5247 = vpack.c.b16 %v5234, %v5233
    %v5248 = vpack.c.b16 %v5236, %v5235
    %v5249 = vpack.c.b16 %v5238, %v5237
    %v5250 = vpack.c.b16 %v5240, %v5239
    %v5251 = vpack.c.b16 %v5242, %v5241
    %v5252 = vpack.c.b16 %v5244, %v5243
    %5261 = vmatpush.bf16.msra.mxu0 %v5252
    %5262 = vmatpush.bf16.msra.mxu0 %v5251
    %5263 = vmatpush.bf16.msra.mxu0 %v5250
    %5264 = vmatpush.bf16.msra.mxu0 %v5249
    %5265 = vmatpush.bf16.msra.mxu0 %v5248
    %5266 = vmatpush.bf16.msra.mxu0 %v5247
    %5267 = vmatpush.bf16.msra.mxu0 %v5246
    %5268 = vmatpush.bf16.msra.mxu0 %v5245
    %5269 = vmatmul.bf16.gmra.mxu0 %v5192
    %v5270 = vpop.f32.mrf.mxu0
    %v5271 = vadd.f32 %v5211, %v5270
    %v5272 = vpop.f32.mrf.mxu0
    %5273 = vdwg.mxu0
    %v5274 = vmax.f32 %v5271, 0.0
    %v5275 = vpack.c.bf16 %v5274, %v5274
    %v5276 = vld [vmem:[#allocation43] sm:$0xf]
    %v5277 = vld [vmem:[#allocation43 + $0x4] sm:$0xf]
    %v5278 = vld [vmem:[#allocation43 + $0x8] sm:$0xf]
    %v5279 = vld [vmem:[#allocation43 + $0xc] sm:$0xf]
    %v5280 = vld [vmem:[#allocation43 + $0x10] sm:$0xf]
    %v5281 = vld [vmem:[#allocation43 + $0x14] sm:$0xf]
    %v5282 = vld [vmem:[#allocation43 + $0x18] sm:$0xf]
    %v5283 = vld [vmem:[#allocation43 + $0x1c] sm:$0xf]
    %v5284 = vld [vmem:[#allocation43 + $0x20] sm:$0xf]
    %v5285 = vld [vmem:[#allocation43 + $0x24] sm:$0xf]
    %v5286 = vld [vmem:[#allocation43 + $0x28] sm:$0xf]
    %v5287 = vld [vmem:[#allocation43 + $0x2c] sm:$0xf]
    %v5288 = vld [vmem:[#allocation43 + $0x30] sm:$0xf]
    %v5289 = vld [vmem:[#allocation43 + $0x34] sm:$0xf]
    %v5290 = vld [vmem:[#allocation43 + $0x38] sm:$0xf]
    %v5291 = vld [vmem:[#allocation43 + $0x3c] sm:$0xf]
    %v5292 = vld [vmem:[#allocation44] sm:$0x1]
    %v5294 = vperm.slane %v5292, 0
    %v5312 = vunpack.c.l.b16 %v5276
    %v5313 = vunpack.c.l.b16 %v5277
    %v5314 = vunpack.c.l.b16 %v5278
    %v5315 = vunpack.c.l.b16 %v5279
    %v5316 = vunpack.c.l.b16 %v5280
    %v5317 = vunpack.c.l.b16 %v5281
    %v5318 = vunpack.c.l.b16 %v5282
    %v5319 = vunpack.c.l.b16 %v5283
    %v5320 = vunpack.c.l.b16 %v5284
    %v5321 = vunpack.c.l.b16 %v5285
    %v5322 = vunpack.c.l.b16 %v5286
    %v5323 = vunpack.c.l.b16 %v5287
    %v5324 = vunpack.c.l.b16 %v5288
    %v5325 = vunpack.c.l.b16 %v5289
    %v5326 = vunpack.c.l.b16 %v5290
    %v5327 = vunpack.c.l.b16 %v5291
    %v5328 = vpack.c.b16 %v5313, %v5312
    %v5329 = vpack.c.b16 %v5315, %v5314
    %v5330 = vpack.c.b16 %v5317, %v5316
    %v5331 = vpack.c.b16 %v5319, %v5318
    %v5332 = vpack.c.b16 %v5321, %v5320
    %v5333 = vpack.c.b16 %v5323, %v5322
    %v5334 = vpack.c.b16 %v5325, %v5324
    %v5335 = vpack.c.b16 %v5327, %v5326
    %5344 = vmatpush.bf16.msra.mxu0 %v5335
    %5345 = vmatpush.bf16.msra.mxu0 %v5334
    %5346 = vmatpush.bf16.msra.mxu0 %v5333
    %5347 = vmatpush.bf16.msra.mxu0 %v5332
    %5348 = vmatpush.bf16.msra.mxu0 %v5331
    %5349 = vmatpush.bf16.msra.mxu0 %v5330
    %5350 = vmatpush.bf16.msra.mxu0 %v5329
    %5351 = vmatpush.bf16.msra.mxu0 %v5328
    %5352 = vmatmul.bf16.gmra.mxu0 %v5275
    %v5353 = vpop.f32.mrf.mxu0
    %v5354 = vadd.f32 %v5294, %v5353
    %v5355 = vpop.f32.mrf.mxu0
    %5356 = vdwg.mxu0
    %v5357 = vadd.f32 %v5354, %v5191
    %v5358 = vmax.f32 %v5357, 0.0
    %v5359 = vpack.c.bf16 %v5358, %v5358
    %v5360 = vld [vmem:[#allocation50] sm:$0xf]
    %v5361 = vld [vmem:[#allocation50 + $0x4] sm:$0xf]
    %v5362 = vld [vmem:[#allocation50 + $0x8] sm:$0xf]
    %v5363 = vld [vmem:[#allocation50 + $0xc] sm:$0xf]
    %v5364 = vld [vmem:[#allocation50 + $0x10] sm:$0xf]
    %v5365 = vld [vmem:[#allocation50 + $0x14] sm:$0xf]
    %v5366 = vld [vmem:[#allocation50 + $0x18] sm:$0xf]
    %v5367 = vld [vmem:[#allocation50 + $0x1c] sm:$0xf]
    %v5368 = vld [vmem:[#allocation50 + $0x20] sm:$0xf]
    %v5369 = vld [vmem:[#allocation50 + $0x24] sm:$0xf]
    %v5370 = vld [vmem:[#allocation50 + $0x28] sm:$0xf]
    %v5371 = vld [vmem:[#allocation50 + $0x2c] sm:$0xf]
    %v5372 = vld [vmem:[#allocation50 + $0x30] sm:$0xf]
    %v5373 = vld [vmem:[#allocation50 + $0x34] sm:$0xf]
    %v5374 = vld [vmem:[#allocation50 + $0x38] sm:$0xf]
    %v5375 = vld [vmem:[#allocation50 + $0x3c] sm:$0xf]
    %v5376 = vld [vmem:[%s81] sm:$0x1]
    %v5378 = vperm.slane %v5376, 0
    %v5396 = vunpack.c.l.b16 %v5360
    %v5397 = vunpack.c.l.b16 %v5361
    %v5398 = vunpack.c.l.b16 %v5362
    %v5399 = vunpack.c.l.b16 %v5363
    %v5400 = vunpack.c.l.b16 %v5364
    %v5401 = vunpack.c.l.b16 %v5365
    %v5402 = vunpack.c.l.b16 %v5366
    %v5403 = vunpack.c.l.b16 %v5367
    %v5404 = vunpack.c.l.b16 %v5368
    %v5405 = vunpack.c.l.b16 %v5369
    %v5406 = vunpack.c.l.b16 %v5370
    %v5407 = vunpack.c.l.b16 %v5371
    %v5408 = vunpack.c.l.b16 %v5372
    %v5409 = vunpack.c.l.b16 %v5373
    %v5410 = vunpack.c.l.b16 %v5374
    %v5411 = vunpack.c.l.b16 %v5375
    %v5412 = vpack.c.b16 %v5397, %v5396
    %v5413 = vpack.c.b16 %v5399, %v5398
    %v5414 = vpack.c.b16 %v5401, %v5400
    %v5415 = vpack.c.b16 %v5403, %v5402
    %v5416 = vpack.c.b16 %v5405, %v5404
    %v5417 = vpack.c.b16 %v5407, %v5406
    %v5418 = vpack.c.b16 %v5409, %v5408
    %v5419 = vpack.c.b16 %v5411, %v5410
    %5428 = vmatpush.bf16.msra.mxu0 %v5419
    %5429 = vmatpush.bf16.msra.mxu0 %v5418
    %5430 = vmatpush.bf16.msra.mxu0 %v5417
    %5431 = vmatpush.bf16.msra.mxu0 %v5416
    %5432 = vmatpush.bf16.msra.mxu0 %v5415
    %5433 = vmatpush.bf16.msra.mxu0 %v5414
    %5434 = vmatpush.bf16.msra.mxu0 %v5413
    %5435 = vmatpush.bf16.msra.mxu0 %v5412
    %5436 = vmatmul.bf16.gmra.mxu0 %v5359
    %v5437 = vpop.f32.mrf.mxu0
    %v5438 = vadd.f32 %v5378, %v5437
    %v5439 = vpop.f32.mrf.mxu0
    %5440 = vdwg.mxu0
    %v5441 = vld [vmem:[#allocation46] sm:$0xf]
    %v5442 = vld [vmem:[#allocation46 + $0x4] sm:$0xf]
    %v5443 = vld [vmem:[#allocation46 + $0x8] sm:$0xf]
    %v5444 = vld [vmem:[#allocation46 + $0xc] sm:$0xf]
    %v5445 = vld [vmem:[#allocation46 + $0x10] sm:$0xf]
    %v5446 = vld [vmem:[#allocation46 + $0x14] sm:$0xf]
    %v5447 = vld [vmem:[#allocation46 + $0x18] sm:$0xf]
    %v5448 = vld [vmem:[#allocation46 + $0x1c] sm:$0xf]
    %v5449 = vld [vmem:[#allocation46 + $0x20] sm:$0xf]
    %v5450 = vld [vmem:[#allocation46 + $0x24] sm:$0xf]
    %v5451 = vld [vmem:[#allocation46 + $0x28] sm:$0xf]
    %v5452 = vld [vmem:[#allocation46 + $0x2c] sm:$0xf]
    %v5453 = vld [vmem:[#allocation46 + $0x30] sm:$0xf]
    %v5454 = vld [vmem:[#allocation46 + $0x34] sm:$0xf]
    %v5455 = vld [vmem:[#allocation46 + $0x38] sm:$0xf]
    %v5456 = vld [vmem:[#allocation46 + $0x3c] sm:$0xf]
    %v5457 = vld [vmem:[#allocation47] sm:$0x1]
    %v5459 = vperm.slane %v5457, 0
    %v5477 = vunpack.c.l.b16 %v5441
    %v5478 = vunpack.c.l.b16 %v5442
    %v5479 = vunpack.c.l.b16 %v5443
    %v5480 = vunpack.c.l.b16 %v5444
    %v5481 = vunpack.c.l.b16 %v5445
    %v5482 = vunpack.c.l.b16 %v5446
    %v5483 = vunpack.c.l.b16 %v5447
    %v5484 = vunpack.c.l.b16 %v5448
    %v5485 = vunpack.c.l.b16 %v5449
    %v5486 = vunpack.c.l.b16 %v5450
    %v5487 = vunpack.c.l.b16 %v5451
    %v5488 = vunpack.c.l.b16 %v5452
    %v5489 = vunpack.c.l.b16 %v5453
    %v5490 = vunpack.c.l.b16 %v5454
    %v5491 = vunpack.c.l.b16 %v5455
    %v5492 = vunpack.c.l.b16 %v5456
    %v5493 = vpack.c.b16 %v5478, %v5477
    %v5494 = vpack.c.b16 %v5480, %v5479
    %v5495 = vpack.c.b16 %v5482, %v5481
    %v5496 = vpack.c.b16 %v5484, %v5483
    %v5497 = vpack.c.b16 %v5486, %v5485
    %v5498 = vpack.c.b16 %v5488, %v5487
    %v5499 = vpack.c.b16 %v5490, %v5489
    %v5500 = vpack.c.b16 %v5492, %v5491
    %5509 = vmatpush.bf16.msra.mxu0 %v5500
    %5510 = vmatpush.bf16.msra.mxu0 %v5499
    %5511 = vmatpush.bf16.msra.mxu0 %v5498
    %5512 = vmatpush.bf16.msra.mxu0 %v5497
    %5513 = vmatpush.bf16.msra.mxu0 %v5496
    %5514 = vmatpush.bf16.msra.mxu0 %v5495
    %5515 = vmatpush.bf16.msra.mxu0 %v5494
    %5516 = vmatpush.bf16.msra.mxu0 %v5493
    %5517 = vmatmul.bf16.gmra.mxu0 %v5359
    %v5518 = vpop.f32.mrf.mxu0
    %v5519 = vadd.f32 %v5459, %v5518
    %v5520 = vpop.f32.mrf.mxu0
    %5521 = vdwg.mxu0
    %v5522 = vmax.f32 %v5519, 0.0
    %v5523 = vpack.c.bf16 %v5522, %v5522
    %v5524 = vld [vmem:[#allocation49] sm:$0xf]
    %v5525 = vld [vmem:[#allocation49 + $0x4] sm:$0xf]
    %v5526 = vld [vmem:[#allocation49 + $0x8] sm:$0xf]
    %v5527 = vld [vmem:[#allocation49 + $0xc] sm:$0xf]
    %v5528 = vld [vmem:[#allocation49 + $0x10] sm:$0xf]
    %v5529 = vld [vmem:[#allocation49 + $0x14] sm:$0xf]
    %v5530 = vld [vmem:[#allocation49 + $0x18] sm:$0xf]
    %v5531 = vld [vmem:[#allocation49 + $0x1c] sm:$0xf]
    %v5532 = vld [vmem:[#allocation49 + $0x20] sm:$0xf]
    %v5533 = vld [vmem:[#allocation49 + $0x24] sm:$0xf]
    %v5534 = vld [vmem:[#allocation49 + $0x28] sm:$0xf]
    %v5535 = vld [vmem:[#allocation49 + $0x2c] sm:$0xf]
    %v5536 = vld [vmem:[#allocation49 + $0x30] sm:$0xf]
    %v5537 = vld [vmem:[#allocation49 + $0x34] sm:$0xf]
    %v5538 = vld [vmem:[#allocation49 + $0x38] sm:$0xf]
    %v5539 = vld [vmem:[#allocation49 + $0x3c] sm:$0xf]
    %v5540 = vld [vmem:[%s77] sm:$0x1]
    %v5542 = vperm.slane %v5540, 0
    %v5560 = vunpack.c.l.b16 %v5524
    %v5561 = vunpack.c.l.b16 %v5525
    %v5562 = vunpack.c.l.b16 %v5526
    %v5563 = vunpack.c.l.b16 %v5527
    %v5564 = vunpack.c.l.b16 %v5528
    %v5565 = vunpack.c.l.b16 %v5529
    %v5566 = vunpack.c.l.b16 %v5530
    %v5567 = vunpack.c.l.b16 %v5531
    %v5568 = vunpack.c.l.b16 %v5532
    %v5569 = vunpack.c.l.b16 %v5533
    %v5570 = vunpack.c.l.b16 %v5534
    %v5571 = vunpack.c.l.b16 %v5535
    %v5572 = vunpack.c.l.b16 %v5536
    %v5573 = vunpack.c.l.b16 %v5537
    %v5574 = vunpack.c.l.b16 %v5538
    %v5575 = vunpack.c.l.b16 %v5539
    %v5576 = vpack.c.b16 %v5561, %v5560
    %v5577 = vpack.c.b16 %v5563, %v5562
    %v5578 = vpack.c.b16 %v5565, %v5564
    %v5579 = vpack.c.b16 %v5567, %v5566
    %v5580 = vpack.c.b16 %v5569, %v5568
    %v5581 = vpack.c.b16 %v5571, %v5570
    %v5582 = vpack.c.b16 %v5573, %v5572
    %v5583 = vpack.c.b16 %v5575, %v5574
    %5592 = vmatpush.bf16.msra.mxu0 %v5583
    %5593 = vmatpush.bf16.msra.mxu0 %v5582
    %5594 = vmatpush.bf16.msra.mxu0 %v5581
    %5595 = vmatpush.bf16.msra.mxu0 %v5580
    %5596 = vmatpush.bf16.msra.mxu0 %v5579
    %5597 = vmatpush.bf16.msra.mxu0 %v5578
    %5598 = vmatpush.bf16.msra.mxu0 %v5577
    %5599 = vmatpush.bf16.msra.mxu0 %v5576
    %5600 = vmatmul.bf16.gmra.mxu0 %v5523
    %v5601 = vpop.f32.mrf.mxu0
    %v5602 = vadd.f32 %v5542, %v5601
    %v5603 = vpop.f32.mrf.mxu0
    %5604 = vdwg.mxu0
    %v5605 = vadd.f32 %v5602, %v5438
    %v5606 = vmax.f32 %v5605, 0.0
    %v5607 = vpack.c.bf16 %v5606, %v5606
    %v5608 = vld [vmem:[#allocation52] sm:$0xf]
    %v5609 = vld [vmem:[#allocation52 + $0x4] sm:$0xf]
    %v5610 = vld [vmem:[#allocation52 + $0x8] sm:$0xf]
    %v5611 = vld [vmem:[#allocation52 + $0xc] sm:$0xf]
    %v5612 = vld [vmem:[#allocation52 + $0x10] sm:$0xf]
    %v5613 = vld [vmem:[#allocation52 + $0x14] sm:$0xf]
    %v5614 = vld [vmem:[#allocation52 + $0x18] sm:$0xf]
    %v5615 = vld [vmem:[#allocation52 + $0x1c] sm:$0xf]
    %v5616 = vld [vmem:[#allocation52 + $0x20] sm:$0xf]
    %v5617 = vld [vmem:[#allocation52 + $0x24] sm:$0xf]
    %v5618 = vld [vmem:[#allocation52 + $0x28] sm:$0xf]
    %v5619 = vld [vmem:[#allocation52 + $0x2c] sm:$0xf]
    %v5620 = vld [vmem:[#allocation52 + $0x30] sm:$0xf]
    %v5621 = vld [vmem:[#allocation52 + $0x34] sm:$0xf]
    %v5622 = vld [vmem:[#allocation52 + $0x38] sm:$0xf]
    %v5623 = vld [vmem:[#allocation52 + $0x3c] sm:$0xf]
    %v5624 = vld [vmem:[%s85] sm:$0x1]
    %v5626 = vperm.slane %v5624, 0
    %v5644 = vunpack.c.l.b16 %v5608
    %v5645 = vunpack.c.l.b16 %v5609
    %v5646 = vunpack.c.l.b16 %v5610
    %v5647 = vunpack.c.l.b16 %v5611
    %v5648 = vunpack.c.l.b16 %v5612
    %v5649 = vunpack.c.l.b16 %v5613
    %v5650 = vunpack.c.l.b16 %v5614
    %v5651 = vunpack.c.l.b16 %v5615
    %v5652 = vunpack.c.l.b16 %v5616
    %v5653 = vunpack.c.l.b16 %v5617
    %v5654 = vunpack.c.l.b16 %v5618
    %v5655 = vunpack.c.l.b16 %v5619
    %v5656 = vunpack.c.l.b16 %v5620
    %v5657 = vunpack.c.l.b16 %v5621
    %v5658 = vunpack.c.l.b16 %v5622
    %v5659 = vunpack.c.l.b16 %v5623
    %v5660 = vpack.c.b16 %v5645, %v5644
    %v5661 = vpack.c.b16 %v5647, %v5646
    %v5662 = vpack.c.b16 %v5649, %v5648
    %v5663 = vpack.c.b16 %v5651, %v5650
    %v5664 = vpack.c.b16 %v5653, %v5652
    %v5665 = vpack.c.b16 %v5655, %v5654
    %v5666 = vpack.c.b16 %v5657, %v5656
    %v5667 = vpack.c.b16 %v5659, %v5658
    %5676 = vmatpush.bf16.msra.mxu0 %v5667
    %5677 = vmatpush.bf16.msra.mxu0 %v5666
    %5678 = vmatpush.bf16.msra.mxu0 %v5665
    %5679 = vmatpush.bf16.msra.mxu0 %v5664
    %5680 = vmatpush.bf16.msra.mxu0 %v5663
    %5681 = vmatpush.bf16.msra.mxu0 %v5662
    %5682 = vmatpush.bf16.msra.mxu0 %v5661
    %5683 = vmatpush.bf16.msra.mxu0 %v5660
    %5684 = vmatmul.bf16.gmra.mxu0 %v5607
    %v5685 = vpop.f32.mrf.mxu0
    %v5686 = vadd.f32 %v5626, %v5685
    %v5687 = vpop.f32.mrf.mxu0
    %5688 = vdwg.mxu0
    %v5689 = vmax.f32 %v5686, 0.0
    %v5690 = vpack.c.bf16 %v5689, %v5689
    %v5691 = vld [vmem:[#allocation53] sm:$0xf]
    %v5692 = vld [vmem:[#allocation53 + $0x4] sm:$0xf]
    %v5693 = vld [vmem:[#allocation53 + $0x8] sm:$0xf]
    %v5694 = vld [vmem:[#allocation53 + $0xc] sm:$0xf]
    %v5695 = vld [vmem:[#allocation53 + $0x10] sm:$0xf]
    %v5696 = vld [vmem:[#allocation53 + $0x14] sm:$0xf]
    %v5697 = vld [vmem:[#allocation53 + $0x18] sm:$0xf]
    %v5698 = vld [vmem:[#allocation53 + $0x1c] sm:$0xf]
    %v5699 = vld [vmem:[#allocation53 + $0x20] sm:$0xf]
    %v5700 = vld [vmem:[#allocation53 + $0x24] sm:$0xf]
    %v5701 = vld [vmem:[#allocation53 + $0x28] sm:$0xf]
    %v5702 = vld [vmem:[#allocation53 + $0x2c] sm:$0xf]
    %v5703 = vld [vmem:[#allocation53 + $0x30] sm:$0xf]
    %v5704 = vld [vmem:[#allocation53 + $0x34] sm:$0xf]
    %v5705 = vld [vmem:[#allocation53 + $0x38] sm:$0xf]
    %v5706 = vld [vmem:[#allocation53 + $0x3c] sm:$0xf]
    %v5707 = vld [vmem:[%s89] sm:$0x1]
    %v5709 = vperm.slane %v5707, 0
    %v5727 = vunpack.c.l.b16 %v5691
    %v5728 = vunpack.c.l.b16 %v5692
    %v5729 = vunpack.c.l.b16 %v5693
    %v5730 = vunpack.c.l.b16 %v5694
    %v5731 = vunpack.c.l.b16 %v5695
    %v5732 = vunpack.c.l.b16 %v5696
    %v5733 = vunpack.c.l.b16 %v5697
    %v5734 = vunpack.c.l.b16 %v5698
    %v5735 = vunpack.c.l.b16 %v5699
    %v5736 = vunpack.c.l.b16 %v5700
    %v5737 = vunpack.c.l.b16 %v5701
    %v5738 = vunpack.c.l.b16 %v5702
    %v5739 = vunpack.c.l.b16 %v5703
    %v5740 = vunpack.c.l.b16 %v5704
    %v5741 = vunpack.c.l.b16 %v5705
    %v5742 = vunpack.c.l.b16 %v5706
    %v5743 = vpack.c.b16 %v5728, %v5727
    %v5744 = vpack.c.b16 %v5730, %v5729
    %v5745 = vpack.c.b16 %v5732, %v5731
    %v5746 = vpack.c.b16 %v5734, %v5733
    %v5747 = vpack.c.b16 %v5736, %v5735
    %v5748 = vpack.c.b16 %v5738, %v5737
    %v5749 = vpack.c.b16 %v5740, %v5739
    %v5750 = vpack.c.b16 %v5742, %v5741
    %5759 = vmatpush.bf16.msra.mxu0 %v5750
    %5760 = vmatpush.bf16.msra.mxu0 %v5749
    %5761 = vmatpush.bf16.msra.mxu0 %v5748
    %5762 = vmatpush.bf16.msra.mxu0 %v5747
    %5763 = vmatpush.bf16.msra.mxu0 %v5746
    %5764 = vmatpush.bf16.msra.mxu0 %v5745
    %5765 = vmatpush.bf16.msra.mxu0 %v5744
    %5766 = vmatpush.bf16.msra.mxu0 %v5743
    %5767 = vmatmul.bf16.gmra.mxu0 %v5690
    %v5768 = vpop.f32.mrf.mxu0
    %v5769 = vadd.f32 %v5709, %v5768
    %v5770 = vpop.f32.mrf.mxu0
    %5771 = vdwg.mxu0
    %v5772 = vadd.f32 %v5769, %v5606
    %v5773 = vmax.f32 %v5772, 0.0
    %v5774 = vpack.c.bf16 %v5773, %v5773
    %v5775 = vld [vmem:[#allocation55] sm:$0xf]
    %v5776 = vld [vmem:[#allocation55 + $0x4] sm:$0xf]
    %v5777 = vld [vmem:[#allocation55 + $0x8] sm:$0xf]
    %v5778 = vld [vmem:[#allocation55 + $0xc] sm:$0xf]
    %v5779 = vld [vmem:[#allocation55 + $0x10] sm:$0xf]
    %v5780 = vld [vmem:[#allocation55 + $0x14] sm:$0xf]
    %v5781 = vld [vmem:[#allocation55 + $0x18] sm:$0xf]
    %v5782 = vld [vmem:[#allocation55 + $0x1c] sm:$0xf]
    %v5783 = vld [vmem:[#allocation55 + $0x20] sm:$0xf]
    %v5784 = vld [vmem:[#allocation55 + $0x24] sm:$0xf]
    %v5785 = vld [vmem:[#allocation55 + $0x28] sm:$0xf]
    %v5786 = vld [vmem:[#allocation55 + $0x2c] sm:$0xf]
    %v5787 = vld [vmem:[#allocation55 + $0x30] sm:$0xf]
    %v5788 = vld [vmem:[#allocation55 + $0x34] sm:$0xf]
    %v5789 = vld [vmem:[#allocation55 + $0x38] sm:$0xf]
    %v5790 = vld [vmem:[#allocation55 + $0x3c] sm:$0xf]
    %v5807 = vunpack.c.l.b16 %v5775
    %v5808 = vunpack.c.l.b16 %v5776
    %v5809 = vunpack.c.l.b16 %v5777
    %v5810 = vunpack.c.l.b16 %v5778
    %v5811 = vunpack.c.l.b16 %v5779
    %v5812 = vunpack.c.l.b16 %v5780
    %v5813 = vunpack.c.l.b16 %v5781
    %v5814 = vunpack.c.l.b16 %v5782
    %v5815 = vunpack.c.l.b16 %v5783
    %v5816 = vunpack.c.l.b16 %v5784
    %v5817 = vunpack.c.l.b16 %v5785
    %v5818 = vunpack.c.l.b16 %v5786
    %v5819 = vunpack.c.l.b16 %v5787
    %v5820 = vunpack.c.l.b16 %v5788
    %v5821 = vunpack.c.l.b16 %v5789
    %v5822 = vunpack.c.l.b16 %v5790
    %v5823 = vpack.c.b16 %v5808, %v5807
    %v5824 = vpack.c.b16 %v5810, %v5809
    %v5825 = vpack.c.b16 %v5812, %v5811
    %v5826 = vpack.c.b16 %v5814, %v5813
    %v5827 = vpack.c.b16 %v5816, %v5815
    %v5828 = vpack.c.b16 %v5818, %v5817
    %v5829 = vpack.c.b16 %v5820, %v5819
    %v5830 = vpack.c.b16 %v5822, %v5821
    %5839 = vmatpush.bf16.msra.mxu0 %v5830
    %5840 = vmatpush.bf16.msra.mxu0 %v5829
    %5841 = vmatpush.bf16.msra.mxu0 %v5828
    %5842 = vmatpush.bf16.msra.mxu0 %v5827
    %5843 = vmatpush.bf16.msra.mxu0 %v5826
    %5844 = vmatpush.bf16.msra.mxu0 %v5825
    %5845 = vmatpush.bf16.msra.mxu0 %v5824
    %5846 = vmatpush.bf16.msra.mxu0 %v5823
    %5847 = vmatmul.bf16.gmra.mxu0 %v5774
    %v5848 = vpop.f32.mrf.mxu0
    %v5849 = vadd.f32 0.0, %v5848
    %v5850 = vpop.f32.mrf.mxu0
    %5851 = vdwg.mxu0
    %v5852 = vpack.c.bf16 %v5849, %v5849
    %v5853 = vld [vmem:[#allocation56] sm:$0xf]
    %v5854 = vld [vmem:[#allocation56 + $0x4] sm:$0xf]
    %v5855 = vld [vmem:[#allocation56 + $0x8] sm:$0xf]
    %v5856 = vld [vmem:[#allocation56 + $0xc] sm:$0xf]
    %v5857 = vld [vmem:[#allocation56 + $0x10] sm:$0xf]
    %v5858 = vld [vmem:[#allocation56 + $0x14] sm:$0xf]
    %v5859 = vld [vmem:[#allocation56 + $0x18] sm:$0xf]
    %v5860 = vld [vmem:[#allocation56 + $0x1c] sm:$0xf]
    %v5861 = vld [vmem:[#allocation56 + $0x20] sm:$0xf]
    %v5862 = vld [vmem:[#allocation56 + $0x24] sm:$0xf]
    %v5863 = vld [vmem:[#allocation56 + $0x28] sm:$0xf]
    %v5864 = vld [vmem:[#allocation56 + $0x2c] sm:$0xf]
    %v5865 = vld [vmem:[#allocation56 + $0x30] sm:$0xf]
    %v5866 = vld [vmem:[#allocation56 + $0x34] sm:$0xf]
    %v5867 = vld [vmem:[#allocation56 + $0x38] sm:$0xf]
    %v5868 = vld [vmem:[#allocation56 + $0x3c] sm:$0xf]
    %v5869 = vld [vmem:[%s99] sm:$0x1]
    %v5871 = vperm.slane %v5869, 0
    %v5889 = vunpack.c.l.b16 %v5853
    %v5890 = vunpack.c.l.b16 %v5854
    %v5891 = vunpack.c.l.b16 %v5855
    %v5892 = vunpack.c.l.b16 %v5856
    %v5893 = vunpack.c.l.b16 %v5857
    %v5894 = vunpack.c.l.b16 %v5858
    %v5895 = vunpack.c.l.b16 %v5859
    %v5896 = vunpack.c.l.b16 %v5860
    %v5897 = vunpack.c.l.b16 %v5861
    %v5898 = vunpack.c.l.b16 %v5862
    %v5899 = vunpack.c.l.b16 %v5863
    %v5900 = vunpack.c.l.b16 %v5864
    %v5901 = vunpack.c.l.b16 %v5865
    %v5902 = vunpack.c.l.b16 %v5866
    %v5903 = vunpack.c.l.b16 %v5867
    %v5904 = vunpack.c.l.b16 %v5868
    %v5905 = vpack.c.b16 %v5890, %v5889
    %v5906 = vpack.c.b16 %v5892, %v5891
    %v5907 = vpack.c.b16 %v5894, %v5893
    %v5908 = vpack.c.b16 %v5896, %v5895
    %v5909 = vpack.c.b16 %v5898, %v5897
    %v5910 = vpack.c.b16 %v5900, %v5899
    %v5911 = vpack.c.b16 %v5902, %v5901
    %v5912 = vpack.c.b16 %v5904, %v5903
    %5921 = vmatpush.bf16.msra.mxu0 %v5912
    %5922 = vmatpush.bf16.msra.mxu0 %v5911
    %5923 = vmatpush.bf16.msra.mxu0 %v5910
    %5924 = vmatpush.bf16.msra.mxu0 %v5909
    %5925 = vmatpush.bf16.msra.mxu0 %v5908
    %5926 = vmatpush.bf16.msra.mxu0 %v5907
    %5927 = vmatpush.bf16.msra.mxu0 %v5906
    %5928 = vmatpush.bf16.msra.mxu0 %v5905
    %5929 = vmatmul.bf16.gmra.mxu0 %v5852
    %v5930 = vpop.f32.mrf.mxu0
    %v5931 = vadd.f32 %v5871, %v5930
    %v5932 = vpop.f32.mrf.mxu0
    %5933 = vdwg.mxu0
    %v5934 = vld [vmem:[%s3] sm:$0xff]
    %v5935 = vld [vmem:[%s95] sm:$0x3]
    %5937 = vset.pattern.permute.xlu0 0
    %5938 = vperm.xlu0 %5937, %v5934
    %v5939 = vpop.permute.xlu0 %5938
    %v5941 = vperm.slane %v5935, 0
    %v5942 = vmul.f32 %v5939, %v5941
    %v5943 = vadd.f32 %v5931, %v5942
    %5944 = vset.pattern.permute.xlu0 1
    %5945 = vperm.xlu0 %5944, %v5934
    %v5946 = vpop.permute.xlu0 %5945
    %v5948 = vperm.slane %v5935, 1
    %v5949 = vmul.f32 %v5946, %v5948
    %v5950 = vadd.f32 %v5943, %v5949
    %v5951 = vld [vmem:[%s97] sm:$0xf]
    %v5952 = vld [vmem:[%s97 + $0x4] sm:$0xf]
    %v5953 = vld [vmem:[%s97 + $0x8] sm:$0xf]
    %v5954 = vld [vmem:[%s97 + $0xc] sm:$0xf]
    %v5959 = vunpack.c.l.b16 %v5951
    %v5960 = vunpack.c.l.b16 %v5952
    %v5961 = vunpack.c.l.b16 %v5953
    %v5962 = vunpack.c.l.b16 %v5954
    %v5963 = vpack.c.b16 %v5960, %v5959
    %v5964 = vpack.c.b16 %v5962, %v5961
    %vm5967 = vcmask 261120
    %v5969 = vsel %vm5967, 0, 0
    %5971 = vmatpush.bf16.msra.mxu0 0
    %5972 = vmatpush.bf16.msra.mxu0 0
    %5973 = vmatpush.bf16.msra.mxu0 0
    %5974 = vmatpush.bf16.msra.mxu0 0
    %5975 = vmatpush.bf16.msra.mxu0 0
    %5976 = vmatpush.bf16.msra.mxu0 0
    %5977 = vmatpush.bf16.msra.mxu0 %v5964
    %5978 = vmatpush.bf16.msra.mxu0 %v5963
    %5979 = vmatmul.bf16.gmra.mxu0 %v5969
    %v5980 = vpop.f32.mrf.mxu0
    %v5981 = vadd.f32 0.0, %v5980
    %v5982 = vpop.f32.mrf.mxu0
    %5983 = vdwg.mxu0
    %v5984 = vadd.f32 %v5950, %v5981
    %v5985 = vxor.u32 %v5984, 2147483648
    %v5986 = vmul.f32 %v5985, 1.442695
    %v5987 = vpow.pop %v5986
    %v5988 = vadd.f32 %v5987, 1.0
    %v5989 = vrcp.pop %v5988
    %v5990 = vmul.f32 %v5988, %v5989
    %v5991 = vsub.f32 1.0, %v5990
    %v5992 = vmul.f32 %v5989, %v5991
    %v5993 = vadd.f32 %v5989, %v5992
    %vm5994 = vweird.f32 %v5988
    %vm5995 = vweird.f32 %v5989
    %vm5996 = vmor %vm5994, %vm5995
    %v5997 = vsel %vm5996, %v5989, %v5993
    %v5998 = vand.u32 2147483647, %v5988
    %vm5999 = vcmp.eq.f32.partialorder %v5998, 8.507059e+37
    %v6000 = vand.u32 %v5988, 2147483648
    %v6001 = vor.u32 1.1754944e-38, %v6000
    %v6002 = vsel %vm5999, %v6001, %v5997
    %v6003 = vmul.f32 1.0, %v6002
    %v6004 = vtanh.pop %v5984
    %v6005 = vmul.f32 %v6003, 0.0
    %6007 = vrot.lane.b32.xlu0 %v6004, 64
    %v6008 = vpop.permute.xlu0 %6007
    %v6010 = vmul.f32 %v6003, %v6008
    %6012 = vrot.lane.b32.xlu0 %v6010, 32
    %v6013 = vpop.permute.xlu0 %6012
    %v6015 = vadd.f32 %v6005, %v6013
    %v6016 = vtanh.pop %v6015
    %6018 = vrot.lane.b32.xlu0 %v6016, 64
    %v6019 = vpop.permute.xlu0 %6018
    %v6021 = vmul.f32 %v6003, %v6019
    %v6022 = vpack.c.bf16 %v6021, %v6021
    %6024 = vrot.lane.b32.xlu0 %v6022, 32
    %v6025 = vpop.permute.xlu0 %6024
    %v6027 = vsel %vm5967, %v6025, 0
    %6029 = vmatpush.bf16.msra.mxu0 0
    %6030 = vmatpush.bf16.msra.mxu0 0
    %6031 = vmatpush.bf16.msra.mxu0 0
    %6032 = vmatpush.bf16.msra.mxu0 0
    %6033 = vmatpush.bf16.msra.mxu0 0
    %6034 = vmatpush.bf16.msra.mxu0 0
    %6035 = vmatpush.bf16.msra.mxu0 %v5964
    %6036 = vmatpush.bf16.msra.mxu0 %v5963
    %6037 = vmatmul.bf16.gmra.mxu0 %v6027
    %v6038 = vpop.f32.mrf.mxu0
    %v6039 = vadd.f32 0.0, %v6038
    %v6040 = vpop.f32.mrf.mxu0
    %6041 = vdwg.mxu0
    %v6043 = vrot.slane %v6039, 4
    %v6045 = vadd.f32 %v5950, %v6043
    %v6046 = vxor.u32 %v6045, 2147483648
    %v6047 = vmul.f32 %v6046, 1.442695
    %v6048 = vpow.pop %v6047
    %v6049 = vadd.f32 %v6048, 1.0
    %v6050 = vrcp.pop %v6049
    %v6051 = vmul.f32 %v6049, %v6050
    %v6052 = vsub.f32 1.0, %v6051
    %v6053 = vmul.f32 %v6050, %v6052
    %v6054 = vadd.f32 %v6050, %v6053
    %vm6055 = vweird.f32 %v6049
    %vm6056 = vweird.f32 %v6050
    %vm6057 = vmor %vm6055, %vm6056
    %v6058 = vsel %vm6057, %v6050, %v6054
    %v6059 = vand.u32 2147483647, %v6049
    %vm6060 = vcmp.eq.f32.partialorder %v6059, 8.507059e+37
    %v6061 = vand.u32 %v6049, 2147483648
    %v6062 = vor.u32 1.1754944e-38, %v6061
    %v6063 = vsel %vm6060, %v6062, %v6058
    %v6064 = vmul.f32 1.0, %v6063
    %v6065 = vtanh.pop %v6045
    %v6067 = vrot.slane %v6015, 4
    %v6069 = vmul.f32 %v6064, %v6067
    %6071 = vrot.lane.b32.xlu0 %v6065, 64
    %v6072 = vpop.permute.xlu0 %6071
    %v6074 = vmul.f32 %v6064, %v6072
    %6076 = vrot.lane.b32.xlu0 %v6074, 32
    %v6077 = vpop.permute.xlu0 %6076
    %v6079 = vadd.f32 %v6069, %v6077
    %v6080 = vtanh.pop %v6079
    %6082 = vrot.lane.b32.xlu0 %v6080, 64
    %v6083 = vpop.permute.xlu0 %6082
    %v6085 = vmul.f32 %v6064, %v6083
    %v6086 = vpack.c.bf16 %v6085, %v6085
    %v6088 = vrot.slane %v6086, 2
    %6089 = vrot.lane.b32.xlu0 %v6088, 32
    %v6090 = vpop.permute.xlu0 %6089
    %v6092 = vsel %vm5967, %v6090, 0
    %6094 = vmatpush.bf16.msra.mxu0 0
    %6095 = vmatpush.bf16.msra.mxu0 0
    %6096 = vmatpush.bf16.msra.mxu0 0
    %6097 = vmatpush.bf16.msra.mxu0 0
    %6098 = vmatpush.bf16.msra.mxu0 0
    %6099 = vmatpush.bf16.msra.mxu0 0
    %6100 = vmatpush.bf16.msra.mxu0 %v5964
    %6101 = vmatpush.bf16.msra.mxu0 %v5963
    %6102 = vmatmul.bf16.gmra.mxu0 %v6092
    %v6103 = vpop.f32.mrf.mxu0
    %v6104 = vadd.f32 0.0, %v6103
    %v6105 = vpop.f32.mrf.mxu0
    %6106 = vdwg.mxu0
    %v6108 = vrot.slane %v6104, 7
    %v6110 = vadd.f32 %v5950, %v6108
    %v6111 = vxor.u32 %v6110, 2147483648
    %v6112 = vmul.f32 %v6111, 1.442695
    %v6113 = vpow.pop %v6112
    %v6114 = vadd.f32 %v6113, 1.0
    %v6115 = vrcp.pop %v6114
    %v6116 = vmul.f32 %v6114, %v6115
    %v6117 = vsub.f32 1.0, %v6116
    %v6118 = vmul.f32 %v6115, %v6117
    %v6119 = vadd.f32 %v6115, %v6118
    %vm6120 = vweird.f32 %v6114
    %vm6121 = vweird.f32 %v6115
    %vm6122 = vmor %vm6120, %vm6121
    %v6123 = vsel %vm6122, %v6115, %v6119
    %v6124 = vand.u32 2147483647, %v6114
    %vm6125 = vcmp.eq.f32.partialorder %v6124, 8.507059e+37
    %v6126 = vand.u32 %v6114, 2147483648
    %v6127 = vor.u32 1.1754944e-38, %v6126
    %v6128 = vsel %vm6125, %v6127, %v6123
    %v6129 = vmul.f32 1.0, %v6128
    %v6130 = vtanh.pop %v6110
    %v6132 = vrot.slane %v6079, 3
    %v6134 = vmul.f32 %v6129, %v6132
    %6136 = vrot.lane.b32.xlu0 %v6130, 64
    %v6137 = vpop.permute.xlu0 %6136
    %v6139 = vmul.f32 %v6129, %v6137
    %6141 = vrot.lane.b32.xlu0 %v6139, 32
    %v6142 = vpop.permute.xlu0 %6141
    %v6144 = vadd.f32 %v6134, %v6142
    %v6145 = vtanh.pop %v6144
    %6147 = vrot.lane.b32.xlu0 %v6145, 64
    %v6148 = vpop.permute.xlu0 %6147
    %v6150 = vmul.f32 %v6129, %v6148
    %v6151 = vpack.c.bf16 %v6150, %v6150
    %v6153 = vshrl.u32 %v6151, 16
    %6155 = vrot.lane.b32.xlu0 %v6153, 32
    %v6156 = vpop.permute.xlu0 %6155
    %v6158 = vsel %vm5967, %v6156, 0
    %6160 = vmatpush.bf16.msra.mxu0 0
    %6161 = vmatpush.bf16.msra.mxu0 0
    %6162 = vmatpush.bf16.msra.mxu0 0
    %6163 = vmatpush.bf16.msra.mxu0 0
    %6164 = vmatpush.bf16.msra.mxu0 0
    %6165 = vmatpush.bf16.msra.mxu0 0
    %6166 = vmatpush.bf16.msra.mxu0 %v5964
    %6167 = vmatpush.bf16.msra.mxu0 %v5963
    %6168 = vmatmul.bf16.gmra.mxu0 %v6158
    %v6169 = vpop.f32.mrf.mxu0
    %v6170 = vadd.f32 0.0, %v6169
    %v6171 = vpop.f32.mrf.mxu0
    %6172 = vdwg.mxu0
    %v6174 = vrot.slane %v6170, 3
    %v6176 = vadd.f32 %v5950, %v6174
    %v6177 = vxor.u32 %v6176, 2147483648
    %v6178 = vmul.f32 %v6177, 1.442695
    %v6179 = vpow.pop %v6178
    %v6180 = vadd.f32 %v6179, 1.0
    %v6181 = vrcp.pop %v6180
    %v6182 = vmul.f32 %v6180, %v6181
    %v6183 = vsub.f32 1.0, %v6182
    %v6184 = vmul.f32 %v6181, %v6183
    %v6185 = vadd.f32 %v6181, %v6184
    %vm6186 = vweird.f32 %v6180
    %vm6187 = vweird.f32 %v6181
    %vm6188 = vmor %vm6186, %vm6187
    %v6189 = vsel %vm6188, %v6181, %v6185
    %v6190 = vand.u32 2147483647, %v6180
    %vm6191 = vcmp.eq.f32.partialorder %v6190, 8.507059e+37
    %v6192 = vand.u32 %v6180, 2147483648
    %v6193 = vor.u32 1.1754944e-38, %v6192
    %v6194 = vsel %vm6191, %v6193, %v6189
    %v6195 = vmul.f32 1.0, %v6194
    %v6196 = vtanh.pop %v6176
    %v6198 = vrot.slane %v6144, 4
    %v6200 = vmul.f32 %v6195, %v6198
    %6202 = vrot.lane.b32.xlu0 %v6196, 64
    %v6203 = vpop.permute.xlu0 %6202
    %v6205 = vmul.f32 %v6195, %v6203
    %6207 = vrot.lane.b32.xlu0 %v6205, 32
    %v6208 = vpop.permute.xlu0 %6207
    %v6210 = vadd.f32 %v6200, %v6208
    %v6211 = vtanh.pop %v6210
    %6213 = vrot.lane.b32.xlu0 %v6211, 64
    %v6214 = vpop.permute.xlu0 %6213
    %v6216 = vmul.f32 %v6195, %v6214
    %v6217 = vpack.c.bf16 %v6216, %v6216
    %v6219 = vshrl.u32 %v6217, 16
    %v6221 = vrot.slane %v6219, 2
    %6222 = vrot.lane.b32.xlu0 %v6221, 32
    %v6223 = vpop.permute.xlu0 %6222
    %v6225 = vsel %vm5967, %v6223, 0
    %6227 = vmatpush.bf16.msra.mxu0 0
    %6228 = vmatpush.bf16.msra.mxu0 0
    %6229 = vmatpush.bf16.msra.mxu0 0
    %6230 = vmatpush.bf16.msra.mxu0 0
    %6231 = vmatpush.bf16.msra.mxu0 0
    %6232 = vmatpush.bf16.msra.mxu0 0
    %6233 = vmatpush.bf16.msra.mxu0 %v5964
    %6234 = vmatpush.bf16.msra.mxu0 %v5963
    %6235 = vmatmul.bf16.gmra.mxu0 %v6225
    %v6236 = vpop.f32.mrf.mxu0
    %v6237 = vadd.f32 0.0, %v6236
    %v6238 = vpop.f32.mrf.mxu0
    %6239 = vdwg.mxu0
    %v6241 = vrot.slane %v6237, 6
    %v6243 = vadd.f32 %v5950, %v6241
    %v6244 = vxor.u32 %v6243, 2147483648
    %v6245 = vmul.f32 %v6244, 1.442695
    %v6246 = vpow.pop %v6245
    %v6247 = vadd.f32 %v6246, 1.0
    %v6248 = vrcp.pop %v6247
    %v6249 = vmul.f32 %v6247, %v6248
    %v6250 = vsub.f32 1.0, %v6249
    %v6251 = vmul.f32 %v6248, %v6250
    %v6252 = vadd.f32 %v6248, %v6251
    %vm6253 = vweird.f32 %v6247
    %vm6254 = vweird.f32 %v6248
    %vm6255 = vmor %vm6253, %vm6254
    %v6256 = vsel %vm6255, %v6248, %v6252
    %v6257 = vand.u32 2147483647, %v6247
    %vm6258 = vcmp.eq.f32.partialorder %v6257, 8.507059e+37
    %v6259 = vand.u32 %v6247, 2147483648
    %v6260 = vor.u32 1.1754944e-38, %v6259
    %v6261 = vsel %vm6258, %v6260, %v6256
    %v6262 = vmul.f32 1.0, %v6261
    %v6263 = vtanh.pop %v6243
    %v6265 = vrot.slane %v6210, 3
    %v6267 = vmul.f32 %v6262, %v6265
    %6269 = vrot.lane.b32.xlu0 %v6263, 64
    %v6270 = vpop.permute.xlu0 %6269
    %v6272 = vmul.f32 %v6262, %v6270
    %6274 = vrot.lane.b32.xlu0 %v6272, 32
    %v6275 = vpop.permute.xlu0 %6274
    %v6277 = vadd.f32 %v6267, %v6275
    %v6278 = vtanh.pop %v6277
    %6280 = vrot.lane.b32.xlu0 %v6278, 64
    %v6281 = vpop.permute.xlu0 %6280
    %v6283 = vmul.f32 %v6262, %v6281
    %v6284 = vpack.c.bf16 %v6283, %v6283
    %v6286 = vrot.slane %v6284, 1
    %6287 = vrot.lane.b32.xlu0 %v6286, 32
    %v6288 = vpop.permute.xlu0 %6287
    %v6290 = vsel %vm5967, %v6288, 0
    %6292 = vmatpush.bf16.msra.mxu0 0
    %6293 = vmatpush.bf16.msra.mxu0 0
    %6294 = vmatpush.bf16.msra.mxu0 0
    %6295 = vmatpush.bf16.msra.mxu0 0
    %6296 = vmatpush.bf16.msra.mxu0 0
    %6297 = vmatpush.bf16.msra.mxu0 0
    %6298 = vmatpush.bf16.msra.mxu0 %v5964
    %6299 = vmatpush.bf16.msra.mxu0 %v5963
    %6300 = vmatmul.bf16.gmra.mxu0 %v6290
    %v6301 = vpop.f32.mrf.mxu0
    %v6302 = vadd.f32 0.0, %v6301
    %v6303 = vpop.f32.mrf.mxu0
    %6304 = vdwg.mxu0
    %v6306 = vrot.slane %v6302, 2
    %v6308 = vadd.f32 %v5950, %v6306
    %v6309 = vxor.u32 %v6308, 2147483648
    %v6310 = vmul.f32 %v6309, 1.442695
    %v6311 = vpow.pop %v6310
    %v6312 = vadd.f32 %v6311, 1.0
    %v6313 = vrcp.pop %v6312
    %v6314 = vmul.f32 %v6312, %v6313
    %v6315 = vsub.f32 1.0, %v6314
    %v6316 = vmul.f32 %v6313, %v6315
    %v6317 = vadd.f32 %v6313, %v6316
    %vm6318 = vweird.f32 %v6312
    %vm6319 = vweird.f32 %v6313
    %vm6320 = vmor %vm6318, %vm6319
    %v6321 = vsel %vm6320, %v6313, %v6317
    %v6322 = vand.u32 2147483647, %v6312
    %vm6323 = vcmp.eq.f32.partialorder %v6322, 8.507059e+37
    %v6324 = vand.u32 %v6312, 2147483648
    %v6325 = vor.u32 1.1754944e-38, %v6324
    %v6326 = vsel %vm6323, %v6325, %v6321
    %v6327 = vmul.f32 1.0, %v6326
    %v6328 = vtanh.pop %v6308
    %v6330 = vrot.slane %v6277, 4
    %v6332 = vmul.f32 %v6327, %v6330
    %6334 = vrot.lane.b32.xlu0 %v6328, 64
    %v6335 = vpop.permute.xlu0 %6334
    %v6337 = vmul.f32 %v6327, %v6335
    %6339 = vrot.lane.b32.xlu0 %v6337, 32
    %v6340 = vpop.permute.xlu0 %6339
    %v6342 = vadd.f32 %v6332, %v6340
    %v6343 = vtanh.pop %v6342
    %6345 = vrot.lane.b32.xlu0 %v6343, 64
    %v6346 = vpop.permute.xlu0 %6345
    %v6348 = vmul.f32 %v6327, %v6346
    %v6349 = vpack.c.bf16 %v6348, %v6348
    %v6351 = vrot.slane %v6349, 3
    %6352 = vrot.lane.b32.xlu0 %v6351, 32
    %v6353 = vpop.permute.xlu0 %6352
    %v6355 = vsel %vm5967, %v6353, 0
    %6357 = vmatpush.bf16.msra.mxu0 0
    %6358 = vmatpush.bf16.msra.mxu0 0
    %6359 = vmatpush.bf16.msra.mxu0 0
    %6360 = vmatpush.bf16.msra.mxu0 0
    %6361 = vmatpush.bf16.msra.mxu0 0
    %6362 = vmatpush.bf16.msra.mxu0 0
    %6363 = vmatpush.bf16.msra.mxu0 %v5964
    %6364 = vmatpush.bf16.msra.mxu0 %v5963
    %6365 = vmatmul.bf16.gmra.mxu0 %v6355
    %v6366 = vpop.f32.mrf.mxu0
    %v6367 = vadd.f32 0.0, %v6366
    %v6368 = vpop.f32.mrf.mxu0
    %6369 = vdwg.mxu0
    %v6371 = vrot.slane %v6367, 5
    %v6373 = vadd.f32 %v5950, %v6371
    %v6374 = vxor.u32 %v6373, 2147483648
    %v6375 = vmul.f32 %v6374, 1.442695
    %v6376 = vpow.pop %v6375
    %v6377 = vadd.f32 %v6376, 1.0
    %v6378 = vrcp.pop %v6377
    %v6379 = vmul.f32 %v6377, %v6378
    %v6380 = vsub.f32 1.0, %v6379
    %v6381 = vmul.f32 %v6378, %v6380
    %v6382 = vadd.f32 %v6378, %v6381
    %vm6383 = vweird.f32 %v6377
    %vm6384 = vweird.f32 %v6378
    %vm6385 = vmor %vm6383, %vm6384
    %v6386 = vsel %vm6385, %v6378, %v6382
    %v6387 = vand.u32 2147483647, %v6377
    %vm6388 = vcmp.eq.f32.partialorder %v6387, 8.507059e+37
    %v6389 = vand.u32 %v6377, 2147483648
    %v6390 = vor.u32 1.1754944e-38, %v6389
    %v6391 = vsel %vm6388, %v6390, %v6386
    %v6392 = vmul.f32 1.0, %v6391
    %v6393 = vtanh.pop %v6373
    %v6395 = vrot.slane %v6342, 3
    %v6397 = vmul.f32 %v6392, %v6395
    %6399 = vrot.lane.b32.xlu0 %v6393, 64
    %v6400 = vpop.permute.xlu0 %6399
    %v6402 = vmul.f32 %v6392, %v6400
    %6404 = vrot.lane.b32.xlu0 %v6402, 32
    %v6405 = vpop.permute.xlu0 %6404
    %v6407 = vadd.f32 %v6397, %v6405
    %v6408 = vtanh.pop %v6407
    %6410 = vrot.lane.b32.xlu0 %v6408, 64
    %v6411 = vpop.permute.xlu0 %6410
    %v6413 = vmul.f32 %v6392, %v6411
    %v6414 = vpack.c.bf16 %v6413, %v6413
    %v6416 = vshrl.u32 %v6414, 16
    %v6418 = vrot.slane %v6416, 1
    %6419 = vrot.lane.b32.xlu0 %v6418, 32
    %v6420 = vpop.permute.xlu0 %6419
    %v6422 = vsel %vm5967, %v6420, 0
    %6424 = vmatpush.bf16.msra.mxu0 0
    %6425 = vmatpush.bf16.msra.mxu0 0
    %6426 = vmatpush.bf16.msra.mxu0 0
    %6427 = vmatpush.bf16.msra.mxu0 0
    %6428 = vmatpush.bf16.msra.mxu0 0
    %6429 = vmatpush.bf16.msra.mxu0 0
    %6430 = vmatpush.bf16.msra.mxu0 %v5964
    %6431 = vmatpush.bf16.msra.mxu0 %v5963
    %6432 = vmatmul.bf16.gmra.mxu0 %v6422
    %v6433 = vpop.f32.mrf.mxu0
    %v6434 = vadd.f32 0.0, %v6433
    %v6435 = vpop.f32.mrf.mxu0
    %6436 = vdwg.mxu0
    %v6438 = vrot.slane %v6434, 1
    %v6440 = vadd.f32 %v5950, %v6438
    %v6441 = vxor.u32 %v6440, 2147483648
    %v6442 = vmul.f32 %v6441, 1.442695
    %v6443 = vpow.pop %v6442
    %v6444 = vadd.f32 %v6443, 1.0
    %v6445 = vrcp.pop %v6444
    %v6446 = vmul.f32 %v6444, %v6445
    %v6447 = vsub.f32 1.0, %v6446
    %v6448 = vmul.f32 %v6445, %v6447
    %v6449 = vadd.f32 %v6445, %v6448
    %vm6450 = vweird.f32 %v6444
    %vm6451 = vweird.f32 %v6445
    %vm6452 = vmor %vm6450, %vm6451
    %v6453 = vsel %vm6452, %v6445, %v6449
    %v6454 = vand.u32 2147483647, %v6444
    %vm6455 = vcmp.eq.f32.partialorder %v6454, 8.507059e+37
    %v6456 = vand.u32 %v6444, 2147483648
    %v6457 = vor.u32 1.1754944e-38, %v6456
    %v6458 = vsel %vm6455, %v6457, %v6453
    %v6459 = vmul.f32 1.0, %v6458
    %v6460 = vtanh.pop %v6440
    %v6462 = vrot.slane %v6407, 4
    %v6464 = vmul.f32 %v6459, %v6462
    %6466 = vrot.lane.b32.xlu0 %v6460, 64
    %v6467 = vpop.permute.xlu0 %6466
    %v6469 = vmul.f32 %v6459, %v6467
    %6471 = vrot.lane.b32.xlu0 %v6469, 32
    %v6472 = vpop.permute.xlu0 %6471
    %v6474 = vadd.f32 %v6464, %v6472
    %v6475 = vtanh.pop %v6474
    %6477 = vrot.lane.b32.xlu0 %v6475, 64
    %v6478 = vpop.permute.xlu0 %6477
    %v6480 = vmul.f32 %v6459, %v6478
    %v6482 = vrot.slane %v6085, 3
    %v6485 = vrot.slane %v6150, 7
    %v6488 = vrot.slane %v6216, 2
    %v6491 = vrot.slane %v6283, 6
    %v6494 = vrot.slane %v6348, 1
    %v6497 = vrot.slane %v6413, 5
    %vm6499 = vcmask 1040384
    %v6500 = vsel %vm6499, %v6021, %v6482
    %vm6501 = vcmask 1041408
    %v6502 = vsel %vm6501, %v6500, %v6485
    %vm6503 = vcmask 1042432
    %v6504 = vsel %vm6503, %v6502, %v6488
    %vm6505 = vcmask 1043456
    %v6506 = vsel %vm6505, %v6504, %v6491
    %vm6507 = vcmask 1044480
    %v6508 = vsel %vm6507, %v6506, %v6494
    %vm6509 = vcmask 1045504
    %v6510 = vsel %vm6509, %v6508, %v6497
    %vm6511 = vcmask 1046528
    %v6512 = vsel %vm6511, %v6510, %v6480
    %v6513 = vpack.c.bf16 %v6512, %v6512
    %v6514 = vld [vmem:[%s101] sm:$0xf]
    %v6515 = vld [vmem:[%s101 + $0x4] sm:$0xf]
    %v6516 = vld [vmem:[%s101 + $0x8] sm:$0xf]
    %v6517 = vld [vmem:[%s101 + $0xc] sm:$0xf]
    %v6518 = vld [vmem:[%s105] sm:$0x1]
    %v6520 = vperm.slane %v6518, 0
    %6523 = vrot.lane.b32.xlu0 %v6513, 32
    %v6524 = vpop.permute.xlu0 %6523
    %v6529 = vunpack.c.l.b16 %v6514
    %v6530 = vunpack.c.l.b16 %v6515
    %v6531 = vunpack.c.l.b16 %v6516
    %v6532 = vunpack.c.l.b16 %v6517
    %v6533 = vpack.c.b16 %v6530, %v6529
    %v6534 = vpack.c.b16 %v6532, %v6531
    %v6538 = vsel %vm5967, %v6524, 0
    %6540 = vmatpush.bf16.msra.mxu0 0
    %6541 = vmatpush.bf16.msra.mxu0 0
    %6542 = vmatpush.bf16.msra.mxu0 0
    %6543 = vmatpush.bf16.msra.mxu0 0
    %6544 = vmatpush.bf16.msra.mxu0 0
    %6545 = vmatpush.bf16.msra.mxu0 0
    %6546 = vmatpush.bf16.msra.mxu0 %v6534
    %6547 = vmatpush.bf16.msra.mxu0 %v6533
    %6548 = vmatmul.bf16.gmra.mxu0 %v6538
    %v6549 = vpop.f32.mrf.mxu0
    %v6550 = vadd.f32 %v6520, %v6549
    %v6551 = vpop.f32.mrf.mxu0
    %6552 = vdwg.mxu0
    %v6553 = vld [vmem:[%s103] sm:$0xf]
    %v6554 = vld [vmem:[%s103 + $0x4] sm:$0xf]
    %v6555 = vld [vmem:[%s103 + $0x8] sm:$0xf]
    %v6556 = vld [vmem:[%s103 + $0xc] sm:$0xf]
    %v6561 = vunpack.c.l.b16 %v6553
    %v6562 = vunpack.c.l.b16 %v6554
    %v6563 = vunpack.c.l.b16 %v6555
    %v6564 = vunpack.c.l.b16 %v6556
    %v6565 = vpack.c.b16 %v6562, %v6561
    %v6566 = vpack.c.b16 %v6564, %v6563
    %6569 = vmatpush.bf16.msra.mxu0 0
    %6570 = vmatpush.bf16.msra.mxu0 0
    %6571 = vmatpush.bf16.msra.mxu0 0
    %6572 = vmatpush.bf16.msra.mxu0 0
    %6573 = vmatpush.bf16.msra.mxu0 0
    %6574 = vmatpush.bf16.msra.mxu0 0
    %6575 = vmatpush.bf16.msra.mxu0 %v6566
    %6576 = vmatpush.bf16.msra.mxu0 %v6565
    %6577 = vmatmul.bf16.gmra.mxu0 %v5969
    %v6578 = vpop.f32.mrf.mxu0
    %v6579 = vadd.f32 0.0, %v6578
    %v6580 = vpop.f32.mrf.mxu0
    %6581 = vdwg.mxu0
    %v6582 = vadd.f32 %v6550, %v6579
    %v6583 = vxor.u32 %v6582, 2147483648
    %v6584 = vmul.f32 %v6583, 1.442695
    %v6585 = vpow.pop %v6584
    %v6586 = vadd.f32 %v6585, 1.0
    %v6587 = vrcp.pop %v6586
    %v6588 = vmul.f32 %v6586, %v6587
    %v6589 = vsub.f32 1.0, %v6588
    %v6590 = vmul.f32 %v6587, %v6589
    %v6591 = vadd.f32 %v6587, %v6590
    %vm6592 = vweird.f32 %v6586
    %vm6593 = vweird.f32 %v6587
    %vm6594 = vmor %vm6592, %vm6593
    %v6595 = vsel %vm6594, %v6587, %v6591
    %v6596 = vand.u32 2147483647, %v6586
    %vm6597 = vcmp.eq.f32.partialorder %v6596, 8.507059e+37
    %v6598 = vand.u32 %v6586, 2147483648
    %v6599 = vor.u32 1.1754944e-38, %v6598
    %v6600 = vsel %vm6597, %v6599, %v6595
    %v6601 = vmul.f32 1.0, %v6600
    %v6602 = vtanh.pop %v6582
    %v6603 = vmul.f32 %v6601, 0.0
    %6605 = vrot.lane.b32.xlu0 %v6602, 64
    %v6606 = vpop.permute.xlu0 %6605
    %v6608 = vmul.f32 %v6601, %v6606
    %6610 = vrot.lane.b32.xlu0 %v6608, 32
    %v6611 = vpop.permute.xlu0 %6610
    %v6613 = vadd.f32 %v6603, %v6611
    %v6614 = vtanh.pop %v6613
    %6616 = vrot.lane.b32.xlu0 %v6614, 64
    %v6617 = vpop.permute.xlu0 %6616
    %v6619 = vmul.f32 %v6601, %v6617
    %v6620 = vpack.c.bf16 %v6619, %v6619
    %6622 = vrot.lane.b32.xlu0 %v6620, 32
    %v6623 = vpop.permute.xlu0 %6622
    %v6625 = vsel %vm5967, %v6623, 0
    %6627 = vmatpush.bf16.msra.mxu0 0
    %6628 = vmatpush.bf16.msra.mxu0 0
    %6629 = vmatpush.bf16.msra.mxu0 0
    %6630 = vmatpush.bf16.msra.mxu0 0
    %6631 = vmatpush.bf16.msra.mxu0 0
    %6632 = vmatpush.bf16.msra.mxu0 0
    %6633 = vmatpush.bf16.msra.mxu0 %v6566
    %6634 = vmatpush.bf16.msra.mxu0 %v6565
    %6635 = vmatmul.bf16.gmra.mxu0 %v6625
    %v6636 = vpop.f32.mrf.mxu0
    %v6637 = vadd.f32 0.0, %v6636
    %v6638 = vpop.f32.mrf.mxu0
    %6639 = vdwg.mxu0
    %v6641 = vrot.slane %v6637, 7
    %v6643 = vadd.f32 %v6550, %v6641
    %v6644 = vxor.u32 %v6643, 2147483648
    %v6645 = vmul.f32 %v6644, 1.442695
    %v6646 = vpow.pop %v6645
    %v6647 = vadd.f32 %v6646, 1.0
    %v6648 = vrcp.pop %v6647
    %v6649 = vmul.f32 %v6647, %v6648
    %v6650 = vsub.f32 1.0, %v6649
    %v6651 = vmul.f32 %v6648, %v6650
    %v6652 = vadd.f32 %v6648, %v6651
    %vm6653 = vweird.f32 %v6647
    %vm6654 = vweird.f32 %v6648
    %vm6655 = vmor %vm6653, %vm6654
    %v6656 = vsel %vm6655, %v6648, %v6652
    %v6657 = vand.u32 2147483647, %v6647
    %vm6658 = vcmp.eq.f32.partialorder %v6657, 8.507059e+37
    %v6659 = vand.u32 %v6647, 2147483648
    %v6660 = vor.u32 1.1754944e-38, %v6659
    %v6661 = vsel %vm6658, %v6660, %v6656
    %v6662 = vmul.f32 1.0, %v6661
    %v6663 = vtanh.pop %v6643
    %v6665 = vrot.slane %v6613, 7
    %v6667 = vmul.f32 %v6662, %v6665
    %6669 = vrot.lane.b32.xlu0 %v6663, 64
    %v6670 = vpop.permute.xlu0 %6669
    %v6672 = vmul.f32 %v6662, %v6670
    %6674 = vrot.lane.b32.xlu0 %v6672, 32
    %v6675 = vpop.permute.xlu0 %6674
    %v6677 = vadd.f32 %v6667, %v6675
    %v6678 = vtanh.pop %v6677
    %6680 = vrot.lane.b32.xlu0 %v6678, 64
    %v6681 = vpop.permute.xlu0 %6680
    %v6683 = vmul.f32 %v6662, %v6681
    %v6684 = vpack.c.bf16 %v6683, %v6683
    %v6686 = vshrl.u32 %v6684, 16
    %6688 = vrot.lane.b32.xlu0 %v6686, 32
    %v6689 = vpop.permute.xlu0 %6688
    %v6691 = vsel %vm5967, %v6689, 0
    %6693 = vmatpush.bf16.msra.mxu0 0
    %6694 = vmatpush.bf16.msra.mxu0 0
    %6695 = vmatpush.bf16.msra.mxu0 0
    %6696 = vmatpush.bf16.msra.mxu0 0
    %6697 = vmatpush.bf16.msra.mxu0 0
    %6698 = vmatpush.bf16.msra.mxu0 0
    %6699 = vmatpush.bf16.msra.mxu0 %v6566
    %6700 = vmatpush.bf16.msra.mxu0 %v6565
    %6701 = vmatmul.bf16.gmra.mxu0 %v6691
    %v6702 = vpop.f32.mrf.mxu0
    %v6703 = vadd.f32 0.0, %v6702
    %v6704 = vpop.f32.mrf.mxu0
    %6705 = vdwg.mxu0
    %v6707 = vrot.slane %v6703, 6
    %v6709 = vadd.f32 %v6550, %v6707
    %v6710 = vxor.u32 %v6709, 2147483648
    %v6711 = vmul.f32 %v6710, 1.442695
    %v6712 = vpow.pop %v6711
    %v6713 = vadd.f32 %v6712, 1.0
    %v6714 = vrcp.pop %v6713
    %v6715 = vmul.f32 %v6713, %v6714
    %v6716 = vsub.f32 1.0, %v6715
    %v6717 = vmul.f32 %v6714, %v6716
    %v6718 = vadd.f32 %v6714, %v6717
    %vm6719 = vweird.f32 %v6713
    %vm6720 = vweird.f32 %v6714
    %vm6721 = vmor %vm6719, %vm6720
    %v6722 = vsel %vm6721, %v6714, %v6718
    %v6723 = vand.u32 2147483647, %v6713
    %vm6724 = vcmp.eq.f32.partialorder %v6723, 8.507059e+37
    %v6725 = vand.u32 %v6713, 2147483648
    %v6726 = vor.u32 1.1754944e-38, %v6725
    %v6727 = vsel %vm6724, %v6726, %v6722
    %v6728 = vmul.f32 1.0, %v6727
    %v6729 = vtanh.pop %v6709
    %v6731 = vrot.slane %v6677, 7
    %v6733 = vmul.f32 %v6728, %v6731
    %6735 = vrot.lane.b32.xlu0 %v6729, 64
    %v6736 = vpop.permute.xlu0 %6735
    %v6738 = vmul.f32 %v6728, %v6736
    %6740 = vrot.lane.b32.xlu0 %v6738, 32
    %v6741 = vpop.permute.xlu0 %6740
    %v6743 = vadd.f32 %v6733, %v6741
    %v6744 = vtanh.pop %v6743
    %6746 = vrot.lane.b32.xlu0 %v6744, 64
    %v6747 = vpop.permute.xlu0 %6746
    %v6749 = vmul.f32 %v6728, %v6747
    %v6750 = vpack.c.bf16 %v6749, %v6749
    %v6752 = vrot.slane %v6750, 1
    %6753 = vrot.lane.b32.xlu0 %v6752, 32
    %v6754 = vpop.permute.xlu0 %6753
    %v6756 = vsel %vm5967, %v6754, 0
    %6758 = vmatpush.bf16.msra.mxu0 0
    %6759 = vmatpush.bf16.msra.mxu0 0
    %6760 = vmatpush.bf16.msra.mxu0 0
    %6761 = vmatpush.bf16.msra.mxu0 0
    %6762 = vmatpush.bf16.msra.mxu0 0
    %6763 = vmatpush.bf16.msra.mxu0 0
    %6764 = vmatpush.bf16.msra.mxu0 %v6566
    %6765 = vmatpush.bf16.msra.mxu0 %v6565
    %6766 = vmatmul.bf16.gmra.mxu0 %v6756
    %v6767 = vpop.f32.mrf.mxu0
    %v6768 = vadd.f32 0.0, %v6767
    %v6769 = vpop.f32.mrf.mxu0
    %6770 = vdwg.mxu0
    %v6772 = vrot.slane %v6768, 5
    %v6774 = vadd.f32 %v6550, %v6772
    %v6775 = vxor.u32 %v6774, 2147483648
    %v6776 = vmul.f32 %v6775, 1.442695
    %v6777 = vpow.pop %v6776
    %v6778 = vadd.f32 %v6777, 1.0
    %v6779 = vrcp.pop %v6778
    %v6780 = vmul.f32 %v6778, %v6779
    %v6781 = vsub.f32 1.0, %v6780
    %v6782 = vmul.f32 %v6779, %v6781
    %v6783 = vadd.f32 %v6779, %v6782
    %vm6784 = vweird.f32 %v6778
    %vm6785 = vweird.f32 %v6779
    %vm6786 = vmor %vm6784, %vm6785
    %v6787 = vsel %vm6786, %v6779, %v6783
    %v6788 = vand.u32 2147483647, %v6778
    %vm6789 = vcmp.eq.f32.partialorder %v6788, 8.507059e+37
    %v6790 = vand.u32 %v6778, 2147483648
    %v6791 = vor.u32 1.1754944e-38, %v6790
    %v6792 = vsel %vm6789, %v6791, %v6787
    %v6793 = vmul.f32 1.0, %v6792
    %v6794 = vtanh.pop %v6774
    %v6796 = vrot.slane %v6743, 7
    %v6798 = vmul.f32 %v6793, %v6796
    %6800 = vrot.lane.b32.xlu0 %v6794, 64
    %v6801 = vpop.permute.xlu0 %6800
    %v6803 = vmul.f32 %v6793, %v6801
    %6805 = vrot.lane.b32.xlu0 %v6803, 32
    %v6806 = vpop.permute.xlu0 %6805
    %v6808 = vadd.f32 %v6798, %v6806
    %v6809 = vtanh.pop %v6808
    %6811 = vrot.lane.b32.xlu0 %v6809, 64
    %v6812 = vpop.permute.xlu0 %6811
    %v6814 = vmul.f32 %v6793, %v6812
    %v6815 = vpack.c.bf16 %v6814, %v6814
    %v6817 = vshrl.u32 %v6815, 16
    %v6819 = vrot.slane %v6817, 1
    %6820 = vrot.lane.b32.xlu0 %v6819, 32
    %v6821 = vpop.permute.xlu0 %6820
    %v6823 = vsel %vm5967, %v6821, 0
    %6825 = vmatpush.bf16.msra.mxu0 0
    %6826 = vmatpush.bf16.msra.mxu0 0
    %6827 = vmatpush.bf16.msra.mxu0 0
    %6828 = vmatpush.bf16.msra.mxu0 0
    %6829 = vmatpush.bf16.msra.mxu0 0
    %6830 = vmatpush.bf16.msra.mxu0 0
    %6831 = vmatpush.bf16.msra.mxu0 %v6566
    %6832 = vmatpush.bf16.msra.mxu0 %v6565
    %6833 = vmatmul.bf16.gmra.mxu0 %v6823
    %v6834 = vpop.f32.mrf.mxu0
    %v6835 = vadd.f32 0.0, %v6834
    %v6836 = vpop.f32.mrf.mxu0
    %6837 = vdwg.mxu0
    %v6839 = vrot.slane %v6835, 4
    %v6841 = vadd.f32 %v6550, %v6839
    %v6842 = vxor.u32 %v6841, 2147483648
    %v6843 = vmul.f32 %v6842, 1.442695
    %v6844 = vpow.pop %v6843
    %v6845 = vadd.f32 %v6844, 1.0
    %v6846 = vrcp.pop %v6845
    %v6847 = vmul.f32 %v6845, %v6846
    %v6848 = vsub.f32 1.0, %v6847
    %v6849 = vmul.f32 %v6846, %v6848
    %v6850 = vadd.f32 %v6846, %v6849
    %vm6851 = vweird.f32 %v6845
    %vm6852 = vweird.f32 %v6846
    %vm6853 = vmor %vm6851, %vm6852
    %v6854 = vsel %vm6853, %v6846, %v6850
    %v6855 = vand.u32 2147483647, %v6845
    %vm6856 = vcmp.eq.f32.partialorder %v6855, 8.507059e+37
    %v6857 = vand.u32 %v6845, 2147483648
    %v6858 = vor.u32 1.1754944e-38, %v6857
    %v6859 = vsel %vm6856, %v6858, %v6854
    %v6860 = vmul.f32 1.0, %v6859
    %v6861 = vtanh.pop %v6841
    %v6863 = vrot.slane %v6808, 7
    %v6865 = vmul.f32 %v6860, %v6863
    %6867 = vrot.lane.b32.xlu0 %v6861, 64
    %v6868 = vpop.permute.xlu0 %6867
    %v6870 = vmul.f32 %v6860, %v6868
    %6872 = vrot.lane.b32.xlu0 %v6870, 32
    %v6873 = vpop.permute.xlu0 %6872
    %v6875 = vadd.f32 %v6865, %v6873
    %v6876 = vtanh.pop %v6875
    %6878 = vrot.lane.b32.xlu0 %v6876, 64
    %v6879 = vpop.permute.xlu0 %6878
    %v6881 = vmul.f32 %v6860, %v6879
    %v6882 = vpack.c.bf16 %v6881, %v6881
    %v6884 = vrot.slane %v6882, 2
    %6885 = vrot.lane.b32.xlu0 %v6884, 32
    %v6886 = vpop.permute.xlu0 %6885
    %v6888 = vsel %vm5967, %v6886, 0
    %6890 = vmatpush.bf16.msra.mxu0 0
    %6891 = vmatpush.bf16.msra.mxu0 0
    %6892 = vmatpush.bf16.msra.mxu0 0
    %6893 = vmatpush.bf16.msra.mxu0 0
    %6894 = vmatpush.bf16.msra.mxu0 0
    %6895 = vmatpush.bf16.msra.mxu0 0
    %6896 = vmatpush.bf16.msra.mxu0 %v6566
    %6897 = vmatpush.bf16.msra.mxu0 %v6565
    %6898 = vmatmul.bf16.gmra.mxu0 %v6888
    %v6899 = vpop.f32.mrf.mxu0
    %v6900 = vadd.f32 0.0, %v6899
    %v6901 = vpop.f32.mrf.mxu0
    %6902 = vdwg.mxu0
    %v6904 = vrot.slane %v6900, 3
    %v6906 = vadd.f32 %v6550, %v6904
    %v6907 = vxor.u32 %v6906, 2147483648
    %v6908 = vmul.f32 %v6907, 1.442695
    %v6909 = vpow.pop %v6908
    %v6910 = vadd.f32 %v6909, 1.0
    %v6911 = vrcp.pop %v6910
    %v6912 = vmul.f32 %v6910, %v6911
    %v6913 = vsub.f32 1.0, %v6912
    %v6914 = vmul.f32 %v6911, %v6913
    %v6915 = vadd.f32 %v6911, %v6914
    %vm6916 = vweird.f32 %v6910
    %vm6917 = vweird.f32 %v6911
    %vm6918 = vmor %vm6916, %vm6917
    %v6919 = vsel %vm6918, %v6911, %v6915
    %v6920 = vand.u32 2147483647, %v6910
    %vm6921 = vcmp.eq.f32.partialorder %v6920, 8.507059e+37
    %v6922 = vand.u32 %v6910, 2147483648
    %v6923 = vor.u32 1.1754944e-38, %v6922
    %v6924 = vsel %vm6921, %v6923, %v6919
    %v6925 = vmul.f32 1.0, %v6924
    %v6926 = vtanh.pop %v6906
    %v6928 = vrot.slane %v6875, 7
    %v6930 = vmul.f32 %v6925, %v6928
    %6932 = vrot.lane.b32.xlu0 %v6926, 64
    %v6933 = vpop.permute.xlu0 %6932
    %v6935 = vmul.f32 %v6925, %v6933
    %6937 = vrot.lane.b32.xlu0 %v6935, 32
    %v6938 = vpop.permute.xlu0 %6937
    %v6940 = vadd.f32 %v6930, %v6938
    %v6941 = vtanh.pop %v6940
    %6943 = vrot.lane.b32.xlu0 %v6941, 64
    %v6944 = vpop.permute.xlu0 %6943
    %v6946 = vmul.f32 %v6925, %v6944
    %v6948 = vrot.slane %v6881, 4
    %v6951 = vrot.slane %v6946, 4
    %v6953 = vsel %vm6499, %v6948, %v6951
    %v6954 = vld [vmem:[%s5] sm:$0x3]
    %v6955 = vxor.u32 %v6954, 2147483648
    %v6956 = vmul.f32 %v6955, 1.442695
    %v6957 = vpow.pop %v6956
    %v6958 = vadd.f32 %v6957, 1.0
    %v6959 = vrcp.pop %v6958
    %v6960 = vmul.f32 %v6958, %v6959
    %v6961 = vsub.f32 1.0, %v6960
    %v6962 = vmul.f32 %v6959, %v6961
    %v6963 = vadd.f32 %v6959, %v6962
    %vm6964 = vweird.f32 %v6958
    %vm6965 = vweird.f32 %v6959
    %vm6966 = vmor %vm6964, %vm6965
    %v6967 = vsel %vm6966, %v6959, %v6963
    %v6968 = vand.u32 2147483647, %v6958
    %vm6969 = vcmp.eq.f32.partialorder %v6968, 8.507059e+37
    %v6970 = vand.u32 %v6958, 2147483648
    %v6971 = vor.u32 1.1754944e-38, %v6970
    %v6972 = vsel %vm6969, %v6971, %v6967
    %v6973 = vmul.f32 1.0, %v6972
    %v6974 = vld [vmem:[%s107] sm:$0xff]
    %v6975 = vld [vmem:[%s107 + $0x8] sm:$0xff]
    %v6976 = vld [vmem:[%s107 + $0x10] sm:$0xff]
    %v6977 = vld [vmem:[%s107 + $0x18] sm:$0xff]
    %v6978 = vld [vmem:[%s109] sm:$0x1]
    %6980 = vset.pattern.permute.xlu0 0
    %6981 = vperm.xlu0 %6980, %v6973
    %v6982 = vpop.permute.xlu0 %6981
    %v6985 = vperm.slane %v6978, 0
    %v6987 = vmul.f32 %v6982, %v6985
    %6989 = vrot.lane.b32.xlu0 %v6953, 32
    %v6990 = vpop.permute.xlu0 %6989
    %v6991 = vsel %vm5967, %v6990, 0
    %6993 = vmatpush.msra.mxu0 0.0
    %6994 = vmatpush.msra.mxu0 0.0
    %6995 = vmatpush.msra.mxu0 0.0
    %6996 = vmatpush.msra.mxu0 0.0
    %6997 = vmatpush.msra.mxu0 0.0
    %6998 = vmatpush.msra.mxu0 0.0
    %6999 = vmatpush.msra.mxu0 0.0
    %7000 = vmatpush.msra.mxu0 0.0
    %7001 = vmatpush.msra.mxu0 0.0
    %7002 = vmatpush.msra.mxu0 0.0
    %7003 = vmatpush.msra.mxu0 0.0
    %7004 = vmatpush.msra.mxu0 0.0
    %7005 = vmatpush.msra.mxu0 %v6977
    %7006 = vmatpush.msra.mxu0 %v6976
    %7007 = vmatpush.msra.mxu0 %v6975
    %7008 = vmatpush.msra.mxu0 %v6974
    %7009 = vmatmul.f32.gmra.mxu0 %v6991
    %v7010 = vpop.f32.mrf.mxu0
    %v7011 = vadd.f32 %v6987, %v7010
    %7012 = vdwg.mxu0
    %v7013 = vld [vmem:[%s111] sm:$0x1]
    %v7015 = vperm.slane %v7013, 0
    %v7017 = vadd.f32 %v7011, %v7015
    %v7018 = vxor.u32 %v7017, 2147483648
    %v7019 = vmul.f32 %v7018, 1.442695
    %v7020 = vpow.pop %v7019
    %v7021 = vadd.f32 %v7020, 1.0
    %v7022 = vrcp.pop %v7021
    %v7023 = vmul.f32 %v7021, %v7022
    %v7024 = vsub.f32 1.0, %v7023
    %v7025 = vmul.f32 %v7022, %v7024
    %v7026 = vadd.f32 %v7022, %v7025
    %vm7027 = vweird.f32 %v7021
    %vm7028 = vweird.f32 %v7022
    %vm7029 = vmor %vm7027, %vm7028
    %v7030 = vsel %vm7029, %v7022, %v7026
    %v7031 = vand.u32 2147483647, %v7021
    %vm7032 = vcmp.eq.f32.partialorder %v7031, 8.507059e+37
    %v7033 = vand.u32 %v7021, 2147483648
    %v7034 = vor.u32 1.1754944e-38, %v7033
    %v7035 = vsel %vm7032, %v7034, %v7030
    %v7036 = vmul.f32 1.0, %v7035
    %vm7037 = vcmask 17408
    %7038 = vst.msk [vmem:[#allocation58] sm:$0x3] %vm7037, %v7036
    // Predicated region
    $region370: #{resnt18rnn_forward.1} parent=1 // pred_check
      _
    $region371: #{resnt18rnn_forward.1} parent=1 // pred_check_branch
      %7040 = sbr.rel (0) target = $region373
    $region372: #{resnt18rnn_forward.1} parent=1 // pred_region
      %7042 = vsyncadd [#allocation4], 0
      %s7044 = sshll.u32 [#allocation58], 4
      %s7045 = int_to_ptr.vmem [resolvable:$true] %s7044
      %s7046 = sshll.u32 %s113, 4
      %s7047 = int_to_ptr.hbm [resolvable:$true] %s7046
      %7049 = dma.vmem_to_hbm [thread:$0]  %s7045, 32, %s7047, [#allocation4]
    $region373: #{resnt18rnn_forward.1} parent=1 // pred_fallthru
      _
    // Predicated region
    $region374: #{resnt18rnn_forward.1} parent=1 // pred_check
      _
    $region375: #{resnt18rnn_forward.1} parent=1 // pred_check_branch
      %7051 = sbr.rel (0) target = $region377
    $region376: #{resnt18rnn_forward.1} parent=1 // pred_region
      %7053 = dma.done [#allocation4], 32
    $region377: #{resnt18rnn_forward.1} parent=1 // pred_fallthru
      _
    %7054 = vsyncpa [#allocation3], 1
    %7055 = vsyncpa [#allocation6], 1
    %7056 = vsyncpa [#allocation9], 1
    %7057 = vsyncpa [#allocation12], 1
    %7058 = vsyncpa [#allocation15], 1
    %7059 = vsyncpa [#allocation18], 1
    %7060 = vsyncpa [#allocation21], 1
    %7061 = vsyncpa [#allocation24], 1
    %7062 = vsyncpa [#allocation27], 1
    %7063 = vsyncpa [#allocation30], 1
    %7064 = vsyncpa [#allocation33], 1
    %7065 = vsyncpa [#allocation36], 1
    %7066 = vsyncpa [#allocation39], 1
    %7067 = vsyncpa [#allocation42], 1
    %7068 = vsyncpa [#allocation45], 1
    %7069 = vsyncpa [#allocation48], 1
    %7070 = vsyncpa [#allocation51], 1
    %7071 = vsyncpa [#allocation54], 1
    %7072 = vsyncpa [#allocation57], 1
    %7073 = vsyncpa [#allocation4], 1

</llo_original>
